<compile_context>
chip_gen: v7x
topology: tpu7x:2x2x1
jax: 0.10.0
libtpu: 0.0.40
codegen_flags: <defaults>
</compile_context>

<pallas_src>
import jax
import jax.numpy as jnp
from jax.experimental import pallas as pl
from jax.experimental.pallas import tpu as pltpu


# ----------------------------------------------------------------------------
# Relative position index (pure JAX glue — mirrors the PyTorch helper exactly)
# ----------------------------------------------------------------------------
def get_relative_position_index(win_h: int, win_w: int) -> jnp.ndarray:
    coords = jnp.stack(
        jnp.meshgrid(jnp.arange(win_h), jnp.arange(win_w), indexing="ij")
    )  # (2, Wh, Ww)
    coords_flatten = coords.reshape(2, -1)                       # (2, Wh*Ww)
    relative_coords = coords_flatten[:, :, None] - coords_flatten[:, None, :]
    relative_coords = jnp.transpose(relative_coords, (1, 2, 0))  # (N, N, 2)
    relative_coords = relative_coords.at[:, :, 0].add(win_h - 1)
    relative_coords = relative_coords.at[:, :, 1].add(win_w - 1)
    relative_coords = relative_coords.at[:, :, 0].multiply(2 * win_w - 1)
    return relative_coords.sum(-1)                               # (N, N)


# ----------------------------------------------------------------------------
# Pallas kernel: Wb windows per grid step, fused QKV / proj matmuls.
# ----------------------------------------------------------------------------
def _window_attn_kernel(x_ref, wqkv_ref, bqkv_ref, bias_ref, wproj_ref,
                        bproj_ref, o_ref):
    # x_ref:     (Wb, Np, C)    f32   tokens (Np = token dim padded to mult of 8)
    # wqkv_ref:  (C, 3*A)       bf16  fused qkv weight, scale folded into q cols
    # bqkv_ref:  (1, 3*A)       f32   fused qkv bias, scale folded into q cols
    # bias_ref:  (H, Np, Np)    f32   rel-pos bias; padded key cols carry -1e9
    # wproj_ref: (A, Cp)        bf16  output projection, zero-padded to Cp lanes
    # bproj_ref: (1, Cp)        f32   output projection bias (zero-padded)
    # o_ref:     (Wb, Np, Cp)   f32   output tokens (lane-dense Cp = 128)
    wb, npad, c = x_ref.shape
    three_a = wqkv_ref.shape[1]
    num_heads = bias_ref.shape[0]
    attn_dim = three_a // 3
    head_dim = attn_dim // num_heads
    cp = wproj_ref.shape[1]
    m = wb * npad

    # In-VMEM bf16 cast (VPU filler under the MXU; no extra HBM pass).
    # The (Wb, Np, C) -> (Wb*Np, C) collapse is layout-free since Np % 8 == 0.
    x2 = x_ref[...].reshape(m, c).astype(jnp.bfloat16)

    # Fused QKV projection: a single lane-dense (m, C) x (C, 3*H*hd) matmul.
    qkv = jnp.dot(x2, wqkv_ref[...], preferred_element_type=jnp.float32)
    qkv = (qkv + bqkv_ref[...]).astype(jnp.bfloat16)     # early bf16 packing
    qkv = qkv.reshape(wb, npad, three_a)                  # no-op reshape

    o_heads = []
    for h in range(num_heads):                            # static, unrolled
        lo = h * head_dim
        hi = lo + head_dim
        q = qkv[:, :, lo:hi]                              # (Wb, Np, hd) bf16
        k = qkv[:, :, attn_dim + lo:attn_dim + hi]
        # Window-batched attention scores (f32 accumulate / softmax).
        s = jnp.einsum("wnd,wmd->wnm", q, k,
                       preferred_element_type=jnp.float32)       # (Wb, Np, Np)
        s = s + bias_ref[h]                               # masks padded key cols
        # TODO(synk): optional shifted-window attention-mask path (mask=None in
        # this demo) is not implemented.
        s = s - jnp.max(s, axis=-1, keepdims=True)
        p = jnp.exp(s)
        p = (p / jnp.sum(p, axis=-1, keepdims=True)).astype(jnp.bfloat16)
        # attn_drop / proj_drop have p=0.0 -> identity (eval semantics).
        v = qkv[:, :, 2 * attn_dim + lo:2 * attn_dim + hi]
        o_h = jnp.einsum("wnm,wmd->wnd", p, v,
                         preferred_element_type=jnp.float32)     # (Wb, Np, hd)
        o_heads.append(o_h.astype(jnp.bfloat16))

    # Fused output projection across heads: (m, A) x (A, Cp) with Cp = 128
    # lanes -> unmasked, lane-dense final store.
    o_all = jnp.concatenate(o_heads, axis=-1).reshape(m, attn_dim)
    out = jnp.dot(o_all, wproj_ref[...], preferred_element_type=jnp.float32)
    out = out + bproj_ref[...]
    o_ref[...] = out.reshape(wb, npad, cp).astype(o_ref.dtype)


# ----------------------------------------------------------------------------
# One-time parameter restructuring (run once, not per forward call).
# ----------------------------------------------------------------------------
def prepare_window_attention_params(w_qkv, b_qkv, rel_pos_table, win_h, win_w,
                                     w_proj, b_proj, *, num_heads, head_dim,
                                     n_pad, c_pad):
    C = w_qkv.shape[0]
    C_out = w_proj.shape[1]
    attn_dim = num_heads * head_dim
    N = win_h * win_w
    scale = head_dim ** (-0.5)

    # qkv columns follow PyTorch's (3, H, hd) ordering -> first attn_dim columns
    # are q; fold the attention scale into them (one-time transform).
    w = w_qkv.astype(jnp.float32)
    b = b_qkv.reshape(1, 3 * attn_dim).astype(jnp.float32)
    w = w.at[:, :attn_dim].multiply(scale)
    b = b.at[:, :attn_dim].multiply(scale)

    # Relative position bias gather -> (H, N, N), padded to (H, Np, Np) with
    # -1e9 on the padded key columns (softmax mask) and 0 on padded query rows.
    rpi = get_relative_position_index(win_h, win_w)              # (N, N) int32
    bias = rel_pos_table[rpi.reshape(-1)].reshape(N, N, num_heads)
    bias = jnp.transpose(bias, (2, 0, 1)).astype(jnp.float32)    # (H, N, N)
    bias_pad = jnp.full((num_heads, n_pad, n_pad), -1e9, dtype=jnp.float32)
    bias_pad = bias_pad.at[:, :, :N].set(0.0)
    bias_pad = bias_pad.at[:, :N, :N].set(bias)

    # Output projection zero-padded to Cp lanes (unmasked stores in-kernel).
    wp = jnp.zeros((attn_dim, c_pad), jnp.float32).at[:, :C_out].set(
        w_proj.astype(jnp.float32))
    bp = jnp.zeros((1, c_pad), jnp.float32).at[:, :C_out].set(
        b_proj.reshape(1, C_out).astype(jnp.float32))

    return {
        "w_qkv": w.astype(jnp.bfloat16),       # (C, 3A)
        "b_qkv": b,                            # (1, 3A) f32
        "rel_bias": bias_pad,                  # (H, Np, Np) f32
        "w_proj": wp.astype(jnp.bfloat16),     # (A, Cp)
        "b_proj": bp,                          # (1, Cp) f32
    }


# ----------------------------------------------------------------------------
# Generation-aware windows-per-block heuristic.
# ----------------------------------------------------------------------------
def _default_windows_per_block(B_, per_window_bytes):
    try:
        kind = jax.devices()[0].device_kind.lower()
    except Exception:
        kind = ""
    # v7x: 2 TensorCores/chip -> keep >= 2 grid steps so both get work.
    # v5e/v6e: single TC -> one big step avoids per-step pipeline overhead.
    if "v7" in kind and B_ >= 2 and B_ % 2 == 0:
        wb = B_ // 2
    else:
        wb = B_
    # VMEM-aware cap (matters at real Swin sizes on v7x's 64 MiB VMEM / 32 MiB
    # default scoped limit; a no-op at the demo size).
    budget = 8 << 20
    max_wb = max(1, budget // max(per_window_bytes, 1))
    while wb > 1 and (wb > max_wb or B_ % wb != 0):
        wb -= 1
    return max(wb, 1)


# ----------------------------------------------------------------------------
# Wrapper: pad tokens, call the kernel, slice the padding back off.
# ----------------------------------------------------------------------------
def window_attention(x, params, *, num_heads, head_dim, windows_per_block=None):
    """x: (B_, N, C) float32. params from prepare_window_attention_params.
    Returns (B_, N, C) float32."""
    B_, N, C = x.shape
    attn_dim = num_heads * head_dim
    Np = params["rel_bias"].shape[-1]
    Cp = params["w_proj"].shape[-1]

    if windows_per_block is None:
        # Rough per-window VMEM residency: double-buffered x/out blocks + qkv
        # (bf16) + one head's scores/probs (f32) + per-head outputs (bf16).
        per_window_bytes = (2 * (Np * C * 4 + Np * Cp * 4)
                            + Np * 3 * attn_dim * 2
                            + 2 * Np * Np * 4
                            + Np * attn_dim * 2)
        windows_per_block = _default_windows_per_block(B_, per_window_bytes)
    wb = windows_per_block
    assert B_ % wb == 0, "windows_per_block must divide B_"
    grid = (B_ // wb,)

    # Pad the token dim N -> Np (sublane-aligned). Padded rows are zeros; their
    # key columns are masked via rel_bias and their outputs are sliced off.
    x_pad = jnp.pad(x, ((0, 0), (0, Np - N), (0, 0)))

    cost = pl.CostEstimate(
        flops=(2 * B_ * Np * C * 3 * attn_dim            # fused QKV
               + 4 * B_ * num_heads * Np * Np * head_dim  # q@k^T and p@v
               + 2 * B_ * Np * attn_dim * Cp),            # output projection
        transcendentals=B_ * num_heads * Np * Np,         # softmax exp
        bytes_accessed=(x_pad.size * 4 + B_ * Np * Cp * 4
                        + params["w_qkv"].size * 2 + params["b_qkv"].size * 4
                        + params["rel_bias"].size * 4
                        + params["w_proj"].size * 2 + params["b_proj"].size * 4),
    )

    out_pad = pl.pallas_call(
        _window_attn_kernel,
        out_shape=jax.ShapeDtypeStruct((B_, Np, Cp), x.dtype),
        grid_spec=pltpu.PrefetchScalarGridSpec(
            num_scalar_prefetch=0,
            grid=grid,
            in_specs=[
                pl.BlockSpec((wb, Np, C), lambda b: (b, 0, 0)),            # x
                pl.BlockSpec((C, 3 * attn_dim), lambda b: (0, 0)),         # w_qkv
                pl.BlockSpec((1, 3 * attn_dim), lambda b: (0, 0)),         # b_qkv
                pl.BlockSpec((num_heads, Np, Np), lambda b: (0, 0, 0)),    # rel bias
                pl.BlockSpec((attn_dim, Cp), lambda b: (0, 0)),            # w_proj
                pl.BlockSpec((1, Cp), lambda b: (0, 0)),                   # b_proj
            ],
            out_specs=pl.BlockSpec((wb, Np, Cp), lambda b: (b, 0, 0)),
        ),
        compiler_params=pltpu.CompilerParams(
            dimension_semantics=("parallel",),
        ),
        cost_estimate=cost,
    )(x_pad, params["w_qkv"], params["b_qkv"], params["rel_bias"],
      params["w_proj"], params["b_proj"])

    return out_pad[:, :N, :C]


# ----------------------------------------------------------------------------
# Pure-JAX f32 reference (numerical sanity check against the kernel)
# ----------------------------------------------------------------------------
def window_attention_ref(x, w_qkv, b_qkv, rel_bias, w_proj, b_proj,
                         *, num_heads, head_dim):
    B_, N, C = x.shape
    scale = head_dim ** (-0.5)
    qkv = x @ w_qkv + b_qkv[0]                                   # (B_, N, 3*H*hd)
    qkv = qkv.reshape(B_, N, 3, num_heads, head_dim)
    qkv = jnp.transpose(qkv, (2, 0, 3, 1, 4))                    # (3, B_, H, N, hd)
    q, k, v = qkv[0], qkv[1], qkv[2]
    q = q * scale
    attn = jnp.einsum("bhnd,bhmd->bhnm", q, k) + rel_bias[None]  # (B_, H, N, N)
    attn = jax.nn.softmax(attn, axis=-1)
    out = jnp.einsum("bhnm,bhmd->bhnd", attn, v)                 # (B_, H, N, hd)
    out = jnp.transpose(out, (0, 2, 1, 3)).reshape(B_, N, num_heads * head_dim)
    return out @ w_proj + b_proj[0]


# ----------------------------------------------------------------------------
# Main
# ----------------------------------------------------------------------------
if __name__ == "__main__":
    # Shapes implied by the module's demo input x = torch.randn(8, 49, 96),
    # window_size = (7, 7), dim = 96, num_heads = 3 -> head_dim = 32.
    B_, dim = 8, 96
    win_h, win_w = 7, 7
    N = win_h * win_w                       # 49
    num_heads = 3
    head_dim = dim // num_heads             # 32
    attn_dim = num_heads * head_dim         # 96
    N_PAD = 56                              # tokens padded to multiple of 8
    C_PAD = 128                             # output channels padded to lane tile

    key = jax.random.PRNGKey(0)
    kx, kqw, kqb, kpw, kpb, ktab = jax.random.split(key, 6)

    x = jax.random.normal(kx, (B_, N, dim), dtype=jnp.float32)

    # Deterministic synthetic parameter init (std ~ Linear-ish scale).
    w_qkv = jax.random.normal(kqw, (dim, 3 * attn_dim), dtype=jnp.float32) * 0.02
    b_qkv = jax.random.normal(kqb, (1, 3 * attn_dim), dtype=jnp.float32) * 0.02
    w_proj = jax.random.normal(kpw, (attn_dim, dim), dtype=jnp.float32) * 0.02
    b_proj = jax.random.normal(kpb, (1, dim), dtype=jnp.float32) * 0.02
    # trunc_normal_(std=0.02) approximated by plain normal * 0.02 (synthetic init).
    rel_pos_table = jax.random.normal(
        ktab, ((2 * win_h - 1) * (2 * win_w - 1), num_heads), dtype=jnp.float32
    ) * 0.02

    # One-time parameter prep (hoisted out of the per-call hot path).
    params = prepare_window_attention_params(
        w_qkv, b_qkv, rel_pos_table, win_h, win_w, w_proj, b_proj,
        num_heads=num_heads, head_dim=head_dim, n_pad=N_PAD, c_pad=C_PAD)
    params = jax.tree_util.tree_map(jax.block_until_ready, params)

    out = window_attention(x, params, num_heads=num_heads, head_dim=head_dim)
    out = jax.block_until_ready(out)

    # Reference (exact f32).
    rpi = get_relative_position_index(win_h, win_w)              # (N, N) int32
    rel_bias = rel_pos_table[rpi.reshape(-1)].reshape(N, N, num_heads)
    rel_bias = jnp.transpose(rel_bias, (2, 0, 1)).astype(jnp.float32)  # (H, N, N)
    ref = window_attention_ref(
        x, w_qkv, b_qkv, rel_bias, w_proj, b_proj,
        num_heads=num_heads, head_dim=head_dim,
    )

    assert out.shape == (B_, N, dim)
    # Softmax is exact in-kernel; the remaining error is bf16 operand rounding
    # in the three MXU stages (f32 accumulation).
    assert jnp.allclose(out, ref, atol=3e-3, rtol=3e-2), "mismatch vs reference"

    print("KERNEL_OK")
</pallas_src>

<mosaic_0001>
module attributes {stable_mosaic.version = 11 : i64} {
  func.func @_window_attn_kernel(%arg0: i32, %arg1: memref<8x56x96xf32, #tpu.memory_space<vmem>>, %arg2: memref<96x288xbf16, #tpu.memory_space<vmem>>, %arg3: memref<1x288xf32, #tpu.memory_space<vmem>>, %arg4: memref<3x56x56xf32, #tpu.memory_space<vmem>>, %arg5: memref<96x128xbf16, #tpu.memory_space<vmem>>, %arg6: memref<1x128xf32, #tpu.memory_space<vmem>>, %arg7: memref<8x56x128xf32, #tpu.memory_space<vmem>>) attributes {dimension_semantics = [#tpu.dimension_semantics<parallel>], iteration_bounds = array<i64: 1>, scalar_prefetch = 0 : i64, scratch_operands = 0 : i64, tpu.core_type = #tpu.core_type<tc>, window_params = [{transform_indices = @transform_0, window_bounds = array<i64: 8, 56, 96>}, {pipeline_mode = #tpu.pipeline_mode<synchronous>, transform_indices = @transform_1, window_bounds = array<i64: 96, 288>}, {pipeline_mode = #tpu.pipeline_mode<synchronous>, transform_indices = @transform_2, window_bounds = array<i64: 1, 288>}, {pipeline_mode = #tpu.pipeline_mode<synchronous>, transform_indices = @transform_3, window_bounds = array<i64: 3, 56, 56>}, {pipeline_mode = #tpu.pipeline_mode<synchronous>, transform_indices = @transform_4, window_bounds = array<i64: 96, 128>}, {pipeline_mode = #tpu.pipeline_mode<synchronous>, transform_indices = @transform_5, window_bounds = array<i64: 1, 128>}, {transform_indices = @transform_6, window_bounds = array<i64: 8, 56, 128>}]} {
    %c0 = arith.constant 0 : index
    %c0_0 = arith.constant 0 : index
    %c0_1 = arith.constant 0 : index
    %0 = vector.load %arg1[%c0, %c0_0, %c0_1] : memref<8x56x96xf32, #tpu.memory_space<vmem>>, vector<8x56x96xf32>
    %1 = vector.shape_cast %0 : vector<8x56x96xf32> to vector<448x96xf32>
    %2 = arith.truncf %1 : vector<448x96xf32> to vector<448x96xbf16>
    %c0_2 = arith.constant 0 : index
    %c0_3 = arith.constant 0 : index
    %3 = vector.load %arg2[%c0_2, %c0_3] : memref<96x288xbf16, #tpu.memory_space<vmem>>, vector<96x288xbf16>
    %cst = arith.constant dense<0.000000e+00> : vector<448x288xf32>
    %4 = tpu.matmul %2, %3, %cst {dimension_numbers = #tpu.dot_dimension_numbers<[1], [0], [0], [1], [0, 0, 1, 1], [], []>} : vector<448x96xbf16>, vector<96x288xbf16>, vector<448x288xf32> -> vector<448x288xf32>
    %c0_4 = arith.constant 0 : index
    %c0_5 = arith.constant 0 : index
    %5 = vector.load %arg3[%c0_4, %c0_5] : memref<1x288xf32, #tpu.memory_space<vmem>>, vector<1x288xf32>
    %6 = vector.broadcast %5 : vector<1x288xf32> to vector<448x288xf32>
    %7 = arith.addf %4, %6 : vector<448x288xf32>
    %8 = arith.truncf %7 : vector<448x288xf32> to vector<448x288xbf16>
    %9 = vector.shape_cast %8 : vector<448x288xbf16> to vector<8x56x288xbf16>
    %10 = vector.extract_strided_slice %9 {offsets = [0, 0, 0], sizes = [8, 56, 32], strides = [1, 1, 1]} : vector<8x56x288xbf16> to vector<8x56x32xbf16>
    %11 = vector.extract_strided_slice %9 {offsets = [0, 0, 96], sizes = [8, 56, 32], strides = [1, 1, 1]} : vector<8x56x288xbf16> to vector<8x56x32xbf16>
    "tpu.trace_start"() <{level = 10 : i32, message = "wnd,wmd->wnm"}> : () -> ()
    %cst_6 = arith.constant dense<0.000000e+00> : vector<8x56x56xf32>
    %12 = tpu.matmul %10, %11, %cst_6 {dimension_numbers = #tpu.dot_dimension_numbers<[2], [2], [1], [1], [0, 0, 0, 1, 1, 1], [0], [0]>} : vector<8x56x32xbf16>, vector<8x56x32xbf16>, vector<8x56x56xf32> -> vector<8x56x56xf32>
    "tpu.trace_stop"() : () -> ()
    %c0_7 = arith.constant 0 : index
    %c0_8 = arith.constant 0 : index
    %c0_9 = arith.constant 0 : index
    %13 = vector.load %arg4[%c0_7, %c0_8, %c0_9] : memref<3x56x56xf32, #tpu.memory_space<vmem>>, vector<1x56x56xf32>
    %14 = vector.shape_cast %13 : vector<1x56x56xf32> to vector<56x56xf32>
    %15 = vector.shape_cast %14 : vector<56x56xf32> to vector<1x56x56xf32>
    %16 = vector.broadcast %15 : vector<1x56x56xf32> to vector<8x56x56xf32>
    %17 = arith.addf %12, %16 : vector<8x56x56xf32>
    %cst_10 = arith.constant dense<0xFF800000> : vector<8x56xf32>
    %18 = vector.multi_reduction <maximumf>, %17, %cst_10 [2] : vector<8x56x56xf32> to vector<8x56xf32>
    %19 = vector.shape_cast %18 : vector<8x56xf32> to vector<8x56x1xf32>
    %20 = vector.broadcast %19 : vector<8x56x1xf32> to vector<8x56x56xf32>
    %21 = arith.subf %17, %20 : vector<8x56x56xf32>
    %22 = math.exp %21 : vector<8x56x56xf32>
    %cst_11 = arith.constant dense<0.000000e+00> : vector<8x56xf32>
    %23 = vector.multi_reduction <add>, %22, %cst_11 [2] : vector<8x56x56xf32> to vector<8x56xf32>
    %24 = vector.shape_cast %23 : vector<8x56xf32> to vector<8x56x1xf32>
    %25 = vector.broadcast %24 : vector<8x56x1xf32> to vector<8x56x56xf32>
    %26 = arith.divf %22, %25 : vector<8x56x56xf32>
    %27 = arith.truncf %26 : vector<8x56x56xf32> to vector<8x56x56xbf16>
    %28 = vector.extract_strided_slice %9 {offsets = [0, 0, 192], sizes = [8, 56, 32], strides = [1, 1, 1]} : vector<8x56x288xbf16> to vector<8x56x32xbf16>
    "tpu.trace_start"() <{level = 10 : i32, message = "wnm,wmd->wnd"}> : () -> ()
    %cst_12 = arith.constant dense<0.000000e+00> : vector<8x56x32xf32>
    %29 = tpu.matmul %27, %28, %cst_12 {dimension_numbers = #tpu.dot_dimension_numbers<[2], [1], [1], [2], [0, 0, 0, 1, 1, 2], [0], [0]>} : vector<8x56x56xbf16>, vector<8x56x32xbf16>, vector<8x56x32xf32> -> vector<8x56x32xf32>
    "tpu.trace_stop"() : () -> ()
    %30 = arith.truncf %29 : vector<8x56x32xf32> to vector<8x56x32xbf16>
    %31 = vector.extract_strided_slice %9 {offsets = [0, 0, 32], sizes = [8, 56, 32], strides = [1, 1, 1]} : vector<8x56x288xbf16> to vector<8x56x32xbf16>
    %32 = vector.extract_strided_slice %9 {offsets = [0, 0, 128], sizes = [8, 56, 32], strides = [1, 1, 1]} : vector<8x56x288xbf16> to vector<8x56x32xbf16>
    "tpu.trace_start"() <{level = 10 : i32, message = "wnd,wmd->wnm"}> : () -> ()
    %cst_13 = arith.constant dense<0.000000e+00> : vector<8x56x56xf32>
    %33 = tpu.matmul %31, %32, %cst_13 {dimension_numbers = #tpu.dot_dimension_numbers<[2], [2], [1], [1], [0, 0, 0, 1, 1, 1], [0], [0]>} : vector<8x56x32xbf16>, vector<8x56x32xbf16>, vector<8x56x56xf32> -> vector<8x56x56xf32>
    "tpu.trace_stop"() : () -> ()
    %c1 = arith.constant 1 : index
    %c0_14 = arith.constant 0 : index
    %c0_15 = arith.constant 0 : index
    %34 = vector.load %arg4[%c1, %c0_14, %c0_15] : memref<3x56x56xf32, #tpu.memory_space<vmem>>, vector<1x56x56xf32>
    %35 = vector.shape_cast %34 : vector<1x56x56xf32> to vector<56x56xf32>
    %36 = vector.shape_cast %35 : vector<56x56xf32> to vector<1x56x56xf32>
    %37 = vector.broadcast %36 : vector<1x56x56xf32> to vector<8x56x56xf32>
    %38 = arith.addf %33, %37 : vector<8x56x56xf32>
    %cst_16 = arith.constant dense<0xFF800000> : vector<8x56xf32>
    %39 = vector.multi_reduction <maximumf>, %38, %cst_16 [2] : vector<8x56x56xf32> to vector<8x56xf32>
    %40 = vector.shape_cast %39 : vector<8x56xf32> to vector<8x56x1xf32>
    %41 = vector.broadcast %40 : vector<8x56x1xf32> to vector<8x56x56xf32>
    %42 = arith.subf %38, %41 : vector<8x56x56xf32>
    %43 = math.exp %42 : vector<8x56x56xf32>
    %cst_17 = arith.constant dense<0.000000e+00> : vector<8x56xf32>
    %44 = vector.multi_reduction <add>, %43, %cst_17 [2] : vector<8x56x56xf32> to vector<8x56xf32>
    %45 = vector.shape_cast %44 : vector<8x56xf32> to vector<8x56x1xf32>
    %46 = vector.broadcast %45 : vector<8x56x1xf32> to vector<8x56x56xf32>
    %47 = arith.divf %43, %46 : vector<8x56x56xf32>
    %48 = arith.truncf %47 : vector<8x56x56xf32> to vector<8x56x56xbf16>
    %49 = vector.extract_strided_slice %9 {offsets = [0, 0, 224], sizes = [8, 56, 32], strides = [1, 1, 1]} : vector<8x56x288xbf16> to vector<8x56x32xbf16>
    "tpu.trace_start"() <{level = 10 : i32, message = "wnm,wmd->wnd"}> : () -> ()
    %cst_18 = arith.constant dense<0.000000e+00> : vector<8x56x32xf32>
    %50 = tpu.matmul %48, %49, %cst_18 {dimension_numbers = #tpu.dot_dimension_numbers<[2], [1], [1], [2], [0, 0, 0, 1, 1, 2], [0], [0]>} : vector<8x56x56xbf16>, vector<8x56x32xbf16>, vector<8x56x32xf32> -> vector<8x56x32xf32>
    "tpu.trace_stop"() : () -> ()
    %51 = arith.truncf %50 : vector<8x56x32xf32> to vector<8x56x32xbf16>
    %52 = vector.extract_strided_slice %9 {offsets = [0, 0, 64], sizes = [8, 56, 32], strides = [1, 1, 1]} : vector<8x56x288xbf16> to vector<8x56x32xbf16>
    %53 = vector.extract_strided_slice %9 {offsets = [0, 0, 160], sizes = [8, 56, 32], strides = [1, 1, 1]} : vector<8x56x288xbf16> to vector<8x56x32xbf16>
    "tpu.trace_start"() <{level = 10 : i32, message = "wnd,wmd->wnm"}> : () -> ()
    %cst_19 = arith.constant dense<0.000000e+00> : vector<8x56x56xf32>
    %54 = tpu.matmul %52, %53, %cst_19 {dimension_numbers = #tpu.dot_dimension_numbers<[2], [2], [1], [1], [0, 0, 0, 1, 1, 1], [0], [0]>} : vector<8x56x32xbf16>, vector<8x56x32xbf16>, vector<8x56x56xf32> -> vector<8x56x56xf32>
    "tpu.trace_stop"() : () -> ()
    %c2 = arith.constant 2 : index
    %c0_20 = arith.constant 0 : index
    %c0_21 = arith.constant 0 : index
    %55 = vector.load %arg4[%c2, %c0_20, %c0_21] : memref<3x56x56xf32, #tpu.memory_space<vmem>>, vector<1x56x56xf32>
    %56 = vector.shape_cast %55 : vector<1x56x56xf32> to vector<56x56xf32>
    %57 = vector.shape_cast %56 : vector<56x56xf32> to vector<1x56x56xf32>
    %58 = vector.broadcast %57 : vector<1x56x56xf32> to vector<8x56x56xf32>
    %59 = arith.addf %54, %58 : vector<8x56x56xf32>
    %cst_22 = arith.constant dense<0xFF800000> : vector<8x56xf32>
    %60 = vector.multi_reduction <maximumf>, %59, %cst_22 [2] : vector<8x56x56xf32> to vector<8x56xf32>
    %61 = vector.shape_cast %60 : vector<8x56xf32> to vector<8x56x1xf32>
    %62 = vector.broadcast %61 : vector<8x56x1xf32> to vector<8x56x56xf32>
    %63 = arith.subf %59, %62 : vector<8x56x56xf32>
    %64 = math.exp %63 : vector<8x56x56xf32>
    %cst_23 = arith.constant dense<0.000000e+00> : vector<8x56xf32>
    %65 = vector.multi_reduction <add>, %64, %cst_23 [2] : vector<8x56x56xf32> to vector<8x56xf32>
    %66 = vector.shape_cast %65 : vector<8x56xf32> to vector<8x56x1xf32>
    %67 = vector.broadcast %66 : vector<8x56x1xf32> to vector<8x56x56xf32>
    %68 = arith.divf %64, %67 : vector<8x56x56xf32>
    %69 = arith.truncf %68 : vector<8x56x56xf32> to vector<8x56x56xbf16>
    %70 = vector.extract_strided_slice %9 {offsets = [0, 0, 256], sizes = [8, 56, 32], strides = [1, 1, 1]} : vector<8x56x288xbf16> to vector<8x56x32xbf16>
    "tpu.trace_start"() <{level = 10 : i32, message = "wnm,wmd->wnd"}> : () -> ()
    %cst_24 = arith.constant dense<0.000000e+00> : vector<8x56x32xf32>
    %71 = tpu.matmul %69, %70, %cst_24 {dimension_numbers = #tpu.dot_dimension_numbers<[2], [1], [1], [2], [0, 0, 0, 1, 1, 2], [0], [0]>} : vector<8x56x56xbf16>, vector<8x56x32xbf16>, vector<8x56x32xf32> -> vector<8x56x32xf32>
    "tpu.trace_stop"() : () -> ()
    %72 = arith.truncf %71 : vector<8x56x32xf32> to vector<8x56x32xbf16>
    %73 = tpu.concatenate %30, %51, %72 in 2 : vector<8x56x32xbf16>, vector<8x56x32xbf16>, vector<8x56x32xbf16> -> vector<8x56x96xbf16>
    %74 = vector.shape_cast %73 : vector<8x56x96xbf16> to vector<448x96xbf16>
    %c0_25 = arith.constant 0 : index
    %c0_26 = arith.constant 0 : index
    %75 = vector.load %arg5[%c0_25, %c0_26] : memref<96x128xbf16, #tpu.memory_space<vmem>>, vector<96x128xbf16>
    %cst_27 = arith.constant dense<0.000000e+00> : vector<448x128xf32>
    %76 = tpu.matmul %74, %75, %cst_27 {dimension_numbers = #tpu.dot_dimension_numbers<[1], [0], [0], [1], [0, 0, 1, 1], [], []>} : vector<448x96xbf16>, vector<96x128xbf16>, vector<448x128xf32> -> vector<448x128xf32>
    %c0_28 = arith.constant 0 : index
    %c0_29 = arith.constant 0 : index
    %77 = vector.load %arg6[%c0_28, %c0_29] : memref<1x128xf32, #tpu.memory_space<vmem>>, vector<1x128xf32>
    %78 = vector.broadcast %77 : vector<1x128xf32> to vector<448x128xf32>
    %79 = arith.addf %76, %78 : vector<448x128xf32>
    %80 = vector.shape_cast %79 : vector<448x128xf32> to vector<8x56x128xf32>
    %c0_30 = arith.constant 0 : index
    %c0_31 = arith.constant 0 : index
    %c0_32 = arith.constant 0 : index
    %81 = vector.load %arg7[%c0_30, %c0_31, %c0_32] : memref<8x56x128xf32, #tpu.memory_space<vmem>>, vector<8x56x128xf32>
    tpu.vector_store %arg7[%c0_30, %c0_31, %c0_32], %80 {strides = array<i32>} : memref<8x56x128xf32, #tpu.memory_space<vmem>>, vector<8x56x128xf32>,
    return
  }
  func.func @transform_0(%arg0: i32) -> (i32, i32, i32) {
    %c0_i32 = arith.constant 0 : i32
    %c0_i32_0 = arith.constant 0 : i32
    %c0_i32_1 = arith.constant 0 : i32
    return %arg0, %c0_i32, %c0_i32_0 : i32, i32, i32
  }
  func.func @transform_1(%arg0: i32) -> (i32, i32) {
    %c0_i32 = arith.constant 0 : i32
    %c0_i32_0 = arith.constant 0 : i32
    %c0_i32_1 = arith.constant 0 : i32
    return %c0_i32, %c0_i32_0 : i32, i32
  }
  func.func @transform_2(%arg0: i32) -> (i32, i32) {
    %c0_i32 = arith.constant 0 : i32
    %c0_i32_0 = arith.constant 0 : i32
    %c0_i32_1 = arith.constant 0 : i32
    return %c0_i32, %c0_i32_0 : i32, i32
  }
  func.func @transform_3(%arg0: i32) -> (i32, i32, i32) {
    %c0_i32 = arith.constant 0 : i32
    %c0_i32_0 = arith.constant 0 : i32
    %c0_i32_1 = arith.constant 0 : i32
    %c0_i32_2 = arith.constant 0 : i32
    return %c0_i32, %c0_i32_0, %c0_i32_1 : i32, i32, i32
  }
  func.func @transform_4(%arg0: i32) -> (i32, i32) {
    %c0_i32 = arith.constant 0 : i32
    %c0_i32_0 = arith.constant 0 : i32
    %c0_i32_1 = arith.constant 0 : i32
    return %c0_i32, %c0_i32_0 : i32, i32
  }
  func.func @transform_5(%arg0: i32) -> (i32, i32) {
    %c0_i32 = arith.constant 0 : i32
    %c0_i32_0 = arith.constant 0 : i32
    %c0_i32_1 = arith.constant 0 : i32
    return %c0_i32, %c0_i32_0 : i32, i32
  }
  func.func @transform_6(%arg0: i32) -> (i32, i32, i32) {
    %c0_i32 = arith.constant 0 : i32
    %c0_i32_0 = arith.constant 0 : i32
    %c0_i32_1 = arith.constant 0 : i32
    return %arg0, %c0_i32, %c0_i32_0 : i32, i32, i32
  }
}

</mosaic_0001>

<llo_original>
// kernel: tpu_custom_call.1
$region0: #{tpu_custom_call.1}
  #allocation0 [shape = 'u32[]', space=smem, size = 0x4, offset = 0x4, fixed_abs, tag = 'smem constant byte address 0x4 - core index']
  #allocation1 [shape = 'u32[144,128]{1,0:T(1,128)}', space=vmem, size = 0x12000, scoped, tag = 'internal scratch']
  %s0 = inlined_call_operand.hbm [shape: f32[8,56,96], index: 0, kind: input, shape index: {}]
  %s1 = inlined_call_operand.hbm [shape: bf16[96,288], index: 1, kind: input, shape index: {}]
  %s2 = inlined_call_operand.vmem [shape: f32[1,288], index: 2, kind: input, shape index: {}]
  %s3 = inlined_call_operand.hbm [shape: f32[3,56,56], index: 3, kind: input, shape index: {}]
  %s4 = inlined_call_operand.hbm [shape: bf16[96,128], index: 4, kind: input, shape index: {}]
  %s5 = inlined_call_operand.vmem [shape: f32[1,128], index: 5, kind: input, shape index: {}]
  %s6 = inlined_call_operand.hbm [shape: f32[8,56,128], index: 6, kind: output, shape index: {}]
  %s7 = sld [smem:[#allocation0]]
  $region50: #{tpu_custom_call.1} parent=0
    _
  %s9 = ssub.s32 1, %s7
  %s10 = scalar_select 0, %s9, %s7
  $region1: #{tpu_custom_call.1} parent=0
    #allocation2 [shape = 'u8[229376]{0}', space=vmem, size = 0x38000, scoped, tag = 'input window, operand 0, single buffered']
    #allocation3 [shape = 's32[1]{0}', space=sflag, size = 0x4, scoped, tag = 'scoped memory for tpu_custom_call.1']
    #allocation4 [shape = 's32[1]{0}', space=sflag, size = 0x4, scoped, tag = 'scoped memory for tpu_custom_call.1']
    #allocation5 [shape = 'u8[73728]{0}', space=vmem, size = 0x12000, scoped, tag = 'input window, operand 1, single buffered']
    #allocation6 [shape = 's32[1]{0}', space=sflag, size = 0x4, scoped, tag = 'scoped memory for tpu_custom_call.1']
    #allocation7 [shape = 'u8[86016]{0}', space=vmem, size = 0x15000, scoped, tag = 'input window, operand 3, single buffered']
    #allocation8 [shape = 'u8[24576]{0}', space=vmem, size = 0x6000, scoped, tag = 'input window, operand 4, single buffered']
    #allocation9 [shape = 's32[1]{0}', space=sflag, size = 0x4, scoped, tag = 'scoped memory for tpu_custom_call.1']
    #allocation10 [shape = 'u8[229376]{0}', space=vmem, size = 0x38000, scoped, tag = 'output window, operand 0, single buffered']
    %11 = vsyncpa [#allocation3], 0
    %12 = vsyncpa [#allocation6], 0
    %13 = vsyncpa [#allocation9], 0
    %14 = vsyncpa [#allocation4], 0
    // Predicated region
    $region2: #{tpu_custom_call.1} parent=1 // pred_check
      _
    $region3: #{tpu_custom_call.1} parent=1 // pred_check_branch
      %16 = sbr.rel (0) target = $region5
    $region4: #{tpu_custom_call.1} parent=1 // pred_region
      %s18 = ssub.s32 7168, 7168
      %19 = vsyncadd [#allocation3], %s18
      %s20 = sshll.u32 [#allocation2], 4
      %s21 = int_to_ptr.vmem [resolvable:$true] %s20
      %26 = dma.hbm_to_vmem [thread:$0]  %s0, 7168, %s21, [#allocation3], 128, 128, 8
    $region5: #{tpu_custom_call.1} parent=1 // pred_fallthru
      _
    // Predicated region
    $region6: #{tpu_custom_call.1} parent=1 // pred_check
      _
    $region7: #{tpu_custom_call.1} parent=1 // pred_check_branch
      %28 = sbr.rel (0) target = $region9
    $region8: #{tpu_custom_call.1} parent=1 // pred_region
      %s30 = ssub.s32 2304, 2304
      %31 = vsyncadd [#allocation6], %s30
      %s32 = sshll.u32 [#allocation5], 4
      %s33 = int_to_ptr.vmem [resolvable:$true] %s32
      %38 = dma.hbm_to_vmem [thread:$0]  %s1, 2304, %s33, [#allocation6], 192, 192, 12
    $region9: #{tpu_custom_call.1} parent=1 // pred_fallthru
      _
    // Predicated region
    $region10: #{tpu_custom_call.1} parent=1 // pred_check
      _
    $region11: #{tpu_custom_call.1} parent=1 // pred_check_branch
      %40 = sbr.rel (0) target = $region13
    $region12: #{tpu_custom_call.1} parent=1 // pred_region
      _
    $region13: #{tpu_custom_call.1} parent=1 // pred_fallthru
      _
    // Predicated region
    $region14: #{tpu_custom_call.1} parent=1 // pred_check
      _
    $region15: #{tpu_custom_call.1} parent=1 // pred_check_branch
      %42 = sbr.rel (0) target = $region17
    $region16: #{tpu_custom_call.1} parent=1 // pred_region
      %s44 = ssub.s32 2688, 2688
      %45 = vsyncadd [#allocation6], %s44
      %s46 = sshll.u32 [#allocation7], 4
      %s47 = int_to_ptr.vmem [resolvable:$true] %s46
      %52 = dma.hbm_to_vmem [thread:$0]  %s3, 2688, %s47, [#allocation6], 128, 128, 8
    $region17: #{tpu_custom_call.1} parent=1 // pred_fallthru
      _
    // Predicated region
    $region18: #{tpu_custom_call.1} parent=1 // pred_check
      _
    $region19: #{tpu_custom_call.1} parent=1 // pred_check_branch
      %54 = sbr.rel (0) target = $region21
    $region20: #{tpu_custom_call.1} parent=1 // pred_region
      %s56 = ssub.s32 768, 768
      %57 = vsyncadd [#allocation9], %s56
      %s58 = sshll.u32 [#allocation8], 4
      %s59 = int_to_ptr.vmem [resolvable:$true] %s58
      %64 = dma.hbm_to_vmem [thread:$0]  %s4, 768, %s59, [#allocation9], 64, 64, 4
    $region21: #{tpu_custom_call.1} parent=1 // pred_fallthru
      _
    // Predicated region
    $region22: #{tpu_custom_call.1} parent=1 // pred_check
      _
    $region23: #{tpu_custom_call.1} parent=1 // pred_check_branch
      %66 = sbr.rel (0) target = $region25
    $region24: #{tpu_custom_call.1} parent=1 // pred_region
      _
    $region25: #{tpu_custom_call.1} parent=1 // pred_fallthru
      _
    // Predicated region
    $region26: #{tpu_custom_call.1} parent=1 // pred_check
      _
    $region27: #{tpu_custom_call.1} parent=1 // pred_check_branch
      %68 = sbr.rel (0) target = $region29
    $region28: #{tpu_custom_call.1} parent=1 // pred_region
      %69 = dma.done [#allocation3], 7168
    $region29: #{tpu_custom_call.1} parent=1 // pred_fallthru
      _
    // Predicated region
    $region30: #{tpu_custom_call.1} parent=1 // pred_check
      _
    $region31: #{tpu_custom_call.1} parent=1 // pred_check_branch
      %71 = sbr.rel (0) target = $region33
    $region32: #{tpu_custom_call.1} parent=1 // pred_region
      %72 = dma.done [#allocation6], 2304
    $region33: #{tpu_custom_call.1} parent=1 // pred_fallthru
      _
    // Predicated region
    $region34: #{tpu_custom_call.1} parent=1 // pred_check
      _
    $region35: #{tpu_custom_call.1} parent=1 // pred_check_branch
      %74 = sbr.rel (0) target = $region37
    $region36: #{tpu_custom_call.1} parent=1 // pred_region
      %75 = dma.done [#allocation6], 2688
    $region37: #{tpu_custom_call.1} parent=1 // pred_fallthru
      _
    // Predicated region
    $region38: #{tpu_custom_call.1} parent=1 // pred_check
      _
    $region39: #{tpu_custom_call.1} parent=1 // pred_check_branch
      %77 = sbr.rel (0) target = $region41
    $region40: #{tpu_custom_call.1} parent=1 // pred_region
      %78 = dma.done [#allocation9], 768
    $region41: #{tpu_custom_call.1} parent=1 // pred_fallthru
      _
    %v80 = vld [vmem:[#allocation2] sm:$0xff]
    %v81 = vld [vmem:[#allocation2 + $0x8] sm:$0xff]
    %v82 = vld [vmem:[#allocation2 + $0x10] sm:$0xff]
    %v83 = vld [vmem:[#allocation2 + $0x18] sm:$0xff]
    %v84 = vld [vmem:[#allocation2 + $0x20] sm:$0xff]
    %v85 = vld [vmem:[#allocation2 + $0x28] sm:$0xff]
    %v86 = vld [vmem:[#allocation2 + $0x30] sm:$0xff]
    %v87 = vld [vmem:[#allocation2 + $0x38] sm:$0xff]
    %v88 = vld [vmem:[#allocation2 + $0x40] sm:$0xff]
    %v89 = vld [vmem:[#allocation2 + $0x48] sm:$0xff]
    %v90 = vld [vmem:[#allocation2 + $0x50] sm:$0xff]
    %v91 = vld [vmem:[#allocation2 + $0x58] sm:$0xff]
    %v92 = vld [vmem:[#allocation2 + $0x60] sm:$0xff]
    %v93 = vld [vmem:[#allocation2 + $0x68] sm:$0xff]
    %v94 = vld [vmem:[#allocation2 + $0x70] sm:$0xff]
    %v95 = vld [vmem:[#allocation2 + $0x78] sm:$0xff]
    %v96 = vld [vmem:[#allocation2 + $0x80] sm:$0xff]
    %v97 = vld [vmem:[#allocation2 + $0x88] sm:$0xff]
    %v98 = vld [vmem:[#allocation2 + $0x90] sm:$0xff]
    %v99 = vld [vmem:[#allocation2 + $0x98] sm:$0xff]
    %v100 = vld [vmem:[#allocation2 + $0xa0] sm:$0xff]
    %v101 = vld [vmem:[#allocation2 + $0xa8] sm:$0xff]
    %v102 = vld [vmem:[#allocation2 + $0xb0] sm:$0xff]
    %v103 = vld [vmem:[#allocation2 + $0xb8] sm:$0xff]
    %v104 = vld [vmem:[#allocation2 + $0xc0] sm:$0xff]
    %v105 = vld [vmem:[#allocation2 + $0xc8] sm:$0xff]
    %v106 = vld [vmem:[#allocation2 + $0xd0] sm:$0xff]
    %v107 = vld [vmem:[#allocation2 + $0xd8] sm:$0xff]
    %v108 = vld [vmem:[#allocation2 + $0xe0] sm:$0xff]
    %v109 = vld [vmem:[#allocation2 + $0xe8] sm:$0xff]
    %v110 = vld [vmem:[#allocation2 + $0xf0] sm:$0xff]
    %v111 = vld [vmem:[#allocation2 + $0xf8] sm:$0xff]
    %v112 = vld [vmem:[#allocation2 + $0x100] sm:$0xff]
    %v113 = vld [vmem:[#allocation2 + $0x108] sm:$0xff]
    %v114 = vld [vmem:[#allocation2 + $0x110] sm:$0xff]
    %v115 = vld [vmem:[#allocation2 + $0x118] sm:$0xff]
    %v116 = vld [vmem:[#allocation2 + $0x120] sm:$0xff]
    %v117 = vld [vmem:[#allocation2 + $0x128] sm:$0xff]
    %v118 = vld [vmem:[#allocation2 + $0x130] sm:$0xff]
    %v119 = vld [vmem:[#allocation2 + $0x138] sm:$0xff]
    %v120 = vld [vmem:[#allocation2 + $0x140] sm:$0xff]
    %v121 = vld [vmem:[#allocation2 + $0x148] sm:$0xff]
    %v122 = vld [vmem:[#allocation2 + $0x150] sm:$0xff]
    %v123 = vld [vmem:[#allocation2 + $0x158] sm:$0xff]
    %v124 = vld [vmem:[#allocation2 + $0x160] sm:$0xff]
    %v125 = vld [vmem:[#allocation2 + $0x168] sm:$0xff]
    %v126 = vld [vmem:[#allocation2 + $0x170] sm:$0xff]
    %v127 = vld [vmem:[#allocation2 + $0x178] sm:$0xff]
    %v128 = vld [vmem:[#allocation2 + $0x180] sm:$0xff]
    %v129 = vld [vmem:[#allocation2 + $0x188] sm:$0xff]
    %v130 = vld [vmem:[#allocation2 + $0x190] sm:$0xff]
    %v131 = vld [vmem:[#allocation2 + $0x198] sm:$0xff]
    %v132 = vld [vmem:[#allocation2 + $0x1a0] sm:$0xff]
    %v133 = vld [vmem:[#allocation2 + $0x1a8] sm:$0xff]
    %v134 = vld [vmem:[#allocation2 + $0x1b0] sm:$0xff]
    %v135 = vld [vmem:[#allocation2 + $0x1b8] sm:$0xff]
    %v136 = vpack.c.bf16 %v81, %v80
    %v137 = vpack.c.bf16 %v83, %v82
    %v138 = vpack.c.bf16 %v85, %v84
    %v139 = vpack.c.bf16 %v87, %v86
    %v140 = vpack.c.bf16 %v89, %v88
    %v141 = vpack.c.bf16 %v91, %v90
    %v142 = vpack.c.bf16 %v93, %v92
    %v143 = vpack.c.bf16 %v95, %v94
    %v144 = vpack.c.bf16 %v97, %v96
    %v145 = vpack.c.bf16 %v99, %v98
    %v146 = vpack.c.bf16 %v101, %v100
    %v147 = vpack.c.bf16 %v103, %v102
    %v148 = vpack.c.bf16 %v105, %v104
    %v149 = vpack.c.bf16 %v107, %v106
    %v150 = vpack.c.bf16 %v109, %v108
    %v151 = vpack.c.bf16 %v111, %v110
    %v152 = vpack.c.bf16 %v113, %v112
    %v153 = vpack.c.bf16 %v115, %v114
    %v154 = vpack.c.bf16 %v117, %v116
    %v155 = vpack.c.bf16 %v119, %v118
    %v156 = vpack.c.bf16 %v121, %v120
    %v157 = vpack.c.bf16 %v123, %v122
    %v158 = vpack.c.bf16 %v125, %v124
    %v159 = vpack.c.bf16 %v127, %v126
    %v160 = vpack.c.bf16 %v129, %v128
    %v161 = vpack.c.bf16 %v131, %v130
    %v162 = vpack.c.bf16 %v133, %v132
    %v163 = vpack.c.bf16 %v135, %v134
    %v164 = vld [vmem:[#allocation5] sm:$0xff]
    %v165 = vld [vmem:[#allocation5 + $0x8] sm:$0xf]
    %v166 = vld [vmem:[#allocation5 + $0xc] sm:$0xff]
    %v167 = vld [vmem:[#allocation5 + $0x14] sm:$0xf]
    %v168 = vld [vmem:[#allocation5 + $0x18] sm:$0xff]
    %v169 = vld [vmem:[#allocation5 + $0x20] sm:$0xf]
    %v170 = vld [vmem:[#allocation5 + $0x24] sm:$0xff]
    %v171 = vld [vmem:[#allocation5 + $0x2c] sm:$0xf]
    %v172 = vld [vmem:[#allocation5 + $0x30] sm:$0xff]
    %v173 = vld [vmem:[#allocation5 + $0x38] sm:$0xf]
    %v174 = vld [vmem:[#allocation5 + $0x3c] sm:$0xff]
    %v175 = vld [vmem:[#allocation5 + $0x44] sm:$0xf]
    %v176 = vld [vmem:[#allocation5 + $0x48] sm:$0xff]
    %v177 = vld [vmem:[#allocation5 + $0x50] sm:$0xf]
    %v178 = vld [vmem:[#allocation5 + $0x54] sm:$0xff]
    %v179 = vld [vmem:[#allocation5 + $0x5c] sm:$0xf]
    %v180 = vld [vmem:[#allocation5 + $0x60] sm:$0xff]
    %v181 = vld [vmem:[#allocation5 + $0x68] sm:$0xf]
    %v182 = vld [vmem:[#allocation5 + $0x6c] sm:$0xff]
    %v183 = vld [vmem:[#allocation5 + $0x74] sm:$0xf]
    %v184 = vld [vmem:[#allocation5 + $0x78] sm:$0xff]
    %v185 = vld [vmem:[#allocation5 + $0x80] sm:$0xf]
    %v186 = vld [vmem:[#allocation5 + $0x84] sm:$0xff]
    %v187 = vld [vmem:[#allocation5 + $0x8c] sm:$0xf]
    %v188 = vld [vmem:[%s2] sm:$0x7]
    %v190 = vlaneseq
    %v191 = vshrl.u32 %v190, 7
    %v192 = vsub.s32 0, %v191
    %v193 = vrot.slane %v188, %v192
    %v194 = vlaneseq
    %v195 = vshrl.u32 %v194, 7
    %v196 = vsub.s32 1, %v195
    %v197 = vrot.slane %v188, %v196
    %v198 = vlaneseq
    %v199 = vshrl.u32 %v198, 7
    %v200 = vsub.s32 2, %v199
    %v201 = vrot.slane %v188, %v200
    %v229 = vunpack.c.l.b16 %v164
    %v230 = vunpack.c.h.b16 %v164
    %v231 = vunpack.c.l.b16 %v165
    %v232 = vunpack.c.l.b16 %v166
    %v233 = vunpack.c.h.b16 %v166
    %v234 = vunpack.c.l.b16 %v167
    %v235 = vunpack.c.l.b16 %v168
    %v236 = vunpack.c.h.b16 %v168
    %v237 = vunpack.c.l.b16 %v169
    %v238 = vunpack.c.l.b16 %v170
    %v239 = vunpack.c.h.b16 %v170
    %v240 = vunpack.c.l.b16 %v171
    %v241 = vunpack.c.l.b16 %v172
    %v242 = vunpack.c.h.b16 %v172
    %v243 = vunpack.c.l.b16 %v173
    %v244 = vunpack.c.l.b16 %v174
    %v245 = vunpack.c.h.b16 %v174
    %v246 = vunpack.c.l.b16 %v175
    %v247 = vunpack.c.l.b16 %v176
    %v248 = vunpack.c.h.b16 %v176
    %v249 = vunpack.c.l.b16 %v177
    %v250 = vunpack.c.l.b16 %v178
    %v251 = vunpack.c.h.b16 %v178
    %v252 = vunpack.c.l.b16 %v179
    %v253 = vunpack.c.l.b16 %v180
    %v254 = vunpack.c.h.b16 %v180
    %v255 = vunpack.c.l.b16 %v181
    %v256 = vunpack.c.l.b16 %v182
    %v257 = vunpack.c.h.b16 %v182
    %v258 = vunpack.c.l.b16 %v183
    %v259 = vunpack.c.l.b16 %v184
    %v260 = vunpack.c.h.b16 %v184
    %v261 = vunpack.c.l.b16 %v185
    %v262 = vunpack.c.l.b16 %v186
    %v263 = vunpack.c.h.b16 %v186
    %v264 = vunpack.c.l.b16 %v187
    %v265 = vpack.c.b16 %v232, %v229
    %v266 = vpack.c.b16 %v233, %v230
    %v267 = vpack.c.b16 %v234, %v231
    %v268 = vpack.c.b16 %v238, %v235
    %v269 = vpack.c.b16 %v239, %v236
    %v270 = vpack.c.b16 %v240, %v237
    %v271 = vpack.c.b16 %v244, %v241
    %v272 = vpack.c.b16 %v245, %v242
    %v273 = vpack.c.b16 %v246, %v243
    %v274 = vpack.c.b16 %v250, %v247
    %v275 = vpack.c.b16 %v251, %v248
    %v276 = vpack.c.b16 %v252, %v249
    %v277 = vpack.c.b16 %v256, %v253
    %v278 = vpack.c.b16 %v257, %v254
    %v279 = vpack.c.b16 %v258, %v255
    %v280 = vpack.c.b16 %v262, %v259
    %v281 = vpack.c.b16 %v263, %v260
    %v282 = vpack.c.b16 %v264, %v261
    %vm301 = vcmask 785408
    %v303 = vsel %vm301, %v136, 0
    %v306 = vsel %vm301, %v137, 0
    %v309 = vsel %vm301, %v138, 0
    %v312 = vsel %vm301, %v139, 0
    %v315 = vsel %vm301, %v140, 0
    %v318 = vsel %vm301, %v141, 0
    %v321 = vsel %vm301, %v142, 0
    %v324 = vsel %vm301, %v143, 0
    %v327 = vsel %vm301, %v144, 0
    %v330 = vsel %vm301, %v145, 0
    %v333 = vsel %vm301, %v146, 0
    %v336 = vsel %vm301, %v147, 0
    %v339 = vsel %vm301, %v148, 0
    %v342 = vsel %vm301, %v149, 0
    %v345 = vsel %vm301, %v150, 0
    %v348 = vsel %vm301, %v151, 0
    %v351 = vsel %vm301, %v152, 0
    %v354 = vsel %vm301, %v153, 0
    %v357 = vsel %vm301, %v154, 0
    %v360 = vsel %vm301, %v155, 0
    %v363 = vsel %vm301, %v156, 0
    %v366 = vsel %vm301, %v157, 0
    %v369 = vsel %vm301, %v158, 0
    %v372 = vsel %vm301, %v159, 0
    %v375 = vsel %vm301, %v160, 0
    %v378 = vsel %vm301, %v161, 0
    %v381 = vsel %vm301, %v162, 0
    %v384 = vsel %vm301, %v163, 0
    %386 = vmatprep.subr.bf16.mxu0 %v266
    %387 = vmatpush1.bf16.msra.mxu0 %v265
    %388 = vmatprep.subr.bf16.mxu0 %v269
    %389 = vmatpush1.bf16.msra.mxu0 %v268
    %390 = vmatprep.subr.bf16.mxu0 %v272
    %391 = vmatpush1.bf16.msra.mxu0 %v271
    %392 = vmatprep.subr.bf16.mxu0 %v275
    %393 = vmatpush1.bf16.msra.mxu0 %v274
    %394 = vmatprep.subr.bf16.mxu0 %v278
    %395 = vmatpush1.bf16.msra.mxu0 %v277
    %396 = vmatprep.subr.bf16.mxu0 %v281
    %397 = vmatpush1.bf16.msra.mxu0 %v280
    %398 = vmatprep.subr.bf16.mxu0 0
    %399 = vmatpush1.bf16.msra.mxu0 0
    %400 = vmatprep.subr.bf16.mxu0 0
    %401 = vmatpush1.bf16.msra.mxu0 0
    %402 = vmatprep.subr.bf16.mxu0 0
    %403 = vmatpush1.bf16.msra.mxu0 0
    %404 = vmatprep.subr.bf16.mxu0 0
    %405 = vmatpush1.bf16.msra.mxu0 0
    %406 = vmatprep.subr.bf16.mxu0 0
    %407 = vmatpush1.bf16.msra.mxu0 0
    %408 = vmatprep.subr.bf16.mxu0 0
    %409 = vmatpush1.bf16.msra.mxu0 0
    %410 = vmatprep.subr.bf16.mxu0 0
    %411 = vmatpush1.bf16.msra.mxu0 0
    %412 = vmatprep.subr.bf16.mxu0 0
    %413 = vmatpush1.bf16.msra.mxu0 0
    %414 = vmatprep.subr.bf16.mxu0 0
    %415 = vmatpush1.bf16.msra.mxu0 0
    %416 = vmatprep.subr.bf16.mxu0 0
    %417 = vmatpush1.bf16.msra.mxu0 0
    %418 = vmatprep.mubr.bf16.mxu0 0
    %419 = vmatmul.mubr.bf16.gmra.mrb[0].mxu0 %v303
    %v420 = vpop.f32.mrb[0].mxu0
    %v421 = vadd.f32 %v193, %v420
    %v422 = vpop.f32.mrb[0].mxu0
    %v423 = vadd.f32 %v197, %v422
    %v424 = vpop.f32.mrb[0].mxu0
    %v425 = vadd.f32 %v193, %v424
    %v426 = vpop.f32.mrb[0].mxu0
    %v427 = vadd.f32 %v197, %v426
    %428 = vmatprep.mubr.bf16.mxu0 0
    %429 = vmatmul.mubr.bf16.gmra.mrb[0].mxu0 %v306
    %v430 = vpop.f32.mrb[0].mxu0
    %v431 = vadd.f32 %v193, %v430
    %v432 = vpop.f32.mrb[0].mxu0
    %v433 = vadd.f32 %v197, %v432
    %v434 = vpop.f32.mrb[0].mxu0
    %v435 = vadd.f32 %v193, %v434
    %v436 = vpop.f32.mrb[0].mxu0
    %v437 = vadd.f32 %v197, %v436
    %438 = vmatprep.mubr.bf16.mxu0 0
    %439 = vmatmul.mubr.bf16.gmra.mrb[0].mxu0 %v309
    %v440 = vpop.f32.mrb[0].mxu0
    %v441 = vadd.f32 %v193, %v440
    %v442 = vpop.f32.mrb[0].mxu0
    %v443 = vadd.f32 %v197, %v442
    %v444 = vpop.f32.mrb[0].mxu0
    %v445 = vadd.f32 %v193, %v444
    %v446 = vpop.f32.mrb[0].mxu0
    %v447 = vadd.f32 %v197, %v446
    %448 = vmatprep.mubr.bf16.mxu0 0
    %449 = vmatmul.mubr.bf16.gmra.mrb[0].mxu0 %v312
    %v450 = vpop.f32.mrb[0].mxu0
    %v451 = vadd.f32 %v193, %v450
    %v452 = vpop.f32.mrb[0].mxu0
    %v453 = vadd.f32 %v197, %v452
    %v454 = vpop.f32.mrb[0].mxu0
    %v455 = vadd.f32 %v193, %v454
    %v456 = vpop.f32.mrb[0].mxu0
    %v457 = vadd.f32 %v197, %v456
    %458 = vmatprep.mubr.bf16.mxu0 0
    %459 = vmatmul.mubr.bf16.gmra.mrb[0].mxu0 %v315
    %v460 = vpop.f32.mrb[0].mxu0
    %v461 = vadd.f32 %v193, %v460
    %v462 = vpop.f32.mrb[0].mxu0
    %v463 = vadd.f32 %v197, %v462
    %v464 = vpop.f32.mrb[0].mxu0
    %v465 = vadd.f32 %v193, %v464
    %v466 = vpop.f32.mrb[0].mxu0
    %v467 = vadd.f32 %v197, %v466
    %468 = vmatprep.mubr.bf16.mxu0 0
    %469 = vmatmul.mubr.bf16.gmra.mrb[0].mxu0 %v318
    %v470 = vpop.f32.mrb[0].mxu0
    %v471 = vadd.f32 %v193, %v470
    %v472 = vpop.f32.mrb[0].mxu0
    %v473 = vadd.f32 %v197, %v472
    %v474 = vpop.f32.mrb[0].mxu0
    %v475 = vadd.f32 %v193, %v474
    %v476 = vpop.f32.mrb[0].mxu0
    %v477 = vadd.f32 %v197, %v476
    %478 = vmatprep.mubr.bf16.mxu0 0
    %479 = vmatmul.mubr.bf16.gmra.mrb[0].mxu0 %v321
    %v480 = vpop.f32.mrb[0].mxu0
    %v481 = vadd.f32 %v193, %v480
    %v482 = vpop.f32.mrb[0].mxu0
    %v483 = vadd.f32 %v197, %v482
    %v484 = vpop.f32.mrb[0].mxu0
    %v485 = vadd.f32 %v193, %v484
    %v486 = vpop.f32.mrb[0].mxu0
    %v487 = vadd.f32 %v197, %v486
    %488 = vmatprep.mubr.bf16.mxu0 0
    %489 = vmatmul.mubr.bf16.gmra.mrb[0].mxu0 %v324
    %v490 = vpop.f32.mrb[0].mxu0
    %v491 = vadd.f32 %v193, %v490
    %v492 = vpop.f32.mrb[0].mxu0
    %v493 = vadd.f32 %v197, %v492
    %v494 = vpop.f32.mrb[0].mxu0
    %v495 = vadd.f32 %v193, %v494
    %v496 = vpop.f32.mrb[0].mxu0
    %v497 = vadd.f32 %v197, %v496
    %498 = vmatprep.mubr.bf16.mxu0 0
    %499 = vmatmul.mubr.bf16.gmra.mrb[0].mxu0 %v327
    %v500 = vpop.f32.mrb[0].mxu0
    %v501 = vadd.f32 %v193, %v500
    %v502 = vpop.f32.mrb[0].mxu0
    %v503 = vadd.f32 %v197, %v502
    %v504 = vpop.f32.mrb[0].mxu0
    %v505 = vadd.f32 %v193, %v504
    %v506 = vpop.f32.mrb[0].mxu0
    %v507 = vadd.f32 %v197, %v506
    %508 = vmatprep.mubr.bf16.mxu0 0
    %509 = vmatmul.mubr.bf16.gmra.mrb[0].mxu0 %v330
    %v510 = vpop.f32.mrb[0].mxu0
    %v511 = vadd.f32 %v193, %v510
    %v512 = vpop.f32.mrb[0].mxu0
    %v513 = vadd.f32 %v197, %v512
    %v514 = vpop.f32.mrb[0].mxu0
    %v515 = vadd.f32 %v193, %v514
    %v516 = vpop.f32.mrb[0].mxu0
    %v517 = vadd.f32 %v197, %v516
    %518 = vmatprep.mubr.bf16.mxu0 0
    %519 = vmatmul.mubr.bf16.gmra.mrb[0].mxu0 %v333
    %v520 = vpop.f32.mrb[0].mxu0
    %v521 = vadd.f32 %v193, %v520
    %v522 = vpop.f32.mrb[0].mxu0
    %v523 = vadd.f32 %v197, %v522
    %v524 = vpop.f32.mrb[0].mxu0
    %v525 = vadd.f32 %v193, %v524
    %v526 = vpop.f32.mrb[0].mxu0
    %v527 = vadd.f32 %v197, %v526
    %528 = vmatprep.mubr.bf16.mxu0 0
    %529 = vmatmul.mubr.bf16.gmra.mrb[0].mxu0 %v336
    %v530 = vpop.f32.mrb[0].mxu0
    %v531 = vadd.f32 %v193, %v530
    %v532 = vpop.f32.mrb[0].mxu0
    %v533 = vadd.f32 %v197, %v532
    %v534 = vpop.f32.mrb[0].mxu0
    %v535 = vadd.f32 %v193, %v534
    %v536 = vpop.f32.mrb[0].mxu0
    %v537 = vadd.f32 %v197, %v536
    %538 = vmatprep.mubr.bf16.mxu0 0
    %539 = vmatmul.mubr.bf16.gmra.mrb[0].mxu0 %v339
    %v540 = vpop.f32.mrb[0].mxu0
    %v541 = vadd.f32 %v193, %v540
    %v542 = vpop.f32.mrb[0].mxu0
    %v543 = vadd.f32 %v197, %v542
    %v544 = vpop.f32.mrb[0].mxu0
    %v545 = vadd.f32 %v193, %v544
    %v546 = vpop.f32.mrb[0].mxu0
    %v547 = vadd.f32 %v197, %v546
    %548 = vmatprep.mubr.bf16.mxu0 0
    %549 = vmatmul.mubr.bf16.gmra.mrb[0].mxu0 %v342
    %v550 = vpop.f32.mrb[0].mxu0
    %v551 = vadd.f32 %v193, %v550
    %v552 = vpop.f32.mrb[0].mxu0
    %v553 = vadd.f32 %v197, %v552
    %v554 = vpop.f32.mrb[0].mxu0
    %v555 = vadd.f32 %v193, %v554
    %v556 = vpop.f32.mrb[0].mxu0
    %v557 = vadd.f32 %v197, %v556
    %558 = vmatprep.mubr.bf16.mxu0 0
    %559 = vmatmul.mubr.bf16.gmra.mrb[0].mxu0 %v345
    %v560 = vpop.f32.mrb[0].mxu0
    %v561 = vadd.f32 %v193, %v560
    %v562 = vpop.f32.mrb[0].mxu0
    %v563 = vadd.f32 %v197, %v562
    %v564 = vpop.f32.mrb[0].mxu0
    %v565 = vadd.f32 %v193, %v564
    %v566 = vpop.f32.mrb[0].mxu0
    %v567 = vadd.f32 %v197, %v566
    %568 = vmatprep.mubr.bf16.mxu0 0
    %569 = vmatmul.mubr.bf16.gmra.mrb[0].mxu0 %v348
    %v570 = vpop.f32.mrb[0].mxu0
    %v571 = vadd.f32 %v193, %v570
    %v572 = vpop.f32.mrb[0].mxu0
    %v573 = vadd.f32 %v197, %v572
    %v574 = vpop.f32.mrb[0].mxu0
    %v575 = vadd.f32 %v193, %v574
    %v576 = vpop.f32.mrb[0].mxu0
    %v577 = vadd.f32 %v197, %v576
    %578 = vmatprep.mubr.bf16.mxu0 0
    %579 = vmatmul.mubr.bf16.gmra.mrb[0].mxu0 %v351
    %v580 = vpop.f32.mrb[0].mxu0
    %v581 = vadd.f32 %v193, %v580
    %v582 = vpop.f32.mrb[0].mxu0
    %v583 = vadd.f32 %v197, %v582
    %v584 = vpop.f32.mrb[0].mxu0
    %v585 = vadd.f32 %v193, %v584
    %v586 = vpop.f32.mrb[0].mxu0
    %v587 = vadd.f32 %v197, %v586
    %588 = vmatprep.mubr.bf16.mxu0 0
    %589 = vmatmul.mubr.bf16.gmra.mrb[0].mxu0 %v354
    %v590 = vpop.f32.mrb[0].mxu0
    %v591 = vadd.f32 %v193, %v590
    %v592 = vpop.f32.mrb[0].mxu0
    %v593 = vadd.f32 %v197, %v592
    %v594 = vpop.f32.mrb[0].mxu0
    %v595 = vadd.f32 %v193, %v594
    %v596 = vpop.f32.mrb[0].mxu0
    %v597 = vadd.f32 %v197, %v596
    %598 = vmatprep.mubr.bf16.mxu0 0
    %599 = vmatmul.mubr.bf16.gmra.mrb[0].mxu0 %v357
    %v600 = vpop.f32.mrb[0].mxu0
    %v601 = vadd.f32 %v193, %v600
    %v602 = vpop.f32.mrb[0].mxu0
    %v603 = vadd.f32 %v197, %v602
    %v604 = vpop.f32.mrb[0].mxu0
    %v605 = vadd.f32 %v193, %v604
    %v606 = vpop.f32.mrb[0].mxu0
    %v607 = vadd.f32 %v197, %v606
    %608 = vmatprep.mubr.bf16.mxu0 0
    %609 = vmatmul.mubr.bf16.gmra.mrb[0].mxu0 %v360
    %v610 = vpop.f32.mrb[0].mxu0
    %v611 = vadd.f32 %v193, %v610
    %v612 = vpop.f32.mrb[0].mxu0
    %v613 = vadd.f32 %v197, %v612
    %v614 = vpop.f32.mrb[0].mxu0
    %v615 = vadd.f32 %v193, %v614
    %v616 = vpop.f32.mrb[0].mxu0
    %v617 = vadd.f32 %v197, %v616
    %618 = vmatprep.mubr.bf16.mxu0 0
    %619 = vmatmul.mubr.bf16.gmra.mrb[0].mxu0 %v363
    %v620 = vpop.f32.mrb[0].mxu0
    %v621 = vadd.f32 %v193, %v620
    %v622 = vpop.f32.mrb[0].mxu0
    %v623 = vadd.f32 %v197, %v622
    %v624 = vpop.f32.mrb[0].mxu0
    %v625 = vadd.f32 %v193, %v624
    %v626 = vpop.f32.mrb[0].mxu0
    %v627 = vadd.f32 %v197, %v626
    %628 = vmatprep.mubr.bf16.mxu0 0
    %629 = vmatmul.mubr.bf16.gmra.mrb[0].mxu0 %v366
    %v630 = vpop.f32.mrb[0].mxu0
    %v631 = vadd.f32 %v193, %v630
    %v632 = vpop.f32.mrb[0].mxu0
    %v633 = vadd.f32 %v197, %v632
    %v634 = vpop.f32.mrb[0].mxu0
    %v635 = vadd.f32 %v193, %v634
    %v636 = vpop.f32.mrb[0].mxu0
    %v637 = vadd.f32 %v197, %v636
    %638 = vmatprep.mubr.bf16.mxu0 0
    %639 = vmatmul.mubr.bf16.gmra.mrb[0].mxu0 %v369
    %v640 = vpop.f32.mrb[0].mxu0
    %v641 = vadd.f32 %v193, %v640
    %v642 = vpop.f32.mrb[0].mxu0
    %v643 = vadd.f32 %v197, %v642
    %v644 = vpop.f32.mrb[0].mxu0
    %v645 = vadd.f32 %v193, %v644
    %v646 = vpop.f32.mrb[0].mxu0
    %v647 = vadd.f32 %v197, %v646
    %648 = vmatprep.mubr.bf16.mxu0 0
    %649 = vmatmul.mubr.bf16.gmra.mrb[0].mxu0 %v372
    %v650 = vpop.f32.mrb[0].mxu0
    %v651 = vadd.f32 %v193, %v650
    %v652 = vpop.f32.mrb[0].mxu0
    %v653 = vadd.f32 %v197, %v652
    %v654 = vpop.f32.mrb[0].mxu0
    %v655 = vadd.f32 %v193, %v654
    %v656 = vpop.f32.mrb[0].mxu0
    %v657 = vadd.f32 %v197, %v656
    %658 = vmatprep.mubr.bf16.mxu0 0
    %659 = vmatmul.mubr.bf16.gmra.mrb[0].mxu0 %v375
    %v660 = vpop.f32.mrb[0].mxu0
    %v661 = vadd.f32 %v193, %v660
    %v662 = vpop.f32.mrb[0].mxu0
    %v663 = vadd.f32 %v197, %v662
    %v664 = vpop.f32.mrb[0].mxu0
    %v665 = vadd.f32 %v193, %v664
    %v666 = vpop.f32.mrb[0].mxu0
    %v667 = vadd.f32 %v197, %v666
    %668 = vmatprep.mubr.bf16.mxu0 0
    %669 = vmatmul.mubr.bf16.gmra.mrb[0].mxu0 %v378
    %v670 = vpop.f32.mrb[0].mxu0
    %v671 = vadd.f32 %v193, %v670
    %v672 = vpop.f32.mrb[0].mxu0
    %v673 = vadd.f32 %v197, %v672
    %v674 = vpop.f32.mrb[0].mxu0
    %v675 = vadd.f32 %v193, %v674
    %v676 = vpop.f32.mrb[0].mxu0
    %v677 = vadd.f32 %v197, %v676
    %678 = vmatprep.mubr.bf16.mxu0 0
    %679 = vmatmul.mubr.bf16.gmra.mrb[0].mxu0 %v381
    %v680 = vpop.f32.mrb[0].mxu0
    %v681 = vadd.f32 %v193, %v680
    %v682 = vpop.f32.mrb[0].mxu0
    %v683 = vadd.f32 %v197, %v682
    %v684 = vpop.f32.mrb[0].mxu0
    %v685 = vadd.f32 %v193, %v684
    %v686 = vpop.f32.mrb[0].mxu0
    %v687 = vadd.f32 %v197, %v686
    %688 = vmatprep.mubr.bf16.mxu0 0
    %689 = vmatmul.mubr.bf16.gmra.mrb[0].mxu0 %v384
    %v690 = vpop.f32.mrb[0].mxu0
    %v691 = vadd.f32 %v193, %v690
    %v692 = vpop.f32.mrb[0].mxu0
    %v693 = vadd.f32 %v197, %v692
    %v694 = vpop.f32.mrb[0].mxu0
    %v695 = vadd.f32 %v193, %v694
    %v696 = vpop.f32.mrb[0].mxu0
    %v697 = vadd.f32 %v197, %v696
    %698 = vdwg.mxu0
    %699 = vmatprep.subr.bf16.mxu0 0
    %700 = vmatpush1.bf16.msra.mxu0 %v267
    %701 = vmatprep.subr.bf16.mxu0 0
    %702 = vmatpush1.bf16.msra.mxu0 %v270
    %703 = vmatprep.subr.bf16.mxu0 0
    %704 = vmatpush1.bf16.msra.mxu0 %v273
    %705 = vmatprep.subr.bf16.mxu0 0
    %706 = vmatpush1.bf16.msra.mxu0 %v276
    %707 = vmatprep.subr.bf16.mxu0 0
    %708 = vmatpush1.bf16.msra.mxu0 %v279
    %709 = vmatprep.subr.bf16.mxu0 0
    %710 = vmatpush1.bf16.msra.mxu0 %v282
    %711 = vmatprep.subr.bf16.mxu0 0
    %712 = vmatpush1.bf16.msra.mxu0 0
    %713 = vmatprep.subr.bf16.mxu0 0
    %714 = vmatpush1.bf16.msra.mxu0 0
    %715 = vmatprep.subr.bf16.mxu0 0
    %716 = vmatpush1.bf16.msra.mxu0 0
    %717 = vmatprep.subr.bf16.mxu0 0
    %718 = vmatpush1.bf16.msra.mxu0 0
    %719 = vmatprep.subr.bf16.mxu0 0
    %720 = vmatpush1.bf16.msra.mxu0 0
    %721 = vmatprep.subr.bf16.mxu0 0
    %722 = vmatpush1.bf16.msra.mxu0 0
    %723 = vmatprep.subr.bf16.mxu0 0
    %724 = vmatpush1.bf16.msra.mxu0 0
    %725 = vmatprep.subr.bf16.mxu0 0
    %726 = vmatpush1.bf16.msra.mxu0 0
    %727 = vmatprep.subr.bf16.mxu0 0
    %728 = vmatpush1.bf16.msra.mxu0 0
    %729 = vmatprep.subr.bf16.mxu0 0
    %730 = vmatpush1.bf16.msra.mxu0 0
    %731 = vmatprep.mubr.bf16.mxu0 0
    %732 = vmatmul.mubr.bf16.gmra.mrb[0].mxu0 %v303
    %v733 = vpop.f32.mrb[0].mxu0
    %v734 = vadd.f32 %v201, %v733
    %v735 = vpop.f32.mrb[0].mxu0
    %v736 = vpop.f32.mrb[0].mxu0
    %v737 = vadd.f32 %v201, %v736
    %v738 = vpop.f32.mrb[0].mxu0
    %739 = vmatprep.mubr.bf16.mxu0 0
    %740 = vmatmul.mubr.bf16.gmra.mrb[0].mxu0 %v306
    %v741 = vpop.f32.mrb[0].mxu0
    %v742 = vadd.f32 %v201, %v741
    %v743 = vpop.f32.mrb[0].mxu0
    %v744 = vpop.f32.mrb[0].mxu0
    %v745 = vadd.f32 %v201, %v744
    %v746 = vpop.f32.mrb[0].mxu0
    %747 = vmatprep.mubr.bf16.mxu0 0
    %748 = vmatmul.mubr.bf16.gmra.mrb[0].mxu0 %v309
    %v749 = vpop.f32.mrb[0].mxu0
    %v750 = vadd.f32 %v201, %v749
    %v751 = vpop.f32.mrb[0].mxu0
    %v752 = vpop.f32.mrb[0].mxu0
    %v753 = vadd.f32 %v201, %v752
    %v754 = vpop.f32.mrb[0].mxu0
    %755 = vmatprep.mubr.bf16.mxu0 0
    %756 = vmatmul.mubr.bf16.gmra.mrb[0].mxu0 %v312
    %v757 = vpop.f32.mrb[0].mxu0
    %v758 = vadd.f32 %v201, %v757
    %v759 = vpop.f32.mrb[0].mxu0
    %v760 = vpop.f32.mrb[0].mxu0
    %v761 = vadd.f32 %v201, %v760
    %v762 = vpop.f32.mrb[0].mxu0
    %763 = vmatprep.mubr.bf16.mxu0 0
    %764 = vmatmul.mubr.bf16.gmra.mrb[0].mxu0 %v315
    %v765 = vpop.f32.mrb[0].mxu0
    %v766 = vadd.f32 %v201, %v765
    %v767 = vpop.f32.mrb[0].mxu0
    %v768 = vpop.f32.mrb[0].mxu0
    %v769 = vadd.f32 %v201, %v768
    %v770 = vpop.f32.mrb[0].mxu0
    %771 = vmatprep.mubr.bf16.mxu0 0
    %772 = vmatmul.mubr.bf16.gmra.mrb[0].mxu0 %v318
    %v773 = vpop.f32.mrb[0].mxu0
    %v774 = vadd.f32 %v201, %v773
    %v775 = vpop.f32.mrb[0].mxu0
    %v776 = vpop.f32.mrb[0].mxu0
    %v777 = vadd.f32 %v201, %v776
    %v778 = vpop.f32.mrb[0].mxu0
    %779 = vmatprep.mubr.bf16.mxu0 0
    %780 = vmatmul.mubr.bf16.gmra.mrb[0].mxu0 %v321
    %v781 = vpop.f32.mrb[0].mxu0
    %v782 = vadd.f32 %v201, %v781
    %v783 = vpop.f32.mrb[0].mxu0
    %v784 = vpop.f32.mrb[0].mxu0
    %v785 = vadd.f32 %v201, %v784
    %v786 = vpop.f32.mrb[0].mxu0
    %787 = vmatprep.mubr.bf16.mxu0 0
    %788 = vmatmul.mubr.bf16.gmra.mrb[0].mxu0 %v324
    %v789 = vpop.f32.mrb[0].mxu0
    %v790 = vadd.f32 %v201, %v789
    %v791 = vpop.f32.mrb[0].mxu0
    %v792 = vpop.f32.mrb[0].mxu0
    %v793 = vadd.f32 %v201, %v792
    %v794 = vpop.f32.mrb[0].mxu0
    %795 = vmatprep.mubr.bf16.mxu0 0
    %796 = vmatmul.mubr.bf16.gmra.mrb[0].mxu0 %v327
    %v797 = vpop.f32.mrb[0].mxu0
    %v798 = vadd.f32 %v201, %v797
    %v799 = vpop.f32.mrb[0].mxu0
    %v800 = vpop.f32.mrb[0].mxu0
    %v801 = vadd.f32 %v201, %v800
    %v802 = vpop.f32.mrb[0].mxu0
    %803 = vmatprep.mubr.bf16.mxu0 0
    %804 = vmatmul.mubr.bf16.gmra.mrb[0].mxu0 %v330
    %v805 = vpop.f32.mrb[0].mxu0
    %v806 = vadd.f32 %v201, %v805
    %v807 = vpop.f32.mrb[0].mxu0
    %v808 = vpop.f32.mrb[0].mxu0
    %v809 = vadd.f32 %v201, %v808
    %v810 = vpop.f32.mrb[0].mxu0
    %811 = vmatprep.mubr.bf16.mxu0 0
    %812 = vmatmul.mubr.bf16.gmra.mrb[0].mxu0 %v333
    %v813 = vpop.f32.mrb[0].mxu0
    %v814 = vadd.f32 %v201, %v813
    %v815 = vpop.f32.mrb[0].mxu0
    %v816 = vpop.f32.mrb[0].mxu0
    %v817 = vadd.f32 %v201, %v816
    %v818 = vpop.f32.mrb[0].mxu0
    %819 = vmatprep.mubr.bf16.mxu0 0
    %820 = vmatmul.mubr.bf16.gmra.mrb[0].mxu0 %v336
    %v821 = vpop.f32.mrb[0].mxu0
    %v822 = vadd.f32 %v201, %v821
    %v823 = vpop.f32.mrb[0].mxu0
    %v824 = vpop.f32.mrb[0].mxu0
    %v825 = vadd.f32 %v201, %v824
    %v826 = vpop.f32.mrb[0].mxu0
    %827 = vmatprep.mubr.bf16.mxu0 0
    %828 = vmatmul.mubr.bf16.gmra.mrb[0].mxu0 %v339
    %v829 = vpop.f32.mrb[0].mxu0
    %v830 = vadd.f32 %v201, %v829
    %v831 = vpop.f32.mrb[0].mxu0
    %v832 = vpop.f32.mrb[0].mxu0
    %v833 = vadd.f32 %v201, %v832
    %v834 = vpop.f32.mrb[0].mxu0
    %835 = vmatprep.mubr.bf16.mxu0 0
    %836 = vmatmul.mubr.bf16.gmra.mrb[0].mxu0 %v342
    %v837 = vpop.f32.mrb[0].mxu0
    %v838 = vadd.f32 %v201, %v837
    %v839 = vpop.f32.mrb[0].mxu0
    %v840 = vpop.f32.mrb[0].mxu0
    %v841 = vadd.f32 %v201, %v840
    %v842 = vpop.f32.mrb[0].mxu0
    %843 = vmatprep.mubr.bf16.mxu0 0
    %844 = vmatmul.mubr.bf16.gmra.mrb[0].mxu0 %v345
    %v845 = vpop.f32.mrb[0].mxu0
    %v846 = vadd.f32 %v201, %v845
    %v847 = vpop.f32.mrb[0].mxu0
    %v848 = vpop.f32.mrb[0].mxu0
    %v849 = vadd.f32 %v201, %v848
    %v850 = vpop.f32.mrb[0].mxu0
    %851 = vmatprep.mubr.bf16.mxu0 0
    %852 = vmatmul.mubr.bf16.gmra.mrb[0].mxu0 %v348
    %v853 = vpop.f32.mrb[0].mxu0
    %v854 = vadd.f32 %v201, %v853
    %v855 = vpop.f32.mrb[0].mxu0
    %v856 = vpop.f32.mrb[0].mxu0
    %v857 = vadd.f32 %v201, %v856
    %v858 = vpop.f32.mrb[0].mxu0
    %859 = vmatprep.mubr.bf16.mxu0 0
    %860 = vmatmul.mubr.bf16.gmra.mrb[0].mxu0 %v351
    %v861 = vpop.f32.mrb[0].mxu0
    %v862 = vadd.f32 %v201, %v861
    %v863 = vpop.f32.mrb[0].mxu0
    %v864 = vpop.f32.mrb[0].mxu0
    %v865 = vadd.f32 %v201, %v864
    %v866 = vpop.f32.mrb[0].mxu0
    %867 = vmatprep.mubr.bf16.mxu0 0
    %868 = vmatmul.mubr.bf16.gmra.mrb[0].mxu0 %v354
    %v869 = vpop.f32.mrb[0].mxu0
    %v870 = vadd.f32 %v201, %v869
    %v871 = vpop.f32.mrb[0].mxu0
    %v872 = vpop.f32.mrb[0].mxu0
    %v873 = vadd.f32 %v201, %v872
    %v874 = vpop.f32.mrb[0].mxu0
    %875 = vmatprep.mubr.bf16.mxu0 0
    %876 = vmatmul.mubr.bf16.gmra.mrb[0].mxu0 %v357
    %v877 = vpop.f32.mrb[0].mxu0
    %v878 = vadd.f32 %v201, %v877
    %v879 = vpop.f32.mrb[0].mxu0
    %v880 = vpop.f32.mrb[0].mxu0
    %v881 = vadd.f32 %v201, %v880
    %v882 = vpop.f32.mrb[0].mxu0
    %883 = vmatprep.mubr.bf16.mxu0 0
    %884 = vmatmul.mubr.bf16.gmra.mrb[0].mxu0 %v360
    %v885 = vpop.f32.mrb[0].mxu0
    %v886 = vadd.f32 %v201, %v885
    %v887 = vpop.f32.mrb[0].mxu0
    %v888 = vpop.f32.mrb[0].mxu0
    %v889 = vadd.f32 %v201, %v888
    %v890 = vpop.f32.mrb[0].mxu0
    %891 = vmatprep.mubr.bf16.mxu0 0
    %892 = vmatmul.mubr.bf16.gmra.mrb[0].mxu0 %v363
    %v893 = vpop.f32.mrb[0].mxu0
    %v894 = vadd.f32 %v201, %v893
    %v895 = vpop.f32.mrb[0].mxu0
    %v896 = vpop.f32.mrb[0].mxu0
    %v897 = vadd.f32 %v201, %v896
    %v898 = vpop.f32.mrb[0].mxu0
    %899 = vmatprep.mubr.bf16.mxu0 0
    %900 = vmatmul.mubr.bf16.gmra.mrb[0].mxu0 %v366
    %v901 = vpop.f32.mrb[0].mxu0
    %v902 = vadd.f32 %v201, %v901
    %v903 = vpop.f32.mrb[0].mxu0
    %v904 = vpop.f32.mrb[0].mxu0
    %v905 = vadd.f32 %v201, %v904
    %v906 = vpop.f32.mrb[0].mxu0
    %907 = vmatprep.mubr.bf16.mxu0 0
    %908 = vmatmul.mubr.bf16.gmra.mrb[0].mxu0 %v369
    %v909 = vpop.f32.mrb[0].mxu0
    %v910 = vadd.f32 %v201, %v909
    %v911 = vpop.f32.mrb[0].mxu0
    %v912 = vpop.f32.mrb[0].mxu0
    %v913 = vadd.f32 %v201, %v912
    %v914 = vpop.f32.mrb[0].mxu0
    %915 = vmatprep.mubr.bf16.mxu0 0
    %916 = vmatmul.mubr.bf16.gmra.mrb[0].mxu0 %v372
    %v917 = vpop.f32.mrb[0].mxu0
    %v918 = vadd.f32 %v201, %v917
    %v919 = vpop.f32.mrb[0].mxu0
    %v920 = vpop.f32.mrb[0].mxu0
    %v921 = vadd.f32 %v201, %v920
    %v922 = vpop.f32.mrb[0].mxu0
    %923 = vmatprep.mubr.bf16.mxu0 0
    %924 = vmatmul.mubr.bf16.gmra.mrb[0].mxu0 %v375
    %v925 = vpop.f32.mrb[0].mxu0
    %v926 = vadd.f32 %v201, %v925
    %v927 = vpop.f32.mrb[0].mxu0
    %v928 = vpop.f32.mrb[0].mxu0
    %v929 = vadd.f32 %v201, %v928
    %v930 = vpop.f32.mrb[0].mxu0
    %931 = vmatprep.mubr.bf16.mxu0 0
    %932 = vmatmul.mubr.bf16.gmra.mrb[0].mxu0 %v378
    %v933 = vpop.f32.mrb[0].mxu0
    %v934 = vadd.f32 %v201, %v933
    %v935 = vpop.f32.mrb[0].mxu0
    %v936 = vpop.f32.mrb[0].mxu0
    %v937 = vadd.f32 %v201, %v936
    %v938 = vpop.f32.mrb[0].mxu0
    %939 = vmatprep.mubr.bf16.mxu0 0
    %940 = vmatmul.mubr.bf16.gmra.mrb[0].mxu0 %v381
    %v941 = vpop.f32.mrb[0].mxu0
    %v942 = vadd.f32 %v201, %v941
    %v943 = vpop.f32.mrb[0].mxu0
    %v944 = vpop.f32.mrb[0].mxu0
    %v945 = vadd.f32 %v201, %v944
    %v946 = vpop.f32.mrb[0].mxu0
    %947 = vmatprep.mubr.bf16.mxu0 0
    %948 = vmatmul.mubr.bf16.gmra.mrb[0].mxu0 %v384
    %v949 = vpop.f32.mrb[0].mxu0
    %v950 = vadd.f32 %v201, %v949
    %v951 = vpop.f32.mrb[0].mxu0
    %v952 = vpop.f32.mrb[0].mxu0
    %v953 = vadd.f32 %v201, %v952
    %v954 = vpop.f32.mrb[0].mxu0
    %955 = vdwg.mxu0
    %v956 = vpack.c.bf16 %v425, %v421
    %v957 = vpack.c.bf16 %v427, %v423
    %v958 = vpack.c.bf16 %v737, %v734
    %v959 = vpack.c.bf16 %v435, %v431
    %v960 = vpack.c.bf16 %v437, %v433
    %v961 = vpack.c.bf16 %v745, %v742
    %v962 = vpack.c.bf16 %v445, %v441
    %v963 = vpack.c.bf16 %v447, %v443
    %v964 = vpack.c.bf16 %v753, %v750
    %v965 = vpack.c.bf16 %v455, %v451
    %v966 = vpack.c.bf16 %v457, %v453
    %v967 = vpack.c.bf16 %v761, %v758
    %v968 = vpack.c.bf16 %v465, %v461
    %v969 = vpack.c.bf16 %v467, %v463
    %v970 = vpack.c.bf16 %v769, %v766
    %v971 = vpack.c.bf16 %v475, %v471
    %v972 = vpack.c.bf16 %v477, %v473
    %v973 = vpack.c.bf16 %v777, %v774
    %v974 = vpack.c.bf16 %v485, %v481
    %v975 = vpack.c.bf16 %v487, %v483
    %v976 = vpack.c.bf16 %v785, %v782
    %v977 = vpack.c.bf16 %v495, %v491
    %v978 = vpack.c.bf16 %v497, %v493
    %v979 = vpack.c.bf16 %v793, %v790
    %v980 = vpack.c.bf16 %v505, %v501
    %v981 = vpack.c.bf16 %v507, %v503
    %v982 = vpack.c.bf16 %v801, %v798
    %v983 = vpack.c.bf16 %v515, %v511
    %v984 = vpack.c.bf16 %v517, %v513
    %v985 = vpack.c.bf16 %v809, %v806
    %v986 = vpack.c.bf16 %v525, %v521
    %v987 = vpack.c.bf16 %v527, %v523
    %v988 = vpack.c.bf16 %v817, %v814
    %v989 = vpack.c.bf16 %v535, %v531
    %v990 = vpack.c.bf16 %v537, %v533
    %v991 = vpack.c.bf16 %v825, %v822
    %v992 = vpack.c.bf16 %v545, %v541
    %v993 = vpack.c.bf16 %v547, %v543
    %v994 = vpack.c.bf16 %v833, %v830
    %v995 = vpack.c.bf16 %v555, %v551
    %v996 = vpack.c.bf16 %v557, %v553
    %v997 = vpack.c.bf16 %v841, %v838
    %v998 = vpack.c.bf16 %v565, %v561
    %v999 = vpack.c.bf16 %v567, %v563
    %v1000 = vpack.c.bf16 %v849, %v846
    %v1001 = vpack.c.bf16 %v575, %v571
    %v1002 = vpack.c.bf16 %v577, %v573
    %v1003 = vpack.c.bf16 %v857, %v854
    %v1004 = vpack.c.bf16 %v585, %v581
    %v1005 = vpack.c.bf16 %v587, %v583
    %v1006 = vpack.c.bf16 %v865, %v862
    %v1007 = vpack.c.bf16 %v595, %v591
    %v1008 = vpack.c.bf16 %v597, %v593
    %v1009 = vpack.c.bf16 %v873, %v870
    %v1010 = vpack.c.bf16 %v605, %v601
    %v1011 = vpack.c.bf16 %v607, %v603
    %v1012 = vpack.c.bf16 %v881, %v878
    %v1013 = vpack.c.bf16 %v615, %v611
    %v1014 = vpack.c.bf16 %v617, %v613
    %v1015 = vpack.c.bf16 %v889, %v886
    %v1016 = vpack.c.bf16 %v625, %v621
    %v1017 = vpack.c.bf16 %v627, %v623
    %v1018 = vpack.c.bf16 %v897, %v894
    %v1019 = vpack.c.bf16 %v635, %v631
    %v1020 = vpack.c.bf16 %v637, %v633
    %v1021 = vpack.c.bf16 %v905, %v902
    %v1022 = vpack.c.bf16 %v645, %v641
    %v1023 = vpack.c.bf16 %v647, %v643
    %v1024 = vpack.c.bf16 %v913, %v910
    %v1025 = vpack.c.bf16 %v655, %v651
    %v1026 = vpack.c.bf16 %v657, %v653
    %v1027 = vpack.c.bf16 %v921, %v918
    %v1028 = vpack.c.bf16 %v665, %v661
    %v1029 = vpack.c.bf16 %v667, %v663
    %v1030 = vpack.c.bf16 %v929, %v926
    %v1031 = vpack.c.bf16 %v675, %v671
    %v1032 = vpack.c.bf16 %v677, %v673
    %v1033 = vpack.c.bf16 %v937, %v934
    %v1034 = vpack.c.bf16 %v685, %v681
    %v1035 = vpack.c.bf16 %v687, %v683
    %v1036 = vpack.c.bf16 %v945, %v942
    %v1037 = vpack.c.bf16 %v695, %v691
    %v1038 = vpack.c.bf16 %v697, %v693
    %v1039 = vpack.c.bf16 %v953, %v950
    %v1124 = vunpack.c.l.b16 %v956
    %v1125 = vunpack.c.l.b16 %v957
    %v1126 = vunpack.c.l.b16 %v958
    %v1127 = vunpack.c.h.b16 %v956
    %v1128 = vunpack.c.h.b16 %v957
    %v1129 = vunpack.c.h.b16 %v958
    %v1130 = vunpack.c.l.b16 %v959
    %v1131 = vunpack.c.l.b16 %v960
    %v1132 = vunpack.c.l.b16 %v961
    %v1133 = vunpack.c.h.b16 %v959
    %v1134 = vunpack.c.h.b16 %v960
    %v1135 = vunpack.c.h.b16 %v961
    %v1136 = vunpack.c.l.b16 %v962
    %v1137 = vunpack.c.l.b16 %v963
    %v1138 = vunpack.c.l.b16 %v964
    %v1139 = vunpack.c.h.b16 %v962
    %v1140 = vunpack.c.h.b16 %v963
    %v1141 = vunpack.c.h.b16 %v964
    %v1142 = vunpack.c.l.b16 %v965
    %v1143 = vunpack.c.l.b16 %v966
    %v1144 = vunpack.c.l.b16 %v967
    %v1145 = vunpack.c.h.b16 %v965
    %v1146 = vunpack.c.h.b16 %v966
    %v1147 = vunpack.c.h.b16 %v967
    %v1148 = vunpack.c.l.b16 %v968
    %v1149 = vunpack.c.l.b16 %v969
    %v1150 = vunpack.c.l.b16 %v970
    %v1151 = vunpack.c.h.b16 %v968
    %v1152 = vunpack.c.h.b16 %v969
    %v1153 = vunpack.c.h.b16 %v970
    %v1154 = vunpack.c.l.b16 %v971
    %v1155 = vunpack.c.l.b16 %v972
    %v1156 = vunpack.c.l.b16 %v973
    %v1157 = vunpack.c.h.b16 %v971
    %v1158 = vunpack.c.h.b16 %v972
    %v1159 = vunpack.c.h.b16 %v973
    %v1160 = vunpack.c.l.b16 %v974
    %v1161 = vunpack.c.l.b16 %v975
    %v1162 = vunpack.c.l.b16 %v976
    %v1163 = vunpack.c.h.b16 %v974
    %v1164 = vunpack.c.h.b16 %v975
    %v1165 = vunpack.c.h.b16 %v976
    %v1166 = vunpack.c.l.b16 %v977
    %v1167 = vunpack.c.l.b16 %v978
    %v1168 = vunpack.c.l.b16 %v979
    %v1169 = vunpack.c.h.b16 %v977
    %v1170 = vunpack.c.h.b16 %v978
    %v1171 = vunpack.c.h.b16 %v979
    %v1172 = vunpack.c.l.b16 %v980
    %v1173 = vunpack.c.l.b16 %v981
    %v1174 = vunpack.c.l.b16 %v982
    %v1175 = vunpack.c.h.b16 %v980
    %v1176 = vunpack.c.h.b16 %v981
    %v1177 = vunpack.c.h.b16 %v982
    %v1178 = vunpack.c.l.b16 %v983
    %v1179 = vunpack.c.l.b16 %v984
    %v1180 = vunpack.c.l.b16 %v985
    %v1181 = vunpack.c.h.b16 %v983
    %v1182 = vunpack.c.h.b16 %v984
    %v1183 = vunpack.c.h.b16 %v985
    %v1184 = vunpack.c.l.b16 %v986
    %v1185 = vunpack.c.l.b16 %v987
    %v1186 = vunpack.c.l.b16 %v988
    %v1187 = vunpack.c.h.b16 %v986
    %v1188 = vunpack.c.h.b16 %v987
    %v1189 = vunpack.c.h.b16 %v988
    %v1190 = vunpack.c.l.b16 %v989
    %v1191 = vunpack.c.l.b16 %v990
    %v1192 = vunpack.c.l.b16 %v991
    %v1193 = vunpack.c.h.b16 %v989
    %v1194 = vunpack.c.h.b16 %v990
    %v1195 = vunpack.c.h.b16 %v991
    %v1196 = vunpack.c.l.b16 %v992
    %v1197 = vunpack.c.l.b16 %v993
    %v1198 = vunpack.c.l.b16 %v994
    %v1199 = vunpack.c.h.b16 %v992
    %v1200 = vunpack.c.h.b16 %v993
    %v1201 = vunpack.c.h.b16 %v994
    %v1202 = vunpack.c.l.b16 %v995
    %v1203 = vunpack.c.l.b16 %v996
    %v1204 = vunpack.c.l.b16 %v997
    %v1205 = vunpack.c.h.b16 %v995
    %v1206 = vunpack.c.h.b16 %v996
    %v1207 = vunpack.c.h.b16 %v997
    %v1208 = vunpack.c.l.b16 %v998
    %v1209 = vunpack.c.l.b16 %v999
    %v1210 = vunpack.c.l.b16 %v1000
    %v1211 = vunpack.c.h.b16 %v998
    %v1212 = vunpack.c.h.b16 %v999
    %v1213 = vunpack.c.h.b16 %v1000
    %v1214 = vunpack.c.l.b16 %v1001
    %v1215 = vunpack.c.l.b16 %v1002
    %v1216 = vunpack.c.l.b16 %v1003
    %v1217 = vunpack.c.h.b16 %v1001
    %v1218 = vunpack.c.h.b16 %v1002
    %v1219 = vunpack.c.h.b16 %v1003
    %v1220 = vunpack.c.l.b16 %v1004
    %v1221 = vunpack.c.l.b16 %v1005
    %v1222 = vunpack.c.l.b16 %v1006
    %v1223 = vunpack.c.h.b16 %v1004
    %v1224 = vunpack.c.h.b16 %v1005
    %v1225 = vunpack.c.h.b16 %v1006
    %v1226 = vunpack.c.l.b16 %v1007
    %v1227 = vunpack.c.l.b16 %v1008
    %v1228 = vunpack.c.l.b16 %v1009
    %v1229 = vunpack.c.h.b16 %v1007
    %v1230 = vunpack.c.h.b16 %v1008
    %v1231 = vunpack.c.h.b16 %v1009
    %v1232 = vunpack.c.l.b16 %v1010
    %v1233 = vunpack.c.l.b16 %v1011
    %v1234 = vunpack.c.l.b16 %v1012
    %v1235 = vunpack.c.h.b16 %v1010
    %v1236 = vunpack.c.h.b16 %v1011
    %v1237 = vunpack.c.h.b16 %v1012
    %v1238 = vunpack.c.l.b16 %v1013
    %v1239 = vunpack.c.l.b16 %v1014
    %v1240 = vunpack.c.l.b16 %v1015
    %v1241 = vunpack.c.h.b16 %v1013
    %v1242 = vunpack.c.h.b16 %v1014
    %v1243 = vunpack.c.h.b16 %v1015
    %v1244 = vunpack.c.l.b16 %v1016
    %v1245 = vunpack.c.l.b16 %v1017
    %v1246 = vunpack.c.l.b16 %v1018
    %v1247 = vunpack.c.h.b16 %v1016
    %v1248 = vunpack.c.h.b16 %v1017
    %v1249 = vunpack.c.h.b16 %v1018
    %v1250 = vunpack.c.l.b16 %v1019
    %v1251 = vunpack.c.l.b16 %v1020
    %v1252 = vunpack.c.l.b16 %v1021
    %v1253 = vunpack.c.h.b16 %v1019
    %v1254 = vunpack.c.h.b16 %v1020
    %v1255 = vunpack.c.h.b16 %v1021
    %v1256 = vunpack.c.l.b16 %v1022
    %v1257 = vunpack.c.l.b16 %v1023
    %v1258 = vunpack.c.l.b16 %v1024
    %v1259 = vunpack.c.h.b16 %v1022
    %v1260 = vunpack.c.h.b16 %v1023
    %v1261 = vunpack.c.h.b16 %v1024
    %v1262 = vunpack.c.l.b16 %v1025
    %v1263 = vunpack.c.l.b16 %v1026
    %v1264 = vunpack.c.l.b16 %v1027
    %v1265 = vunpack.c.h.b16 %v1025
    %v1266 = vunpack.c.h.b16 %v1026
    %v1267 = vunpack.c.h.b16 %v1027
    %v1268 = vunpack.c.l.b16 %v1028
    %v1269 = vunpack.c.l.b16 %v1029
    %v1270 = vunpack.c.l.b16 %v1030
    %v1271 = vunpack.c.h.b16 %v1028
    %v1272 = vunpack.c.h.b16 %v1029
    %v1273 = vunpack.c.h.b16 %v1030
    %v1274 = vunpack.c.l.b16 %v1031
    %v1275 = vunpack.c.l.b16 %v1032
    %v1276 = vunpack.c.l.b16 %v1033
    %v1277 = vunpack.c.h.b16 %v1031
    %v1278 = vunpack.c.h.b16 %v1032
    %v1279 = vunpack.c.h.b16 %v1033
    %v1280 = vunpack.c.l.b16 %v1034
    %v1281 = vunpack.c.l.b16 %v1035
    %v1282 = vunpack.c.l.b16 %v1036
    %v1283 = vunpack.c.h.b16 %v1034
    %v1284 = vunpack.c.h.b16 %v1035
    %v1285 = vunpack.c.h.b16 %v1036
    %v1286 = vunpack.c.l.b16 %v1037
    %v1287 = vunpack.c.l.b16 %v1038
    %v1288 = vunpack.c.l.b16 %v1039
    %v1289 = vunpack.c.h.b16 %v1037
    %v1290 = vunpack.c.h.b16 %v1038
    %v1291 = vunpack.c.h.b16 %v1039
    %v1292 = vpack.c.b16 %v1125, %v1124
    %v1293 = vpack.c.b16 %v1128, %v1127
    %v1294 = vpack.c.b16 %v1131, %v1130
    %v1295 = vpack.c.b16 %v1134, %v1133
    %v1296 = vpack.c.b16 %v1137, %v1136
    %v1297 = vpack.c.b16 %v1140, %v1139
    %v1298 = vpack.c.b16 %v1143, %v1142
    %v1299 = vpack.c.b16 %v1146, %v1145
    %v1300 = vpack.c.b16 %v1149, %v1148
    %v1301 = vpack.c.b16 %v1152, %v1151
    %v1302 = vpack.c.b16 %v1155, %v1154
    %v1303 = vpack.c.b16 %v1158, %v1157
    %v1304 = vpack.c.b16 %v1161, %v1160
    %v1305 = vpack.c.b16 %v1164, %v1163
    %v1306 = vpack.c.b16 %v1167, %v1166
    %v1307 = vpack.c.b16 %v1170, %v1169
    %v1308 = vpack.c.b16 %v1173, %v1172
    %v1309 = vpack.c.b16 %v1176, %v1175
    %v1310 = vpack.c.b16 %v1179, %v1178
    %v1311 = vpack.c.b16 %v1182, %v1181
    %v1312 = vpack.c.b16 %v1185, %v1184
    %v1313 = vpack.c.b16 %v1188, %v1187
    %v1314 = vpack.c.b16 %v1191, %v1190
    %v1315 = vpack.c.b16 %v1194, %v1193
    %v1316 = vpack.c.b16 %v1197, %v1196
    %v1317 = vpack.c.b16 %v1200, %v1199
    %v1318 = vpack.c.b16 %v1203, %v1202
    %v1319 = vpack.c.b16 %v1206, %v1205
    %v1320 = vpack.c.b16 %v1209, %v1208
    %v1321 = vpack.c.b16 %v1212, %v1211
    %v1322 = vpack.c.b16 %v1215, %v1214
    %v1323 = vpack.c.b16 %v1218, %v1217
    %v1324 = vpack.c.b16 %v1221, %v1220
    %v1325 = vpack.c.b16 %v1224, %v1223
    %v1326 = vpack.c.b16 %v1227, %v1226
    %v1327 = vpack.c.b16 %v1230, %v1229
    %v1328 = vpack.c.b16 %v1233, %v1232
    %v1329 = vpack.c.b16 %v1236, %v1235
    %v1330 = vpack.c.b16 %v1239, %v1238
    %v1331 = vpack.c.b16 %v1242, %v1241
    %v1332 = vpack.c.b16 %v1245, %v1244
    %v1333 = vpack.c.b16 %v1248, %v1247
    %v1334 = vpack.c.b16 %v1251, %v1250
    %v1335 = vpack.c.b16 %v1254, %v1253
    %v1336 = vpack.c.b16 %v1257, %v1256
    %v1337 = vpack.c.b16 %v1260, %v1259
    %v1338 = vpack.c.b16 %v1263, %v1262
    %v1339 = vpack.c.b16 %v1266, %v1265
    %v1340 = vpack.c.b16 %v1269, %v1268
    %v1341 = vpack.c.b16 %v1272, %v1271
    %v1342 = vpack.c.b16 %v1275, %v1274
    %v1343 = vpack.c.b16 %v1278, %v1277
    %v1344 = vpack.c.b16 %v1281, %v1280
    %v1345 = vpack.c.b16 %v1284, %v1283
    %v1346 = vpack.c.b16 %v1287, %v1286
    %v1347 = vpack.c.b16 %v1290, %v1289
    %v1348 = vld [vmem:[#allocation7] sm:$0xff]
    %v1349 = vld [vmem:[#allocation7 + $0x8] sm:$0xff]
    %v1350 = vld [vmem:[#allocation7 + $0x10] sm:$0xff]
    %v1351 = vld [vmem:[#allocation7 + $0x18] sm:$0xff]
    %v1352 = vld [vmem:[#allocation7 + $0x20] sm:$0xff]
    %v1353 = vld [vmem:[#allocation7 + $0x28] sm:$0xff]
    %v1354 = vld [vmem:[#allocation7 + $0x30] sm:$0xff]
    %v1355 = vpack.c.b16 %v1127, %v1124
    %v1356 = vpack.c.b16 %v1133, %v1130
    %v1357 = vpack.c.b16 %v1139, %v1136
    %v1358 = vpack.c.b16 %v1142, %v1142
    %1359 = vrot.lane.b32.xlu0 %v1355, 32
    %v1360 = vpop.permute.xlu0 %1359
    %1361 = vrot.lane.b32.xlu0 %v1356, 32
    %v1362 = vpop.permute.xlu0 %1361
    %1363 = vrot.lane.b32.xlu0 %v1357, 32
    %v1364 = vpop.permute.xlu0 %1363
    %1365 = vrot.lane.b32.xlu0 %v1358, 32
    %v1366 = vpop.permute.xlu0 %1365
    %vm1367 = vcmask 261120
    %v1369 = vsel %vm1367, %v1355, 0
    %v1372 = vsel %vm1367, %v1356, 0
    %v1375 = vsel %vm1367, %v1357, 0
    %v1378 = vsel %vm1367, %v1358, 0
    %v1381 = vsel %vm1367, %v1360, 0
    %v1384 = vsel %vm1367, %v1362, 0
    %v1387 = vsel %vm1367, %v1364, 0
    %v1390 = vsel %vm1367, %v1366, 0
    %1392 = vmatprep.subr.bf16.mxu0 0
    %1393 = vmatpush1.bf16.xpose.msra.mxu0 %v1381
    %1394 = vmatprep.subr.bf16.mxu0 0
    %1395 = vmatpush1.bf16.xpose.msra.mxu0 %v1384
    %1396 = vmatprep.subr.bf16.mxu0 0
    %1397 = vmatpush1.bf16.xpose.msra.mxu0 %v1387
    %1398 = vmatprep.subr.bf16.mxu0 0
    %1399 = vmatpush1.bf16.xpose.msra.mxu0 %v1390
    %1400 = vmatprep.subr.bf16.mxu0 0
    %1401 = vmatpush1.bf16.xpose.msra.mxu0 0
    %1402 = vmatprep.subr.bf16.mxu0 0
    %1403 = vmatpush1.bf16.xpose.msra.mxu0 0
    %1404 = vmatprep.subr.bf16.mxu0 0
    %1405 = vmatpush1.bf16.xpose.msra.mxu0 0
    %1406 = vmatprep.subr.bf16.mxu0 0
    %1407 = vmatpush1.bf16.xpose.msra.mxu0 0
    %1408 = vmatprep.subr.bf16.mxu0 0
    %1409 = vmatpush1.bf16.xpose.msra.mxu0 0
    %1410 = vmatprep.subr.bf16.mxu0 0
    %1411 = vmatpush1.bf16.xpose.msra.mxu0 0
    %1412 = vmatprep.subr.bf16.mxu0 0
    %1413 = vmatpush1.bf16.xpose.msra.mxu0 0
    %1414 = vmatprep.subr.bf16.mxu0 0
    %1415 = vmatpush1.bf16.xpose.msra.mxu0 0
    %1416 = vmatprep.subr.bf16.mxu0 0
    %1417 = vmatpush1.bf16.xpose.msra.mxu0 0
    %1418 = vmatprep.subr.bf16.mxu0 0
    %1419 = vmatpush1.bf16.xpose.msra.mxu0 0
    %1420 = vmatprep.subr.bf16.mxu0 0
    %1421 = vmatpush1.bf16.xpose.msra.mxu0 0
    %1422 = vmatprep.subr.bf16.mxu0 0
    %1423 = vmatpush1.bf16.xpose.msra.mxu0 0
    %1424 = vmatprep.mubr.bf16.mxu0 0
    %1425 = vmatmul.mubr.bf16.gmra.mrb[0].mxu0 %v1369
    %v1426 = vpop.f32.mrb[0].mxu0
    %v1427 = vadd.f32 %v1348, %v1426
    %v1428 = vpop.f32.mrb[0].mxu0
    %v1429 = vpop.f32.mrb[0].mxu0
    %v1430 = vadd.f32 %v1349, %v1429
    %v1431 = vpop.f32.mrb[0].mxu0
    %1432 = vmatprep.mubr.bf16.mxu0 0
    %1433 = vmatmul.mubr.bf16.gmra.mrb[0].mxu0 %v1372
    %v1434 = vpop.f32.mrb[0].mxu0
    %v1435 = vadd.f32 %v1350, %v1434
    %v1436 = vpop.f32.mrb[0].mxu0
    %v1437 = vpop.f32.mrb[0].mxu0
    %v1438 = vadd.f32 %v1351, %v1437
    %v1439 = vpop.f32.mrb[0].mxu0
    %1440 = vmatprep.mubr.bf16.mxu0 0
    %1441 = vmatmul.mubr.bf16.gmra.mrb[0].mxu0 %v1375
    %v1442 = vpop.f32.mrb[0].mxu0
    %v1443 = vadd.f32 %v1352, %v1442
    %v1444 = vpop.f32.mrb[0].mxu0
    %v1445 = vpop.f32.mrb[0].mxu0
    %v1446 = vadd.f32 %v1353, %v1445
    %v1447 = vpop.f32.mrb[0].mxu0
    %1448 = vmatprep.mubr.bf16.mxu0 0
    %1449 = vmatmul.mubr.bf16.gmra.mrb[0].mxu0 %v1378
    %v1450 = vpop.f32.mrb[0].mxu0
    %v1451 = vadd.f32 %v1354, %v1450
    %v1452 = vpop.f32.mrb[0].mxu0
    %v1453 = vpop.f32.mrb[0].mxu0
    %v1454 = vpop.f32.mrb[0].mxu0
    %1455 = vdwg.mxu0
    %v1456 = vpack.c.b16 %v1148, %v1145
    %v1457 = vpack.c.b16 %v1154, %v1151
    %v1458 = vpack.c.b16 %v1160, %v1157
    %v1459 = vpack.c.b16 %v1163, %v1163
    %1460 = vrot.lane.b32.xlu0 %v1456, 32
    %v1461 = vpop.permute.xlu0 %1460
    %1462 = vrot.lane.b32.xlu0 %v1457, 32
    %v1463 = vpop.permute.xlu0 %1462
    %1464 = vrot.lane.b32.xlu0 %v1458, 32
    %v1465 = vpop.permute.xlu0 %1464
    %1466 = vrot.lane.b32.xlu0 %v1459, 32
    %v1467 = vpop.permute.xlu0 %1466
    %v1469 = vsel %vm1367, %v1456, 0
    %v1472 = vsel %vm1367, %v1457, 0
    %v1475 = vsel %vm1367, %v1458, 0
    %v1478 = vsel %vm1367, %v1459, 0
    %v1481 = vsel %vm1367, %v1461, 0
    %v1484 = vsel %vm1367, %v1463, 0
    %v1487 = vsel %vm1367, %v1465, 0
    %v1490 = vsel %vm1367, %v1467, 0
    %1492 = vmatprep.subr.bf16.mxu0 0
    %1493 = vmatpush1.bf16.xpose.msra.mxu0 %v1481
    %1494 = vmatprep.subr.bf16.mxu0 0
    %1495 = vmatpush1.bf16.xpose.msra.mxu0 %v1484
    %1496 = vmatprep.subr.bf16.mxu0 0
    %1497 = vmatpush1.bf16.xpose.msra.mxu0 %v1487
    %1498 = vmatprep.subr.bf16.mxu0 0
    %1499 = vmatpush1.bf16.xpose.msra.mxu0 %v1490
    %1500 = vmatprep.subr.bf16.mxu0 0
    %1501 = vmatpush1.bf16.xpose.msra.mxu0 0
    %1502 = vmatprep.subr.bf16.mxu0 0
    %1503 = vmatpush1.bf16.xpose.msra.mxu0 0
    %1504 = vmatprep.subr.bf16.mxu0 0
    %1505 = vmatpush1.bf16.xpose.msra.mxu0 0
    %1506 = vmatprep.subr.bf16.mxu0 0
    %1507 = vmatpush1.bf16.xpose.msra.mxu0 0
    %1508 = vmatprep.subr.bf16.mxu0 0
    %1509 = vmatpush1.bf16.xpose.msra.mxu0 0
    %1510 = vmatprep.subr.bf16.mxu0 0
    %1511 = vmatpush1.bf16.xpose.msra.mxu0 0
    %1512 = vmatprep.subr.bf16.mxu0 0
    %1513 = vmatpush1.bf16.xpose.msra.mxu0 0
    %1514 = vmatprep.subr.bf16.mxu0 0
    %1515 = vmatpush1.bf16.xpose.msra.mxu0 0
    %1516 = vmatprep.subr.bf16.mxu0 0
    %1517 = vmatpush1.bf16.xpose.msra.mxu0 0
    %1518 = vmatprep.subr.bf16.mxu0 0
    %1519 = vmatpush1.bf16.xpose.msra.mxu0 0
    %1520 = vmatprep.subr.bf16.mxu0 0
    %1521 = vmatpush1.bf16.xpose.msra.mxu0 0
    %1522 = vmatprep.subr.bf16.mxu0 0
    %1523 = vmatpush1.bf16.xpose.msra.mxu0 0
    %1524 = vmatprep.mubr.bf16.mxu0 0
    %1525 = vmatmul.mubr.bf16.gmra.mrb[0].mxu0 %v1469
    %v1526 = vpop.f32.mrb[0].mxu0
    %v1527 = vadd.f32 %v1348, %v1526
    %v1528 = vpop.f32.mrb[0].mxu0
    %v1529 = vpop.f32.mrb[0].mxu0
    %v1530 = vadd.f32 %v1349, %v1529
    %v1531 = vpop.f32.mrb[0].mxu0
    %1532 = vmatprep.mubr.bf16.mxu0 0
    %1533 = vmatmul.mubr.bf16.gmra.mrb[0].mxu0 %v1472
    %v1534 = vpop.f32.mrb[0].mxu0
    %v1535 = vadd.f32 %v1350, %v1534
    %v1536 = vpop.f32.mrb[0].mxu0
    %v1537 = vpop.f32.mrb[0].mxu0
    %v1538 = vadd.f32 %v1351, %v1537
    %v1539 = vpop.f32.mrb[0].mxu0
    %1540 = vmatprep.mubr.bf16.mxu0 0
    %1541 = vmatmul.mubr.bf16.gmra.mrb[0].mxu0 %v1475
    %v1542 = vpop.f32.mrb[0].mxu0
    %v1543 = vadd.f32 %v1352, %v1542
    %v1544 = vpop.f32.mrb[0].mxu0
    %v1545 = vpop.f32.mrb[0].mxu0
    %v1546 = vadd.f32 %v1353, %v1545
    %v1547 = vpop.f32.mrb[0].mxu0
    %1548 = vmatprep.mubr.bf16.mxu0 0
    %1549 = vmatmul.mubr.bf16.gmra.mrb[0].mxu0 %v1478
    %v1550 = vpop.f32.mrb[0].mxu0
    %v1551 = vadd.f32 %v1354, %v1550
    %v1552 = vpop.f32.mrb[0].mxu0
    %v1553 = vpop.f32.mrb[0].mxu0
    %v1554 = vpop.f32.mrb[0].mxu0
    %1555 = vdwg.mxu0
    %v1556 = vpack.c.b16 %v1169, %v1166
    %v1557 = vpack.c.b16 %v1175, %v1172
    %v1558 = vpack.c.b16 %v1181, %v1178
    %v1559 = vpack.c.b16 %v1184, %v1184
    %1560 = vrot.lane.b32.xlu0 %v1556, 32
    %v1561 = vpop.permute.xlu0 %1560
    %1562 = vrot.lane.b32.xlu0 %v1557, 32
    %v1563 = vpop.permute.xlu0 %1562
    %1564 = vrot.lane.b32.xlu0 %v1558, 32
    %v1565 = vpop.permute.xlu0 %1564
    %1566 = vrot.lane.b32.xlu0 %v1559, 32
    %v1567 = vpop.permute.xlu0 %1566
    %v1569 = vsel %vm1367, %v1556, 0
    %v1572 = vsel %vm1367, %v1557, 0
    %v1575 = vsel %vm1367, %v1558, 0
    %v1578 = vsel %vm1367, %v1559, 0
    %v1581 = vsel %vm1367, %v1561, 0
    %v1584 = vsel %vm1367, %v1563, 0
    %v1587 = vsel %vm1367, %v1565, 0
    %v1590 = vsel %vm1367, %v1567, 0
    %1592 = vmatprep.subr.bf16.mxu0 0
    %1593 = vmatpush1.bf16.xpose.msra.mxu0 %v1581
    %1594 = vmatprep.subr.bf16.mxu0 0
    %1595 = vmatpush1.bf16.xpose.msra.mxu0 %v1584
    %1596 = vmatprep.subr.bf16.mxu0 0
    %1597 = vmatpush1.bf16.xpose.msra.mxu0 %v1587
    %1598 = vmatprep.subr.bf16.mxu0 0
    %1599 = vmatpush1.bf16.xpose.msra.mxu0 %v1590
    %1600 = vmatprep.subr.bf16.mxu0 0
    %1601 = vmatpush1.bf16.xpose.msra.mxu0 0
    %1602 = vmatprep.subr.bf16.mxu0 0
    %1603 = vmatpush1.bf16.xpose.msra.mxu0 0
    %1604 = vmatprep.subr.bf16.mxu0 0
    %1605 = vmatpush1.bf16.xpose.msra.mxu0 0
    %1606 = vmatprep.subr.bf16.mxu0 0
    %1607 = vmatpush1.bf16.xpose.msra.mxu0 0
    %1608 = vmatprep.subr.bf16.mxu0 0
    %1609 = vmatpush1.bf16.xpose.msra.mxu0 0
    %1610 = vmatprep.subr.bf16.mxu0 0
    %1611 = vmatpush1.bf16.xpose.msra.mxu0 0
    %1612 = vmatprep.subr.bf16.mxu0 0
    %1613 = vmatpush1.bf16.xpose.msra.mxu0 0
    %1614 = vmatprep.subr.bf16.mxu0 0
    %1615 = vmatpush1.bf16.xpose.msra.mxu0 0
    %1616 = vmatprep.subr.bf16.mxu0 0
    %1617 = vmatpush1.bf16.xpose.msra.mxu0 0
    %1618 = vmatprep.subr.bf16.mxu0 0
    %1619 = vmatpush1.bf16.xpose.msra.mxu0 0
    %1620 = vmatprep.subr.bf16.mxu0 0
    %1621 = vmatpush1.bf16.xpose.msra.mxu0 0
    %1622 = vmatprep.subr.bf16.mxu0 0
    %1623 = vmatpush1.bf16.xpose.msra.mxu0 0
    %1624 = vmatprep.mubr.bf16.mxu0 0
    %1625 = vmatmul.mubr.bf16.gmra.mrb[0].mxu0 %v1569
    %v1626 = vpop.f32.mrb[0].mxu0
    %v1627 = vadd.f32 %v1348, %v1626
    %v1628 = vpop.f32.mrb[0].mxu0
    %v1629 = vpop.f32.mrb[0].mxu0
    %v1630 = vadd.f32 %v1349, %v1629
    %v1631 = vpop.f32.mrb[0].mxu0
    %1632 = vmatprep.mubr.bf16.mxu0 0
    %1633 = vmatmul.mubr.bf16.gmra.mrb[0].mxu0 %v1572
    %v1634 = vpop.f32.mrb[0].mxu0
    %v1635 = vadd.f32 %v1350, %v1634
    %v1636 = vpop.f32.mrb[0].mxu0
    %v1637 = vpop.f32.mrb[0].mxu0
    %v1638 = vadd.f32 %v1351, %v1637
    %v1639 = vpop.f32.mrb[0].mxu0
    %1640 = vmatprep.mubr.bf16.mxu0 0
    %1641 = vmatmul.mubr.bf16.gmra.mrb[0].mxu0 %v1575
    %v1642 = vpop.f32.mrb[0].mxu0
    %v1643 = vadd.f32 %v1352, %v1642
    %v1644 = vpop.f32.mrb[0].mxu0
    %v1645 = vpop.f32.mrb[0].mxu0
    %v1646 = vadd.f32 %v1353, %v1645
    %v1647 = vpop.f32.mrb[0].mxu0
    %1648 = vmatprep.mubr.bf16.mxu0 0
    %1649 = vmatmul.mubr.bf16.gmra.mrb[0].mxu0 %v1578
    %v1650 = vpop.f32.mrb[0].mxu0
    %v1651 = vadd.f32 %v1354, %v1650
    %v1652 = vpop.f32.mrb[0].mxu0
    %v1653 = vpop.f32.mrb[0].mxu0
    %v1654 = vpop.f32.mrb[0].mxu0
    %1655 = vdwg.mxu0
    %v1656 = vpack.c.b16 %v1190, %v1187
    %v1657 = vpack.c.b16 %v1196, %v1193
    %v1658 = vpack.c.b16 %v1202, %v1199
    %v1659 = vpack.c.b16 %v1205, %v1205
    %1660 = vrot.lane.b32.xlu0 %v1656, 32
    %v1661 = vpop.permute.xlu0 %1660
    %1662 = vrot.lane.b32.xlu0 %v1657, 32
    %v1663 = vpop.permute.xlu0 %1662
    %1664 = vrot.lane.b32.xlu0 %v1658, 32
    %v1665 = vpop.permute.xlu0 %1664
    %1666 = vrot.lane.b32.xlu0 %v1659, 32
    %v1667 = vpop.permute.xlu0 %1666
    %v1669 = vsel %vm1367, %v1656, 0
    %v1672 = vsel %vm1367, %v1657, 0
    %v1675 = vsel %vm1367, %v1658, 0
    %v1678 = vsel %vm1367, %v1659, 0
    %v1681 = vsel %vm1367, %v1661, 0
    %v1684 = vsel %vm1367, %v1663, 0
    %v1687 = vsel %vm1367, %v1665, 0
    %v1690 = vsel %vm1367, %v1667, 0
    %1692 = vmatprep.subr.bf16.mxu0 0
    %1693 = vmatpush1.bf16.xpose.msra.mxu0 %v1681
    %1694 = vmatprep.subr.bf16.mxu0 0
    %1695 = vmatpush1.bf16.xpose.msra.mxu0 %v1684
    %1696 = vmatprep.subr.bf16.mxu0 0
    %1697 = vmatpush1.bf16.xpose.msra.mxu0 %v1687
    %1698 = vmatprep.subr.bf16.mxu0 0
    %1699 = vmatpush1.bf16.xpose.msra.mxu0 %v1690
    %1700 = vmatprep.subr.bf16.mxu0 0
    %1701 = vmatpush1.bf16.xpose.msra.mxu0 0
    %1702 = vmatprep.subr.bf16.mxu0 0
    %1703 = vmatpush1.bf16.xpose.msra.mxu0 0
    %1704 = vmatprep.subr.bf16.mxu0 0
    %1705 = vmatpush1.bf16.xpose.msra.mxu0 0
    %1706 = vmatprep.subr.bf16.mxu0 0
    %1707 = vmatpush1.bf16.xpose.msra.mxu0 0
    %1708 = vmatprep.subr.bf16.mxu0 0
    %1709 = vmatpush1.bf16.xpose.msra.mxu0 0
    %1710 = vmatprep.subr.bf16.mxu0 0
    %1711 = vmatpush1.bf16.xpose.msra.mxu0 0
    %1712 = vmatprep.subr.bf16.mxu0 0
    %1713 = vmatpush1.bf16.xpose.msra.mxu0 0
    %1714 = vmatprep.subr.bf16.mxu0 0
    %1715 = vmatpush1.bf16.xpose.msra.mxu0 0
    %1716 = vmatprep.subr.bf16.mxu0 0
    %1717 = vmatpush1.bf16.xpose.msra.mxu0 0
    %1718 = vmatprep.subr.bf16.mxu0 0
    %1719 = vmatpush1.bf16.xpose.msra.mxu0 0
    %1720 = vmatprep.subr.bf16.mxu0 0
    %1721 = vmatpush1.bf16.xpose.msra.mxu0 0
    %1722 = vmatprep.subr.bf16.mxu0 0
    %1723 = vmatpush1.bf16.xpose.msra.mxu0 0
    %1724 = vmatprep.mubr.bf16.mxu0 0
    %1725 = vmatmul.mubr.bf16.gmra.mrb[0].mxu0 %v1669
    %v1726 = vpop.f32.mrb[0].mxu0
    %v1727 = vadd.f32 %v1348, %v1726
    %v1728 = vpop.f32.mrb[0].mxu0
    %v1729 = vpop.f32.mrb[0].mxu0
    %v1730 = vadd.f32 %v1349, %v1729
    %v1731 = vpop.f32.mrb[0].mxu0
    %1732 = vmatprep.mubr.bf16.mxu0 0
    %1733 = vmatmul.mubr.bf16.gmra.mrb[0].mxu0 %v1672
    %v1734 = vpop.f32.mrb[0].mxu0
    %v1735 = vadd.f32 %v1350, %v1734
    %v1736 = vpop.f32.mrb[0].mxu0
    %v1737 = vpop.f32.mrb[0].mxu0
    %v1738 = vadd.f32 %v1351, %v1737
    %v1739 = vpop.f32.mrb[0].mxu0
    %1740 = vmatprep.mubr.bf16.mxu0 0
    %1741 = vmatmul.mubr.bf16.gmra.mrb[0].mxu0 %v1675
    %v1742 = vpop.f32.mrb[0].mxu0
    %v1743 = vadd.f32 %v1352, %v1742
    %v1744 = vpop.f32.mrb[0].mxu0
    %v1745 = vpop.f32.mrb[0].mxu0
    %v1746 = vadd.f32 %v1353, %v1745
    %v1747 = vpop.f32.mrb[0].mxu0
    %1748 = vmatprep.mubr.bf16.mxu0 0
    %1749 = vmatmul.mubr.bf16.gmra.mrb[0].mxu0 %v1678
    %v1750 = vpop.f32.mrb[0].mxu0
    %v1751 = vadd.f32 %v1354, %v1750
    %v1752 = vpop.f32.mrb[0].mxu0
    %v1753 = vpop.f32.mrb[0].mxu0
    %v1754 = vpop.f32.mrb[0].mxu0
    %1755 = vdwg.mxu0
    %v1756 = vpack.c.b16 %v1211, %v1208
    %v1757 = vpack.c.b16 %v1217, %v1214
    %v1758 = vpack.c.b16 %v1223, %v1220
    %v1759 = vpack.c.b16 %v1226, %v1226
    %1760 = vrot.lane.b32.xlu0 %v1756, 32
    %v1761 = vpop.permute.xlu0 %1760
    %1762 = vrot.lane.b32.xlu0 %v1757, 32
    %v1763 = vpop.permute.xlu0 %1762
    %1764 = vrot.lane.b32.xlu0 %v1758, 32
    %v1765 = vpop.permute.xlu0 %1764
    %1766 = vrot.lane.b32.xlu0 %v1759, 32
    %v1767 = vpop.permute.xlu0 %1766
    %v1769 = vsel %vm1367, %v1756, 0
    %v1772 = vsel %vm1367, %v1757, 0
    %v1775 = vsel %vm1367, %v1758, 0
    %v1778 = vsel %vm1367, %v1759, 0
    %v1781 = vsel %vm1367, %v1761, 0
    %v1784 = vsel %vm1367, %v1763, 0
    %v1787 = vsel %vm1367, %v1765, 0
    %v1790 = vsel %vm1367, %v1767, 0
    %1792 = vmatprep.subr.bf16.mxu0 0
    %1793 = vmatpush1.bf16.xpose.msra.mxu0 %v1781
    %1794 = vmatprep.subr.bf16.mxu0 0
    %1795 = vmatpush1.bf16.xpose.msra.mxu0 %v1784
    %1796 = vmatprep.subr.bf16.mxu0 0
    %1797 = vmatpush1.bf16.xpose.msra.mxu0 %v1787
    %1798 = vmatprep.subr.bf16.mxu0 0
    %1799 = vmatpush1.bf16.xpose.msra.mxu0 %v1790
    %1800 = vmatprep.subr.bf16.mxu0 0
    %1801 = vmatpush1.bf16.xpose.msra.mxu0 0
    %1802 = vmatprep.subr.bf16.mxu0 0
    %1803 = vmatpush1.bf16.xpose.msra.mxu0 0
    %1804 = vmatprep.subr.bf16.mxu0 0
    %1805 = vmatpush1.bf16.xpose.msra.mxu0 0
    %1806 = vmatprep.subr.bf16.mxu0 0
    %1807 = vmatpush1.bf16.xpose.msra.mxu0 0
    %1808 = vmatprep.subr.bf16.mxu0 0
    %1809 = vmatpush1.bf16.xpose.msra.mxu0 0
    %1810 = vmatprep.subr.bf16.mxu0 0
    %1811 = vmatpush1.bf16.xpose.msra.mxu0 0
    %1812 = vmatprep.subr.bf16.mxu0 0
    %1813 = vmatpush1.bf16.xpose.msra.mxu0 0
    %1814 = vmatprep.subr.bf16.mxu0 0
    %1815 = vmatpush1.bf16.xpose.msra.mxu0 0
    %1816 = vmatprep.subr.bf16.mxu0 0
    %1817 = vmatpush1.bf16.xpose.msra.mxu0 0
    %1818 = vmatprep.subr.bf16.mxu0 0
    %1819 = vmatpush1.bf16.xpose.msra.mxu0 0
    %1820 = vmatprep.subr.bf16.mxu0 0
    %1821 = vmatpush1.bf16.xpose.msra.mxu0 0
    %1822 = vmatprep.subr.bf16.mxu0 0
    %1823 = vmatpush1.bf16.xpose.msra.mxu0 0
    %1824 = vmatprep.mubr.bf16.mxu0 0
    %1825 = vmatmul.mubr.bf16.gmra.mrb[0].mxu0 %v1769
    %v1826 = vpop.f32.mrb[0].mxu0
    %v1827 = vadd.f32 %v1348, %v1826
    %v1828 = vpop.f32.mrb[0].mxu0
    %v1829 = vpop.f32.mrb[0].mxu0
    %v1830 = vadd.f32 %v1349, %v1829
    %v1831 = vpop.f32.mrb[0].mxu0
    %1832 = vmatprep.mubr.bf16.mxu0 0
    %1833 = vmatmul.mubr.bf16.gmra.mrb[0].mxu0 %v1772
    %v1834 = vpop.f32.mrb[0].mxu0
    %v1835 = vadd.f32 %v1350, %v1834
    %v1836 = vpop.f32.mrb[0].mxu0
    %v1837 = vpop.f32.mrb[0].mxu0
    %v1838 = vadd.f32 %v1351, %v1837
    %v1839 = vpop.f32.mrb[0].mxu0
    %1840 = vmatprep.mubr.bf16.mxu0 0
    %1841 = vmatmul.mubr.bf16.gmra.mrb[0].mxu0 %v1775
    %v1842 = vpop.f32.mrb[0].mxu0
    %v1843 = vadd.f32 %v1352, %v1842
    %v1844 = vpop.f32.mrb[0].mxu0
    %v1845 = vpop.f32.mrb[0].mxu0
    %v1846 = vadd.f32 %v1353, %v1845
    %v1847 = vpop.f32.mrb[0].mxu0
    %1848 = vmatprep.mubr.bf16.mxu0 0
    %1849 = vmatmul.mubr.bf16.gmra.mrb[0].mxu0 %v1778
    %v1850 = vpop.f32.mrb[0].mxu0
    %v1851 = vadd.f32 %v1354, %v1850
    %v1852 = vpop.f32.mrb[0].mxu0
    %v1853 = vpop.f32.mrb[0].mxu0
    %v1854 = vpop.f32.mrb[0].mxu0
    %1855 = vdwg.mxu0
    %v1856 = vpack.c.b16 %v1232, %v1229
    %v1857 = vpack.c.b16 %v1238, %v1235
    %v1858 = vpack.c.b16 %v1244, %v1241
    %v1859 = vpack.c.b16 %v1247, %v1247
    %1860 = vrot.lane.b32.xlu0 %v1856, 32
    %v1861 = vpop.permute.xlu0 %1860
    %1862 = vrot.lane.b32.xlu0 %v1857, 32
    %v1863 = vpop.permute.xlu0 %1862
    %1864 = vrot.lane.b32.xlu0 %v1858, 32
    %v1865 = vpop.permute.xlu0 %1864
    %1866 = vrot.lane.b32.xlu0 %v1859, 32
    %v1867 = vpop.permute.xlu0 %1866
    %v1869 = vsel %vm1367, %v1856, 0
    %v1872 = vsel %vm1367, %v1857, 0
    %v1875 = vsel %vm1367, %v1858, 0
    %v1878 = vsel %vm1367, %v1859, 0
    %v1881 = vsel %vm1367, %v1861, 0
    %v1884 = vsel %vm1367, %v1863, 0
    %v1887 = vsel %vm1367, %v1865, 0
    %v1890 = vsel %vm1367, %v1867, 0
    %1892 = vmatprep.subr.bf16.mxu0 0
    %1893 = vmatpush1.bf16.xpose.msra.mxu0 %v1881
    %1894 = vmatprep.subr.bf16.mxu0 0
    %1895 = vmatpush1.bf16.xpose.msra.mxu0 %v1884
    %1896 = vmatprep.subr.bf16.mxu0 0
    %1897 = vmatpush1.bf16.xpose.msra.mxu0 %v1887
    %1898 = vmatprep.subr.bf16.mxu0 0
    %1899 = vmatpush1.bf16.xpose.msra.mxu0 %v1890
    %1900 = vmatprep.subr.bf16.mxu0 0
    %1901 = vmatpush1.bf16.xpose.msra.mxu0 0
    %1902 = vmatprep.subr.bf16.mxu0 0
    %1903 = vmatpush1.bf16.xpose.msra.mxu0 0
    %1904 = vmatprep.subr.bf16.mxu0 0
    %1905 = vmatpush1.bf16.xpose.msra.mxu0 0
    %1906 = vmatprep.subr.bf16.mxu0 0
    %1907 = vmatpush1.bf16.xpose.msra.mxu0 0
    %1908 = vmatprep.subr.bf16.mxu0 0
    %1909 = vmatpush1.bf16.xpose.msra.mxu0 0
    %1910 = vmatprep.subr.bf16.mxu0 0
    %1911 = vmatpush1.bf16.xpose.msra.mxu0 0
    %1912 = vmatprep.subr.bf16.mxu0 0
    %1913 = vmatpush1.bf16.xpose.msra.mxu0 0
    %1914 = vmatprep.subr.bf16.mxu0 0
    %1915 = vmatpush1.bf16.xpose.msra.mxu0 0
    %1916 = vmatprep.subr.bf16.mxu0 0
    %1917 = vmatpush1.bf16.xpose.msra.mxu0 0
    %1918 = vmatprep.subr.bf16.mxu0 0
    %1919 = vmatpush1.bf16.xpose.msra.mxu0 0
    %1920 = vmatprep.subr.bf16.mxu0 0
    %1921 = vmatpush1.bf16.xpose.msra.mxu0 0
    %1922 = vmatprep.subr.bf16.mxu0 0
    %1923 = vmatpush1.bf16.xpose.msra.mxu0 0
    %1924 = vmatprep.mubr.bf16.mxu0 0
    %1925 = vmatmul.mubr.bf16.gmra.mrb[0].mxu0 %v1869
    %v1926 = vpop.f32.mrb[0].mxu0
    %v1927 = vadd.f32 %v1348, %v1926
    %v1928 = vpop.f32.mrb[0].mxu0
    %v1929 = vpop.f32.mrb[0].mxu0
    %v1930 = vadd.f32 %v1349, %v1929
    %v1931 = vpop.f32.mrb[0].mxu0
    %1932 = vmatprep.mubr.bf16.mxu0 0
    %1933 = vmatmul.mubr.bf16.gmra.mrb[0].mxu0 %v1872
    %v1934 = vpop.f32.mrb[0].mxu0
    %v1935 = vadd.f32 %v1350, %v1934
    %v1936 = vpop.f32.mrb[0].mxu0
    %v1937 = vpop.f32.mrb[0].mxu0
    %v1938 = vadd.f32 %v1351, %v1937
    %v1939 = vpop.f32.mrb[0].mxu0
    %1940 = vmatprep.mubr.bf16.mxu0 0
    %1941 = vmatmul.mubr.bf16.gmra.mrb[0].mxu0 %v1875
    %v1942 = vpop.f32.mrb[0].mxu0
    %v1943 = vadd.f32 %v1352, %v1942
    %v1944 = vpop.f32.mrb[0].mxu0
    %v1945 = vpop.f32.mrb[0].mxu0
    %v1946 = vadd.f32 %v1353, %v1945
    %v1947 = vpop.f32.mrb[0].mxu0
    %1948 = vmatprep.mubr.bf16.mxu0 0
    %1949 = vmatmul.mubr.bf16.gmra.mrb[0].mxu0 %v1878
    %v1950 = vpop.f32.mrb[0].mxu0
    %v1951 = vadd.f32 %v1354, %v1950
    %v1952 = vpop.f32.mrb[0].mxu0
    %v1953 = vpop.f32.mrb[0].mxu0
    %v1954 = vpop.f32.mrb[0].mxu0
    %1955 = vdwg.mxu0
    %v1956 = vpack.c.b16 %v1253, %v1250
    %v1957 = vpack.c.b16 %v1259, %v1256
    %v1958 = vpack.c.b16 %v1265, %v1262
    %v1959 = vpack.c.b16 %v1268, %v1268
    %1960 = vrot.lane.b32.xlu0 %v1956, 32
    %v1961 = vpop.permute.xlu0 %1960
    %1962 = vrot.lane.b32.xlu0 %v1957, 32
    %v1963 = vpop.permute.xlu0 %1962
    %1964 = vrot.lane.b32.xlu0 %v1958, 32
    %v1965 = vpop.permute.xlu0 %1964
    %1966 = vrot.lane.b32.xlu0 %v1959, 32
    %v1967 = vpop.permute.xlu0 %1966
    %v1969 = vsel %vm1367, %v1956, 0
    %v1972 = vsel %vm1367, %v1957, 0
    %v1975 = vsel %vm1367, %v1958, 0
    %v1978 = vsel %vm1367, %v1959, 0
    %v1981 = vsel %vm1367, %v1961, 0
    %v1984 = vsel %vm1367, %v1963, 0
    %v1987 = vsel %vm1367, %v1965, 0
    %v1990 = vsel %vm1367, %v1967, 0
    %1992 = vmatprep.subr.bf16.mxu0 0
    %1993 = vmatpush1.bf16.xpose.msra.mxu0 %v1981
    %1994 = vmatprep.subr.bf16.mxu0 0
    %1995 = vmatpush1.bf16.xpose.msra.mxu0 %v1984
    %1996 = vmatprep.subr.bf16.mxu0 0
    %1997 = vmatpush1.bf16.xpose.msra.mxu0 %v1987
    %1998 = vmatprep.subr.bf16.mxu0 0
    %1999 = vmatpush1.bf16.xpose.msra.mxu0 %v1990
    %2000 = vmatprep.subr.bf16.mxu0 0
    %2001 = vmatpush1.bf16.xpose.msra.mxu0 0
    %2002 = vmatprep.subr.bf16.mxu0 0
    %2003 = vmatpush1.bf16.xpose.msra.mxu0 0
    %2004 = vmatprep.subr.bf16.mxu0 0
    %2005 = vmatpush1.bf16.xpose.msra.mxu0 0
    %2006 = vmatprep.subr.bf16.mxu0 0
    %2007 = vmatpush1.bf16.xpose.msra.mxu0 0
    %2008 = vmatprep.subr.bf16.mxu0 0
    %2009 = vmatpush1.bf16.xpose.msra.mxu0 0
    %2010 = vmatprep.subr.bf16.mxu0 0
    %2011 = vmatpush1.bf16.xpose.msra.mxu0 0
    %2012 = vmatprep.subr.bf16.mxu0 0
    %2013 = vmatpush1.bf16.xpose.msra.mxu0 0
    %2014 = vmatprep.subr.bf16.mxu0 0
    %2015 = vmatpush1.bf16.xpose.msra.mxu0 0
    %2016 = vmatprep.subr.bf16.mxu0 0
    %2017 = vmatpush1.bf16.xpose.msra.mxu0 0
    %2018 = vmatprep.subr.bf16.mxu0 0
    %2019 = vmatpush1.bf16.xpose.msra.mxu0 0
    %2020 = vmatprep.subr.bf16.mxu0 0
    %2021 = vmatpush1.bf16.xpose.msra.mxu0 0
    %2022 = vmatprep.subr.bf16.mxu0 0
    %2023 = vmatpush1.bf16.xpose.msra.mxu0 0
    %2024 = vmatprep.mubr.bf16.mxu0 0
    %2025 = vmatmul.mubr.bf16.gmra.mrb[0].mxu0 %v1969
    %v2026 = vpop.f32.mrb[0].mxu0
    %v2027 = vadd.f32 %v1348, %v2026
    %v2028 = vpop.f32.mrb[0].mxu0
    %v2029 = vpop.f32.mrb[0].mxu0
    %v2030 = vadd.f32 %v1349, %v2029
    %v2031 = vpop.f32.mrb[0].mxu0
    %2032 = vmatprep.mubr.bf16.mxu0 0
    %2033 = vmatmul.mubr.bf16.gmra.mrb[0].mxu0 %v1972
    %v2034 = vpop.f32.mrb[0].mxu0
    %v2035 = vadd.f32 %v1350, %v2034
    %v2036 = vpop.f32.mrb[0].mxu0
    %v2037 = vpop.f32.mrb[0].mxu0
    %v2038 = vadd.f32 %v1351, %v2037
    %v2039 = vpop.f32.mrb[0].mxu0
    %2040 = vmatprep.mubr.bf16.mxu0 0
    %2041 = vmatmul.mubr.bf16.gmra.mrb[0].mxu0 %v1975
    %v2042 = vpop.f32.mrb[0].mxu0
    %v2043 = vadd.f32 %v1352, %v2042
    %v2044 = vpop.f32.mrb[0].mxu0
    %v2045 = vpop.f32.mrb[0].mxu0
    %v2046 = vadd.f32 %v1353, %v2045
    %v2047 = vpop.f32.mrb[0].mxu0
    %2048 = vmatprep.mubr.bf16.mxu0 0
    %2049 = vmatmul.mubr.bf16.gmra.mrb[0].mxu0 %v1978
    %v2050 = vpop.f32.mrb[0].mxu0
    %v2051 = vadd.f32 %v1354, %v2050
    %v2052 = vpop.f32.mrb[0].mxu0
    %v2053 = vpop.f32.mrb[0].mxu0
    %v2054 = vpop.f32.mrb[0].mxu0
    %2055 = vdwg.mxu0
    %v2056 = vpack.c.b16 %v1274, %v1271
    %v2057 = vpack.c.b16 %v1280, %v1277
    %v2058 = vpack.c.b16 %v1286, %v1283
    %v2059 = vpack.c.b16 %v1289, %v1289
    %2060 = vrot.lane.b32.xlu0 %v2056, 32
    %v2061 = vpop.permute.xlu0 %2060
    %2062 = vrot.lane.b32.xlu0 %v2057, 32
    %v2063 = vpop.permute.xlu0 %2062
    %2064 = vrot.lane.b32.xlu0 %v2058, 32
    %v2065 = vpop.permute.xlu0 %2064
    %2066 = vrot.lane.b32.xlu0 %v2059, 32
    %v2067 = vpop.permute.xlu0 %2066
    %v2069 = vsel %vm1367, %v2056, 0
    %v2072 = vsel %vm1367, %v2057, 0
    %v2075 = vsel %vm1367, %v2058, 0
    %v2078 = vsel %vm1367, %v2059, 0
    %v2081 = vsel %vm1367, %v2061, 0
    %v2084 = vsel %vm1367, %v2063, 0
    %v2087 = vsel %vm1367, %v2065, 0
    %v2090 = vsel %vm1367, %v2067, 0
    %2092 = vmatprep.subr.bf16.mxu0 0
    %2093 = vmatpush1.bf16.xpose.msra.mxu0 %v2081
    %2094 = vmatprep.subr.bf16.mxu0 0
    %2095 = vmatpush1.bf16.xpose.msra.mxu0 %v2084
    %2096 = vmatprep.subr.bf16.mxu0 0
    %2097 = vmatpush1.bf16.xpose.msra.mxu0 %v2087
    %2098 = vmatprep.subr.bf16.mxu0 0
    %2099 = vmatpush1.bf16.xpose.msra.mxu0 %v2090
    %2100 = vmatprep.subr.bf16.mxu0 0
    %2101 = vmatpush1.bf16.xpose.msra.mxu0 0
    %2102 = vmatprep.subr.bf16.mxu0 0
    %2103 = vmatpush1.bf16.xpose.msra.mxu0 0
    %2104 = vmatprep.subr.bf16.mxu0 0
    %2105 = vmatpush1.bf16.xpose.msra.mxu0 0
    %2106 = vmatprep.subr.bf16.mxu0 0
    %2107 = vmatpush1.bf16.xpose.msra.mxu0 0
    %2108 = vmatprep.subr.bf16.mxu0 0
    %2109 = vmatpush1.bf16.xpose.msra.mxu0 0
    %2110 = vmatprep.subr.bf16.mxu0 0
    %2111 = vmatpush1.bf16.xpose.msra.mxu0 0
    %2112 = vmatprep.subr.bf16.mxu0 0
    %2113 = vmatpush1.bf16.xpose.msra.mxu0 0
    %2114 = vmatprep.subr.bf16.mxu0 0
    %2115 = vmatpush1.bf16.xpose.msra.mxu0 0
    %2116 = vmatprep.subr.bf16.mxu0 0
    %2117 = vmatpush1.bf16.xpose.msra.mxu0 0
    %2118 = vmatprep.subr.bf16.mxu0 0
    %2119 = vmatpush1.bf16.xpose.msra.mxu0 0
    %2120 = vmatprep.subr.bf16.mxu0 0
    %2121 = vmatpush1.bf16.xpose.msra.mxu0 0
    %2122 = vmatprep.subr.bf16.mxu0 0
    %2123 = vmatpush1.bf16.xpose.msra.mxu0 0
    %2124 = vmatprep.mubr.bf16.mxu0 0
    %2125 = vmatmul.mubr.bf16.gmra.mrb[0].mxu0 %v2069
    %v2126 = vpop.f32.mrb[0].mxu0
    %v2127 = vadd.f32 %v1348, %v2126
    %v2128 = vpop.f32.mrb[0].mxu0
    %v2129 = vpop.f32.mrb[0].mxu0
    %v2130 = vadd.f32 %v1349, %v2129
    %v2131 = vpop.f32.mrb[0].mxu0
    %2132 = vmatprep.mubr.bf16.mxu0 0
    %2133 = vmatmul.mubr.bf16.gmra.mrb[0].mxu0 %v2072
    %v2134 = vpop.f32.mrb[0].mxu0
    %v2135 = vadd.f32 %v1350, %v2134
    %v2136 = vpop.f32.mrb[0].mxu0
    %v2137 = vpop.f32.mrb[0].mxu0
    %v2138 = vadd.f32 %v1351, %v2137
    %v2139 = vpop.f32.mrb[0].mxu0
    %2140 = vmatprep.mubr.bf16.mxu0 0
    %2141 = vmatmul.mubr.bf16.gmra.mrb[0].mxu0 %v2075
    %v2142 = vpop.f32.mrb[0].mxu0
    %v2143 = vadd.f32 %v1352, %v2142
    %v2144 = vpop.f32.mrb[0].mxu0
    %v2145 = vpop.f32.mrb[0].mxu0
    %v2146 = vadd.f32 %v1353, %v2145
    %v2147 = vpop.f32.mrb[0].mxu0
    %2148 = vmatprep.mubr.bf16.mxu0 0
    %2149 = vmatmul.mubr.bf16.gmra.mrb[0].mxu0 %v2078
    %v2150 = vpop.f32.mrb[0].mxu0
    %v2151 = vadd.f32 %v1354, %v2150
    %v2152 = vpop.f32.mrb[0].mxu0
    %v2153 = vpop.f32.mrb[0].mxu0
    %v2154 = vpop.f32.mrb[0].mxu0
    %2155 = vdwg.mxu0
    %vm2156 = vcmask 457728
    %v2157 = vsel %vm2156, %v1427, -inf
    %2158 = vmax.xlane.f32.xlu0 %v2157
    %v2159 = vpop.xlane.xlu0 %2158
    %v2160 = vsel %vm2156, %v1430, -inf
    %2161 = vmax.xlane.f32.xlu0 %v2160
    %v2162 = vpop.xlane.xlu0 %2161
    %v2163 = vsel %vm2156, %v1435, -inf
    %2164 = vmax.xlane.f32.xlu0 %v2163
    %v2165 = vpop.xlane.xlu0 %2164
    %v2166 = vsel %vm2156, %v1438, -inf
    %2167 = vmax.xlane.f32.xlu0 %v2166
    %v2168 = vpop.xlane.xlu0 %2167
    %v2169 = vsel %vm2156, %v1443, -inf
    %2170 = vmax.xlane.f32.xlu0 %v2169
    %v2171 = vpop.xlane.xlu0 %2170
    %v2172 = vsel %vm2156, %v1446, -inf
    %2173 = vmax.xlane.f32.xlu0 %v2172
    %v2174 = vpop.xlane.xlu0 %2173
    %v2175 = vsel %vm2156, %v1451, -inf
    %2176 = vmax.xlane.f32.xlu0 %v2175
    %v2177 = vpop.xlane.xlu0 %2176
    %v2178 = vsel %vm2156, %v1527, -inf
    %2179 = vmax.xlane.f32.xlu0 %v2178
    %v2180 = vpop.xlane.xlu0 %2179
    %v2181 = vsel %vm2156, %v1530, -inf
    %2182 = vmax.xlane.f32.xlu0 %v2181
    %v2183 = vpop.xlane.xlu0 %2182
    %v2184 = vsel %vm2156, %v1535, -inf
    %2185 = vmax.xlane.f32.xlu0 %v2184
    %v2186 = vpop.xlane.xlu0 %2185
    %v2187 = vsel %vm2156, %v1538, -inf
    %2188 = vmax.xlane.f32.xlu0 %v2187
    %v2189 = vpop.xlane.xlu0 %2188
    %v2190 = vsel %vm2156, %v1543, -inf
    %2191 = vmax.xlane.f32.xlu0 %v2190
    %v2192 = vpop.xlane.xlu0 %2191
    %v2193 = vsel %vm2156, %v1546, -inf
    %2194 = vmax.xlane.f32.xlu0 %v2193
    %v2195 = vpop.xlane.xlu0 %2194
    %v2196 = vsel %vm2156, %v1551, -inf
    %2197 = vmax.xlane.f32.xlu0 %v2196
    %v2198 = vpop.xlane.xlu0 %2197
    %v2199 = vsel %vm2156, %v1627, -inf
    %2200 = vmax.xlane.f32.xlu0 %v2199
    %v2201 = vpop.xlane.xlu0 %2200
    %v2202 = vsel %vm2156, %v1630, -inf
    %2203 = vmax.xlane.f32.xlu0 %v2202
    %v2204 = vpop.xlane.xlu0 %2203
    %v2205 = vsel %vm2156, %v1635, -inf
    %2206 = vmax.xlane.f32.xlu0 %v2205
    %v2207 = vpop.xlane.xlu0 %2206
    %v2208 = vsel %vm2156, %v1638, -inf
    %2209 = vmax.xlane.f32.xlu0 %v2208
    %v2210 = vpop.xlane.xlu0 %2209
    %v2211 = vsel %vm2156, %v1643, -inf
    %2212 = vmax.xlane.f32.xlu0 %v2211
    %v2213 = vpop.xlane.xlu0 %2212
    %v2214 = vsel %vm2156, %v1646, -inf
    %2215 = vmax.xlane.f32.xlu0 %v2214
    %v2216 = vpop.xlane.xlu0 %2215
    %v2217 = vsel %vm2156, %v1651, -inf
    %2218 = vmax.xlane.f32.xlu0 %v2217
    %v2219 = vpop.xlane.xlu0 %2218
    %v2220 = vsel %vm2156, %v1727, -inf
    %2221 = vmax.xlane.f32.xlu0 %v2220
    %v2222 = vpop.xlane.xlu0 %2221
    %v2223 = vsel %vm2156, %v1730, -inf
    %2224 = vmax.xlane.f32.xlu0 %v2223
    %v2225 = vpop.xlane.xlu0 %2224
    %v2226 = vsel %vm2156, %v1735, -inf
    %2227 = vmax.xlane.f32.xlu0 %v2226
    %v2228 = vpop.xlane.xlu0 %2227
    %v2229 = vsel %vm2156, %v1738, -inf
    %2230 = vmax.xlane.f32.xlu0 %v2229
    %v2231 = vpop.xlane.xlu0 %2230
    %v2232 = vsel %vm2156, %v1743, -inf
    %2233 = vmax.xlane.f32.xlu0 %v2232
    %v2234 = vpop.xlane.xlu0 %2233
    %v2235 = vsel %vm2156, %v1746, -inf
    %2236 = vmax.xlane.f32.xlu0 %v2235
    %v2237 = vpop.xlane.xlu0 %2236
    %v2238 = vsel %vm2156, %v1751, -inf
    %2239 = vmax.xlane.f32.xlu0 %v2238
    %v2240 = vpop.xlane.xlu0 %2239
    %v2241 = vsel %vm2156, %v1827, -inf
    %2242 = vmax.xlane.f32.xlu0 %v2241
    %v2243 = vpop.xlane.xlu0 %2242
    %v2244 = vsel %vm2156, %v1830, -inf
    %2245 = vmax.xlane.f32.xlu0 %v2244
    %v2246 = vpop.xlane.xlu0 %2245
    %v2247 = vsel %vm2156, %v1835, -inf
    %2248 = vmax.xlane.f32.xlu0 %v2247
    %v2249 = vpop.xlane.xlu0 %2248
    %v2250 = vsel %vm2156, %v1838, -inf
    %2251 = vmax.xlane.f32.xlu0 %v2250
    %v2252 = vpop.xlane.xlu0 %2251
    %v2253 = vsel %vm2156, %v1843, -inf
    %2254 = vmax.xlane.f32.xlu0 %v2253
    %v2255 = vpop.xlane.xlu0 %2254
    %v2256 = vsel %vm2156, %v1846, -inf
    %2257 = vmax.xlane.f32.xlu0 %v2256
    %v2258 = vpop.xlane.xlu0 %2257
    %v2259 = vsel %vm2156, %v1851, -inf
    %2260 = vmax.xlane.f32.xlu0 %v2259
    %v2261 = vpop.xlane.xlu0 %2260
    %v2262 = vsel %vm2156, %v1927, -inf
    %2263 = vmax.xlane.f32.xlu0 %v2262
    %v2264 = vpop.xlane.xlu0 %2263
    %v2265 = vsel %vm2156, %v1930, -inf
    %2266 = vmax.xlane.f32.xlu0 %v2265
    %v2267 = vpop.xlane.xlu0 %2266
    %v2268 = vsel %vm2156, %v1935, -inf
    %2269 = vmax.xlane.f32.xlu0 %v2268
    %v2270 = vpop.xlane.xlu0 %2269
    %v2271 = vsel %vm2156, %v1938, -inf
    %2272 = vmax.xlane.f32.xlu0 %v2271
    %v2273 = vpop.xlane.xlu0 %2272
    %v2274 = vsel %vm2156, %v1943, -inf
    %2275 = vmax.xlane.f32.xlu0 %v2274
    %v2276 = vpop.xlane.xlu0 %2275
    %v2277 = vsel %vm2156, %v1946, -inf
    %2278 = vmax.xlane.f32.xlu0 %v2277
    %v2279 = vpop.xlane.xlu0 %2278
    %v2280 = vsel %vm2156, %v1951, -inf
    %2281 = vmax.xlane.f32.xlu0 %v2280
    %v2282 = vpop.xlane.xlu0 %2281
    %v2283 = vsel %vm2156, %v2027, -inf
    %2284 = vmax.xlane.f32.xlu0 %v2283
    %v2285 = vpop.xlane.xlu0 %2284
    %v2286 = vsel %vm2156, %v2030, -inf
    %2287 = vmax.xlane.f32.xlu0 %v2286
    %v2288 = vpop.xlane.xlu0 %2287
    %v2289 = vsel %vm2156, %v2035, -inf
    %2290 = vmax.xlane.f32.xlu0 %v2289
    %v2291 = vpop.xlane.xlu0 %2290
    %v2292 = vsel %vm2156, %v2038, -inf
    %2293 = vmax.xlane.f32.xlu0 %v2292
    %v2294 = vpop.xlane.xlu0 %2293
    %v2295 = vsel %vm2156, %v2043, -inf
    %2296 = vmax.xlane.f32.xlu0 %v2295
    %v2297 = vpop.xlane.xlu0 %2296
    %v2298 = vsel %vm2156, %v2046, -inf
    %2299 = vmax.xlane.f32.xlu0 %v2298
    %v2300 = vpop.xlane.xlu0 %2299
    %v2301 = vsel %vm2156, %v2051, -inf
    %2302 = vmax.xlane.f32.xlu0 %v2301
    %v2303 = vpop.xlane.xlu0 %2302
    %v2304 = vsel %vm2156, %v2127, -inf
    %2305 = vmax.xlane.f32.xlu0 %v2304
    %v2306 = vpop.xlane.xlu0 %2305
    %v2307 = vsel %vm2156, %v2130, -inf
    %2308 = vmax.xlane.f32.xlu0 %v2307
    %v2309 = vpop.xlane.xlu0 %2308
    %v2310 = vsel %vm2156, %v2135, -inf
    %2311 = vmax.xlane.f32.xlu0 %v2310
    %v2312 = vpop.xlane.xlu0 %2311
    %v2313 = vsel %vm2156, %v2138, -inf
    %2314 = vmax.xlane.f32.xlu0 %v2313
    %v2315 = vpop.xlane.xlu0 %2314
    %v2316 = vsel %vm2156, %v2143, -inf
    %2317 = vmax.xlane.f32.xlu0 %v2316
    %v2318 = vpop.xlane.xlu0 %2317
    %v2319 = vsel %vm2156, %v2146, -inf
    %2320 = vmax.xlane.f32.xlu0 %v2319
    %v2321 = vpop.xlane.xlu0 %2320
    %v2322 = vsel %vm2156, %v2151, -inf
    %2323 = vmax.xlane.f32.xlu0 %v2322
    %v2324 = vpop.xlane.xlu0 %2323
    %v2325 = vsub.f32 %v1427, %v2159
    %v2326 = vsub.f32 %v1430, %v2162
    %v2327 = vsub.f32 %v1435, %v2165
    %v2328 = vsub.f32 %v1438, %v2168
    %v2329 = vsub.f32 %v1443, %v2171
    %v2330 = vsub.f32 %v1446, %v2174
    %v2331 = vsub.f32 %v1451, %v2177
    %v2332 = vsub.f32 %v1527, %v2180
    %v2333 = vsub.f32 %v1530, %v2183
    %v2334 = vsub.f32 %v1535, %v2186
    %v2335 = vsub.f32 %v1538, %v2189
    %v2336 = vsub.f32 %v1543, %v2192
    %v2337 = vsub.f32 %v1546, %v2195
    %v2338 = vsub.f32 %v1551, %v2198
    %v2339 = vsub.f32 %v1627, %v2201
    %v2340 = vsub.f32 %v1630, %v2204
    %v2341 = vsub.f32 %v1635, %v2207
    %v2342 = vsub.f32 %v1638, %v2210
    %v2343 = vsub.f32 %v1643, %v2213
    %v2344 = vsub.f32 %v1646, %v2216
    %v2345 = vsub.f32 %v1651, %v2219
    %v2346 = vsub.f32 %v1727, %v2222
    %v2347 = vsub.f32 %v1730, %v2225
    %v2348 = vsub.f32 %v1735, %v2228
    %v2349 = vsub.f32 %v1738, %v2231
    %v2350 = vsub.f32 %v1743, %v2234
    %v2351 = vsub.f32 %v1746, %v2237
    %v2352 = vsub.f32 %v1751, %v2240
    %v2353 = vsub.f32 %v1827, %v2243
    %v2354 = vsub.f32 %v1830, %v2246
    %v2355 = vsub.f32 %v1835, %v2249
    %v2356 = vsub.f32 %v1838, %v2252
    %v2357 = vsub.f32 %v1843, %v2255
    %v2358 = vsub.f32 %v1846, %v2258
    %v2359 = vsub.f32 %v1851, %v2261
    %v2360 = vsub.f32 %v1927, %v2264
    %v2361 = vsub.f32 %v1930, %v2267
    %v2362 = vsub.f32 %v1935, %v2270
    %v2363 = vsub.f32 %v1938, %v2273
    %v2364 = vsub.f32 %v1943, %v2276
    %v2365 = vsub.f32 %v1946, %v2279
    %v2366 = vsub.f32 %v1951, %v2282
    %v2367 = vsub.f32 %v2027, %v2285
    %v2368 = vsub.f32 %v2030, %v2288
    %v2369 = vsub.f32 %v2035, %v2291
    %v2370 = vsub.f32 %v2038, %v2294
    %v2371 = vsub.f32 %v2043, %v2297
    %v2372 = vsub.f32 %v2046, %v2300
    %v2373 = vsub.f32 %v2051, %v2303
    %v2374 = vsub.f32 %v2127, %v2306
    %v2375 = vsub.f32 %v2130, %v2309
    %v2376 = vsub.f32 %v2135, %v2312
    %v2377 = vsub.f32 %v2138, %v2315
    %v2378 = vsub.f32 %v2143, %v2318
    %v2379 = vsub.f32 %v2146, %v2321
    %v2380 = vsub.f32 %v2151, %v2324
    %v2381 = vmul.f32 %v2325, 1.442695
    %v2382 = vpow.pop %v2381
    %v2383 = vmul.f32 %v2326, 1.442695
    %v2384 = vpow.pop %v2383
    %v2385 = vmul.f32 %v2327, 1.442695
    %v2386 = vpow.pop %v2385
    %v2387 = vmul.f32 %v2328, 1.442695
    %v2388 = vpow.pop %v2387
    %v2389 = vmul.f32 %v2329, 1.442695
    %v2390 = vpow.pop %v2389
    %v2391 = vmul.f32 %v2330, 1.442695
    %v2392 = vpow.pop %v2391
    %v2393 = vmul.f32 %v2331, 1.442695
    %v2394 = vpow.pop %v2393
    %v2395 = vmul.f32 %v2332, 1.442695
    %v2396 = vpow.pop %v2395
    %v2397 = vmul.f32 %v2333, 1.442695
    %v2398 = vpow.pop %v2397
    %v2399 = vmul.f32 %v2334, 1.442695
    %v2400 = vpow.pop %v2399
    %v2401 = vmul.f32 %v2335, 1.442695
    %v2402 = vpow.pop %v2401
    %v2403 = vmul.f32 %v2336, 1.442695
    %v2404 = vpow.pop %v2403
    %v2405 = vmul.f32 %v2337, 1.442695
    %v2406 = vpow.pop %v2405
    %v2407 = vmul.f32 %v2338, 1.442695
    %v2408 = vpow.pop %v2407
    %v2409 = vmul.f32 %v2339, 1.442695
    %v2410 = vpow.pop %v2409
    %v2411 = vmul.f32 %v2340, 1.442695
    %v2412 = vpow.pop %v2411
    %v2413 = vmul.f32 %v2341, 1.442695
    %v2414 = vpow.pop %v2413
    %v2415 = vmul.f32 %v2342, 1.442695
    %v2416 = vpow.pop %v2415
    %v2417 = vmul.f32 %v2343, 1.442695
    %v2418 = vpow.pop %v2417
    %v2419 = vmul.f32 %v2344, 1.442695
    %v2420 = vpow.pop %v2419
    %v2421 = vmul.f32 %v2345, 1.442695
    %v2422 = vpow.pop %v2421
    %v2423 = vmul.f32 %v2346, 1.442695
    %v2424 = vpow.pop %v2423
    %v2425 = vmul.f32 %v2347, 1.442695
    %v2426 = vpow.pop %v2425
    %v2427 = vmul.f32 %v2348, 1.442695
    %v2428 = vpow.pop %v2427
    %v2429 = vmul.f32 %v2349, 1.442695
    %v2430 = vpow.pop %v2429
    %v2431 = vmul.f32 %v2350, 1.442695
    %v2432 = vpow.pop %v2431
    %v2433 = vmul.f32 %v2351, 1.442695
    %v2434 = vpow.pop %v2433
    %v2435 = vmul.f32 %v2352, 1.442695
    %v2436 = vpow.pop %v2435
    %v2437 = vmul.f32 %v2353, 1.442695
    %v2438 = vpow.pop %v2437
    %v2439 = vmul.f32 %v2354, 1.442695
    %v2440 = vpow.pop %v2439
    %v2441 = vmul.f32 %v2355, 1.442695
    %v2442 = vpow.pop %v2441
    %v2443 = vmul.f32 %v2356, 1.442695
    %v2444 = vpow.pop %v2443
    %v2445 = vmul.f32 %v2357, 1.442695
    %v2446 = vpow.pop %v2445
    %v2447 = vmul.f32 %v2358, 1.442695
    %v2448 = vpow.pop %v2447
    %v2449 = vmul.f32 %v2359, 1.442695
    %v2450 = vpow.pop %v2449
    %v2451 = vmul.f32 %v2360, 1.442695
    %v2452 = vpow.pop %v2451
    %v2453 = vmul.f32 %v2361, 1.442695
    %v2454 = vpow.pop %v2453
    %v2455 = vmul.f32 %v2362, 1.442695
    %v2456 = vpow.pop %v2455
    %v2457 = vmul.f32 %v2363, 1.442695
    %v2458 = vpow.pop %v2457
    %v2459 = vmul.f32 %v2364, 1.442695
    %v2460 = vpow.pop %v2459
    %v2461 = vmul.f32 %v2365, 1.442695
    %v2462 = vpow.pop %v2461
    %v2463 = vmul.f32 %v2366, 1.442695
    %v2464 = vpow.pop %v2463
    %v2465 = vmul.f32 %v2367, 1.442695
    %v2466 = vpow.pop %v2465
    %v2467 = vmul.f32 %v2368, 1.442695
    %v2468 = vpow.pop %v2467
    %v2469 = vmul.f32 %v2369, 1.442695
    %v2470 = vpow.pop %v2469
    %v2471 = vmul.f32 %v2370, 1.442695
    %v2472 = vpow.pop %v2471
    %v2473 = vmul.f32 %v2371, 1.442695
    %v2474 = vpow.pop %v2473
    %v2475 = vmul.f32 %v2372, 1.442695
    %v2476 = vpow.pop %v2475
    %v2477 = vmul.f32 %v2373, 1.442695
    %v2478 = vpow.pop %v2477
    %v2479 = vmul.f32 %v2374, 1.442695
    %v2480 = vpow.pop %v2479
    %v2481 = vmul.f32 %v2375, 1.442695
    %v2482 = vpow.pop %v2481
    %v2483 = vmul.f32 %v2376, 1.442695
    %v2484 = vpow.pop %v2483
    %v2485 = vmul.f32 %v2377, 1.442695
    %v2486 = vpow.pop %v2485
    %v2487 = vmul.f32 %v2378, 1.442695
    %v2488 = vpow.pop %v2487
    %v2489 = vmul.f32 %v2379, 1.442695
    %v2490 = vpow.pop %v2489
    %v2491 = vmul.f32 %v2380, 1.442695
    %v2492 = vpow.pop %v2491
    %v2493 = vsel %vm2156, %v2382, 0.0
    %2494 = vadd.xlane.f32.xlu0 %v2493
    %v2495 = vpop.xlane.xlu0 %2494
    %v2496 = vsel %vm2156, %v2384, 0.0
    %2497 = vadd.xlane.f32.xlu0 %v2496
    %v2498 = vpop.xlane.xlu0 %2497
    %v2499 = vsel %vm2156, %v2386, 0.0
    %2500 = vadd.xlane.f32.xlu0 %v2499
    %v2501 = vpop.xlane.xlu0 %2500
    %v2502 = vsel %vm2156, %v2388, 0.0
    %2503 = vadd.xlane.f32.xlu0 %v2502
    %v2504 = vpop.xlane.xlu0 %2503
    %v2505 = vsel %vm2156, %v2390, 0.0
    %2506 = vadd.xlane.f32.xlu0 %v2505
    %v2507 = vpop.xlane.xlu0 %2506
    %v2508 = vsel %vm2156, %v2392, 0.0
    %2509 = vadd.xlane.f32.xlu0 %v2508
    %v2510 = vpop.xlane.xlu0 %2509
    %v2511 = vsel %vm2156, %v2394, 0.0
    %2512 = vadd.xlane.f32.xlu0 %v2511
    %v2513 = vpop.xlane.xlu0 %2512
    %v2514 = vsel %vm2156, %v2396, 0.0
    %2515 = vadd.xlane.f32.xlu0 %v2514
    %v2516 = vpop.xlane.xlu0 %2515
    %v2517 = vsel %vm2156, %v2398, 0.0
    %2518 = vadd.xlane.f32.xlu0 %v2517
    %v2519 = vpop.xlane.xlu0 %2518
    %v2520 = vsel %vm2156, %v2400, 0.0
    %2521 = vadd.xlane.f32.xlu0 %v2520
    %v2522 = vpop.xlane.xlu0 %2521
    %v2523 = vsel %vm2156, %v2402, 0.0
    %2524 = vadd.xlane.f32.xlu0 %v2523
    %v2525 = vpop.xlane.xlu0 %2524
    %v2526 = vsel %vm2156, %v2404, 0.0
    %2527 = vadd.xlane.f32.xlu0 %v2526
    %v2528 = vpop.xlane.xlu0 %2527
    %v2529 = vsel %vm2156, %v2406, 0.0
    %2530 = vadd.xlane.f32.xlu0 %v2529
    %v2531 = vpop.xlane.xlu0 %2530
    %v2532 = vsel %vm2156, %v2408, 0.0
    %2533 = vadd.xlane.f32.xlu0 %v2532
    %v2534 = vpop.xlane.xlu0 %2533
    %v2535 = vsel %vm2156, %v2410, 0.0
    %2536 = vadd.xlane.f32.xlu0 %v2535
    %v2537 = vpop.xlane.xlu0 %2536
    %v2538 = vsel %vm2156, %v2412, 0.0
    %2539 = vadd.xlane.f32.xlu0 %v2538
    %v2540 = vpop.xlane.xlu0 %2539
    %v2541 = vsel %vm2156, %v2414, 0.0
    %2542 = vadd.xlane.f32.xlu0 %v2541
    %v2543 = vpop.xlane.xlu0 %2542
    %v2544 = vsel %vm2156, %v2416, 0.0
    %2545 = vadd.xlane.f32.xlu0 %v2544
    %v2546 = vpop.xlane.xlu0 %2545
    %v2547 = vsel %vm2156, %v2418, 0.0
    %2548 = vadd.xlane.f32.xlu0 %v2547
    %v2549 = vpop.xlane.xlu0 %2548
    %v2550 = vsel %vm2156, %v2420, 0.0
    %2551 = vadd.xlane.f32.xlu0 %v2550
    %v2552 = vpop.xlane.xlu0 %2551
    %v2553 = vsel %vm2156, %v2422, 0.0
    %2554 = vadd.xlane.f32.xlu0 %v2553
    %v2555 = vpop.xlane.xlu0 %2554
    %v2556 = vsel %vm2156, %v2424, 0.0
    %2557 = vadd.xlane.f32.xlu0 %v2556
    %v2558 = vpop.xlane.xlu0 %2557
    %v2559 = vsel %vm2156, %v2426, 0.0
    %2560 = vadd.xlane.f32.xlu0 %v2559
    %v2561 = vpop.xlane.xlu0 %2560
    %v2562 = vsel %vm2156, %v2428, 0.0
    %2563 = vadd.xlane.f32.xlu0 %v2562
    %v2564 = vpop.xlane.xlu0 %2563
    %v2565 = vsel %vm2156, %v2430, 0.0
    %2566 = vadd.xlane.f32.xlu0 %v2565
    %v2567 = vpop.xlane.xlu0 %2566
    %v2568 = vsel %vm2156, %v2432, 0.0
    %2569 = vadd.xlane.f32.xlu0 %v2568
    %v2570 = vpop.xlane.xlu0 %2569
    %v2571 = vsel %vm2156, %v2434, 0.0
    %2572 = vadd.xlane.f32.xlu0 %v2571
    %v2573 = vpop.xlane.xlu0 %2572
    %v2574 = vsel %vm2156, %v2436, 0.0
    %2575 = vadd.xlane.f32.xlu0 %v2574
    %v2576 = vpop.xlane.xlu0 %2575
    %v2577 = vsel %vm2156, %v2438, 0.0
    %2578 = vadd.xlane.f32.xlu0 %v2577
    %v2579 = vpop.xlane.xlu0 %2578
    %v2580 = vsel %vm2156, %v2440, 0.0
    %2581 = vadd.xlane.f32.xlu0 %v2580
    %v2582 = vpop.xlane.xlu0 %2581
    %v2583 = vsel %vm2156, %v2442, 0.0
    %2584 = vadd.xlane.f32.xlu0 %v2583
    %v2585 = vpop.xlane.xlu0 %2584
    %v2586 = vsel %vm2156, %v2444, 0.0
    %2587 = vadd.xlane.f32.xlu0 %v2586
    %v2588 = vpop.xlane.xlu0 %2587
    %v2589 = vsel %vm2156, %v2446, 0.0
    %2590 = vadd.xlane.f32.xlu0 %v2589
    %v2591 = vpop.xlane.xlu0 %2590
    %v2592 = vsel %vm2156, %v2448, 0.0
    %2593 = vadd.xlane.f32.xlu0 %v2592
    %v2594 = vpop.xlane.xlu0 %2593
    %v2595 = vsel %vm2156, %v2450, 0.0
    %2596 = vadd.xlane.f32.xlu0 %v2595
    %v2597 = vpop.xlane.xlu0 %2596
    %v2598 = vsel %vm2156, %v2452, 0.0
    %2599 = vadd.xlane.f32.xlu0 %v2598
    %v2600 = vpop.xlane.xlu0 %2599
    %v2601 = vsel %vm2156, %v2454, 0.0
    %2602 = vadd.xlane.f32.xlu0 %v2601
    %v2603 = vpop.xlane.xlu0 %2602
    %v2604 = vsel %vm2156, %v2456, 0.0
    %2605 = vadd.xlane.f32.xlu0 %v2604
    %v2606 = vpop.xlane.xlu0 %2605
    %v2607 = vsel %vm2156, %v2458, 0.0
    %2608 = vadd.xlane.f32.xlu0 %v2607
    %v2609 = vpop.xlane.xlu0 %2608
    %v2610 = vsel %vm2156, %v2460, 0.0
    %2611 = vadd.xlane.f32.xlu0 %v2610
    %v2612 = vpop.xlane.xlu0 %2611
    %v2613 = vsel %vm2156, %v2462, 0.0
    %2614 = vadd.xlane.f32.xlu0 %v2613
    %v2615 = vpop.xlane.xlu0 %2614
    %v2616 = vsel %vm2156, %v2464, 0.0
    %2617 = vadd.xlane.f32.xlu0 %v2616
    %v2618 = vpop.xlane.xlu0 %2617
    %v2619 = vsel %vm2156, %v2466, 0.0
    %2620 = vadd.xlane.f32.xlu0 %v2619
    %v2621 = vpop.xlane.xlu0 %2620
    %v2622 = vsel %vm2156, %v2468, 0.0
    %2623 = vadd.xlane.f32.xlu0 %v2622
    %v2624 = vpop.xlane.xlu0 %2623
    %v2625 = vsel %vm2156, %v2470, 0.0
    %2626 = vadd.xlane.f32.xlu0 %v2625
    %v2627 = vpop.xlane.xlu0 %2626
    %v2628 = vsel %vm2156, %v2472, 0.0
    %2629 = vadd.xlane.f32.xlu0 %v2628
    %v2630 = vpop.xlane.xlu0 %2629
    %v2631 = vsel %vm2156, %v2474, 0.0
    %2632 = vadd.xlane.f32.xlu0 %v2631
    %v2633 = vpop.xlane.xlu0 %2632
    %v2634 = vsel %vm2156, %v2476, 0.0
    %2635 = vadd.xlane.f32.xlu0 %v2634
    %v2636 = vpop.xlane.xlu0 %2635
    %v2637 = vsel %vm2156, %v2478, 0.0
    %2638 = vadd.xlane.f32.xlu0 %v2637
    %v2639 = vpop.xlane.xlu0 %2638
    %v2640 = vsel %vm2156, %v2480, 0.0
    %2641 = vadd.xlane.f32.xlu0 %v2640
    %v2642 = vpop.xlane.xlu0 %2641
    %v2643 = vsel %vm2156, %v2482, 0.0
    %2644 = vadd.xlane.f32.xlu0 %v2643
    %v2645 = vpop.xlane.xlu0 %2644
    %v2646 = vsel %vm2156, %v2484, 0.0
    %2647 = vadd.xlane.f32.xlu0 %v2646
    %v2648 = vpop.xlane.xlu0 %2647
    %v2649 = vsel %vm2156, %v2486, 0.0
    %2650 = vadd.xlane.f32.xlu0 %v2649
    %v2651 = vpop.xlane.xlu0 %2650
    %v2652 = vsel %vm2156, %v2488, 0.0
    %2653 = vadd.xlane.f32.xlu0 %v2652
    %v2654 = vpop.xlane.xlu0 %2653
    %v2655 = vsel %vm2156, %v2490, 0.0
    %2656 = vadd.xlane.f32.xlu0 %v2655
    %v2657 = vpop.xlane.xlu0 %2656
    %v2658 = vsel %vm2156, %v2492, 0.0
    %2659 = vadd.xlane.f32.xlu0 %v2658
    %v2660 = vpop.xlane.xlu0 %2659
    %v2661 = vrcp.pop %v2495
    %v2662 = vmul.f32 %v2382, %v2661
    %v2663 = vrcp.pop %v2498
    %v2664 = vmul.f32 %v2384, %v2663
    %v2665 = vrcp.pop %v2501
    %v2666 = vmul.f32 %v2386, %v2665
    %v2667 = vrcp.pop %v2504
    %v2668 = vmul.f32 %v2388, %v2667
    %v2669 = vrcp.pop %v2507
    %v2670 = vmul.f32 %v2390, %v2669
    %v2671 = vrcp.pop %v2510
    %v2672 = vmul.f32 %v2392, %v2671
    %v2673 = vrcp.pop %v2513
    %v2674 = vmul.f32 %v2394, %v2673
    %v2675 = vrcp.pop %v2516
    %v2676 = vmul.f32 %v2396, %v2675
    %v2677 = vrcp.pop %v2519
    %v2678 = vmul.f32 %v2398, %v2677
    %v2679 = vrcp.pop %v2522
    %v2680 = vmul.f32 %v2400, %v2679
    %v2681 = vrcp.pop %v2525
    %v2682 = vmul.f32 %v2402, %v2681
    %v2683 = vrcp.pop %v2528
    %v2684 = vmul.f32 %v2404, %v2683
    %v2685 = vrcp.pop %v2531
    %v2686 = vmul.f32 %v2406, %v2685
    %v2687 = vrcp.pop %v2534
    %v2688 = vmul.f32 %v2408, %v2687
    %v2689 = vrcp.pop %v2537
    %v2690 = vmul.f32 %v2410, %v2689
    %v2691 = vrcp.pop %v2540
    %v2692 = vmul.f32 %v2412, %v2691
    %v2693 = vrcp.pop %v2543
    %v2694 = vmul.f32 %v2414, %v2693
    %v2695 = vrcp.pop %v2546
    %v2696 = vmul.f32 %v2416, %v2695
    %v2697 = vrcp.pop %v2549
    %v2698 = vmul.f32 %v2418, %v2697
    %v2699 = vrcp.pop %v2552
    %v2700 = vmul.f32 %v2420, %v2699
    %v2701 = vrcp.pop %v2555
    %v2702 = vmul.f32 %v2422, %v2701
    %v2703 = vrcp.pop %v2558
    %v2704 = vmul.f32 %v2424, %v2703
    %v2705 = vrcp.pop %v2561
    %v2706 = vmul.f32 %v2426, %v2705
    %v2707 = vrcp.pop %v2564
    %v2708 = vmul.f32 %v2428, %v2707
    %v2709 = vrcp.pop %v2567
    %v2710 = vmul.f32 %v2430, %v2709
    %v2711 = vrcp.pop %v2570
    %v2712 = vmul.f32 %v2432, %v2711
    %v2713 = vrcp.pop %v2573
    %v2714 = vmul.f32 %v2434, %v2713
    %v2715 = vrcp.pop %v2576
    %v2716 = vmul.f32 %v2436, %v2715
    %v2717 = vrcp.pop %v2579
    %v2718 = vmul.f32 %v2438, %v2717
    %v2719 = vrcp.pop %v2582
    %v2720 = vmul.f32 %v2440, %v2719
    %v2721 = vrcp.pop %v2585
    %v2722 = vmul.f32 %v2442, %v2721
    %v2723 = vrcp.pop %v2588
    %v2724 = vmul.f32 %v2444, %v2723
    %v2725 = vrcp.pop %v2591
    %v2726 = vmul.f32 %v2446, %v2725
    %v2727 = vrcp.pop %v2594
    %v2728 = vmul.f32 %v2448, %v2727
    %v2729 = vrcp.pop %v2597
    %v2730 = vmul.f32 %v2450, %v2729
    %v2731 = vrcp.pop %v2600
    %v2732 = vmul.f32 %v2452, %v2731
    %v2733 = vrcp.pop %v2603
    %v2734 = vmul.f32 %v2454, %v2733
    %v2735 = vrcp.pop %v2606
    %v2736 = vmul.f32 %v2456, %v2735
    %v2737 = vrcp.pop %v2609
    %v2738 = vmul.f32 %v2458, %v2737
    %v2739 = vrcp.pop %v2612
    %v2740 = vmul.f32 %v2460, %v2739
    %v2741 = vrcp.pop %v2615
    %v2742 = vmul.f32 %v2462, %v2741
    %v2743 = vrcp.pop %v2618
    %v2744 = vmul.f32 %v2464, %v2743
    %v2745 = vrcp.pop %v2621
    %v2746 = vmul.f32 %v2466, %v2745
    %v2747 = vrcp.pop %v2624
    %v2748 = vmul.f32 %v2468, %v2747
    %v2749 = vrcp.pop %v2627
    %v2750 = vmul.f32 %v2470, %v2749
    %v2751 = vrcp.pop %v2630
    %v2752 = vmul.f32 %v2472, %v2751
    %v2753 = vrcp.pop %v2633
    %v2754 = vmul.f32 %v2474, %v2753
    %v2755 = vrcp.pop %v2636
    %v2756 = vmul.f32 %v2476, %v2755
    %v2757 = vrcp.pop %v2639
    %v2758 = vmul.f32 %v2478, %v2757
    %v2759 = vrcp.pop %v2642
    %v2760 = vmul.f32 %v2480, %v2759
    %v2761 = vrcp.pop %v2645
    %v2762 = vmul.f32 %v2482, %v2761
    %v2763 = vrcp.pop %v2648
    %v2764 = vmul.f32 %v2484, %v2763
    %v2765 = vrcp.pop %v2651
    %v2766 = vmul.f32 %v2486, %v2765
    %v2767 = vrcp.pop %v2654
    %v2768 = vmul.f32 %v2488, %v2767
    %v2769 = vrcp.pop %v2657
    %v2770 = vmul.f32 %v2490, %v2769
    %v2771 = vrcp.pop %v2660
    %v2772 = vmul.f32 %v2492, %v2771
    %v2773 = vpack.c.bf16 %v2664, %v2662
    %v2774 = vpack.c.bf16 %v2668, %v2666
    %v2775 = vpack.c.bf16 %v2672, %v2670
    %v2776 = vpack.c.bf16 %v2674, %v2674
    %v2777 = vpack.c.bf16 %v2678, %v2676
    %v2778 = vpack.c.bf16 %v2682, %v2680
    %v2779 = vpack.c.bf16 %v2686, %v2684
    %v2780 = vpack.c.bf16 %v2688, %v2688
    %v2781 = vpack.c.bf16 %v2692, %v2690
    %v2782 = vpack.c.bf16 %v2696, %v2694
    %v2783 = vpack.c.bf16 %v2700, %v2698
    %v2784 = vpack.c.bf16 %v2702, %v2702
    %v2785 = vpack.c.bf16 %v2706, %v2704
    %v2786 = vpack.c.bf16 %v2710, %v2708
    %v2787 = vpack.c.bf16 %v2714, %v2712
    %v2788 = vpack.c.bf16 %v2716, %v2716
    %v2789 = vpack.c.bf16 %v2720, %v2718
    %v2790 = vpack.c.bf16 %v2724, %v2722
    %v2791 = vpack.c.bf16 %v2728, %v2726
    %v2792 = vpack.c.bf16 %v2730, %v2730
    %v2793 = vpack.c.bf16 %v2734, %v2732
    %v2794 = vpack.c.bf16 %v2738, %v2736
    %v2795 = vpack.c.bf16 %v2742, %v2740
    %v2796 = vpack.c.bf16 %v2744, %v2744
    %v2797 = vpack.c.bf16 %v2748, %v2746
    %v2798 = vpack.c.bf16 %v2752, %v2750
    %v2799 = vpack.c.bf16 %v2756, %v2754
    %v2800 = vpack.c.bf16 %v2758, %v2758
    %v2801 = vpack.c.bf16 %v2762, %v2760
    %v2802 = vpack.c.bf16 %v2766, %v2764
    %v2803 = vpack.c.bf16 %v2770, %v2768
    %v2804 = vpack.c.bf16 %v2772, %v2772
    %2805 = vrot.lane.b32.xlu0 %v1292, 64
    %v2806 = vpop.permute.xlu0 %2805
    %2807 = vrot.lane.b32.xlu0 %v1293, 64
    %v2808 = vpop.permute.xlu0 %2807
    %2809 = vrot.lane.b32.xlu0 %v1294, 64
    %v2810 = vpop.permute.xlu0 %2809
    %2811 = vrot.lane.b32.xlu0 %v1295, 64
    %v2812 = vpop.permute.xlu0 %2811
    %2813 = vrot.lane.b32.xlu0 %v1296, 64
    %v2814 = vpop.permute.xlu0 %2813
    %2815 = vrot.lane.b32.xlu0 %v1297, 64
    %v2816 = vpop.permute.xlu0 %2815
    %2817 = vrot.lane.b32.xlu0 %v1298, 64
    %v2818 = vpop.permute.xlu0 %2817
    %v2819 = vrot.slane %v2806, 4
    %v2820 = vrot.slane %v2808, 4
    %v2821 = vrot.slane %v2810, 4
    %v2822 = vrot.slane %v2812, 4
    %v2823 = vrot.slane %v2814, 4
    %v2824 = vrot.slane %v2816, 4
    %v2825 = vrot.slane %v2818, 4
    %v2826 = vunpack.c.l.b16 %v2819
    %v2827 = vunpack.c.l.b16 %v2820
    %v2828 = vunpack.c.l.b16 %v2821
    %v2829 = vunpack.c.l.b16 %v2822
    %v2830 = vunpack.c.l.b16 %v2823
    %v2831 = vunpack.c.l.b16 %v2824
    %v2832 = vunpack.c.l.b16 %v2825
    %v2833 = vpack.c.b16 %v2827, %v2826
    %v2834 = vpack.c.b16 %v2829, %v2828
    %v2835 = vpack.c.b16 %v2831, %v2830
    %v2836 = vpack.c.b16 %v2832, %v2832
    %v2841 = vsel %vm2156, %v2773, 0
    %v2844 = vsel %vm2156, %v2774, 0
    %v2847 = vsel %vm2156, %v2775, 0
    %v2850 = vsel %vm2156, %v2776, 0
    %vm2852 = vcmask 1043456
    %v2854 = vsel %vm2852, %v2836, 0
    %2856 = vmatprep.subr.bf16.mxu0 0
    %2857 = vmatpush1.bf16.msra.mxu0 %v2833
    %2858 = vmatprep.subr.bf16.mxu0 0
    %2859 = vmatpush1.bf16.msra.mxu0 %v2834
    %2860 = vmatprep.subr.bf16.mxu0 0
    %2861 = vmatpush1.bf16.msra.mxu0 %v2835
    %2862 = vmatprep.subr.bf16.mxu0 0
    %2863 = vmatpush1.bf16.msra.mxu0 %v2854
    %2864 = vmatprep.subr.bf16.mxu0 0
    %2865 = vmatpush1.bf16.msra.mxu0 0
    %2866 = vmatprep.subr.bf16.mxu0 0
    %2867 = vmatpush1.bf16.msra.mxu0 0
    %2868 = vmatprep.subr.bf16.mxu0 0
    %2869 = vmatpush1.bf16.msra.mxu0 0
    %2870 = vmatprep.subr.bf16.mxu0 0
    %2871 = vmatpush1.bf16.msra.mxu0 0
    %2872 = vmatprep.subr.bf16.mxu0 0
    %2873 = vmatpush1.bf16.msra.mxu0 0
    %2874 = vmatprep.subr.bf16.mxu0 0
    %2875 = vmatpush1.bf16.msra.mxu0 0
    %2876 = vmatprep.subr.bf16.mxu0 0
    %2877 = vmatpush1.bf16.msra.mxu0 0
    %2878 = vmatprep.subr.bf16.mxu0 0
    %2879 = vmatpush1.bf16.msra.mxu0 0
    %2880 = vmatprep.subr.bf16.mxu0 0
    %2881 = vmatpush1.bf16.msra.mxu0 0
    %2882 = vmatprep.subr.bf16.mxu0 0
    %2883 = vmatpush1.bf16.msra.mxu0 0
    %2884 = vmatprep.subr.bf16.mxu0 0
    %2885 = vmatpush1.bf16.msra.mxu0 0
    %2886 = vmatprep.subr.bf16.mxu0 0
    %2887 = vmatpush1.bf16.msra.mxu0 0
    %2888 = vmatprep.mubr.bf16.mxu0 0
    %2889 = vmatmul.mubr.bf16.gmra.mrb[0].mxu0 %v2841
    %v2890 = vpop.f32.mrb[0].mxu0
    %v2891 = vadd.f32 0.0, %v2890
    %v2892 = vpop.f32.mrb[0].mxu0
    %v2893 = vpop.f32.mrb[0].mxu0
    %v2894 = vadd.f32 0.0, %v2893
    %v2895 = vpop.f32.mrb[0].mxu0
    %2896 = vmatprep.mubr.bf16.mxu0 0
    %2897 = vmatmul.mubr.bf16.gmra.mrb[0].mxu0 %v2844
    %v2898 = vpop.f32.mrb[0].mxu0
    %v2899 = vadd.f32 0.0, %v2898
    %v2900 = vpop.f32.mrb[0].mxu0
    %v2901 = vpop.f32.mrb[0].mxu0
    %v2902 = vadd.f32 0.0, %v2901
    %v2903 = vpop.f32.mrb[0].mxu0
    %2904 = vmatprep.mubr.bf16.mxu0 0
    %2905 = vmatmul.mubr.bf16.gmra.mrb[0].mxu0 %v2847
    %v2906 = vpop.f32.mrb[0].mxu0
    %v2907 = vadd.f32 0.0, %v2906
    %v2908 = vpop.f32.mrb[0].mxu0
    %v2909 = vpop.f32.mrb[0].mxu0
    %v2910 = vadd.f32 0.0, %v2909
    %v2911 = vpop.f32.mrb[0].mxu0
    %2912 = vmatprep.mubr.bf16.mxu0 0
    %2913 = vmatmul.mubr.bf16.gmra.mrb[0].mxu0 %v2850
    %v2914 = vpop.f32.mrb[0].mxu0
    %v2915 = vadd.f32 0.0, %v2914
    %v2916 = vpop.f32.mrb[0].mxu0
    %v2917 = vpop.f32.mrb[0].mxu0
    %v2918 = vpop.f32.mrb[0].mxu0
    %2919 = vdwg.mxu0
    %2920 = vrot.lane.b32.xlu0 %v1299, 64
    %v2921 = vpop.permute.xlu0 %2920
    %2922 = vrot.lane.b32.xlu0 %v1300, 64
    %v2923 = vpop.permute.xlu0 %2922
    %2924 = vrot.lane.b32.xlu0 %v1301, 64
    %v2925 = vpop.permute.xlu0 %2924
    %2926 = vrot.lane.b32.xlu0 %v1302, 64
    %v2927 = vpop.permute.xlu0 %2926
    %2928 = vrot.lane.b32.xlu0 %v1303, 64
    %v2929 = vpop.permute.xlu0 %2928
    %2930 = vrot.lane.b32.xlu0 %v1304, 64
    %v2931 = vpop.permute.xlu0 %2930
    %2932 = vrot.lane.b32.xlu0 %v1305, 64
    %v2933 = vpop.permute.xlu0 %2932
    %v2934 = vrot.slane %v2921, 4
    %v2935 = vrot.slane %v2923, 4
    %v2936 = vrot.slane %v2925, 4
    %v2937 = vrot.slane %v2927, 4
    %v2938 = vrot.slane %v2929, 4
    %v2939 = vrot.slane %v2931, 4
    %v2940 = vrot.slane %v2933, 4
    %v2941 = vunpack.c.l.b16 %v2934
    %v2942 = vunpack.c.l.b16 %v2935
    %v2943 = vunpack.c.l.b16 %v2936
    %v2944 = vunpack.c.l.b16 %v2937
    %v2945 = vunpack.c.l.b16 %v2938
    %v2946 = vunpack.c.l.b16 %v2939
    %v2947 = vunpack.c.l.b16 %v2940
    %v2948 = vpack.c.b16 %v2942, %v2941
    %v2949 = vpack.c.b16 %v2944, %v2943
    %v2950 = vpack.c.b16 %v2946, %v2945
    %v2951 = vpack.c.b16 %v2947, %v2947
    %v2956 = vsel %vm2156, %v2777, 0
    %v2959 = vsel %vm2156, %v2778, 0
    %v2962 = vsel %vm2156, %v2779, 0
    %v2965 = vsel %vm2156, %v2780, 0
    %v2968 = vsel %vm2852, %v2951, 0
    %2970 = vmatprep.subr.bf16.mxu0 0
    %2971 = vmatpush1.bf16.msra.mxu0 %v2948
    %2972 = vmatprep.subr.bf16.mxu0 0
    %2973 = vmatpush1.bf16.msra.mxu0 %v2949
    %2974 = vmatprep.subr.bf16.mxu0 0
    %2975 = vmatpush1.bf16.msra.mxu0 %v2950
    %2976 = vmatprep.subr.bf16.mxu0 0
    %2977 = vmatpush1.bf16.msra.mxu0 %v2968
    %2978 = vmatprep.subr.bf16.mxu0 0
    %2979 = vmatpush1.bf16.msra.mxu0 0
    %2980 = vmatprep.subr.bf16.mxu0 0
    %2981 = vmatpush1.bf16.msra.mxu0 0
    %2982 = vmatprep.subr.bf16.mxu0 0
    %2983 = vmatpush1.bf16.msra.mxu0 0
    %2984 = vmatprep.subr.bf16.mxu0 0
    %2985 = vmatpush1.bf16.msra.mxu0 0
    %2986 = vmatprep.subr.bf16.mxu0 0
    %2987 = vmatpush1.bf16.msra.mxu0 0
    %2988 = vmatprep.subr.bf16.mxu0 0
    %2989 = vmatpush1.bf16.msra.mxu0 0
    %2990 = vmatprep.subr.bf16.mxu0 0
    %2991 = vmatpush1.bf16.msra.mxu0 0
    %2992 = vmatprep.subr.bf16.mxu0 0
    %2993 = vmatpush1.bf16.msra.mxu0 0
    %2994 = vmatprep.subr.bf16.mxu0 0
    %2995 = vmatpush1.bf16.msra.mxu0 0
    %2996 = vmatprep.subr.bf16.mxu0 0
    %2997 = vmatpush1.bf16.msra.mxu0 0
    %2998 = vmatprep.subr.bf16.mxu0 0
    %2999 = vmatpush1.bf16.msra.mxu0 0
    %3000 = vmatprep.subr.bf16.mxu0 0
    %3001 = vmatpush1.bf16.msra.mxu0 0
    %3002 = vmatprep.mubr.bf16.mxu0 0
    %3003 = vmatmul.mubr.bf16.gmra.mrb[0].mxu0 %v2956
    %v3004 = vpop.f32.mrb[0].mxu0
    %v3005 = vadd.f32 0.0, %v3004
    %v3006 = vpop.f32.mrb[0].mxu0
    %v3007 = vpop.f32.mrb[0].mxu0
    %v3008 = vadd.f32 0.0, %v3007
    %v3009 = vpop.f32.mrb[0].mxu0
    %3010 = vmatprep.mubr.bf16.mxu0 0
    %3011 = vmatmul.mubr.bf16.gmra.mrb[0].mxu0 %v2959
    %v3012 = vpop.f32.mrb[0].mxu0
    %v3013 = vadd.f32 0.0, %v3012
    %v3014 = vpop.f32.mrb[0].mxu0
    %v3015 = vpop.f32.mrb[0].mxu0
    %v3016 = vadd.f32 0.0, %v3015
    %v3017 = vpop.f32.mrb[0].mxu0
    %3018 = vmatprep.mubr.bf16.mxu0 0
    %3019 = vmatmul.mubr.bf16.gmra.mrb[0].mxu0 %v2962
    %v3020 = vpop.f32.mrb[0].mxu0
    %v3021 = vadd.f32 0.0, %v3020
    %v3022 = vpop.f32.mrb[0].mxu0
    %v3023 = vpop.f32.mrb[0].mxu0
    %v3024 = vadd.f32 0.0, %v3023
    %v3025 = vpop.f32.mrb[0].mxu0
    %3026 = vmatprep.mubr.bf16.mxu0 0
    %3027 = vmatmul.mubr.bf16.gmra.mrb[0].mxu0 %v2965
    %v3028 = vpop.f32.mrb[0].mxu0
    %v3029 = vadd.f32 0.0, %v3028
    %v3030 = vpop.f32.mrb[0].mxu0
    %v3031 = vpop.f32.mrb[0].mxu0
    %v3032 = vpop.f32.mrb[0].mxu0
    %3033 = vdwg.mxu0
    %3034 = vrot.lane.b32.xlu0 %v1306, 64
    %v3035 = vpop.permute.xlu0 %3034
    %3036 = vrot.lane.b32.xlu0 %v1307, 64
    %v3037 = vpop.permute.xlu0 %3036
    %3038 = vrot.lane.b32.xlu0 %v1308, 64
    %v3039 = vpop.permute.xlu0 %3038
    %3040 = vrot.lane.b32.xlu0 %v1309, 64
    %v3041 = vpop.permute.xlu0 %3040
    %3042 = vrot.lane.b32.xlu0 %v1310, 64
    %v3043 = vpop.permute.xlu0 %3042
    %3044 = vrot.lane.b32.xlu0 %v1311, 64
    %v3045 = vpop.permute.xlu0 %3044
    %3046 = vrot.lane.b32.xlu0 %v1312, 64
    %v3047 = vpop.permute.xlu0 %3046
    %v3048 = vrot.slane %v3035, 4
    %v3049 = vrot.slane %v3037, 4
    %v3050 = vrot.slane %v3039, 4
    %v3051 = vrot.slane %v3041, 4
    %v3052 = vrot.slane %v3043, 4
    %v3053 = vrot.slane %v3045, 4
    %v3054 = vrot.slane %v3047, 4
    %v3055 = vunpack.c.l.b16 %v3048
    %v3056 = vunpack.c.l.b16 %v3049
    %v3057 = vunpack.c.l.b16 %v3050
    %v3058 = vunpack.c.l.b16 %v3051
    %v3059 = vunpack.c.l.b16 %v3052
    %v3060 = vunpack.c.l.b16 %v3053
    %v3061 = vunpack.c.l.b16 %v3054
    %v3062 = vpack.c.b16 %v3056, %v3055
    %v3063 = vpack.c.b16 %v3058, %v3057
    %v3064 = vpack.c.b16 %v3060, %v3059
    %v3065 = vpack.c.b16 %v3061, %v3061
    %v3070 = vsel %vm2156, %v2781, 0
    %v3073 = vsel %vm2156, %v2782, 0
    %v3076 = vsel %vm2156, %v2783, 0
    %v3079 = vsel %vm2156, %v2784, 0
    %v3082 = vsel %vm2852, %v3065, 0
    %3084 = vmatprep.subr.bf16.mxu0 0
    %3085 = vmatpush1.bf16.msra.mxu0 %v3062
    %3086 = vmatprep.subr.bf16.mxu0 0
    %3087 = vmatpush1.bf16.msra.mxu0 %v3063
    %3088 = vmatprep.subr.bf16.mxu0 0
    %3089 = vmatpush1.bf16.msra.mxu0 %v3064
    %3090 = vmatprep.subr.bf16.mxu0 0
    %3091 = vmatpush1.bf16.msra.mxu0 %v3082
    %3092 = vmatprep.subr.bf16.mxu0 0
    %3093 = vmatpush1.bf16.msra.mxu0 0
    %3094 = vmatprep.subr.bf16.mxu0 0
    %3095 = vmatpush1.bf16.msra.mxu0 0
    %3096 = vmatprep.subr.bf16.mxu0 0
    %3097 = vmatpush1.bf16.msra.mxu0 0
    %3098 = vmatprep.subr.bf16.mxu0 0
    %3099 = vmatpush1.bf16.msra.mxu0 0
    %3100 = vmatprep.subr.bf16.mxu0 0
    %3101 = vmatpush1.bf16.msra.mxu0 0
    %3102 = vmatprep.subr.bf16.mxu0 0
    %3103 = vmatpush1.bf16.msra.mxu0 0
    %3104 = vmatprep.subr.bf16.mxu0 0
    %3105 = vmatpush1.bf16.msra.mxu0 0
    %3106 = vmatprep.subr.bf16.mxu0 0
    %3107 = vmatpush1.bf16.msra.mxu0 0
    %3108 = vmatprep.subr.bf16.mxu0 0
    %3109 = vmatpush1.bf16.msra.mxu0 0
    %3110 = vmatprep.subr.bf16.mxu0 0
    %3111 = vmatpush1.bf16.msra.mxu0 0
    %3112 = vmatprep.subr.bf16.mxu0 0
    %3113 = vmatpush1.bf16.msra.mxu0 0
    %3114 = vmatprep.subr.bf16.mxu0 0
    %3115 = vmatpush1.bf16.msra.mxu0 0
    %3116 = vmatprep.mubr.bf16.mxu0 0
    %3117 = vmatmul.mubr.bf16.gmra.mrb[0].mxu0 %v3070
    %v3118 = vpop.f32.mrb[0].mxu0
    %v3119 = vadd.f32 0.0, %v3118
    %v3120 = vpop.f32.mrb[0].mxu0
    %v3121 = vpop.f32.mrb[0].mxu0
    %v3122 = vadd.f32 0.0, %v3121
    %v3123 = vpop.f32.mrb[0].mxu0
    %3124 = vmatprep.mubr.bf16.mxu0 0
    %3125 = vmatmul.mubr.bf16.gmra.mrb[0].mxu0 %v3073
    %v3126 = vpop.f32.mrb[0].mxu0
    %v3127 = vadd.f32 0.0, %v3126
    %v3128 = vpop.f32.mrb[0].mxu0
    %v3129 = vpop.f32.mrb[0].mxu0
    %v3130 = vadd.f32 0.0, %v3129
    %v3131 = vpop.f32.mrb[0].mxu0
    %3132 = vmatprep.mubr.bf16.mxu0 0
    %3133 = vmatmul.mubr.bf16.gmra.mrb[0].mxu0 %v3076
    %v3134 = vpop.f32.mrb[0].mxu0
    %v3135 = vadd.f32 0.0, %v3134
    %v3136 = vpop.f32.mrb[0].mxu0
    %v3137 = vpop.f32.mrb[0].mxu0
    %v3138 = vadd.f32 0.0, %v3137
    %v3139 = vpop.f32.mrb[0].mxu0
    %3140 = vmatprep.mubr.bf16.mxu0 0
    %3141 = vmatmul.mubr.bf16.gmra.mrb[0].mxu0 %v3079
    %v3142 = vpop.f32.mrb[0].mxu0
    %v3143 = vadd.f32 0.0, %v3142
    %v3144 = vpop.f32.mrb[0].mxu0
    %v3145 = vpop.f32.mrb[0].mxu0
    %v3146 = vpop.f32.mrb[0].mxu0
    %3147 = vdwg.mxu0
    %3148 = vrot.lane.b32.xlu0 %v1313, 64
    %v3149 = vpop.permute.xlu0 %3148
    %3150 = vrot.lane.b32.xlu0 %v1314, 64
    %v3151 = vpop.permute.xlu0 %3150
    %3152 = vrot.lane.b32.xlu0 %v1315, 64
    %v3153 = vpop.permute.xlu0 %3152
    %3154 = vrot.lane.b32.xlu0 %v1316, 64
    %v3155 = vpop.permute.xlu0 %3154
    %3156 = vrot.lane.b32.xlu0 %v1317, 64
    %v3157 = vpop.permute.xlu0 %3156
    %3158 = vrot.lane.b32.xlu0 %v1318, 64
    %v3159 = vpop.permute.xlu0 %3158
    %3160 = vrot.lane.b32.xlu0 %v1319, 64
    %v3161 = vpop.permute.xlu0 %3160
    %v3162 = vrot.slane %v3149, 4
    %v3163 = vrot.slane %v3151, 4
    %v3164 = vrot.slane %v3153, 4
    %v3165 = vrot.slane %v3155, 4
    %v3166 = vrot.slane %v3157, 4
    %v3167 = vrot.slane %v3159, 4
    %v3168 = vrot.slane %v3161, 4
    %v3169 = vunpack.c.l.b16 %v3162
    %v3170 = vunpack.c.l.b16 %v3163
    %v3171 = vunpack.c.l.b16 %v3164
    %v3172 = vunpack.c.l.b16 %v3165
    %v3173 = vunpack.c.l.b16 %v3166
    %v3174 = vunpack.c.l.b16 %v3167
    %v3175 = vunpack.c.l.b16 %v3168
    %v3176 = vpack.c.b16 %v3170, %v3169
    %v3177 = vpack.c.b16 %v3172, %v3171
    %v3178 = vpack.c.b16 %v3174, %v3173
    %v3179 = vpack.c.b16 %v3175, %v3175
    %v3184 = vsel %vm2156, %v2785, 0
    %v3187 = vsel %vm2156, %v2786, 0
    %v3190 = vsel %vm2156, %v2787, 0
    %v3193 = vsel %vm2156, %v2788, 0
    %v3196 = vsel %vm2852, %v3179, 0
    %3198 = vmatprep.subr.bf16.mxu0 0
    %3199 = vmatpush1.bf16.msra.mxu0 %v3176
    %3200 = vmatprep.subr.bf16.mxu0 0
    %3201 = vmatpush1.bf16.msra.mxu0 %v3177
    %3202 = vmatprep.subr.bf16.mxu0 0
    %3203 = vmatpush1.bf16.msra.mxu0 %v3178
    %3204 = vmatprep.subr.bf16.mxu0 0
    %3205 = vmatpush1.bf16.msra.mxu0 %v3196
    %3206 = vmatprep.subr.bf16.mxu0 0
    %3207 = vmatpush1.bf16.msra.mxu0 0
    %3208 = vmatprep.subr.bf16.mxu0 0
    %3209 = vmatpush1.bf16.msra.mxu0 0
    %3210 = vmatprep.subr.bf16.mxu0 0
    %3211 = vmatpush1.bf16.msra.mxu0 0
    %3212 = vmatprep.subr.bf16.mxu0 0
    %3213 = vmatpush1.bf16.msra.mxu0 0
    %3214 = vmatprep.subr.bf16.mxu0 0
    %3215 = vmatpush1.bf16.msra.mxu0 0
    %3216 = vmatprep.subr.bf16.mxu0 0
    %3217 = vmatpush1.bf16.msra.mxu0 0
    %3218 = vmatprep.subr.bf16.mxu0 0
    %3219 = vmatpush1.bf16.msra.mxu0 0
    %3220 = vmatprep.subr.bf16.mxu0 0
    %3221 = vmatpush1.bf16.msra.mxu0 0
    %3222 = vmatprep.subr.bf16.mxu0 0
    %3223 = vmatpush1.bf16.msra.mxu0 0
    %3224 = vmatprep.subr.bf16.mxu0 0
    %3225 = vmatpush1.bf16.msra.mxu0 0
    %3226 = vmatprep.subr.bf16.mxu0 0
    %3227 = vmatpush1.bf16.msra.mxu0 0
    %3228 = vmatprep.subr.bf16.mxu0 0
    %3229 = vmatpush1.bf16.msra.mxu0 0
    %3230 = vmatprep.mubr.bf16.mxu0 0
    %3231 = vmatmul.mubr.bf16.gmra.mrb[0].mxu0 %v3184
    %v3232 = vpop.f32.mrb[0].mxu0
    %v3233 = vadd.f32 0.0, %v3232
    %v3234 = vpop.f32.mrb[0].mxu0
    %v3235 = vpop.f32.mrb[0].mxu0
    %v3236 = vadd.f32 0.0, %v3235
    %v3237 = vpop.f32.mrb[0].mxu0
    %3238 = vmatprep.mubr.bf16.mxu0 0
    %3239 = vmatmul.mubr.bf16.gmra.mrb[0].mxu0 %v3187
    %v3240 = vpop.f32.mrb[0].mxu0
    %v3241 = vadd.f32 0.0, %v3240
    %v3242 = vpop.f32.mrb[0].mxu0
    %v3243 = vpop.f32.mrb[0].mxu0
    %v3244 = vadd.f32 0.0, %v3243
    %v3245 = vpop.f32.mrb[0].mxu0
    %3246 = vmatprep.mubr.bf16.mxu0 0
    %3247 = vmatmul.mubr.bf16.gmra.mrb[0].mxu0 %v3190
    %v3248 = vpop.f32.mrb[0].mxu0
    %v3249 = vadd.f32 0.0, %v3248
    %v3250 = vpop.f32.mrb[0].mxu0
    %v3251 = vpop.f32.mrb[0].mxu0
    %v3252 = vadd.f32 0.0, %v3251
    %v3253 = vpop.f32.mrb[0].mxu0
    %3254 = vmatprep.mubr.bf16.mxu0 0
    %3255 = vmatmul.mubr.bf16.gmra.mrb[0].mxu0 %v3193
    %v3256 = vpop.f32.mrb[0].mxu0
    %v3257 = vadd.f32 0.0, %v3256
    %v3258 = vpop.f32.mrb[0].mxu0
    %v3259 = vpop.f32.mrb[0].mxu0
    %v3260 = vpop.f32.mrb[0].mxu0
    %3261 = vdwg.mxu0
    %3262 = vrot.lane.b32.xlu0 %v1320, 64
    %v3263 = vpop.permute.xlu0 %3262
    %3264 = vrot.lane.b32.xlu0 %v1321, 64
    %v3265 = vpop.permute.xlu0 %3264
    %3266 = vrot.lane.b32.xlu0 %v1322, 64
    %v3267 = vpop.permute.xlu0 %3266
    %3268 = vrot.lane.b32.xlu0 %v1323, 64
    %v3269 = vpop.permute.xlu0 %3268
    %3270 = vrot.lane.b32.xlu0 %v1324, 64
    %v3271 = vpop.permute.xlu0 %3270
    %3272 = vrot.lane.b32.xlu0 %v1325, 64
    %v3273 = vpop.permute.xlu0 %3272
    %3274 = vrot.lane.b32.xlu0 %v1326, 64
    %v3275 = vpop.permute.xlu0 %3274
    %v3276 = vrot.slane %v3263, 4
    %v3277 = vrot.slane %v3265, 4
    %v3278 = vrot.slane %v3267, 4
    %v3279 = vrot.slane %v3269, 4
    %v3280 = vrot.slane %v3271, 4
    %v3281 = vrot.slane %v3273, 4
    %v3282 = vrot.slane %v3275, 4
    %v3283 = vunpack.c.l.b16 %v3276
    %v3284 = vunpack.c.l.b16 %v3277
    %v3285 = vunpack.c.l.b16 %v3278
    %v3286 = vunpack.c.l.b16 %v3279
    %v3287 = vunpack.c.l.b16 %v3280
    %v3288 = vunpack.c.l.b16 %v3281
    %v3289 = vunpack.c.l.b16 %v3282
    %v3290 = vpack.c.b16 %v3284, %v3283
    %v3291 = vpack.c.b16 %v3286, %v3285
    %v3292 = vpack.c.b16 %v3288, %v3287
    %v3293 = vpack.c.b16 %v3289, %v3289
    %v3298 = vsel %vm2156, %v2789, 0
    %v3301 = vsel %vm2156, %v2790, 0
    %v3304 = vsel %vm2156, %v2791, 0
    %v3307 = vsel %vm2156, %v2792, 0
    %v3310 = vsel %vm2852, %v3293, 0
    %3312 = vmatprep.subr.bf16.mxu0 0
    %3313 = vmatpush1.bf16.msra.mxu0 %v3290
    %3314 = vmatprep.subr.bf16.mxu0 0
    %3315 = vmatpush1.bf16.msra.mxu0 %v3291
    %3316 = vmatprep.subr.bf16.mxu0 0
    %3317 = vmatpush1.bf16.msra.mxu0 %v3292
    %3318 = vmatprep.subr.bf16.mxu0 0
    %3319 = vmatpush1.bf16.msra.mxu0 %v3310
    %3320 = vmatprep.subr.bf16.mxu0 0
    %3321 = vmatpush1.bf16.msra.mxu0 0
    %3322 = vmatprep.subr.bf16.mxu0 0
    %3323 = vmatpush1.bf16.msra.mxu0 0
    %3324 = vmatprep.subr.bf16.mxu0 0
    %3325 = vmatpush1.bf16.msra.mxu0 0
    %3326 = vmatprep.subr.bf16.mxu0 0
    %3327 = vmatpush1.bf16.msra.mxu0 0
    %3328 = vmatprep.subr.bf16.mxu0 0
    %3329 = vmatpush1.bf16.msra.mxu0 0
    %3330 = vmatprep.subr.bf16.mxu0 0
    %3331 = vmatpush1.bf16.msra.mxu0 0
    %3332 = vmatprep.subr.bf16.mxu0 0
    %3333 = vmatpush1.bf16.msra.mxu0 0
    %3334 = vmatprep.subr.bf16.mxu0 0
    %3335 = vmatpush1.bf16.msra.mxu0 0
    %3336 = vmatprep.subr.bf16.mxu0 0
    %3337 = vmatpush1.bf16.msra.mxu0 0
    %3338 = vmatprep.subr.bf16.mxu0 0
    %3339 = vmatpush1.bf16.msra.mxu0 0
    %3340 = vmatprep.subr.bf16.mxu0 0
    %3341 = vmatpush1.bf16.msra.mxu0 0
    %3342 = vmatprep.subr.bf16.mxu0 0
    %3343 = vmatpush1.bf16.msra.mxu0 0
    %3344 = vmatprep.mubr.bf16.mxu0 0
    %3345 = vmatmul.mubr.bf16.gmra.mrb[0].mxu0 %v3298
    %v3346 = vpop.f32.mrb[0].mxu0
    %v3347 = vadd.f32 0.0, %v3346
    %v3348 = vpop.f32.mrb[0].mxu0
    %v3349 = vpop.f32.mrb[0].mxu0
    %v3350 = vadd.f32 0.0, %v3349
    %v3351 = vpop.f32.mrb[0].mxu0
    %3352 = vmatprep.mubr.bf16.mxu0 0
    %3353 = vmatmul.mubr.bf16.gmra.mrb[0].mxu0 %v3301
    %v3354 = vpop.f32.mrb[0].mxu0
    %v3355 = vadd.f32 0.0, %v3354
    %v3356 = vpop.f32.mrb[0].mxu0
    %v3357 = vpop.f32.mrb[0].mxu0
    %v3358 = vadd.f32 0.0, %v3357
    %v3359 = vpop.f32.mrb[0].mxu0
    %3360 = vmatprep.mubr.bf16.mxu0 0
    %3361 = vmatmul.mubr.bf16.gmra.mrb[0].mxu0 %v3304
    %v3362 = vpop.f32.mrb[0].mxu0
    %v3363 = vadd.f32 0.0, %v3362
    %v3364 = vpop.f32.mrb[0].mxu0
    %v3365 = vpop.f32.mrb[0].mxu0
    %v3366 = vadd.f32 0.0, %v3365
    %v3367 = vpop.f32.mrb[0].mxu0
    %3368 = vmatprep.mubr.bf16.mxu0 0
    %3369 = vmatmul.mubr.bf16.gmra.mrb[0].mxu0 %v3307
    %v3370 = vpop.f32.mrb[0].mxu0
    %v3371 = vadd.f32 0.0, %v3370
    %v3372 = vpop.f32.mrb[0].mxu0
    %v3373 = vpop.f32.mrb[0].mxu0
    %v3374 = vpop.f32.mrb[0].mxu0
    %3375 = vdwg.mxu0
    %3376 = vrot.lane.b32.xlu0 %v1327, 64
    %v3377 = vpop.permute.xlu0 %3376
    %3378 = vrot.lane.b32.xlu0 %v1328, 64
    %v3379 = vpop.permute.xlu0 %3378
    %3380 = vrot.lane.b32.xlu0 %v1329, 64
    %v3381 = vpop.permute.xlu0 %3380
    %3382 = vrot.lane.b32.xlu0 %v1330, 64
    %v3383 = vpop.permute.xlu0 %3382
    %3384 = vrot.lane.b32.xlu0 %v1331, 64
    %v3385 = vpop.permute.xlu0 %3384
    %3386 = vrot.lane.b32.xlu0 %v1332, 64
    %v3387 = vpop.permute.xlu0 %3386
    %3388 = vrot.lane.b32.xlu0 %v1333, 64
    %v3389 = vpop.permute.xlu0 %3388
    %v3390 = vrot.slane %v3377, 4
    %v3391 = vrot.slane %v3379, 4
    %v3392 = vrot.slane %v3381, 4
    %v3393 = vrot.slane %v3383, 4
    %v3394 = vrot.slane %v3385, 4
    %v3395 = vrot.slane %v3387, 4
    %v3396 = vrot.slane %v3389, 4
    %v3397 = vunpack.c.l.b16 %v3390
    %v3398 = vunpack.c.l.b16 %v3391
    %v3399 = vunpack.c.l.b16 %v3392
    %v3400 = vunpack.c.l.b16 %v3393
    %v3401 = vunpack.c.l.b16 %v3394
    %v3402 = vunpack.c.l.b16 %v3395
    %v3403 = vunpack.c.l.b16 %v3396
    %v3404 = vpack.c.b16 %v3398, %v3397
    %v3405 = vpack.c.b16 %v3400, %v3399
    %v3406 = vpack.c.b16 %v3402, %v3401
    %v3407 = vpack.c.b16 %v3403, %v3403
    %v3412 = vsel %vm2156, %v2793, 0
    %v3415 = vsel %vm2156, %v2794, 0
    %v3418 = vsel %vm2156, %v2795, 0
    %v3421 = vsel %vm2156, %v2796, 0
    %v3424 = vsel %vm2852, %v3407, 0
    %3426 = vmatprep.subr.bf16.mxu0 0
    %3427 = vmatpush1.bf16.msra.mxu0 %v3404
    %3428 = vmatprep.subr.bf16.mxu0 0
    %3429 = vmatpush1.bf16.msra.mxu0 %v3405
    %3430 = vmatprep.subr.bf16.mxu0 0
    %3431 = vmatpush1.bf16.msra.mxu0 %v3406
    %3432 = vmatprep.subr.bf16.mxu0 0
    %3433 = vmatpush1.bf16.msra.mxu0 %v3424
    %3434 = vmatprep.subr.bf16.mxu0 0
    %3435 = vmatpush1.bf16.msra.mxu0 0
    %3436 = vmatprep.subr.bf16.mxu0 0
    %3437 = vmatpush1.bf16.msra.mxu0 0
    %3438 = vmatprep.subr.bf16.mxu0 0
    %3439 = vmatpush1.bf16.msra.mxu0 0
    %3440 = vmatprep.subr.bf16.mxu0 0
    %3441 = vmatpush1.bf16.msra.mxu0 0
    %3442 = vmatprep.subr.bf16.mxu0 0
    %3443 = vmatpush1.bf16.msra.mxu0 0
    %3444 = vmatprep.subr.bf16.mxu0 0
    %3445 = vmatpush1.bf16.msra.mxu0 0
    %3446 = vmatprep.subr.bf16.mxu0 0
    %3447 = vmatpush1.bf16.msra.mxu0 0
    %3448 = vmatprep.subr.bf16.mxu0 0
    %3449 = vmatpush1.bf16.msra.mxu0 0
    %3450 = vmatprep.subr.bf16.mxu0 0
    %3451 = vmatpush1.bf16.msra.mxu0 0
    %3452 = vmatprep.subr.bf16.mxu0 0
    %3453 = vmatpush1.bf16.msra.mxu0 0
    %3454 = vmatprep.subr.bf16.mxu0 0
    %3455 = vmatpush1.bf16.msra.mxu0 0
    %3456 = vmatprep.subr.bf16.mxu0 0
    %3457 = vmatpush1.bf16.msra.mxu0 0
    %3458 = vmatprep.mubr.bf16.mxu0 0
    %3459 = vmatmul.mubr.bf16.gmra.mrb[0].mxu0 %v3412
    %v3460 = vpop.f32.mrb[0].mxu0
    %v3461 = vadd.f32 0.0, %v3460
    %v3462 = vpop.f32.mrb[0].mxu0
    %v3463 = vpop.f32.mrb[0].mxu0
    %v3464 = vadd.f32 0.0, %v3463
    %v3465 = vpop.f32.mrb[0].mxu0
    %3466 = vmatprep.mubr.bf16.mxu0 0
    %3467 = vmatmul.mubr.bf16.gmra.mrb[0].mxu0 %v3415
    %v3468 = vpop.f32.mrb[0].mxu0
    %v3469 = vadd.f32 0.0, %v3468
    %v3470 = vpop.f32.mrb[0].mxu0
    %v3471 = vpop.f32.mrb[0].mxu0
    %v3472 = vadd.f32 0.0, %v3471
    %v3473 = vpop.f32.mrb[0].mxu0
    %3474 = vmatprep.mubr.bf16.mxu0 0
    %3475 = vmatmul.mubr.bf16.gmra.mrb[0].mxu0 %v3418
    %v3476 = vpop.f32.mrb[0].mxu0
    %v3477 = vadd.f32 0.0, %v3476
    %v3478 = vpop.f32.mrb[0].mxu0
    %v3479 = vpop.f32.mrb[0].mxu0
    %v3480 = vadd.f32 0.0, %v3479
    %v3481 = vpop.f32.mrb[0].mxu0
    %3482 = vmatprep.mubr.bf16.mxu0 0
    %3483 = vmatmul.mubr.bf16.gmra.mrb[0].mxu0 %v3421
    %v3484 = vpop.f32.mrb[0].mxu0
    %v3485 = vadd.f32 0.0, %v3484
    %v3486 = vpop.f32.mrb[0].mxu0
    %v3487 = vpop.f32.mrb[0].mxu0
    %v3488 = vpop.f32.mrb[0].mxu0
    %3489 = vdwg.mxu0
    %3490 = vrot.lane.b32.xlu0 %v1334, 64
    %v3491 = vpop.permute.xlu0 %3490
    %3492 = vrot.lane.b32.xlu0 %v1335, 64
    %v3493 = vpop.permute.xlu0 %3492
    %3494 = vrot.lane.b32.xlu0 %v1336, 64
    %v3495 = vpop.permute.xlu0 %3494
    %3496 = vrot.lane.b32.xlu0 %v1337, 64
    %v3497 = vpop.permute.xlu0 %3496
    %3498 = vrot.lane.b32.xlu0 %v1338, 64
    %v3499 = vpop.permute.xlu0 %3498
    %3500 = vrot.lane.b32.xlu0 %v1339, 64
    %v3501 = vpop.permute.xlu0 %3500
    %3502 = vrot.lane.b32.xlu0 %v1340, 64
    %v3503 = vpop.permute.xlu0 %3502
    %v3504 = vrot.slane %v3491, 4
    %v3505 = vrot.slane %v3493, 4
    %v3506 = vrot.slane %v3495, 4
    %v3507 = vrot.slane %v3497, 4
    %v3508 = vrot.slane %v3499, 4
    %v3509 = vrot.slane %v3501, 4
    %v3510 = vrot.slane %v3503, 4
    %v3511 = vunpack.c.l.b16 %v3504
    %v3512 = vunpack.c.l.b16 %v3505
    %v3513 = vunpack.c.l.b16 %v3506
    %v3514 = vunpack.c.l.b16 %v3507
    %v3515 = vunpack.c.l.b16 %v3508
    %v3516 = vunpack.c.l.b16 %v3509
    %v3517 = vunpack.c.l.b16 %v3510
    %v3518 = vpack.c.b16 %v3512, %v3511
    %v3519 = vpack.c.b16 %v3514, %v3513
    %v3520 = vpack.c.b16 %v3516, %v3515
    %v3521 = vpack.c.b16 %v3517, %v3517
    %v3526 = vsel %vm2156, %v2797, 0
    %v3529 = vsel %vm2156, %v2798, 0
    %v3532 = vsel %vm2156, %v2799, 0
    %v3535 = vsel %vm2156, %v2800, 0
    %v3538 = vsel %vm2852, %v3521, 0
    %3540 = vmatprep.subr.bf16.mxu0 0
    %3541 = vmatpush1.bf16.msra.mxu0 %v3518
    %3542 = vmatprep.subr.bf16.mxu0 0
    %3543 = vmatpush1.bf16.msra.mxu0 %v3519
    %3544 = vmatprep.subr.bf16.mxu0 0
    %3545 = vmatpush1.bf16.msra.mxu0 %v3520
    %3546 = vmatprep.subr.bf16.mxu0 0
    %3547 = vmatpush1.bf16.msra.mxu0 %v3538
    %3548 = vmatprep.subr.bf16.mxu0 0
    %3549 = vmatpush1.bf16.msra.mxu0 0
    %3550 = vmatprep.subr.bf16.mxu0 0
    %3551 = vmatpush1.bf16.msra.mxu0 0
    %3552 = vmatprep.subr.bf16.mxu0 0
    %3553 = vmatpush1.bf16.msra.mxu0 0
    %3554 = vmatprep.subr.bf16.mxu0 0
    %3555 = vmatpush1.bf16.msra.mxu0 0
    %3556 = vmatprep.subr.bf16.mxu0 0
    %3557 = vmatpush1.bf16.msra.mxu0 0
    %3558 = vmatprep.subr.bf16.mxu0 0
    %3559 = vmatpush1.bf16.msra.mxu0 0
    %3560 = vmatprep.subr.bf16.mxu0 0
    %3561 = vmatpush1.bf16.msra.mxu0 0
    %3562 = vmatprep.subr.bf16.mxu0 0
    %3563 = vmatpush1.bf16.msra.mxu0 0
    %3564 = vmatprep.subr.bf16.mxu0 0
    %3565 = vmatpush1.bf16.msra.mxu0 0
    %3566 = vmatprep.subr.bf16.mxu0 0
    %3567 = vmatpush1.bf16.msra.mxu0 0
    %3568 = vmatprep.subr.bf16.mxu0 0
    %3569 = vmatpush1.bf16.msra.mxu0 0
    %3570 = vmatprep.subr.bf16.mxu0 0
    %3571 = vmatpush1.bf16.msra.mxu0 0
    %3572 = vmatprep.mubr.bf16.mxu0 0
    %3573 = vmatmul.mubr.bf16.gmra.mrb[0].mxu0 %v3526
    %v3574 = vpop.f32.mrb[0].mxu0
    %v3575 = vadd.f32 0.0, %v3574
    %v3576 = vpop.f32.mrb[0].mxu0
    %v3577 = vpop.f32.mrb[0].mxu0
    %v3578 = vadd.f32 0.0, %v3577
    %v3579 = vpop.f32.mrb[0].mxu0
    %3580 = vmatprep.mubr.bf16.mxu0 0
    %3581 = vmatmul.mubr.bf16.gmra.mrb[0].mxu0 %v3529
    %v3582 = vpop.f32.mrb[0].mxu0
    %v3583 = vadd.f32 0.0, %v3582
    %v3584 = vpop.f32.mrb[0].mxu0
    %v3585 = vpop.f32.mrb[0].mxu0
    %v3586 = vadd.f32 0.0, %v3585
    %v3587 = vpop.f32.mrb[0].mxu0
    %3588 = vmatprep.mubr.bf16.mxu0 0
    %3589 = vmatmul.mubr.bf16.gmra.mrb[0].mxu0 %v3532
    %v3590 = vpop.f32.mrb[0].mxu0
    %v3591 = vadd.f32 0.0, %v3590
    %v3592 = vpop.f32.mrb[0].mxu0
    %v3593 = vpop.f32.mrb[0].mxu0
    %v3594 = vadd.f32 0.0, %v3593
    %v3595 = vpop.f32.mrb[0].mxu0
    %3596 = vmatprep.mubr.bf16.mxu0 0
    %3597 = vmatmul.mubr.bf16.gmra.mrb[0].mxu0 %v3535
    %v3598 = vpop.f32.mrb[0].mxu0
    %v3599 = vadd.f32 0.0, %v3598
    %v3600 = vpop.f32.mrb[0].mxu0
    %v3601 = vpop.f32.mrb[0].mxu0
    %v3602 = vpop.f32.mrb[0].mxu0
    %3603 = vdwg.mxu0
    %3604 = vrot.lane.b32.xlu0 %v1341, 64
    %v3605 = vpop.permute.xlu0 %3604
    %3606 = vrot.lane.b32.xlu0 %v1342, 64
    %v3607 = vpop.permute.xlu0 %3606
    %3608 = vrot.lane.b32.xlu0 %v1343, 64
    %v3609 = vpop.permute.xlu0 %3608
    %3610 = vrot.lane.b32.xlu0 %v1344, 64
    %v3611 = vpop.permute.xlu0 %3610
    %3612 = vrot.lane.b32.xlu0 %v1345, 64
    %v3613 = vpop.permute.xlu0 %3612
    %3614 = vrot.lane.b32.xlu0 %v1346, 64
    %v3615 = vpop.permute.xlu0 %3614
    %3616 = vrot.lane.b32.xlu0 %v1347, 64
    %v3617 = vpop.permute.xlu0 %3616
    %v3618 = vrot.slane %v3605, 4
    %v3619 = vrot.slane %v3607, 4
    %v3620 = vrot.slane %v3609, 4
    %v3621 = vrot.slane %v3611, 4
    %v3622 = vrot.slane %v3613, 4
    %v3623 = vrot.slane %v3615, 4
    %v3624 = vrot.slane %v3617, 4
    %v3625 = vunpack.c.l.b16 %v3618
    %v3626 = vunpack.c.l.b16 %v3619
    %v3627 = vunpack.c.l.b16 %v3620
    %v3628 = vunpack.c.l.b16 %v3621
    %v3629 = vunpack.c.l.b16 %v3622
    %v3630 = vunpack.c.l.b16 %v3623
    %v3631 = vunpack.c.l.b16 %v3624
    %v3632 = vpack.c.b16 %v3626, %v3625
    %v3633 = vpack.c.b16 %v3628, %v3627
    %v3634 = vpack.c.b16 %v3630, %v3629
    %v3635 = vpack.c.b16 %v3631, %v3631
    %v3640 = vsel %vm2156, %v2801, 0
    %v3643 = vsel %vm2156, %v2802, 0
    %v3646 = vsel %vm2156, %v2803, 0
    %v3649 = vsel %vm2156, %v2804, 0
    %v3652 = vsel %vm2852, %v3635, 0
    %3654 = vmatprep.subr.bf16.mxu0 0
    %3655 = vmatpush1.bf16.msra.mxu0 %v3632
    %3656 = vmatprep.subr.bf16.mxu0 0
    %3657 = vmatpush1.bf16.msra.mxu0 %v3633
    %3658 = vmatprep.subr.bf16.mxu0 0
    %3659 = vmatpush1.bf16.msra.mxu0 %v3634
    %3660 = vmatprep.subr.bf16.mxu0 0
    %3661 = vmatpush1.bf16.msra.mxu0 %v3652
    %3662 = vmatprep.subr.bf16.mxu0 0
    %3663 = vmatpush1.bf16.msra.mxu0 0
    %3664 = vmatprep.subr.bf16.mxu0 0
    %3665 = vmatpush1.bf16.msra.mxu0 0
    %3666 = vmatprep.subr.bf16.mxu0 0
    %3667 = vmatpush1.bf16.msra.mxu0 0
    %3668 = vmatprep.subr.bf16.mxu0 0
    %3669 = vmatpush1.bf16.msra.mxu0 0
    %3670 = vmatprep.subr.bf16.mxu0 0
    %3671 = vmatpush1.bf16.msra.mxu0 0
    %3672 = vmatprep.subr.bf16.mxu0 0
    %3673 = vmatpush1.bf16.msra.mxu0 0
    %3674 = vmatprep.subr.bf16.mxu0 0
    %3675 = vmatpush1.bf16.msra.mxu0 0
    %3676 = vmatprep.subr.bf16.mxu0 0
    %3677 = vmatpush1.bf16.msra.mxu0 0
    %3678 = vmatprep.subr.bf16.mxu0 0
    %3679 = vmatpush1.bf16.msra.mxu0 0
    %3680 = vmatprep.subr.bf16.mxu0 0
    %3681 = vmatpush1.bf16.msra.mxu0 0
    %3682 = vmatprep.subr.bf16.mxu0 0
    %3683 = vmatpush1.bf16.msra.mxu0 0
    %3684 = vmatprep.subr.bf16.mxu0 0
    %3685 = vmatpush1.bf16.msra.mxu0 0
    %3686 = vmatprep.mubr.bf16.mxu0 0
    %3687 = vmatmul.mubr.bf16.gmra.mrb[0].mxu0 %v3640
    %v3688 = vpop.f32.mrb[0].mxu0
    %v3689 = vadd.f32 0.0, %v3688
    %v3690 = vpop.f32.mrb[0].mxu0
    %v3691 = vpop.f32.mrb[0].mxu0
    %v3692 = vadd.f32 0.0, %v3691
    %v3693 = vpop.f32.mrb[0].mxu0
    %3694 = vmatprep.mubr.bf16.mxu0 0
    %3695 = vmatmul.mubr.bf16.gmra.mrb[0].mxu0 %v3643
    %v3696 = vpop.f32.mrb[0].mxu0
    %v3697 = vadd.f32 0.0, %v3696
    %v3698 = vpop.f32.mrb[0].mxu0
    %v3699 = vpop.f32.mrb[0].mxu0
    %v3700 = vadd.f32 0.0, %v3699
    %v3701 = vpop.f32.mrb[0].mxu0
    %3702 = vmatprep.mubr.bf16.mxu0 0
    %3703 = vmatmul.mubr.bf16.gmra.mrb[0].mxu0 %v3646
    %v3704 = vpop.f32.mrb[0].mxu0
    %v3705 = vadd.f32 0.0, %v3704
    %v3706 = vpop.f32.mrb[0].mxu0
    %v3707 = vpop.f32.mrb[0].mxu0
    %v3708 = vadd.f32 0.0, %v3707
    %v3709 = vpop.f32.mrb[0].mxu0
    %3710 = vmatprep.mubr.bf16.mxu0 0
    %3711 = vmatmul.mubr.bf16.gmra.mrb[0].mxu0 %v3649
    %v3712 = vpop.f32.mrb[0].mxu0
    %v3713 = vadd.f32 0.0, %v3712
    %v3714 = vpop.f32.mrb[0].mxu0
    %v3715 = vpop.f32.mrb[0].mxu0
    %v3716 = vpop.f32.mrb[0].mxu0
    %3717 = vdwg.mxu0
    %v3718 = vpack.c.bf16 %v2894, %v2891
    %v3719 = vpack.c.bf16 %v2902, %v2899
    %v3720 = vpack.c.bf16 %v2910, %v2907
    %v3721 = vpack.c.bf16 %v2915, %v2915
    %v3722 = vpack.c.bf16 %v3008, %v3005
    %v3723 = vpack.c.bf16 %v3016, %v3013
    %v3724 = vpack.c.bf16 %v3024, %v3021
    %v3725 = vpack.c.bf16 %v3029, %v3029
    %v3726 = vpack.c.bf16 %v3122, %v3119
    %v3727 = vpack.c.bf16 %v3130, %v3127
    %v3728 = vpack.c.bf16 %v3138, %v3135
    %v3729 = vpack.c.bf16 %v3143, %v3143
    %v3730 = vpack.c.bf16 %v3236, %v3233
    %v3731 = vpack.c.bf16 %v3244, %v3241
    %v3732 = vpack.c.bf16 %v3252, %v3249
    %v3733 = vpack.c.bf16 %v3257, %v3257
    %v3734 = vpack.c.bf16 %v3350, %v3347
    %v3735 = vpack.c.bf16 %v3358, %v3355
    %v3736 = vpack.c.bf16 %v3366, %v3363
    %v3737 = vpack.c.bf16 %v3371, %v3371
    %v3738 = vpack.c.bf16 %v3464, %v3461
    %v3739 = vpack.c.bf16 %v3472, %v3469
    %v3740 = vpack.c.bf16 %v3480, %v3477
    %v3741 = vpack.c.bf16 %v3485, %v3485
    %v3742 = vpack.c.bf16 %v3578, %v3575
    %v3743 = vpack.c.bf16 %v3586, %v3583
    %v3744 = vpack.c.bf16 %v3594, %v3591
    %v3745 = vpack.c.bf16 %v3599, %v3599
    %v3746 = vpack.c.bf16 %v3692, %v3689
    %v3747 = vpack.c.bf16 %v3700, %v3697
    %v3748 = vpack.c.bf16 %v3708, %v3705
    %v3749 = vpack.c.bf16 %v3713, %v3713
    %s3750 = scalar_lea.vmem [#allocation7], 56
    %v3751 = vld [vmem:[%s3750] sm:$0xff]
    %v3752 = vld [vmem:[%s3750 + $0x8] sm:$0xff]
    %v3753 = vld [vmem:[%s3750 + $0x10] sm:$0xff]
    %v3754 = vld [vmem:[%s3750 + $0x18] sm:$0xff]
    %v3755 = vld [vmem:[%s3750 + $0x20] sm:$0xff]
    %v3756 = vld [vmem:[%s3750 + $0x28] sm:$0xff]
    %v3757 = vld [vmem:[%s3750 + $0x30] sm:$0xff]
    %v3758 = vrot.slane %v1292, 4
    %v3759 = vrot.slane %v1293, 4
    %v3760 = vrot.slane %v1294, 4
    %v3761 = vrot.slane %v1295, 4
    %v3762 = vrot.slane %v1296, 4
    %v3763 = vrot.slane %v1297, 4
    %v3764 = vrot.slane %v1298, 4
    %3765 = vrot.lane.b32.xlu0 %v1355, 96
    %v3766 = vpop.permute.xlu0 %3765
    %3767 = vrot.lane.b32.xlu0 %v1356, 96
    %v3768 = vpop.permute.xlu0 %3767
    %3769 = vrot.lane.b32.xlu0 %v1357, 96
    %v3770 = vpop.permute.xlu0 %3769
    %3771 = vrot.lane.b32.xlu0 %v1358, 96
    %v3772 = vpop.permute.xlu0 %3771
    %v3773 = vunpack.c.l.b16 %v3758
    %v3774 = vunpack.c.l.b16 %v3759
    %v3775 = vunpack.c.l.b16 %v3760
    %v3776 = vunpack.c.l.b16 %v3761
    %v3777 = vunpack.c.l.b16 %v3762
    %v3778 = vunpack.c.l.b16 %v3763
    %v3779 = vunpack.c.l.b16 %v3764
    %v3780 = vpack.c.b16 %v3774, %v3773
    %v3781 = vpack.c.b16 %v3776, %v3775
    %v3782 = vpack.c.b16 %v3778, %v3777
    %v3783 = vpack.c.b16 %v3779, %v3779
    %v3785 = vsel %vm1367, %v3766, 0
    %v3788 = vsel %vm1367, %v3768, 0
    %v3791 = vsel %vm1367, %v3770, 0
    %v3794 = vsel %vm1367, %v3772, 0
    %v3797 = vsel %vm1367, %v3780, 0
    %v3800 = vsel %vm1367, %v3781, 0
    %v3803 = vsel %vm1367, %v3782, 0
    %v3806 = vsel %vm1367, %v3783, 0
    %3808 = vmatprep.subr.bf16.mxu0 0
    %3809 = vmatpush1.bf16.xpose.msra.mxu0 %v3797
    %3810 = vmatprep.subr.bf16.mxu0 0
    %3811 = vmatpush1.bf16.xpose.msra.mxu0 %v3800
    %3812 = vmatprep.subr.bf16.mxu0 0
    %3813 = vmatpush1.bf16.xpose.msra.mxu0 %v3803
    %3814 = vmatprep.subr.bf16.mxu0 0
    %3815 = vmatpush1.bf16.xpose.msra.mxu0 %v3806
    %3816 = vmatprep.subr.bf16.mxu0 0
    %3817 = vmatpush1.bf16.xpose.msra.mxu0 0
    %3818 = vmatprep.subr.bf16.mxu0 0
    %3819 = vmatpush1.bf16.xpose.msra.mxu0 0
    %3820 = vmatprep.subr.bf16.mxu0 0
    %3821 = vmatpush1.bf16.xpose.msra.mxu0 0
    %3822 = vmatprep.subr.bf16.mxu0 0
    %3823 = vmatpush1.bf16.xpose.msra.mxu0 0
    %3824 = vmatprep.subr.bf16.mxu0 0
    %3825 = vmatpush1.bf16.xpose.msra.mxu0 0
    %3826 = vmatprep.subr.bf16.mxu0 0
    %3827 = vmatpush1.bf16.xpose.msra.mxu0 0
    %3828 = vmatprep.subr.bf16.mxu0 0
    %3829 = vmatpush1.bf16.xpose.msra.mxu0 0
    %3830 = vmatprep.subr.bf16.mxu0 0
    %3831 = vmatpush1.bf16.xpose.msra.mxu0 0
    %3832 = vmatprep.subr.bf16.mxu0 0
    %3833 = vmatpush1.bf16.xpose.msra.mxu0 0
    %3834 = vmatprep.subr.bf16.mxu0 0
    %3835 = vmatpush1.bf16.xpose.msra.mxu0 0
    %3836 = vmatprep.subr.bf16.mxu0 0
    %3837 = vmatpush1.bf16.xpose.msra.mxu0 0
    %3838 = vmatprep.subr.bf16.mxu0 0
    %3839 = vmatpush1.bf16.xpose.msra.mxu0 0
    %3840 = vmatprep.mubr.bf16.mxu0 0
    %3841 = vmatmul.mubr.bf16.gmra.mrb[0].mxu0 %v3785
    %v3842 = vpop.f32.mrb[0].mxu0
    %v3843 = vadd.f32 %v3751, %v3842
    %v3844 = vpop.f32.mrb[0].mxu0
    %v3845 = vpop.f32.mrb[0].mxu0
    %v3846 = vadd.f32 %v3752, %v3845
    %v3847 = vpop.f32.mrb[0].mxu0
    %3848 = vmatprep.mubr.bf16.mxu0 0
    %3849 = vmatmul.mubr.bf16.gmra.mrb[0].mxu0 %v3788
    %v3850 = vpop.f32.mrb[0].mxu0
    %v3851 = vadd.f32 %v3753, %v3850
    %v3852 = vpop.f32.mrb[0].mxu0
    %v3853 = vpop.f32.mrb[0].mxu0
    %v3854 = vadd.f32 %v3754, %v3853
    %v3855 = vpop.f32.mrb[0].mxu0
    %3856 = vmatprep.mubr.bf16.mxu0 0
    %3857 = vmatmul.mubr.bf16.gmra.mrb[0].mxu0 %v3791
    %v3858 = vpop.f32.mrb[0].mxu0
    %v3859 = vadd.f32 %v3755, %v3858
    %v3860 = vpop.f32.mrb[0].mxu0
    %v3861 = vpop.f32.mrb[0].mxu0
    %v3862 = vadd.f32 %v3756, %v3861
    %v3863 = vpop.f32.mrb[0].mxu0
    %3864 = vmatprep.mubr.bf16.mxu0 0
    %3865 = vmatmul.mubr.bf16.gmra.mrb[0].mxu0 %v3794
    %v3866 = vpop.f32.mrb[0].mxu0
    %v3867 = vadd.f32 %v3757, %v3866
    %v3868 = vpop.f32.mrb[0].mxu0
    %v3869 = vpop.f32.mrb[0].mxu0
    %v3870 = vpop.f32.mrb[0].mxu0
    %3871 = vdwg.mxu0
    %v3872 = vrot.slane %v1299, 4
    %v3873 = vrot.slane %v1300, 4
    %v3874 = vrot.slane %v1301, 4
    %v3875 = vrot.slane %v1302, 4
    %v3876 = vrot.slane %v1303, 4
    %v3877 = vrot.slane %v1304, 4
    %v3878 = vrot.slane %v1305, 4
    %3879 = vrot.lane.b32.xlu0 %v1456, 96
    %v3880 = vpop.permute.xlu0 %3879
    %3881 = vrot.lane.b32.xlu0 %v1457, 96
    %v3882 = vpop.permute.xlu0 %3881
    %3883 = vrot.lane.b32.xlu0 %v1458, 96
    %v3884 = vpop.permute.xlu0 %3883
    %3885 = vrot.lane.b32.xlu0 %v1459, 96
    %v3886 = vpop.permute.xlu0 %3885
    %v3887 = vunpack.c.l.b16 %v3872
    %v3888 = vunpack.c.l.b16 %v3873
    %v3889 = vunpack.c.l.b16 %v3874
    %v3890 = vunpack.c.l.b16 %v3875
    %v3891 = vunpack.c.l.b16 %v3876
    %v3892 = vunpack.c.l.b16 %v3877
    %v3893 = vunpack.c.l.b16 %v3878
    %v3894 = vpack.c.b16 %v3888, %v3887
    %v3895 = vpack.c.b16 %v3890, %v3889
    %v3896 = vpack.c.b16 %v3892, %v3891
    %v3897 = vpack.c.b16 %v3893, %v3893
    %v3899 = vsel %vm1367, %v3880, 0
    %v3902 = vsel %vm1367, %v3882, 0
    %v3905 = vsel %vm1367, %v3884, 0
    %v3908 = vsel %vm1367, %v3886, 0
    %v3911 = vsel %vm1367, %v3894, 0
    %v3914 = vsel %vm1367, %v3895, 0
    %v3917 = vsel %vm1367, %v3896, 0
    %v3920 = vsel %vm1367, %v3897, 0
    %3922 = vmatprep.subr.bf16.mxu0 0
    %3923 = vmatpush1.bf16.xpose.msra.mxu0 %v3911
    %3924 = vmatprep.subr.bf16.mxu0 0
    %3925 = vmatpush1.bf16.xpose.msra.mxu0 %v3914
    %3926 = vmatprep.subr.bf16.mxu0 0
    %3927 = vmatpush1.bf16.xpose.msra.mxu0 %v3917
    %3928 = vmatprep.subr.bf16.mxu0 0
    %3929 = vmatpush1.bf16.xpose.msra.mxu0 %v3920
    %3930 = vmatprep.subr.bf16.mxu0 0
    %3931 = vmatpush1.bf16.xpose.msra.mxu0 0
    %3932 = vmatprep.subr.bf16.mxu0 0
    %3933 = vmatpush1.bf16.xpose.msra.mxu0 0
    %3934 = vmatprep.subr.bf16.mxu0 0
    %3935 = vmatpush1.bf16.xpose.msra.mxu0 0
    %3936 = vmatprep.subr.bf16.mxu0 0
    %3937 = vmatpush1.bf16.xpose.msra.mxu0 0
    %3938 = vmatprep.subr.bf16.mxu0 0
    %3939 = vmatpush1.bf16.xpose.msra.mxu0 0
    %3940 = vmatprep.subr.bf16.mxu0 0
    %3941 = vmatpush1.bf16.xpose.msra.mxu0 0
    %3942 = vmatprep.subr.bf16.mxu0 0
    %3943 = vmatpush1.bf16.xpose.msra.mxu0 0
    %3944 = vmatprep.subr.bf16.mxu0 0
    %3945 = vmatpush1.bf16.xpose.msra.mxu0 0
    %3946 = vmatprep.subr.bf16.mxu0 0
    %3947 = vmatpush1.bf16.xpose.msra.mxu0 0
    %3948 = vmatprep.subr.bf16.mxu0 0
    %3949 = vmatpush1.bf16.xpose.msra.mxu0 0
    %3950 = vmatprep.subr.bf16.mxu0 0
    %3951 = vmatpush1.bf16.xpose.msra.mxu0 0
    %3952 = vmatprep.subr.bf16.mxu0 0
    %3953 = vmatpush1.bf16.xpose.msra.mxu0 0
    %3954 = vmatprep.mubr.bf16.mxu0 0
    %3955 = vmatmul.mubr.bf16.gmra.mrb[0].mxu0 %v3899
    %v3956 = vpop.f32.mrb[0].mxu0
    %v3957 = vadd.f32 %v3751, %v3956
    %v3958 = vpop.f32.mrb[0].mxu0
    %v3959 = vpop.f32.mrb[0].mxu0
    %v3960 = vadd.f32 %v3752, %v3959
    %v3961 = vpop.f32.mrb[0].mxu0
    %3962 = vmatprep.mubr.bf16.mxu0 0
    %3963 = vmatmul.mubr.bf16.gmra.mrb[0].mxu0 %v3902
    %v3964 = vpop.f32.mrb[0].mxu0
    %v3965 = vadd.f32 %v3753, %v3964
    %v3966 = vpop.f32.mrb[0].mxu0
    %v3967 = vpop.f32.mrb[0].mxu0
    %v3968 = vadd.f32 %v3754, %v3967
    %v3969 = vpop.f32.mrb[0].mxu0
    %3970 = vmatprep.mubr.bf16.mxu0 0
    %3971 = vmatmul.mubr.bf16.gmra.mrb[0].mxu0 %v3905
    %v3972 = vpop.f32.mrb[0].mxu0
    %v3973 = vadd.f32 %v3755, %v3972
    %v3974 = vpop.f32.mrb[0].mxu0
    %v3975 = vpop.f32.mrb[0].mxu0
    %v3976 = vadd.f32 %v3756, %v3975
    %v3977 = vpop.f32.mrb[0].mxu0
    %3978 = vmatprep.mubr.bf16.mxu0 0
    %3979 = vmatmul.mubr.bf16.gmra.mrb[0].mxu0 %v3908
    %v3980 = vpop.f32.mrb[0].mxu0
    %v3981 = vadd.f32 %v3757, %v3980
    %v3982 = vpop.f32.mrb[0].mxu0
    %v3983 = vpop.f32.mrb[0].mxu0
    %v3984 = vpop.f32.mrb[0].mxu0
    %3985 = vdwg.mxu0
    %v3986 = vrot.slane %v1306, 4
    %v3987 = vrot.slane %v1307, 4
    %v3988 = vrot.slane %v1308, 4
    %v3989 = vrot.slane %v1309, 4
    %v3990 = vrot.slane %v1310, 4
    %v3991 = vrot.slane %v1311, 4
    %v3992 = vrot.slane %v1312, 4
    %3993 = vrot.lane.b32.xlu0 %v1556, 96
    %v3994 = vpop.permute.xlu0 %3993
    %3995 = vrot.lane.b32.xlu0 %v1557, 96
    %v3996 = vpop.permute.xlu0 %3995
    %3997 = vrot.lane.b32.xlu0 %v1558, 96
    %v3998 = vpop.permute.xlu0 %3997
    %3999 = vrot.lane.b32.xlu0 %v1559, 96
    %v4000 = vpop.permute.xlu0 %3999
    %v4001 = vunpack.c.l.b16 %v3986
    %v4002 = vunpack.c.l.b16 %v3987
    %v4003 = vunpack.c.l.b16 %v3988
    %v4004 = vunpack.c.l.b16 %v3989
    %v4005 = vunpack.c.l.b16 %v3990
    %v4006 = vunpack.c.l.b16 %v3991
    %v4007 = vunpack.c.l.b16 %v3992
    %v4008 = vpack.c.b16 %v4002, %v4001
    %v4009 = vpack.c.b16 %v4004, %v4003
    %v4010 = vpack.c.b16 %v4006, %v4005
    %v4011 = vpack.c.b16 %v4007, %v4007
    %v4013 = vsel %vm1367, %v3994, 0
    %v4016 = vsel %vm1367, %v3996, 0
    %v4019 = vsel %vm1367, %v3998, 0
    %v4022 = vsel %vm1367, %v4000, 0
    %v4025 = vsel %vm1367, %v4008, 0
    %v4028 = vsel %vm1367, %v4009, 0
    %v4031 = vsel %vm1367, %v4010, 0
    %v4034 = vsel %vm1367, %v4011, 0
    %4036 = vmatprep.subr.bf16.mxu0 0
    %4037 = vmatpush1.bf16.xpose.msra.mxu0 %v4025
    %4038 = vmatprep.subr.bf16.mxu0 0
    %4039 = vmatpush1.bf16.xpose.msra.mxu0 %v4028
    %4040 = vmatprep.subr.bf16.mxu0 0
    %4041 = vmatpush1.bf16.xpose.msra.mxu0 %v4031
    %4042 = vmatprep.subr.bf16.mxu0 0
    %4043 = vmatpush1.bf16.xpose.msra.mxu0 %v4034
    %4044 = vmatprep.subr.bf16.mxu0 0
    %4045 = vmatpush1.bf16.xpose.msra.mxu0 0
    %4046 = vmatprep.subr.bf16.mxu0 0
    %4047 = vmatpush1.bf16.xpose.msra.mxu0 0
    %4048 = vmatprep.subr.bf16.mxu0 0
    %4049 = vmatpush1.bf16.xpose.msra.mxu0 0
    %4050 = vmatprep.subr.bf16.mxu0 0
    %4051 = vmatpush1.bf16.xpose.msra.mxu0 0
    %4052 = vmatprep.subr.bf16.mxu0 0
    %4053 = vmatpush1.bf16.xpose.msra.mxu0 0
    %4054 = vmatprep.subr.bf16.mxu0 0
    %4055 = vmatpush1.bf16.xpose.msra.mxu0 0
    %4056 = vmatprep.subr.bf16.mxu0 0
    %4057 = vmatpush1.bf16.xpose.msra.mxu0 0
    %4058 = vmatprep.subr.bf16.mxu0 0
    %4059 = vmatpush1.bf16.xpose.msra.mxu0 0
    %4060 = vmatprep.subr.bf16.mxu0 0
    %4061 = vmatpush1.bf16.xpose.msra.mxu0 0
    %4062 = vmatprep.subr.bf16.mxu0 0
    %4063 = vmatpush1.bf16.xpose.msra.mxu0 0
    %4064 = vmatprep.subr.bf16.mxu0 0
    %4065 = vmatpush1.bf16.xpose.msra.mxu0 0
    %4066 = vmatprep.subr.bf16.mxu0 0
    %4067 = vmatpush1.bf16.xpose.msra.mxu0 0
    %4068 = vmatprep.mubr.bf16.mxu0 0
    %4069 = vmatmul.mubr.bf16.gmra.mrb[0].mxu0 %v4013
    %v4070 = vpop.f32.mrb[0].mxu0
    %v4071 = vadd.f32 %v3751, %v4070
    %v4072 = vpop.f32.mrb[0].mxu0
    %v4073 = vpop.f32.mrb[0].mxu0
    %v4074 = vadd.f32 %v3752, %v4073
    %v4075 = vpop.f32.mrb[0].mxu0
    %4076 = vmatprep.mubr.bf16.mxu0 0
    %4077 = vmatmul.mubr.bf16.gmra.mrb[0].mxu0 %v4016
    %v4078 = vpop.f32.mrb[0].mxu0
    %v4079 = vadd.f32 %v3753, %v4078
    %v4080 = vpop.f32.mrb[0].mxu0
    %v4081 = vpop.f32.mrb[0].mxu0
    %v4082 = vadd.f32 %v3754, %v4081
    %v4083 = vpop.f32.mrb[0].mxu0
    %4084 = vmatprep.mubr.bf16.mxu0 0
    %4085 = vmatmul.mubr.bf16.gmra.mrb[0].mxu0 %v4019
    %v4086 = vpop.f32.mrb[0].mxu0
    %v4087 = vadd.f32 %v3755, %v4086
    %v4088 = vpop.f32.mrb[0].mxu0
    %v4089 = vpop.f32.mrb[0].mxu0
    %v4090 = vadd.f32 %v3756, %v4089
    %v4091 = vpop.f32.mrb[0].mxu0
    %4092 = vmatprep.mubr.bf16.mxu0 0
    %4093 = vmatmul.mubr.bf16.gmra.mrb[0].mxu0 %v4022
    %v4094 = vpop.f32.mrb[0].mxu0
    %v4095 = vadd.f32 %v3757, %v4094
    %v4096 = vpop.f32.mrb[0].mxu0
    %v4097 = vpop.f32.mrb[0].mxu0
    %v4098 = vpop.f32.mrb[0].mxu0
    %4099 = vdwg.mxu0
    %v4100 = vrot.slane %v1313, 4
    %v4101 = vrot.slane %v1314, 4
    %v4102 = vrot.slane %v1315, 4
    %v4103 = vrot.slane %v1316, 4
    %v4104 = vrot.slane %v1317, 4
    %v4105 = vrot.slane %v1318, 4
    %v4106 = vrot.slane %v1319, 4
    %4107 = vrot.lane.b32.xlu0 %v1656, 96
    %v4108 = vpop.permute.xlu0 %4107
    %4109 = vrot.lane.b32.xlu0 %v1657, 96
    %v4110 = vpop.permute.xlu0 %4109
    %4111 = vrot.lane.b32.xlu0 %v1658, 96
    %v4112 = vpop.permute.xlu0 %4111
    %4113 = vrot.lane.b32.xlu0 %v1659, 96
    %v4114 = vpop.permute.xlu0 %4113
    %v4115 = vunpack.c.l.b16 %v4100
    %v4116 = vunpack.c.l.b16 %v4101
    %v4117 = vunpack.c.l.b16 %v4102
    %v4118 = vunpack.c.l.b16 %v4103
    %v4119 = vunpack.c.l.b16 %v4104
    %v4120 = vunpack.c.l.b16 %v4105
    %v4121 = vunpack.c.l.b16 %v4106
    %v4122 = vpack.c.b16 %v4116, %v4115
    %v4123 = vpack.c.b16 %v4118, %v4117
    %v4124 = vpack.c.b16 %v4120, %v4119
    %v4125 = vpack.c.b16 %v4121, %v4121
    %v4127 = vsel %vm1367, %v4108, 0
    %v4130 = vsel %vm1367, %v4110, 0
    %v4133 = vsel %vm1367, %v4112, 0
    %v4136 = vsel %vm1367, %v4114, 0
    %v4139 = vsel %vm1367, %v4122, 0
    %v4142 = vsel %vm1367, %v4123, 0
    %v4145 = vsel %vm1367, %v4124, 0
    %v4148 = vsel %vm1367, %v4125, 0
    %4150 = vmatprep.subr.bf16.mxu0 0
    %4151 = vmatpush1.bf16.xpose.msra.mxu0 %v4139
    %4152 = vmatprep.subr.bf16.mxu0 0
    %4153 = vmatpush1.bf16.xpose.msra.mxu0 %v4142
    %4154 = vmatprep.subr.bf16.mxu0 0
    %4155 = vmatpush1.bf16.xpose.msra.mxu0 %v4145
    %4156 = vmatprep.subr.bf16.mxu0 0
    %4157 = vmatpush1.bf16.xpose.msra.mxu0 %v4148
    %4158 = vmatprep.subr.bf16.mxu0 0
    %4159 = vmatpush1.bf16.xpose.msra.mxu0 0
    %4160 = vmatprep.subr.bf16.mxu0 0
    %4161 = vmatpush1.bf16.xpose.msra.mxu0 0
    %4162 = vmatprep.subr.bf16.mxu0 0
    %4163 = vmatpush1.bf16.xpose.msra.mxu0 0
    %4164 = vmatprep.subr.bf16.mxu0 0
    %4165 = vmatpush1.bf16.xpose.msra.mxu0 0
    %4166 = vmatprep.subr.bf16.mxu0 0
    %4167 = vmatpush1.bf16.xpose.msra.mxu0 0
    %4168 = vmatprep.subr.bf16.mxu0 0
    %4169 = vmatpush1.bf16.xpose.msra.mxu0 0
    %4170 = vmatprep.subr.bf16.mxu0 0
    %4171 = vmatpush1.bf16.xpose.msra.mxu0 0
    %4172 = vmatprep.subr.bf16.mxu0 0
    %4173 = vmatpush1.bf16.xpose.msra.mxu0 0
    %4174 = vmatprep.subr.bf16.mxu0 0
    %4175 = vmatpush1.bf16.xpose.msra.mxu0 0
    %4176 = vmatprep.subr.bf16.mxu0 0
    %4177 = vmatpush1.bf16.xpose.msra.mxu0 0
    %4178 = vmatprep.subr.bf16.mxu0 0
    %4179 = vmatpush1.bf16.xpose.msra.mxu0 0
    %4180 = vmatprep.subr.bf16.mxu0 0
    %4181 = vmatpush1.bf16.xpose.msra.mxu0 0
    %4182 = vmatprep.mubr.bf16.mxu0 0
    %4183 = vmatmul.mubr.bf16.gmra.mrb[0].mxu0 %v4127
    %v4184 = vpop.f32.mrb[0].mxu0
    %v4185 = vadd.f32 %v3751, %v4184
    %v4186 = vpop.f32.mrb[0].mxu0
    %v4187 = vpop.f32.mrb[0].mxu0
    %v4188 = vadd.f32 %v3752, %v4187
    %v4189 = vpop.f32.mrb[0].mxu0
    %4190 = vmatprep.mubr.bf16.mxu0 0
    %4191 = vmatmul.mubr.bf16.gmra.mrb[0].mxu0 %v4130
    %v4192 = vpop.f32.mrb[0].mxu0
    %v4193 = vadd.f32 %v3753, %v4192
    %v4194 = vpop.f32.mrb[0].mxu0
    %v4195 = vpop.f32.mrb[0].mxu0
    %v4196 = vadd.f32 %v3754, %v4195
    %v4197 = vpop.f32.mrb[0].mxu0
    %4198 = vmatprep.mubr.bf16.mxu0 0
    %4199 = vmatmul.mubr.bf16.gmra.mrb[0].mxu0 %v4133
    %v4200 = vpop.f32.mrb[0].mxu0
    %v4201 = vadd.f32 %v3755, %v4200
    %v4202 = vpop.f32.mrb[0].mxu0
    %v4203 = vpop.f32.mrb[0].mxu0
    %v4204 = vadd.f32 %v3756, %v4203
    %v4205 = vpop.f32.mrb[0].mxu0
    %4206 = vmatprep.mubr.bf16.mxu0 0
    %4207 = vmatmul.mubr.bf16.gmra.mrb[0].mxu0 %v4136
    %v4208 = vpop.f32.mrb[0].mxu0
    %v4209 = vadd.f32 %v3757, %v4208
    %v4210 = vpop.f32.mrb[0].mxu0
    %v4211 = vpop.f32.mrb[0].mxu0
    %v4212 = vpop.f32.mrb[0].mxu0
    %4213 = vdwg.mxu0
    %v4214 = vrot.slane %v1320, 4
    %v4215 = vrot.slane %v1321, 4
    %v4216 = vrot.slane %v1322, 4
    %v4217 = vrot.slane %v1323, 4
    %v4218 = vrot.slane %v1324, 4
    %v4219 = vrot.slane %v1325, 4
    %v4220 = vrot.slane %v1326, 4
    %4221 = vrot.lane.b32.xlu0 %v1756, 96
    %v4222 = vpop.permute.xlu0 %4221
    %4223 = vrot.lane.b32.xlu0 %v1757, 96
    %v4224 = vpop.permute.xlu0 %4223
    %4225 = vrot.lane.b32.xlu0 %v1758, 96
    %v4226 = vpop.permute.xlu0 %4225
    %4227 = vrot.lane.b32.xlu0 %v1759, 96
    %v4228 = vpop.permute.xlu0 %4227
    %v4229 = vunpack.c.l.b16 %v4214
    %v4230 = vunpack.c.l.b16 %v4215
    %v4231 = vunpack.c.l.b16 %v4216
    %v4232 = vunpack.c.l.b16 %v4217
    %v4233 = vunpack.c.l.b16 %v4218
    %v4234 = vunpack.c.l.b16 %v4219
    %v4235 = vunpack.c.l.b16 %v4220
    %v4236 = vpack.c.b16 %v4230, %v4229
    %v4237 = vpack.c.b16 %v4232, %v4231
    %v4238 = vpack.c.b16 %v4234, %v4233
    %v4239 = vpack.c.b16 %v4235, %v4235
    %v4241 = vsel %vm1367, %v4222, 0
    %v4244 = vsel %vm1367, %v4224, 0
    %v4247 = vsel %vm1367, %v4226, 0
    %v4250 = vsel %vm1367, %v4228, 0
    %v4253 = vsel %vm1367, %v4236, 0
    %v4256 = vsel %vm1367, %v4237, 0
    %v4259 = vsel %vm1367, %v4238, 0
    %v4262 = vsel %vm1367, %v4239, 0
    %4264 = vmatprep.subr.bf16.mxu0 0
    %4265 = vmatpush1.bf16.xpose.msra.mxu0 %v4253
    %4266 = vmatprep.subr.bf16.mxu0 0
    %4267 = vmatpush1.bf16.xpose.msra.mxu0 %v4256
    %4268 = vmatprep.subr.bf16.mxu0 0
    %4269 = vmatpush1.bf16.xpose.msra.mxu0 %v4259
    %4270 = vmatprep.subr.bf16.mxu0 0
    %4271 = vmatpush1.bf16.xpose.msra.mxu0 %v4262
    %4272 = vmatprep.subr.bf16.mxu0 0
    %4273 = vmatpush1.bf16.xpose.msra.mxu0 0
    %4274 = vmatprep.subr.bf16.mxu0 0
    %4275 = vmatpush1.bf16.xpose.msra.mxu0 0
    %4276 = vmatprep.subr.bf16.mxu0 0
    %4277 = vmatpush1.bf16.xpose.msra.mxu0 0
    %4278 = vmatprep.subr.bf16.mxu0 0
    %4279 = vmatpush1.bf16.xpose.msra.mxu0 0
    %4280 = vmatprep.subr.bf16.mxu0 0
    %4281 = vmatpush1.bf16.xpose.msra.mxu0 0
    %4282 = vmatprep.subr.bf16.mxu0 0
    %4283 = vmatpush1.bf16.xpose.msra.mxu0 0
    %4284 = vmatprep.subr.bf16.mxu0 0
    %4285 = vmatpush1.bf16.xpose.msra.mxu0 0
    %4286 = vmatprep.subr.bf16.mxu0 0
    %4287 = vmatpush1.bf16.xpose.msra.mxu0 0
    %4288 = vmatprep.subr.bf16.mxu0 0
    %4289 = vmatpush1.bf16.xpose.msra.mxu0 0
    %4290 = vmatprep.subr.bf16.mxu0 0
    %4291 = vmatpush1.bf16.xpose.msra.mxu0 0
    %4292 = vmatprep.subr.bf16.mxu0 0
    %4293 = vmatpush1.bf16.xpose.msra.mxu0 0
    %4294 = vmatprep.subr.bf16.mxu0 0
    %4295 = vmatpush1.bf16.xpose.msra.mxu0 0
    %4296 = vmatprep.mubr.bf16.mxu0 0
    %4297 = vmatmul.mubr.bf16.gmra.mrb[0].mxu0 %v4241
    %v4298 = vpop.f32.mrb[0].mxu0
    %v4299 = vadd.f32 %v3751, %v4298
    %v4300 = vpop.f32.mrb[0].mxu0
    %v4301 = vpop.f32.mrb[0].mxu0
    %v4302 = vadd.f32 %v3752, %v4301
    %v4303 = vpop.f32.mrb[0].mxu0
    %4304 = vmatprep.mubr.bf16.mxu0 0
    %4305 = vmatmul.mubr.bf16.gmra.mrb[0].mxu0 %v4244
    %v4306 = vpop.f32.mrb[0].mxu0
    %v4307 = vadd.f32 %v3753, %v4306
    %v4308 = vpop.f32.mrb[0].mxu0
    %v4309 = vpop.f32.mrb[0].mxu0
    %v4310 = vadd.f32 %v3754, %v4309
    %v4311 = vpop.f32.mrb[0].mxu0
    %4312 = vmatprep.mubr.bf16.mxu0 0
    %4313 = vmatmul.mubr.bf16.gmra.mrb[0].mxu0 %v4247
    %v4314 = vpop.f32.mrb[0].mxu0
    %v4315 = vadd.f32 %v3755, %v4314
    %v4316 = vpop.f32.mrb[0].mxu0
    %v4317 = vpop.f32.mrb[0].mxu0
    %v4318 = vadd.f32 %v3756, %v4317
    %v4319 = vpop.f32.mrb[0].mxu0
    %4320 = vmatprep.mubr.bf16.mxu0 0
    %4321 = vmatmul.mubr.bf16.gmra.mrb[0].mxu0 %v4250
    %v4322 = vpop.f32.mrb[0].mxu0
    %v4323 = vadd.f32 %v3757, %v4322
    %v4324 = vpop.f32.mrb[0].mxu0
    %v4325 = vpop.f32.mrb[0].mxu0
    %v4326 = vpop.f32.mrb[0].mxu0
    %4327 = vdwg.mxu0
    %v4328 = vrot.slane %v1327, 4
    %v4329 = vrot.slane %v1328, 4
    %v4330 = vrot.slane %v1329, 4
    %v4331 = vrot.slane %v1330, 4
    %v4332 = vrot.slane %v1331, 4
    %v4333 = vrot.slane %v1332, 4
    %v4334 = vrot.slane %v1333, 4
    %4335 = vrot.lane.b32.xlu0 %v1856, 96
    %v4336 = vpop.permute.xlu0 %4335
    %4337 = vrot.lane.b32.xlu0 %v1857, 96
    %v4338 = vpop.permute.xlu0 %4337
    %4339 = vrot.lane.b32.xlu0 %v1858, 96
    %v4340 = vpop.permute.xlu0 %4339
    %4341 = vrot.lane.b32.xlu0 %v1859, 96
    %v4342 = vpop.permute.xlu0 %4341
    %v4343 = vunpack.c.l.b16 %v4328
    %v4344 = vunpack.c.l.b16 %v4329
    %v4345 = vunpack.c.l.b16 %v4330
    %v4346 = vunpack.c.l.b16 %v4331
    %v4347 = vunpack.c.l.b16 %v4332
    %v4348 = vunpack.c.l.b16 %v4333
    %v4349 = vunpack.c.l.b16 %v4334
    %v4350 = vpack.c.b16 %v4344, %v4343
    %v4351 = vpack.c.b16 %v4346, %v4345
    %v4352 = vpack.c.b16 %v4348, %v4347
    %v4353 = vpack.c.b16 %v4349, %v4349
    %v4355 = vsel %vm1367, %v4336, 0
    %v4358 = vsel %vm1367, %v4338, 0
    %v4361 = vsel %vm1367, %v4340, 0
    %v4364 = vsel %vm1367, %v4342, 0
    %v4367 = vsel %vm1367, %v4350, 0
    %v4370 = vsel %vm1367, %v4351, 0
    %v4373 = vsel %vm1367, %v4352, 0
    %v4376 = vsel %vm1367, %v4353, 0
    %4378 = vmatprep.subr.bf16.mxu0 0
    %4379 = vmatpush1.bf16.xpose.msra.mxu0 %v4367
    %4380 = vmatprep.subr.bf16.mxu0 0
    %4381 = vmatpush1.bf16.xpose.msra.mxu0 %v4370
    %4382 = vmatprep.subr.bf16.mxu0 0
    %4383 = vmatpush1.bf16.xpose.msra.mxu0 %v4373
    %4384 = vmatprep.subr.bf16.mxu0 0
    %4385 = vmatpush1.bf16.xpose.msra.mxu0 %v4376
    %4386 = vmatprep.subr.bf16.mxu0 0
    %4387 = vmatpush1.bf16.xpose.msra.mxu0 0
    %4388 = vmatprep.subr.bf16.mxu0 0
    %4389 = vmatpush1.bf16.xpose.msra.mxu0 0
    %4390 = vmatprep.subr.bf16.mxu0 0
    %4391 = vmatpush1.bf16.xpose.msra.mxu0 0
    %4392 = vmatprep.subr.bf16.mxu0 0
    %4393 = vmatpush1.bf16.xpose.msra.mxu0 0
    %4394 = vmatprep.subr.bf16.mxu0 0
    %4395 = vmatpush1.bf16.xpose.msra.mxu0 0
    %4396 = vmatprep.subr.bf16.mxu0 0
    %4397 = vmatpush1.bf16.xpose.msra.mxu0 0
    %4398 = vmatprep.subr.bf16.mxu0 0
    %4399 = vmatpush1.bf16.xpose.msra.mxu0 0
    %4400 = vmatprep.subr.bf16.mxu0 0
    %4401 = vmatpush1.bf16.xpose.msra.mxu0 0
    %4402 = vmatprep.subr.bf16.mxu0 0
    %4403 = vmatpush1.bf16.xpose.msra.mxu0 0
    %4404 = vmatprep.subr.bf16.mxu0 0
    %4405 = vmatpush1.bf16.xpose.msra.mxu0 0
    %4406 = vmatprep.subr.bf16.mxu0 0
    %4407 = vmatpush1.bf16.xpose.msra.mxu0 0
    %4408 = vmatprep.subr.bf16.mxu0 0
    %4409 = vmatpush1.bf16.xpose.msra.mxu0 0
    %4410 = vmatprep.mubr.bf16.mxu0 0
    %4411 = vmatmul.mubr.bf16.gmra.mrb[0].mxu0 %v4355
    %v4412 = vpop.f32.mrb[0].mxu0
    %v4413 = vadd.f32 %v3751, %v4412
    %v4414 = vpop.f32.mrb[0].mxu0
    %v4415 = vpop.f32.mrb[0].mxu0
    %v4416 = vadd.f32 %v3752, %v4415
    %v4417 = vpop.f32.mrb[0].mxu0
    %4418 = vmatprep.mubr.bf16.mxu0 0
    %4419 = vmatmul.mubr.bf16.gmra.mrb[0].mxu0 %v4358
    %v4420 = vpop.f32.mrb[0].mxu0
    %v4421 = vadd.f32 %v3753, %v4420
    %v4422 = vpop.f32.mrb[0].mxu0
    %v4423 = vpop.f32.mrb[0].mxu0
    %v4424 = vadd.f32 %v3754, %v4423
    %v4425 = vpop.f32.mrb[0].mxu0
    %4426 = vmatprep.mubr.bf16.mxu0 0
    %4427 = vmatmul.mubr.bf16.gmra.mrb[0].mxu0 %v4361
    %v4428 = vpop.f32.mrb[0].mxu0
    %v4429 = vadd.f32 %v3755, %v4428
    %v4430 = vpop.f32.mrb[0].mxu0
    %v4431 = vpop.f32.mrb[0].mxu0
    %v4432 = vadd.f32 %v3756, %v4431
    %v4433 = vpop.f32.mrb[0].mxu0
    %4434 = vmatprep.mubr.bf16.mxu0 0
    %4435 = vmatmul.mubr.bf16.gmra.mrb[0].mxu0 %v4364
    %v4436 = vpop.f32.mrb[0].mxu0
    %v4437 = vadd.f32 %v3757, %v4436
    %v4438 = vpop.f32.mrb[0].mxu0
    %v4439 = vpop.f32.mrb[0].mxu0
    %v4440 = vpop.f32.mrb[0].mxu0
    %4441 = vdwg.mxu0
    %v4442 = vrot.slane %v1334, 4
    %v4443 = vrot.slane %v1335, 4
    %v4444 = vrot.slane %v1336, 4
    %v4445 = vrot.slane %v1337, 4
    %v4446 = vrot.slane %v1338, 4
    %v4447 = vrot.slane %v1339, 4
    %v4448 = vrot.slane %v1340, 4
    %4449 = vrot.lane.b32.xlu0 %v1956, 96
    %v4450 = vpop.permute.xlu0 %4449
    %4451 = vrot.lane.b32.xlu0 %v1957, 96
    %v4452 = vpop.permute.xlu0 %4451
    %4453 = vrot.lane.b32.xlu0 %v1958, 96
    %v4454 = vpop.permute.xlu0 %4453
    %4455 = vrot.lane.b32.xlu0 %v1959, 96
    %v4456 = vpop.permute.xlu0 %4455
    %v4457 = vunpack.c.l.b16 %v4442
    %v4458 = vunpack.c.l.b16 %v4443
    %v4459 = vunpack.c.l.b16 %v4444
    %v4460 = vunpack.c.l.b16 %v4445
    %v4461 = vunpack.c.l.b16 %v4446
    %v4462 = vunpack.c.l.b16 %v4447
    %v4463 = vunpack.c.l.b16 %v4448
    %v4464 = vpack.c.b16 %v4458, %v4457
    %v4465 = vpack.c.b16 %v4460, %v4459
    %v4466 = vpack.c.b16 %v4462, %v4461
    %v4467 = vpack.c.b16 %v4463, %v4463
    %v4469 = vsel %vm1367, %v4450, 0
    %v4472 = vsel %vm1367, %v4452, 0
    %v4475 = vsel %vm1367, %v4454, 0
    %v4478 = vsel %vm1367, %v4456, 0
    %v4481 = vsel %vm1367, %v4464, 0
    %v4484 = vsel %vm1367, %v4465, 0
    %v4487 = vsel %vm1367, %v4466, 0
    %v4490 = vsel %vm1367, %v4467, 0
    %4492 = vmatprep.subr.bf16.mxu0 0
    %4493 = vmatpush1.bf16.xpose.msra.mxu0 %v4481
    %4494 = vmatprep.subr.bf16.mxu0 0
    %4495 = vmatpush1.bf16.xpose.msra.mxu0 %v4484
    %4496 = vmatprep.subr.bf16.mxu0 0
    %4497 = vmatpush1.bf16.xpose.msra.mxu0 %v4487
    %4498 = vmatprep.subr.bf16.mxu0 0
    %4499 = vmatpush1.bf16.xpose.msra.mxu0 %v4490
    %4500 = vmatprep.subr.bf16.mxu0 0
    %4501 = vmatpush1.bf16.xpose.msra.mxu0 0
    %4502 = vmatprep.subr.bf16.mxu0 0
    %4503 = vmatpush1.bf16.xpose.msra.mxu0 0
    %4504 = vmatprep.subr.bf16.mxu0 0
    %4505 = vmatpush1.bf16.xpose.msra.mxu0 0
    %4506 = vmatprep.subr.bf16.mxu0 0
    %4507 = vmatpush1.bf16.xpose.msra.mxu0 0
    %4508 = vmatprep.subr.bf16.mxu0 0
    %4509 = vmatpush1.bf16.xpose.msra.mxu0 0
    %4510 = vmatprep.subr.bf16.mxu0 0
    %4511 = vmatpush1.bf16.xpose.msra.mxu0 0
    %4512 = vmatprep.subr.bf16.mxu0 0
    %4513 = vmatpush1.bf16.xpose.msra.mxu0 0
    %4514 = vmatprep.subr.bf16.mxu0 0
    %4515 = vmatpush1.bf16.xpose.msra.mxu0 0
    %4516 = vmatprep.subr.bf16.mxu0 0
    %4517 = vmatpush1.bf16.xpose.msra.mxu0 0
    %4518 = vmatprep.subr.bf16.mxu0 0
    %4519 = vmatpush1.bf16.xpose.msra.mxu0 0
    %4520 = vmatprep.subr.bf16.mxu0 0
    %4521 = vmatpush1.bf16.xpose.msra.mxu0 0
    %4522 = vmatprep.subr.bf16.mxu0 0
    %4523 = vmatpush1.bf16.xpose.msra.mxu0 0
    %4524 = vmatprep.mubr.bf16.mxu0 0
    %4525 = vmatmul.mubr.bf16.gmra.mrb[0].mxu0 %v4469
    %v4526 = vpop.f32.mrb[0].mxu0
    %v4527 = vadd.f32 %v3751, %v4526
    %v4528 = vpop.f32.mrb[0].mxu0
    %v4529 = vpop.f32.mrb[0].mxu0
    %v4530 = vadd.f32 %v3752, %v4529
    %v4531 = vpop.f32.mrb[0].mxu0
    %4532 = vmatprep.mubr.bf16.mxu0 0
    %4533 = vmatmul.mubr.bf16.gmra.mrb[0].mxu0 %v4472
    %v4534 = vpop.f32.mrb[0].mxu0
    %v4535 = vadd.f32 %v3753, %v4534
    %v4536 = vpop.f32.mrb[0].mxu0
    %v4537 = vpop.f32.mrb[0].mxu0
    %v4538 = vadd.f32 %v3754, %v4537
    %v4539 = vpop.f32.mrb[0].mxu0
    %4540 = vmatprep.mubr.bf16.mxu0 0
    %4541 = vmatmul.mubr.bf16.gmra.mrb[0].mxu0 %v4475
    %v4542 = vpop.f32.mrb[0].mxu0
    %v4543 = vadd.f32 %v3755, %v4542
    %v4544 = vpop.f32.mrb[0].mxu0
    %v4545 = vpop.f32.mrb[0].mxu0
    %v4546 = vadd.f32 %v3756, %v4545
    %v4547 = vpop.f32.mrb[0].mxu0
    %4548 = vmatprep.mubr.bf16.mxu0 0
    %4549 = vmatmul.mubr.bf16.gmra.mrb[0].mxu0 %v4478
    %v4550 = vpop.f32.mrb[0].mxu0
    %v4551 = vadd.f32 %v3757, %v4550
    %v4552 = vpop.f32.mrb[0].mxu0
    %v4553 = vpop.f32.mrb[0].mxu0
    %v4554 = vpop.f32.mrb[0].mxu0
    %4555 = vdwg.mxu0
    %v4556 = vrot.slane %v1341, 4
    %v4557 = vrot.slane %v1342, 4
    %v4558 = vrot.slane %v1343, 4
    %v4559 = vrot.slane %v1344, 4
    %v4560 = vrot.slane %v1345, 4
    %v4561 = vrot.slane %v1346, 4
    %v4562 = vrot.slane %v1347, 4
    %4563 = vrot.lane.b32.xlu0 %v2056, 96
    %v4564 = vpop.permute.xlu0 %4563
    %4565 = vrot.lane.b32.xlu0 %v2057, 96
    %v4566 = vpop.permute.xlu0 %4565
    %4567 = vrot.lane.b32.xlu0 %v2058, 96
    %v4568 = vpop.permute.xlu0 %4567
    %4569 = vrot.lane.b32.xlu0 %v2059, 96
    %v4570 = vpop.permute.xlu0 %4569
    %v4571 = vunpack.c.l.b16 %v4556
    %v4572 = vunpack.c.l.b16 %v4557
    %v4573 = vunpack.c.l.b16 %v4558
    %v4574 = vunpack.c.l.b16 %v4559
    %v4575 = vunpack.c.l.b16 %v4560
    %v4576 = vunpack.c.l.b16 %v4561
    %v4577 = vunpack.c.l.b16 %v4562
    %v4578 = vpack.c.b16 %v4572, %v4571
    %v4579 = vpack.c.b16 %v4574, %v4573
    %v4580 = vpack.c.b16 %v4576, %v4575
    %v4581 = vpack.c.b16 %v4577, %v4577
    %v4583 = vsel %vm1367, %v4564, 0
    %v4586 = vsel %vm1367, %v4566, 0
    %v4589 = vsel %vm1367, %v4568, 0
    %v4592 = vsel %vm1367, %v4570, 0
    %v4595 = vsel %vm1367, %v4578, 0
    %v4598 = vsel %vm1367, %v4579, 0
    %v4601 = vsel %vm1367, %v4580, 0
    %v4604 = vsel %vm1367, %v4581, 0
    %4606 = vmatprep.subr.bf16.mxu0 0
    %4607 = vmatpush1.bf16.xpose.msra.mxu0 %v4595
    %4608 = vmatprep.subr.bf16.mxu0 0
    %4609 = vmatpush1.bf16.xpose.msra.mxu0 %v4598
    %4610 = vmatprep.subr.bf16.mxu0 0
    %4611 = vmatpush1.bf16.xpose.msra.mxu0 %v4601
    %4612 = vmatprep.subr.bf16.mxu0 0
    %4613 = vmatpush1.bf16.xpose.msra.mxu0 %v4604
    %4614 = vmatprep.subr.bf16.mxu0 0
    %4615 = vmatpush1.bf16.xpose.msra.mxu0 0
    %4616 = vmatprep.subr.bf16.mxu0 0
    %4617 = vmatpush1.bf16.xpose.msra.mxu0 0
    %4618 = vmatprep.subr.bf16.mxu0 0
    %4619 = vmatpush1.bf16.xpose.msra.mxu0 0
    %4620 = vmatprep.subr.bf16.mxu0 0
    %4621 = vmatpush1.bf16.xpose.msra.mxu0 0
    %4622 = vmatprep.subr.bf16.mxu0 0
    %4623 = vmatpush1.bf16.xpose.msra.mxu0 0
    %4624 = vmatprep.subr.bf16.mxu0 0
    %4625 = vmatpush1.bf16.xpose.msra.mxu0 0
    %4626 = vmatprep.subr.bf16.mxu0 0
    %4627 = vmatpush1.bf16.xpose.msra.mxu0 0
    %4628 = vmatprep.subr.bf16.mxu0 0
    %4629 = vmatpush1.bf16.xpose.msra.mxu0 0
    %4630 = vmatprep.subr.bf16.mxu0 0
    %4631 = vmatpush1.bf16.xpose.msra.mxu0 0
    %4632 = vmatprep.subr.bf16.mxu0 0
    %4633 = vmatpush1.bf16.xpose.msra.mxu0 0
    %4634 = vmatprep.subr.bf16.mxu0 0
    %4635 = vmatpush1.bf16.xpose.msra.mxu0 0
    %4636 = vmatprep.subr.bf16.mxu0 0
    %4637 = vmatpush1.bf16.xpose.msra.mxu0 0
    %4638 = vmatprep.mubr.bf16.mxu0 0
    %4639 = vmatmul.mubr.bf16.gmra.mrb[0].mxu0 %v4583
    %v4640 = vpop.f32.mrb[0].mxu0
    %v4641 = vadd.f32 %v3751, %v4640
    %v4642 = vpop.f32.mrb[0].mxu0
    %v4643 = vpop.f32.mrb[0].mxu0
    %v4644 = vadd.f32 %v3752, %v4643
    %v4645 = vpop.f32.mrb[0].mxu0
    %4646 = vmatprep.mubr.bf16.mxu0 0
    %4647 = vmatmul.mubr.bf16.gmra.mrb[0].mxu0 %v4586
    %v4648 = vpop.f32.mrb[0].mxu0
    %v4649 = vadd.f32 %v3753, %v4648
    %v4650 = vpop.f32.mrb[0].mxu0
    %v4651 = vpop.f32.mrb[0].mxu0
    %v4652 = vadd.f32 %v3754, %v4651
    %v4653 = vpop.f32.mrb[0].mxu0
    %4654 = vmatprep.mubr.bf16.mxu0 0
    %4655 = vmatmul.mubr.bf16.gmra.mrb[0].mxu0 %v4589
    %v4656 = vpop.f32.mrb[0].mxu0
    %v4657 = vadd.f32 %v3755, %v4656
    %v4658 = vpop.f32.mrb[0].mxu0
    %v4659 = vpop.f32.mrb[0].mxu0
    %v4660 = vadd.f32 %v3756, %v4659
    %v4661 = vpop.f32.mrb[0].mxu0
    %4662 = vmatprep.mubr.bf16.mxu0 0
    %4663 = vmatmul.mubr.bf16.gmra.mrb[0].mxu0 %v4592
    %v4664 = vpop.f32.mrb[0].mxu0
    %v4665 = vadd.f32 %v3757, %v4664
    %v4666 = vpop.f32.mrb[0].mxu0
    %v4667 = vpop.f32.mrb[0].mxu0
    %v4668 = vpop.f32.mrb[0].mxu0
    %4669 = vdwg.mxu0
    %v4670 = vsel %vm2156, %v3843, -inf
    %4671 = vmax.xlane.f32.xlu0 %v4670
    %v4672 = vpop.xlane.xlu0 %4671
    %v4673 = vsel %vm2156, %v3846, -inf
    %4674 = vmax.xlane.f32.xlu0 %v4673
    %v4675 = vpop.xlane.xlu0 %4674
    %v4676 = vsel %vm2156, %v3851, -inf
    %4677 = vmax.xlane.f32.xlu0 %v4676
    %v4678 = vpop.xlane.xlu0 %4677
    %v4679 = vsel %vm2156, %v3854, -inf
    %4680 = vmax.xlane.f32.xlu0 %v4679
    %v4681 = vpop.xlane.xlu0 %4680
    %v4682 = vsel %vm2156, %v3859, -inf
    %4683 = vmax.xlane.f32.xlu0 %v4682
    %v4684 = vpop.xlane.xlu0 %4683
    %v4685 = vsel %vm2156, %v3862, -inf
    %4686 = vmax.xlane.f32.xlu0 %v4685
    %v4687 = vpop.xlane.xlu0 %4686
    %v4688 = vsel %vm2156, %v3867, -inf
    %4689 = vmax.xlane.f32.xlu0 %v4688
    %v4690 = vpop.xlane.xlu0 %4689
    %v4691 = vsel %vm2156, %v3957, -inf
    %4692 = vmax.xlane.f32.xlu0 %v4691
    %v4693 = vpop.xlane.xlu0 %4692
    %v4694 = vsel %vm2156, %v3960, -inf
    %4695 = vmax.xlane.f32.xlu0 %v4694
    %v4696 = vpop.xlane.xlu0 %4695
    %v4697 = vsel %vm2156, %v3965, -inf
    %4698 = vmax.xlane.f32.xlu0 %v4697
    %v4699 = vpop.xlane.xlu0 %4698
    %v4700 = vsel %vm2156, %v3968, -inf
    %4701 = vmax.xlane.f32.xlu0 %v4700
    %v4702 = vpop.xlane.xlu0 %4701
    %v4703 = vsel %vm2156, %v3973, -inf
    %4704 = vmax.xlane.f32.xlu0 %v4703
    %v4705 = vpop.xlane.xlu0 %4704
    %v4706 = vsel %vm2156, %v3976, -inf
    %4707 = vmax.xlane.f32.xlu0 %v4706
    %v4708 = vpop.xlane.xlu0 %4707
    %v4709 = vsel %vm2156, %v3981, -inf
    %4710 = vmax.xlane.f32.xlu0 %v4709
    %v4711 = vpop.xlane.xlu0 %4710
    %v4712 = vsel %vm2156, %v4071, -inf
    %4713 = vmax.xlane.f32.xlu0 %v4712
    %v4714 = vpop.xlane.xlu0 %4713
    %v4715 = vsel %vm2156, %v4074, -inf
    %4716 = vmax.xlane.f32.xlu0 %v4715
    %v4717 = vpop.xlane.xlu0 %4716
    %v4718 = vsel %vm2156, %v4079, -inf
    %4719 = vmax.xlane.f32.xlu0 %v4718
    %v4720 = vpop.xlane.xlu0 %4719
    %v4721 = vsel %vm2156, %v4082, -inf
    %4722 = vmax.xlane.f32.xlu0 %v4721
    %v4723 = vpop.xlane.xlu0 %4722
    %v4724 = vsel %vm2156, %v4087, -inf
    %4725 = vmax.xlane.f32.xlu0 %v4724
    %v4726 = vpop.xlane.xlu0 %4725
    %v4727 = vsel %vm2156, %v4090, -inf
    %4728 = vmax.xlane.f32.xlu0 %v4727
    %v4729 = vpop.xlane.xlu0 %4728
    %v4730 = vsel %vm2156, %v4095, -inf
    %4731 = vmax.xlane.f32.xlu0 %v4730
    %v4732 = vpop.xlane.xlu0 %4731
    %v4733 = vsel %vm2156, %v4185, -inf
    %4734 = vmax.xlane.f32.xlu0 %v4733
    %v4735 = vpop.xlane.xlu0 %4734
    %v4736 = vsel %vm2156, %v4188, -inf
    %4737 = vmax.xlane.f32.xlu0 %v4736
    %v4738 = vpop.xlane.xlu0 %4737
    %v4739 = vsel %vm2156, %v4193, -inf
    %4740 = vmax.xlane.f32.xlu0 %v4739
    %v4741 = vpop.xlane.xlu0 %4740
    %v4742 = vsel %vm2156, %v4196, -inf
    %4743 = vmax.xlane.f32.xlu0 %v4742
    %v4744 = vpop.xlane.xlu0 %4743
    %v4745 = vsel %vm2156, %v4201, -inf
    %4746 = vmax.xlane.f32.xlu0 %v4745
    %v4747 = vpop.xlane.xlu0 %4746
    %v4748 = vsel %vm2156, %v4204, -inf
    %4749 = vmax.xlane.f32.xlu0 %v4748
    %v4750 = vpop.xlane.xlu0 %4749
    %v4751 = vsel %vm2156, %v4209, -inf
    %4752 = vmax.xlane.f32.xlu0 %v4751
    %v4753 = vpop.xlane.xlu0 %4752
    %v4754 = vsel %vm2156, %v4299, -inf
    %4755 = vmax.xlane.f32.xlu0 %v4754
    %v4756 = vpop.xlane.xlu0 %4755
    %v4757 = vsel %vm2156, %v4302, -inf
    %4758 = vmax.xlane.f32.xlu0 %v4757
    %v4759 = vpop.xlane.xlu0 %4758
    %v4760 = vsel %vm2156, %v4307, -inf
    %4761 = vmax.xlane.f32.xlu0 %v4760
    %v4762 = vpop.xlane.xlu0 %4761
    %v4763 = vsel %vm2156, %v4310, -inf
    %4764 = vmax.xlane.f32.xlu0 %v4763
    %v4765 = vpop.xlane.xlu0 %4764
    %v4766 = vsel %vm2156, %v4315, -inf
    %4767 = vmax.xlane.f32.xlu0 %v4766
    %v4768 = vpop.xlane.xlu0 %4767
    %v4769 = vsel %vm2156, %v4318, -inf
    %4770 = vmax.xlane.f32.xlu0 %v4769
    %v4771 = vpop.xlane.xlu0 %4770
    %v4772 = vsel %vm2156, %v4323, -inf
    %4773 = vmax.xlane.f32.xlu0 %v4772
    %v4774 = vpop.xlane.xlu0 %4773
    %v4775 = vsel %vm2156, %v4413, -inf
    %4776 = vmax.xlane.f32.xlu0 %v4775
    %v4777 = vpop.xlane.xlu0 %4776
    %v4778 = vsel %vm2156, %v4416, -inf
    %4779 = vmax.xlane.f32.xlu0 %v4778
    %v4780 = vpop.xlane.xlu0 %4779
    %v4781 = vsel %vm2156, %v4421, -inf
    %4782 = vmax.xlane.f32.xlu0 %v4781
    %v4783 = vpop.xlane.xlu0 %4782
    %v4784 = vsel %vm2156, %v4424, -inf
    %4785 = vmax.xlane.f32.xlu0 %v4784
    %v4786 = vpop.xlane.xlu0 %4785
    %v4787 = vsel %vm2156, %v4429, -inf
    %4788 = vmax.xlane.f32.xlu0 %v4787
    %v4789 = vpop.xlane.xlu0 %4788
    %v4790 = vsel %vm2156, %v4432, -inf
    %4791 = vmax.xlane.f32.xlu0 %v4790
    %v4792 = vpop.xlane.xlu0 %4791
    %v4793 = vsel %vm2156, %v4437, -inf
    %4794 = vmax.xlane.f32.xlu0 %v4793
    %v4795 = vpop.xlane.xlu0 %4794
    %v4796 = vsel %vm2156, %v4527, -inf
    %4797 = vmax.xlane.f32.xlu0 %v4796
    %v4798 = vpop.xlane.xlu0 %4797
    %v4799 = vsel %vm2156, %v4530, -inf
    %4800 = vmax.xlane.f32.xlu0 %v4799
    %v4801 = vpop.xlane.xlu0 %4800
    %v4802 = vsel %vm2156, %v4535, -inf
    %4803 = vmax.xlane.f32.xlu0 %v4802
    %v4804 = vpop.xlane.xlu0 %4803
    %v4805 = vsel %vm2156, %v4538, -inf
    %4806 = vmax.xlane.f32.xlu0 %v4805
    %v4807 = vpop.xlane.xlu0 %4806
    %v4808 = vsel %vm2156, %v4543, -inf
    %4809 = vmax.xlane.f32.xlu0 %v4808
    %v4810 = vpop.xlane.xlu0 %4809
    %v4811 = vsel %vm2156, %v4546, -inf
    %4812 = vmax.xlane.f32.xlu0 %v4811
    %v4813 = vpop.xlane.xlu0 %4812
    %v4814 = vsel %vm2156, %v4551, -inf
    %4815 = vmax.xlane.f32.xlu0 %v4814
    %v4816 = vpop.xlane.xlu0 %4815
    %v4817 = vsel %vm2156, %v4641, -inf
    %4818 = vmax.xlane.f32.xlu0 %v4817
    %v4819 = vpop.xlane.xlu0 %4818
    %v4820 = vsel %vm2156, %v4644, -inf
    %4821 = vmax.xlane.f32.xlu0 %v4820
    %v4822 = vpop.xlane.xlu0 %4821
    %v4823 = vsel %vm2156, %v4649, -inf
    %4824 = vmax.xlane.f32.xlu0 %v4823
    %v4825 = vpop.xlane.xlu0 %4824
    %v4826 = vsel %vm2156, %v4652, -inf
    %4827 = vmax.xlane.f32.xlu0 %v4826
    %v4828 = vpop.xlane.xlu0 %4827
    %v4829 = vsel %vm2156, %v4657, -inf
    %4830 = vmax.xlane.f32.xlu0 %v4829
    %v4831 = vpop.xlane.xlu0 %4830
    %v4832 = vsel %vm2156, %v4660, -inf
    %4833 = vmax.xlane.f32.xlu0 %v4832
    %v4834 = vpop.xlane.xlu0 %4833
    %v4835 = vsel %vm2156, %v4665, -inf
    %4836 = vmax.xlane.f32.xlu0 %v4835
    %v4837 = vpop.xlane.xlu0 %4836
    %v4838 = vsub.f32 %v3843, %v4672
    %v4839 = vsub.f32 %v3846, %v4675
    %v4840 = vsub.f32 %v3851, %v4678
    %v4841 = vsub.f32 %v3854, %v4681
    %v4842 = vsub.f32 %v3859, %v4684
    %v4843 = vsub.f32 %v3862, %v4687
    %v4844 = vsub.f32 %v3867, %v4690
    %v4845 = vsub.f32 %v3957, %v4693
    %v4846 = vsub.f32 %v3960, %v4696
    %v4847 = vsub.f32 %v3965, %v4699
    %v4848 = vsub.f32 %v3968, %v4702
    %v4849 = vsub.f32 %v3973, %v4705
    %v4850 = vsub.f32 %v3976, %v4708
    %v4851 = vsub.f32 %v3981, %v4711
    %v4852 = vsub.f32 %v4071, %v4714
    %v4853 = vsub.f32 %v4074, %v4717
    %v4854 = vsub.f32 %v4079, %v4720
    %v4855 = vsub.f32 %v4082, %v4723
    %v4856 = vsub.f32 %v4087, %v4726
    %v4857 = vsub.f32 %v4090, %v4729
    %v4858 = vsub.f32 %v4095, %v4732
    %v4859 = vsub.f32 %v4185, %v4735
    %v4860 = vsub.f32 %v4188, %v4738
    %v4861 = vsub.f32 %v4193, %v4741
    %v4862 = vsub.f32 %v4196, %v4744
    %v4863 = vsub.f32 %v4201, %v4747
    %v4864 = vsub.f32 %v4204, %v4750
    %v4865 = vsub.f32 %v4209, %v4753
    %v4866 = vsub.f32 %v4299, %v4756
    %v4867 = vsub.f32 %v4302, %v4759
    %v4868 = vsub.f32 %v4307, %v4762
    %v4869 = vsub.f32 %v4310, %v4765
    %v4870 = vsub.f32 %v4315, %v4768
    %v4871 = vsub.f32 %v4318, %v4771
    %v4872 = vsub.f32 %v4323, %v4774
    %v4873 = vsub.f32 %v4413, %v4777
    %v4874 = vsub.f32 %v4416, %v4780
    %v4875 = vsub.f32 %v4421, %v4783
    %v4876 = vsub.f32 %v4424, %v4786
    %v4877 = vsub.f32 %v4429, %v4789
    %v4878 = vsub.f32 %v4432, %v4792
    %v4879 = vsub.f32 %v4437, %v4795
    %v4880 = vsub.f32 %v4527, %v4798
    %v4881 = vsub.f32 %v4530, %v4801
    %v4882 = vsub.f32 %v4535, %v4804
    %v4883 = vsub.f32 %v4538, %v4807
    %v4884 = vsub.f32 %v4543, %v4810
    %v4885 = vsub.f32 %v4546, %v4813
    %v4886 = vsub.f32 %v4551, %v4816
    %v4887 = vsub.f32 %v4641, %v4819
    %v4888 = vsub.f32 %v4644, %v4822
    %v4889 = vsub.f32 %v4649, %v4825
    %v4890 = vsub.f32 %v4652, %v4828
    %v4891 = vsub.f32 %v4657, %v4831
    %v4892 = vsub.f32 %v4660, %v4834
    %v4893 = vsub.f32 %v4665, %v4837
    %v4894 = vmul.f32 %v4838, 1.442695
    %v4895 = vpow.pop %v4894
    %v4896 = vmul.f32 %v4839, 1.442695
    %v4897 = vpow.pop %v4896
    %v4898 = vmul.f32 %v4840, 1.442695
    %v4899 = vpow.pop %v4898
    %v4900 = vmul.f32 %v4841, 1.442695
    %v4901 = vpow.pop %v4900
    %v4902 = vmul.f32 %v4842, 1.442695
    %v4903 = vpow.pop %v4902
    %v4904 = vmul.f32 %v4843, 1.442695
    %v4905 = vpow.pop %v4904
    %v4906 = vmul.f32 %v4844, 1.442695
    %v4907 = vpow.pop %v4906
    %v4908 = vmul.f32 %v4845, 1.442695
    %v4909 = vpow.pop %v4908
    %v4910 = vmul.f32 %v4846, 1.442695
    %v4911 = vpow.pop %v4910
    %v4912 = vmul.f32 %v4847, 1.442695
    %v4913 = vpow.pop %v4912
    %v4914 = vmul.f32 %v4848, 1.442695
    %v4915 = vpow.pop %v4914
    %v4916 = vmul.f32 %v4849, 1.442695
    %v4917 = vpow.pop %v4916
    %v4918 = vmul.f32 %v4850, 1.442695
    %v4919 = vpow.pop %v4918
    %v4920 = vmul.f32 %v4851, 1.442695
    %v4921 = vpow.pop %v4920
    %v4922 = vmul.f32 %v4852, 1.442695
    %v4923 = vpow.pop %v4922
    %v4924 = vmul.f32 %v4853, 1.442695
    %v4925 = vpow.pop %v4924
    %v4926 = vmul.f32 %v4854, 1.442695
    %v4927 = vpow.pop %v4926
    %v4928 = vmul.f32 %v4855, 1.442695
    %v4929 = vpow.pop %v4928
    %v4930 = vmul.f32 %v4856, 1.442695
    %v4931 = vpow.pop %v4930
    %v4932 = vmul.f32 %v4857, 1.442695
    %v4933 = vpow.pop %v4932
    %v4934 = vmul.f32 %v4858, 1.442695
    %v4935 = vpow.pop %v4934
    %v4936 = vmul.f32 %v4859, 1.442695
    %v4937 = vpow.pop %v4936
    %v4938 = vmul.f32 %v4860, 1.442695
    %v4939 = vpow.pop %v4938
    %v4940 = vmul.f32 %v4861, 1.442695
    %v4941 = vpow.pop %v4940
    %v4942 = vmul.f32 %v4862, 1.442695
    %v4943 = vpow.pop %v4942
    %v4944 = vmul.f32 %v4863, 1.442695
    %v4945 = vpow.pop %v4944
    %v4946 = vmul.f32 %v4864, 1.442695
    %v4947 = vpow.pop %v4946
    %v4948 = vmul.f32 %v4865, 1.442695
    %v4949 = vpow.pop %v4948
    %v4950 = vmul.f32 %v4866, 1.442695
    %v4951 = vpow.pop %v4950
    %v4952 = vmul.f32 %v4867, 1.442695
    %v4953 = vpow.pop %v4952
    %v4954 = vmul.f32 %v4868, 1.442695
    %v4955 = vpow.pop %v4954
    %v4956 = vmul.f32 %v4869, 1.442695
    %v4957 = vpow.pop %v4956
    %v4958 = vmul.f32 %v4870, 1.442695
    %v4959 = vpow.pop %v4958
    %v4960 = vmul.f32 %v4871, 1.442695
    %v4961 = vpow.pop %v4960
    %v4962 = vmul.f32 %v4872, 1.442695
    %v4963 = vpow.pop %v4962
    %v4964 = vmul.f32 %v4873, 1.442695
    %v4965 = vpow.pop %v4964
    %v4966 = vmul.f32 %v4874, 1.442695
    %v4967 = vpow.pop %v4966
    %v4968 = vmul.f32 %v4875, 1.442695
    %v4969 = vpow.pop %v4968
    %v4970 = vmul.f32 %v4876, 1.442695
    %v4971 = vpow.pop %v4970
    %v4972 = vmul.f32 %v4877, 1.442695
    %v4973 = vpow.pop %v4972
    %v4974 = vmul.f32 %v4878, 1.442695
    %v4975 = vpow.pop %v4974
    %v4976 = vmul.f32 %v4879, 1.442695
    %v4977 = vpow.pop %v4976
    %v4978 = vmul.f32 %v4880, 1.442695
    %v4979 = vpow.pop %v4978
    %v4980 = vmul.f32 %v4881, 1.442695
    %v4981 = vpow.pop %v4980
    %v4982 = vmul.f32 %v4882, 1.442695
    %v4983 = vpow.pop %v4982
    %v4984 = vmul.f32 %v4883, 1.442695
    %v4985 = vpow.pop %v4984
    %v4986 = vmul.f32 %v4884, 1.442695
    %v4987 = vpow.pop %v4986
    %v4988 = vmul.f32 %v4885, 1.442695
    %v4989 = vpow.pop %v4988
    %v4990 = vmul.f32 %v4886, 1.442695
    %v4991 = vpow.pop %v4990
    %v4992 = vmul.f32 %v4887, 1.442695
    %v4993 = vpow.pop %v4992
    %v4994 = vmul.f32 %v4888, 1.442695
    %v4995 = vpow.pop %v4994
    %v4996 = vmul.f32 %v4889, 1.442695
    %v4997 = vpow.pop %v4996
    %v4998 = vmul.f32 %v4890, 1.442695
    %v4999 = vpow.pop %v4998
    %v5000 = vmul.f32 %v4891, 1.442695
    %v5001 = vpow.pop %v5000
    %v5002 = vmul.f32 %v4892, 1.442695
    %v5003 = vpow.pop %v5002
    %v5004 = vmul.f32 %v4893, 1.442695
    %v5005 = vpow.pop %v5004
    %v5006 = vsel %vm2156, %v4895, 0.0
    %5007 = vadd.xlane.f32.xlu0 %v5006
    %v5008 = vpop.xlane.xlu0 %5007
    %v5009 = vsel %vm2156, %v4897, 0.0
    %5010 = vadd.xlane.f32.xlu0 %v5009
    %v5011 = vpop.xlane.xlu0 %5010
    %v5012 = vsel %vm2156, %v4899, 0.0
    %5013 = vadd.xlane.f32.xlu0 %v5012
    %v5014 = vpop.xlane.xlu0 %5013
    %v5015 = vsel %vm2156, %v4901, 0.0
    %5016 = vadd.xlane.f32.xlu0 %v5015
    %v5017 = vpop.xlane.xlu0 %5016
    %v5018 = vsel %vm2156, %v4903, 0.0
    %5019 = vadd.xlane.f32.xlu0 %v5018
    %v5020 = vpop.xlane.xlu0 %5019
    %v5021 = vsel %vm2156, %v4905, 0.0
    %5022 = vadd.xlane.f32.xlu0 %v5021
    %v5023 = vpop.xlane.xlu0 %5022
    %v5024 = vsel %vm2156, %v4907, 0.0
    %5025 = vadd.xlane.f32.xlu0 %v5024
    %v5026 = vpop.xlane.xlu0 %5025
    %v5027 = vsel %vm2156, %v4909, 0.0
    %5028 = vadd.xlane.f32.xlu0 %v5027
    %v5029 = vpop.xlane.xlu0 %5028
    %v5030 = vsel %vm2156, %v4911, 0.0
    %5031 = vadd.xlane.f32.xlu0 %v5030
    %v5032 = vpop.xlane.xlu0 %5031
    %v5033 = vsel %vm2156, %v4913, 0.0
    %5034 = vadd.xlane.f32.xlu0 %v5033
    %v5035 = vpop.xlane.xlu0 %5034
    %v5036 = vsel %vm2156, %v4915, 0.0
    %5037 = vadd.xlane.f32.xlu0 %v5036
    %v5038 = vpop.xlane.xlu0 %5037
    %v5039 = vsel %vm2156, %v4917, 0.0
    %5040 = vadd.xlane.f32.xlu0 %v5039
    %v5041 = vpop.xlane.xlu0 %5040
    %v5042 = vsel %vm2156, %v4919, 0.0
    %5043 = vadd.xlane.f32.xlu0 %v5042
    %v5044 = vpop.xlane.xlu0 %5043
    %v5045 = vsel %vm2156, %v4921, 0.0
    %5046 = vadd.xlane.f32.xlu0 %v5045
    %v5047 = vpop.xlane.xlu0 %5046
    %v5048 = vsel %vm2156, %v4923, 0.0
    %5049 = vadd.xlane.f32.xlu0 %v5048
    %v5050 = vpop.xlane.xlu0 %5049
    %v5051 = vsel %vm2156, %v4925, 0.0
    %5052 = vadd.xlane.f32.xlu0 %v5051
    %v5053 = vpop.xlane.xlu0 %5052
    %v5054 = vsel %vm2156, %v4927, 0.0
    %5055 = vadd.xlane.f32.xlu0 %v5054
    %v5056 = vpop.xlane.xlu0 %5055
    %v5057 = vsel %vm2156, %v4929, 0.0
    %5058 = vadd.xlane.f32.xlu0 %v5057
    %v5059 = vpop.xlane.xlu0 %5058
    %v5060 = vsel %vm2156, %v4931, 0.0
    %5061 = vadd.xlane.f32.xlu0 %v5060
    %v5062 = vpop.xlane.xlu0 %5061
    %v5063 = vsel %vm2156, %v4933, 0.0
    %5064 = vadd.xlane.f32.xlu0 %v5063
    %v5065 = vpop.xlane.xlu0 %5064
    %v5066 = vsel %vm2156, %v4935, 0.0
    %5067 = vadd.xlane.f32.xlu0 %v5066
    %v5068 = vpop.xlane.xlu0 %5067
    %v5069 = vsel %vm2156, %v4937, 0.0
    %5070 = vadd.xlane.f32.xlu0 %v5069
    %v5071 = vpop.xlane.xlu0 %5070
    %v5072 = vsel %vm2156, %v4939, 0.0
    %5073 = vadd.xlane.f32.xlu0 %v5072
    %v5074 = vpop.xlane.xlu0 %5073
    %v5075 = vsel %vm2156, %v4941, 0.0
    %5076 = vadd.xlane.f32.xlu0 %v5075
    %v5077 = vpop.xlane.xlu0 %5076
    %v5078 = vsel %vm2156, %v4943, 0.0
    %5079 = vadd.xlane.f32.xlu0 %v5078
    %v5080 = vpop.xlane.xlu0 %5079
    %v5081 = vsel %vm2156, %v4945, 0.0
    %5082 = vadd.xlane.f32.xlu0 %v5081
    %v5083 = vpop.xlane.xlu0 %5082
    %v5084 = vsel %vm2156, %v4947, 0.0
    %5085 = vadd.xlane.f32.xlu0 %v5084
    %v5086 = vpop.xlane.xlu0 %5085
    %v5087 = vsel %vm2156, %v4949, 0.0
    %5088 = vadd.xlane.f32.xlu0 %v5087
    %v5089 = vpop.xlane.xlu0 %5088
    %v5090 = vsel %vm2156, %v4951, 0.0
    %5091 = vadd.xlane.f32.xlu0 %v5090
    %v5092 = vpop.xlane.xlu0 %5091
    %v5093 = vsel %vm2156, %v4953, 0.0
    %5094 = vadd.xlane.f32.xlu0 %v5093
    %v5095 = vpop.xlane.xlu0 %5094
    %v5096 = vsel %vm2156, %v4955, 0.0
    %5097 = vadd.xlane.f32.xlu0 %v5096
    %v5098 = vpop.xlane.xlu0 %5097
    %v5099 = vsel %vm2156, %v4957, 0.0
    %5100 = vadd.xlane.f32.xlu0 %v5099
    %v5101 = vpop.xlane.xlu0 %5100
    %v5102 = vsel %vm2156, %v4959, 0.0
    %5103 = vadd.xlane.f32.xlu0 %v5102
    %v5104 = vpop.xlane.xlu0 %5103
    %v5105 = vsel %vm2156, %v4961, 0.0
    %5106 = vadd.xlane.f32.xlu0 %v5105
    %v5107 = vpop.xlane.xlu0 %5106
    %v5108 = vsel %vm2156, %v4963, 0.0
    %5109 = vadd.xlane.f32.xlu0 %v5108
    %v5110 = vpop.xlane.xlu0 %5109
    %v5111 = vsel %vm2156, %v4965, 0.0
    %5112 = vadd.xlane.f32.xlu0 %v5111
    %v5113 = vpop.xlane.xlu0 %5112
    %v5114 = vsel %vm2156, %v4967, 0.0
    %5115 = vadd.xlane.f32.xlu0 %v5114
    %v5116 = vpop.xlane.xlu0 %5115
    %v5117 = vsel %vm2156, %v4969, 0.0
    %5118 = vadd.xlane.f32.xlu0 %v5117
    %v5119 = vpop.xlane.xlu0 %5118
    %v5120 = vsel %vm2156, %v4971, 0.0
    %5121 = vadd.xlane.f32.xlu0 %v5120
    %v5122 = vpop.xlane.xlu0 %5121
    %v5123 = vsel %vm2156, %v4973, 0.0
    %5124 = vadd.xlane.f32.xlu0 %v5123
    %v5125 = vpop.xlane.xlu0 %5124
    %v5126 = vsel %vm2156, %v4975, 0.0
    %5127 = vadd.xlane.f32.xlu0 %v5126
    %v5128 = vpop.xlane.xlu0 %5127
    %v5129 = vsel %vm2156, %v4977, 0.0
    %5130 = vadd.xlane.f32.xlu0 %v5129
    %v5131 = vpop.xlane.xlu0 %5130
    %v5132 = vsel %vm2156, %v4979, 0.0
    %5133 = vadd.xlane.f32.xlu0 %v5132
    %v5134 = vpop.xlane.xlu0 %5133
    %v5135 = vsel %vm2156, %v4981, 0.0
    %5136 = vadd.xlane.f32.xlu0 %v5135
    %v5137 = vpop.xlane.xlu0 %5136
    %v5138 = vsel %vm2156, %v4983, 0.0
    %5139 = vadd.xlane.f32.xlu0 %v5138
    %v5140 = vpop.xlane.xlu0 %5139
    %v5141 = vsel %vm2156, %v4985, 0.0
    %5142 = vadd.xlane.f32.xlu0 %v5141
    %v5143 = vpop.xlane.xlu0 %5142
    %v5144 = vsel %vm2156, %v4987, 0.0
    %5145 = vadd.xlane.f32.xlu0 %v5144
    %v5146 = vpop.xlane.xlu0 %5145
    %v5147 = vsel %vm2156, %v4989, 0.0
    %5148 = vadd.xlane.f32.xlu0 %v5147
    %v5149 = vpop.xlane.xlu0 %5148
    %v5150 = vsel %vm2156, %v4991, 0.0
    %5151 = vadd.xlane.f32.xlu0 %v5150
    %v5152 = vpop.xlane.xlu0 %5151
    %v5153 = vsel %vm2156, %v4993, 0.0
    %5154 = vadd.xlane.f32.xlu0 %v5153
    %v5155 = vpop.xlane.xlu0 %5154
    %v5156 = vsel %vm2156, %v4995, 0.0
    %5157 = vadd.xlane.f32.xlu0 %v5156
    %v5158 = vpop.xlane.xlu0 %5157
    %v5159 = vsel %vm2156, %v4997, 0.0
    %5160 = vadd.xlane.f32.xlu0 %v5159
    %v5161 = vpop.xlane.xlu0 %5160
    %v5162 = vsel %vm2156, %v4999, 0.0
    %5163 = vadd.xlane.f32.xlu0 %v5162
    %v5164 = vpop.xlane.xlu0 %5163
    %v5165 = vsel %vm2156, %v5001, 0.0
    %5166 = vadd.xlane.f32.xlu0 %v5165
    %v5167 = vpop.xlane.xlu0 %5166
    %v5168 = vsel %vm2156, %v5003, 0.0
    %5169 = vadd.xlane.f32.xlu0 %v5168
    %v5170 = vpop.xlane.xlu0 %5169
    %v5171 = vsel %vm2156, %v5005, 0.0
    %5172 = vadd.xlane.f32.xlu0 %v5171
    %v5173 = vpop.xlane.xlu0 %5172
    %v5174 = vrcp.pop %v5008
    %v5175 = vmul.f32 %v4895, %v5174
    %v5176 = vrcp.pop %v5011
    %v5177 = vmul.f32 %v4897, %v5176
    %v5178 = vrcp.pop %v5014
    %v5179 = vmul.f32 %v4899, %v5178
    %v5180 = vrcp.pop %v5017
    %v5181 = vmul.f32 %v4901, %v5180
    %v5182 = vrcp.pop %v5020
    %v5183 = vmul.f32 %v4903, %v5182
    %v5184 = vrcp.pop %v5023
    %v5185 = vmul.f32 %v4905, %v5184
    %v5186 = vrcp.pop %v5026
    %v5187 = vmul.f32 %v4907, %v5186
    %v5188 = vrcp.pop %v5029
    %v5189 = vmul.f32 %v4909, %v5188
    %v5190 = vrcp.pop %v5032
    %v5191 = vmul.f32 %v4911, %v5190
    %v5192 = vrcp.pop %v5035
    %v5193 = vmul.f32 %v4913, %v5192
    %v5194 = vrcp.pop %v5038
    %v5195 = vmul.f32 %v4915, %v5194
    %v5196 = vrcp.pop %v5041
    %v5197 = vmul.f32 %v4917, %v5196
    %v5198 = vrcp.pop %v5044
    %v5199 = vmul.f32 %v4919, %v5198
    %v5200 = vrcp.pop %v5047
    %v5201 = vmul.f32 %v4921, %v5200
    %v5202 = vrcp.pop %v5050
    %v5203 = vmul.f32 %v4923, %v5202
    %v5204 = vrcp.pop %v5053
    %v5205 = vmul.f32 %v4925, %v5204
    %v5206 = vrcp.pop %v5056
    %v5207 = vmul.f32 %v4927, %v5206
    %v5208 = vrcp.pop %v5059
    %v5209 = vmul.f32 %v4929, %v5208
    %v5210 = vrcp.pop %v5062
    %v5211 = vmul.f32 %v4931, %v5210
    %v5212 = vrcp.pop %v5065
    %v5213 = vmul.f32 %v4933, %v5212
    %v5214 = vrcp.pop %v5068
    %v5215 = vmul.f32 %v4935, %v5214
    %v5216 = vrcp.pop %v5071
    %v5217 = vmul.f32 %v4937, %v5216
    %v5218 = vrcp.pop %v5074
    %v5219 = vmul.f32 %v4939, %v5218
    %v5220 = vrcp.pop %v5077
    %v5221 = vmul.f32 %v4941, %v5220
    %v5222 = vrcp.pop %v5080
    %v5223 = vmul.f32 %v4943, %v5222
    %v5224 = vrcp.pop %v5083
    %v5225 = vmul.f32 %v4945, %v5224
    %v5226 = vrcp.pop %v5086
    %v5227 = vmul.f32 %v4947, %v5226
    %v5228 = vrcp.pop %v5089
    %v5229 = vmul.f32 %v4949, %v5228
    %v5230 = vrcp.pop %v5092
    %v5231 = vmul.f32 %v4951, %v5230
    %v5232 = vrcp.pop %v5095
    %v5233 = vmul.f32 %v4953, %v5232
    %v5234 = vrcp.pop %v5098
    %v5235 = vmul.f32 %v4955, %v5234
    %v5236 = vrcp.pop %v5101
    %v5237 = vmul.f32 %v4957, %v5236
    %v5238 = vrcp.pop %v5104
    %v5239 = vmul.f32 %v4959, %v5238
    %v5240 = vrcp.pop %v5107
    %v5241 = vmul.f32 %v4961, %v5240
    %v5242 = vrcp.pop %v5110
    %v5243 = vmul.f32 %v4963, %v5242
    %v5244 = vrcp.pop %v5113
    %v5245 = vmul.f32 %v4965, %v5244
    %v5246 = vrcp.pop %v5116
    %v5247 = vmul.f32 %v4967, %v5246
    %v5248 = vrcp.pop %v5119
    %v5249 = vmul.f32 %v4969, %v5248
    %v5250 = vrcp.pop %v5122
    %v5251 = vmul.f32 %v4971, %v5250
    %v5252 = vrcp.pop %v5125
    %v5253 = vmul.f32 %v4973, %v5252
    %v5254 = vrcp.pop %v5128
    %v5255 = vmul.f32 %v4975, %v5254
    %v5256 = vrcp.pop %v5131
    %v5257 = vmul.f32 %v4977, %v5256
    %v5258 = vrcp.pop %v5134
    %v5259 = vmul.f32 %v4979, %v5258
    %v5260 = vrcp.pop %v5137
    %v5261 = vmul.f32 %v4981, %v5260
    %v5262 = vrcp.pop %v5140
    %v5263 = vmul.f32 %v4983, %v5262
    %v5264 = vrcp.pop %v5143
    %v5265 = vmul.f32 %v4985, %v5264
    %v5266 = vrcp.pop %v5146
    %v5267 = vmul.f32 %v4987, %v5266
    %v5268 = vrcp.pop %v5149
    %v5269 = vmul.f32 %v4989, %v5268
    %v5270 = vrcp.pop %v5152
    %v5271 = vmul.f32 %v4991, %v5270
    %v5272 = vrcp.pop %v5155
    %v5273 = vmul.f32 %v4993, %v5272
    %v5274 = vrcp.pop %v5158
    %v5275 = vmul.f32 %v4995, %v5274
    %v5276 = vrcp.pop %v5161
    %v5277 = vmul.f32 %v4997, %v5276
    %v5278 = vrcp.pop %v5164
    %v5279 = vmul.f32 %v4999, %v5278
    %v5280 = vrcp.pop %v5167
    %v5281 = vmul.f32 %v5001, %v5280
    %v5282 = vrcp.pop %v5170
    %v5283 = vmul.f32 %v5003, %v5282
    %v5284 = vrcp.pop %v5173
    %v5285 = vmul.f32 %v5005, %v5284
    %v5286 = vpack.c.bf16 %v5177, %v5175
    %v5287 = vpack.c.bf16 %v5181, %v5179
    %v5288 = vpack.c.bf16 %v5185, %v5183
    %v5289 = vpack.c.bf16 %v5187, %v5187
    %v5290 = vpack.c.bf16 %v5191, %v5189
    %v5291 = vpack.c.bf16 %v5195, %v5193
    %v5292 = vpack.c.bf16 %v5199, %v5197
    %v5293 = vpack.c.bf16 %v5201, %v5201
    %v5294 = vpack.c.bf16 %v5205, %v5203
    %v5295 = vpack.c.bf16 %v5209, %v5207
    %v5296 = vpack.c.bf16 %v5213, %v5211
    %v5297 = vpack.c.bf16 %v5215, %v5215
    %v5298 = vpack.c.bf16 %v5219, %v5217
    %v5299 = vpack.c.bf16 %v5223, %v5221
    %v5300 = vpack.c.bf16 %v5227, %v5225
    %v5301 = vpack.c.bf16 %v5229, %v5229
    %v5302 = vpack.c.bf16 %v5233, %v5231
    %v5303 = vpack.c.bf16 %v5237, %v5235
    %v5304 = vpack.c.bf16 %v5241, %v5239
    %v5305 = vpack.c.bf16 %v5243, %v5243
    %v5306 = vpack.c.bf16 %v5247, %v5245
    %v5307 = vpack.c.bf16 %v5251, %v5249
    %v5308 = vpack.c.bf16 %v5255, %v5253
    %v5309 = vpack.c.bf16 %v5257, %v5257
    %v5310 = vpack.c.bf16 %v5261, %v5259
    %v5311 = vpack.c.bf16 %v5265, %v5263
    %v5312 = vpack.c.bf16 %v5269, %v5267
    %v5313 = vpack.c.bf16 %v5271, %v5271
    %v5314 = vpack.c.bf16 %v5275, %v5273
    %v5315 = vpack.c.bf16 %v5279, %v5277
    %v5316 = vpack.c.bf16 %v5283, %v5281
    %v5317 = vpack.c.bf16 %v5285, %v5285
    %5318 = vrot.lane.b32.xlu0 %v1292, 32
    %v5319 = vpop.permute.xlu0 %5318
    %5320 = vrot.lane.b32.xlu0 %v1293, 32
    %v5321 = vpop.permute.xlu0 %5320
    %5322 = vrot.lane.b32.xlu0 %v1294, 32
    %v5323 = vpop.permute.xlu0 %5322
    %5324 = vrot.lane.b32.xlu0 %v1295, 32
    %v5325 = vpop.permute.xlu0 %5324
    %5326 = vrot.lane.b32.xlu0 %v1296, 32
    %v5327 = vpop.permute.xlu0 %5326
    %5328 = vrot.lane.b32.xlu0 %v1297, 32
    %v5329 = vpop.permute.xlu0 %5328
    %5330 = vrot.lane.b32.xlu0 %v1298, 32
    %v5331 = vpop.permute.xlu0 %5330
    %v5332 = vrot.slane %v5319, 4
    %v5333 = vrot.slane %v5321, 4
    %v5334 = vrot.slane %v5323, 4
    %v5335 = vrot.slane %v5325, 4
    %v5336 = vrot.slane %v5327, 4
    %v5337 = vrot.slane %v5329, 4
    %v5338 = vrot.slane %v5331, 4
    %v5339 = vunpack.c.l.b16 %v5332
    %v5340 = vunpack.c.l.b16 %v5333
    %v5341 = vunpack.c.l.b16 %v5334
    %v5342 = vunpack.c.l.b16 %v5335
    %v5343 = vunpack.c.l.b16 %v5336
    %v5344 = vunpack.c.l.b16 %v5337
    %v5345 = vunpack.c.l.b16 %v5338
    %v5346 = vpack.c.b16 %v5340, %v5339
    %v5347 = vpack.c.b16 %v5342, %v5341
    %v5348 = vpack.c.b16 %v5344, %v5343
    %v5349 = vpack.c.b16 %v5345, %v5345
    %v5354 = vsel %vm2156, %v5286, 0
    %v5357 = vsel %vm2156, %v5287, 0
    %v5360 = vsel %vm2156, %v5288, 0
    %v5363 = vsel %vm2156, %v5289, 0
    %v5366 = vsel %vm2852, %v5349, 0
    %5368 = vmatprep.subr.bf16.mxu0 0
    %5369 = vmatpush1.bf16.msra.mxu0 %v5346
    %5370 = vmatprep.subr.bf16.mxu0 0
    %5371 = vmatpush1.bf16.msra.mxu0 %v5347
    %5372 = vmatprep.subr.bf16.mxu0 0
    %5373 = vmatpush1.bf16.msra.mxu0 %v5348
    %5374 = vmatprep.subr.bf16.mxu0 0
    %5375 = vmatpush1.bf16.msra.mxu0 %v5366
    %5376 = vmatprep.subr.bf16.mxu0 0
    %5377 = vmatpush1.bf16.msra.mxu0 0
    %5378 = vmatprep.subr.bf16.mxu0 0
    %5379 = vmatpush1.bf16.msra.mxu0 0
    %5380 = vmatprep.subr.bf16.mxu0 0
    %5381 = vmatpush1.bf16.msra.mxu0 0
    %5382 = vmatprep.subr.bf16.mxu0 0
    %5383 = vmatpush1.bf16.msra.mxu0 0
    %5384 = vmatprep.subr.bf16.mxu0 0
    %5385 = vmatpush1.bf16.msra.mxu0 0
    %5386 = vmatprep.subr.bf16.mxu0 0
    %5387 = vmatpush1.bf16.msra.mxu0 0
    %5388 = vmatprep.subr.bf16.mxu0 0
    %5389 = vmatpush1.bf16.msra.mxu0 0
    %5390 = vmatprep.subr.bf16.mxu0 0
    %5391 = vmatpush1.bf16.msra.mxu0 0
    %5392 = vmatprep.subr.bf16.mxu0 0
    %5393 = vmatpush1.bf16.msra.mxu0 0
    %5394 = vmatprep.subr.bf16.mxu0 0
    %5395 = vmatpush1.bf16.msra.mxu0 0
    %5396 = vmatprep.subr.bf16.mxu0 0
    %5397 = vmatpush1.bf16.msra.mxu0 0
    %5398 = vmatprep.subr.bf16.mxu0 0
    %5399 = vmatpush1.bf16.msra.mxu0 0
    %5400 = vmatprep.mubr.bf16.mxu0 0
    %5401 = vmatmul.mubr.bf16.gmra.mrb[0].mxu0 %v5354
    %v5402 = vpop.f32.mrb[0].mxu0
    %v5403 = vadd.f32 0.0, %v5402
    %v5404 = vpop.f32.mrb[0].mxu0
    %v5405 = vpop.f32.mrb[0].mxu0
    %v5406 = vadd.f32 0.0, %v5405
    %v5407 = vpop.f32.mrb[0].mxu0
    %5408 = vmatprep.mubr.bf16.mxu0 0
    %5409 = vmatmul.mubr.bf16.gmra.mrb[0].mxu0 %v5357
    %v5410 = vpop.f32.mrb[0].mxu0
    %v5411 = vadd.f32 0.0, %v5410
    %v5412 = vpop.f32.mrb[0].mxu0
    %v5413 = vpop.f32.mrb[0].mxu0
    %v5414 = vadd.f32 0.0, %v5413
    %v5415 = vpop.f32.mrb[0].mxu0
    %5416 = vmatprep.mubr.bf16.mxu0 0
    %5417 = vmatmul.mubr.bf16.gmra.mrb[0].mxu0 %v5360
    %v5418 = vpop.f32.mrb[0].mxu0
    %v5419 = vadd.f32 0.0, %v5418
    %v5420 = vpop.f32.mrb[0].mxu0
    %v5421 = vpop.f32.mrb[0].mxu0
    %v5422 = vadd.f32 0.0, %v5421
    %v5423 = vpop.f32.mrb[0].mxu0
    %5424 = vmatprep.mubr.bf16.mxu0 0
    %5425 = vmatmul.mubr.bf16.gmra.mrb[0].mxu0 %v5363
    %v5426 = vpop.f32.mrb[0].mxu0
    %v5427 = vadd.f32 0.0, %v5426
    %v5428 = vpop.f32.mrb[0].mxu0
    %v5429 = vpop.f32.mrb[0].mxu0
    %v5430 = vpop.f32.mrb[0].mxu0
    %5431 = vdwg.mxu0
    %5432 = vrot.lane.b32.xlu0 %v1299, 32
    %v5433 = vpop.permute.xlu0 %5432
    %5434 = vrot.lane.b32.xlu0 %v1300, 32
    %v5435 = vpop.permute.xlu0 %5434
    %5436 = vrot.lane.b32.xlu0 %v1301, 32
    %v5437 = vpop.permute.xlu0 %5436
    %5438 = vrot.lane.b32.xlu0 %v1302, 32
    %v5439 = vpop.permute.xlu0 %5438
    %5440 = vrot.lane.b32.xlu0 %v1303, 32
    %v5441 = vpop.permute.xlu0 %5440
    %5442 = vrot.lane.b32.xlu0 %v1304, 32
    %v5443 = vpop.permute.xlu0 %5442
    %5444 = vrot.lane.b32.xlu0 %v1305, 32
    %v5445 = vpop.permute.xlu0 %5444
    %v5446 = vrot.slane %v5433, 4
    %v5447 = vrot.slane %v5435, 4
    %v5448 = vrot.slane %v5437, 4
    %v5449 = vrot.slane %v5439, 4
    %v5450 = vrot.slane %v5441, 4
    %v5451 = vrot.slane %v5443, 4
    %v5452 = vrot.slane %v5445, 4
    %v5453 = vunpack.c.l.b16 %v5446
    %v5454 = vunpack.c.l.b16 %v5447
    %v5455 = vunpack.c.l.b16 %v5448
    %v5456 = vunpack.c.l.b16 %v5449
    %v5457 = vunpack.c.l.b16 %v5450
    %v5458 = vunpack.c.l.b16 %v5451
    %v5459 = vunpack.c.l.b16 %v5452
    %v5460 = vpack.c.b16 %v5454, %v5453
    %v5461 = vpack.c.b16 %v5456, %v5455
    %v5462 = vpack.c.b16 %v5458, %v5457
    %v5463 = vpack.c.b16 %v5459, %v5459
    %v5468 = vsel %vm2156, %v5290, 0
    %v5471 = vsel %vm2156, %v5291, 0
    %v5474 = vsel %vm2156, %v5292, 0
    %v5477 = vsel %vm2156, %v5293, 0
    %v5480 = vsel %vm2852, %v5463, 0
    %5482 = vmatprep.subr.bf16.mxu0 0
    %5483 = vmatpush1.bf16.msra.mxu0 %v5460
    %5484 = vmatprep.subr.bf16.mxu0 0
    %5485 = vmatpush1.bf16.msra.mxu0 %v5461
    %5486 = vmatprep.subr.bf16.mxu0 0
    %5487 = vmatpush1.bf16.msra.mxu0 %v5462
    %5488 = vmatprep.subr.bf16.mxu0 0
    %5489 = vmatpush1.bf16.msra.mxu0 %v5480
    %5490 = vmatprep.subr.bf16.mxu0 0
    %5491 = vmatpush1.bf16.msra.mxu0 0
    %5492 = vmatprep.subr.bf16.mxu0 0
    %5493 = vmatpush1.bf16.msra.mxu0 0
    %5494 = vmatprep.subr.bf16.mxu0 0
    %5495 = vmatpush1.bf16.msra.mxu0 0
    %5496 = vmatprep.subr.bf16.mxu0 0
    %5497 = vmatpush1.bf16.msra.mxu0 0
    %5498 = vmatprep.subr.bf16.mxu0 0
    %5499 = vmatpush1.bf16.msra.mxu0 0
    %5500 = vmatprep.subr.bf16.mxu0 0
    %5501 = vmatpush1.bf16.msra.mxu0 0
    %5502 = vmatprep.subr.bf16.mxu0 0
    %5503 = vmatpush1.bf16.msra.mxu0 0
    %5504 = vmatprep.subr.bf16.mxu0 0
    %5505 = vmatpush1.bf16.msra.mxu0 0
    %5506 = vmatprep.subr.bf16.mxu0 0
    %5507 = vmatpush1.bf16.msra.mxu0 0
    %5508 = vmatprep.subr.bf16.mxu0 0
    %5509 = vmatpush1.bf16.msra.mxu0 0
    %5510 = vmatprep.subr.bf16.mxu0 0
    %5511 = vmatpush1.bf16.msra.mxu0 0
    %5512 = vmatprep.subr.bf16.mxu0 0
    %5513 = vmatpush1.bf16.msra.mxu0 0
    %5514 = vmatprep.mubr.bf16.mxu0 0
    %5515 = vmatmul.mubr.bf16.gmra.mrb[0].mxu0 %v5468
    %v5516 = vpop.f32.mrb[0].mxu0
    %v5517 = vadd.f32 0.0, %v5516
    %v5518 = vpop.f32.mrb[0].mxu0
    %v5519 = vpop.f32.mrb[0].mxu0
    %v5520 = vadd.f32 0.0, %v5519
    %v5521 = vpop.f32.mrb[0].mxu0
    %5522 = vmatprep.mubr.bf16.mxu0 0
    %5523 = vmatmul.mubr.bf16.gmra.mrb[0].mxu0 %v5471
    %v5524 = vpop.f32.mrb[0].mxu0
    %v5525 = vadd.f32 0.0, %v5524
    %v5526 = vpop.f32.mrb[0].mxu0
    %v5527 = vpop.f32.mrb[0].mxu0
    %v5528 = vadd.f32 0.0, %v5527
    %v5529 = vpop.f32.mrb[0].mxu0
    %5530 = vmatprep.mubr.bf16.mxu0 0
    %5531 = vmatmul.mubr.bf16.gmra.mrb[0].mxu0 %v5474
    %v5532 = vpop.f32.mrb[0].mxu0
    %v5533 = vadd.f32 0.0, %v5532
    %v5534 = vpop.f32.mrb[0].mxu0
    %v5535 = vpop.f32.mrb[0].mxu0
    %v5536 = vadd.f32 0.0, %v5535
    %v5537 = vpop.f32.mrb[0].mxu0
    %5538 = vmatprep.mubr.bf16.mxu0 0
    %5539 = vmatmul.mubr.bf16.gmra.mrb[0].mxu0 %v5477
    %v5540 = vpop.f32.mrb[0].mxu0
    %v5541 = vadd.f32 0.0, %v5540
    %v5542 = vpop.f32.mrb[0].mxu0
    %v5543 = vpop.f32.mrb[0].mxu0
    %v5544 = vpop.f32.mrb[0].mxu0
    %5545 = vdwg.mxu0
    %5546 = vrot.lane.b32.xlu0 %v1306, 32
    %v5547 = vpop.permute.xlu0 %5546
    %5548 = vrot.lane.b32.xlu0 %v1307, 32
    %v5549 = vpop.permute.xlu0 %5548
    %5550 = vrot.lane.b32.xlu0 %v1308, 32
    %v5551 = vpop.permute.xlu0 %5550
    %5552 = vrot.lane.b32.xlu0 %v1309, 32
    %v5553 = vpop.permute.xlu0 %5552
    %5554 = vrot.lane.b32.xlu0 %v1310, 32
    %v5555 = vpop.permute.xlu0 %5554
    %5556 = vrot.lane.b32.xlu0 %v1311, 32
    %v5557 = vpop.permute.xlu0 %5556
    %5558 = vrot.lane.b32.xlu0 %v1312, 32
    %v5559 = vpop.permute.xlu0 %5558
    %v5560 = vrot.slane %v5547, 4
    %v5561 = vrot.slane %v5549, 4
    %v5562 = vrot.slane %v5551, 4
    %v5563 = vrot.slane %v5553, 4
    %v5564 = vrot.slane %v5555, 4
    %v5565 = vrot.slane %v5557, 4
    %v5566 = vrot.slane %v5559, 4
    %v5567 = vunpack.c.l.b16 %v5560
    %v5568 = vunpack.c.l.b16 %v5561
    %v5569 = vunpack.c.l.b16 %v5562
    %v5570 = vunpack.c.l.b16 %v5563
    %v5571 = vunpack.c.l.b16 %v5564
    %v5572 = vunpack.c.l.b16 %v5565
    %v5573 = vunpack.c.l.b16 %v5566
    %v5574 = vpack.c.b16 %v5568, %v5567
    %v5575 = vpack.c.b16 %v5570, %v5569
    %v5576 = vpack.c.b16 %v5572, %v5571
    %v5577 = vpack.c.b16 %v5573, %v5573
    %v5582 = vsel %vm2156, %v5294, 0
    %v5585 = vsel %vm2156, %v5295, 0
    %v5588 = vsel %vm2156, %v5296, 0
    %v5591 = vsel %vm2156, %v5297, 0
    %v5594 = vsel %vm2852, %v5577, 0
    %5596 = vmatprep.subr.bf16.mxu0 0
    %5597 = vmatpush1.bf16.msra.mxu0 %v5574
    %5598 = vmatprep.subr.bf16.mxu0 0
    %5599 = vmatpush1.bf16.msra.mxu0 %v5575
    %5600 = vmatprep.subr.bf16.mxu0 0
    %5601 = vmatpush1.bf16.msra.mxu0 %v5576
    %5602 = vmatprep.subr.bf16.mxu0 0
    %5603 = vmatpush1.bf16.msra.mxu0 %v5594
    %5604 = vmatprep.subr.bf16.mxu0 0
    %5605 = vmatpush1.bf16.msra.mxu0 0
    %5606 = vmatprep.subr.bf16.mxu0 0
    %5607 = vmatpush1.bf16.msra.mxu0 0
    %5608 = vmatprep.subr.bf16.mxu0 0
    %5609 = vmatpush1.bf16.msra.mxu0 0
    %5610 = vmatprep.subr.bf16.mxu0 0
    %5611 = vmatpush1.bf16.msra.mxu0 0
    %5612 = vmatprep.subr.bf16.mxu0 0
    %5613 = vmatpush1.bf16.msra.mxu0 0
    %5614 = vmatprep.subr.bf16.mxu0 0
    %5615 = vmatpush1.bf16.msra.mxu0 0
    %5616 = vmatprep.subr.bf16.mxu0 0
    %5617 = vmatpush1.bf16.msra.mxu0 0
    %5618 = vmatprep.subr.bf16.mxu0 0
    %5619 = vmatpush1.bf16.msra.mxu0 0
    %5620 = vmatprep.subr.bf16.mxu0 0
    %5621 = vmatpush1.bf16.msra.mxu0 0
    %5622 = vmatprep.subr.bf16.mxu0 0
    %5623 = vmatpush1.bf16.msra.mxu0 0
    %5624 = vmatprep.subr.bf16.mxu0 0
    %5625 = vmatpush1.bf16.msra.mxu0 0
    %5626 = vmatprep.subr.bf16.mxu0 0
    %5627 = vmatpush1.bf16.msra.mxu0 0
    %5628 = vmatprep.mubr.bf16.mxu0 0
    %5629 = vmatmul.mubr.bf16.gmra.mrb[0].mxu0 %v5582
    %v5630 = vpop.f32.mrb[0].mxu0
    %v5631 = vadd.f32 0.0, %v5630
    %v5632 = vpop.f32.mrb[0].mxu0
    %v5633 = vpop.f32.mrb[0].mxu0
    %v5634 = vadd.f32 0.0, %v5633
    %v5635 = vpop.f32.mrb[0].mxu0
    %5636 = vmatprep.mubr.bf16.mxu0 0
    %5637 = vmatmul.mubr.bf16.gmra.mrb[0].mxu0 %v5585
    %v5638 = vpop.f32.mrb[0].mxu0
    %v5639 = vadd.f32 0.0, %v5638
    %v5640 = vpop.f32.mrb[0].mxu0
    %v5641 = vpop.f32.mrb[0].mxu0
    %v5642 = vadd.f32 0.0, %v5641
    %v5643 = vpop.f32.mrb[0].mxu0
    %5644 = vmatprep.mubr.bf16.mxu0 0
    %5645 = vmatmul.mubr.bf16.gmra.mrb[0].mxu0 %v5588
    %v5646 = vpop.f32.mrb[0].mxu0
    %v5647 = vadd.f32 0.0, %v5646
    %v5648 = vpop.f32.mrb[0].mxu0
    %v5649 = vpop.f32.mrb[0].mxu0
    %v5650 = vadd.f32 0.0, %v5649
    %v5651 = vpop.f32.mrb[0].mxu0
    %5652 = vmatprep.mubr.bf16.mxu0 0
    %5653 = vmatmul.mubr.bf16.gmra.mrb[0].mxu0 %v5591
    %v5654 = vpop.f32.mrb[0].mxu0
    %v5655 = vadd.f32 0.0, %v5654
    %v5656 = vpop.f32.mrb[0].mxu0
    %v5657 = vpop.f32.mrb[0].mxu0
    %v5658 = vpop.f32.mrb[0].mxu0
    %5659 = vdwg.mxu0
    %5660 = vrot.lane.b32.xlu0 %v1313, 32
    %v5661 = vpop.permute.xlu0 %5660
    %5662 = vrot.lane.b32.xlu0 %v1314, 32
    %v5663 = vpop.permute.xlu0 %5662
    %5664 = vrot.lane.b32.xlu0 %v1315, 32
    %v5665 = vpop.permute.xlu0 %5664
    %5666 = vrot.lane.b32.xlu0 %v1316, 32
    %v5667 = vpop.permute.xlu0 %5666
    %5668 = vrot.lane.b32.xlu0 %v1317, 32
    %v5669 = vpop.permute.xlu0 %5668
    %5670 = vrot.lane.b32.xlu0 %v1318, 32
    %v5671 = vpop.permute.xlu0 %5670
    %5672 = vrot.lane.b32.xlu0 %v1319, 32
    %v5673 = vpop.permute.xlu0 %5672
    %v5674 = vrot.slane %v5661, 4
    %v5675 = vrot.slane %v5663, 4
    %v5676 = vrot.slane %v5665, 4
    %v5677 = vrot.slane %v5667, 4
    %v5678 = vrot.slane %v5669, 4
    %v5679 = vrot.slane %v5671, 4
    %v5680 = vrot.slane %v5673, 4
    %v5681 = vunpack.c.l.b16 %v5674
    %v5682 = vunpack.c.l.b16 %v5675
    %v5683 = vunpack.c.l.b16 %v5676
    %v5684 = vunpack.c.l.b16 %v5677
    %v5685 = vunpack.c.l.b16 %v5678
    %v5686 = vunpack.c.l.b16 %v5679
    %v5687 = vunpack.c.l.b16 %v5680
    %v5688 = vpack.c.b16 %v5682, %v5681
    %v5689 = vpack.c.b16 %v5684, %v5683
    %v5690 = vpack.c.b16 %v5686, %v5685
    %v5691 = vpack.c.b16 %v5687, %v5687
    %v5696 = vsel %vm2156, %v5298, 0
    %v5699 = vsel %vm2156, %v5299, 0
    %v5702 = vsel %vm2156, %v5300, 0
    %v5705 = vsel %vm2156, %v5301, 0
    %v5708 = vsel %vm2852, %v5691, 0
    %5710 = vmatprep.subr.bf16.mxu0 0
    %5711 = vmatpush1.bf16.msra.mxu0 %v5688
    %5712 = vmatprep.subr.bf16.mxu0 0
    %5713 = vmatpush1.bf16.msra.mxu0 %v5689
    %5714 = vmatprep.subr.bf16.mxu0 0
    %5715 = vmatpush1.bf16.msra.mxu0 %v5690
    %5716 = vmatprep.subr.bf16.mxu0 0
    %5717 = vmatpush1.bf16.msra.mxu0 %v5708
    %5718 = vmatprep.subr.bf16.mxu0 0
    %5719 = vmatpush1.bf16.msra.mxu0 0
    %5720 = vmatprep.subr.bf16.mxu0 0
    %5721 = vmatpush1.bf16.msra.mxu0 0
    %5722 = vmatprep.subr.bf16.mxu0 0
    %5723 = vmatpush1.bf16.msra.mxu0 0
    %5724 = vmatprep.subr.bf16.mxu0 0
    %5725 = vmatpush1.bf16.msra.mxu0 0
    %5726 = vmatprep.subr.bf16.mxu0 0
    %5727 = vmatpush1.bf16.msra.mxu0 0
    %5728 = vmatprep.subr.bf16.mxu0 0
    %5729 = vmatpush1.bf16.msra.mxu0 0
    %5730 = vmatprep.subr.bf16.mxu0 0
    %5731 = vmatpush1.bf16.msra.mxu0 0
    %5732 = vmatprep.subr.bf16.mxu0 0
    %5733 = vmatpush1.bf16.msra.mxu0 0
    %5734 = vmatprep.subr.bf16.mxu0 0
    %5735 = vmatpush1.bf16.msra.mxu0 0
    %5736 = vmatprep.subr.bf16.mxu0 0
    %5737 = vmatpush1.bf16.msra.mxu0 0
    %5738 = vmatprep.subr.bf16.mxu0 0
    %5739 = vmatpush1.bf16.msra.mxu0 0
    %5740 = vmatprep.subr.bf16.mxu0 0
    %5741 = vmatpush1.bf16.msra.mxu0 0
    %5742 = vmatprep.mubr.bf16.mxu0 0
    %5743 = vmatmul.mubr.bf16.gmra.mrb[0].mxu0 %v5696
    %v5744 = vpop.f32.mrb[0].mxu0
    %v5745 = vadd.f32 0.0, %v5744
    %v5746 = vpop.f32.mrb[0].mxu0
    %v5747 = vpop.f32.mrb[0].mxu0
    %v5748 = vadd.f32 0.0, %v5747
    %v5749 = vpop.f32.mrb[0].mxu0
    %5750 = vmatprep.mubr.bf16.mxu0 0
    %5751 = vmatmul.mubr.bf16.gmra.mrb[0].mxu0 %v5699
    %v5752 = vpop.f32.mrb[0].mxu0
    %v5753 = vadd.f32 0.0, %v5752
    %v5754 = vpop.f32.mrb[0].mxu0
    %v5755 = vpop.f32.mrb[0].mxu0
    %v5756 = vadd.f32 0.0, %v5755
    %v5757 = vpop.f32.mrb[0].mxu0
    %5758 = vmatprep.mubr.bf16.mxu0 0
    %5759 = vmatmul.mubr.bf16.gmra.mrb[0].mxu0 %v5702
    %v5760 = vpop.f32.mrb[0].mxu0
    %v5761 = vadd.f32 0.0, %v5760
    %v5762 = vpop.f32.mrb[0].mxu0
    %v5763 = vpop.f32.mrb[0].mxu0
    %v5764 = vadd.f32 0.0, %v5763
    %v5765 = vpop.f32.mrb[0].mxu0
    %5766 = vmatprep.mubr.bf16.mxu0 0
    %5767 = vmatmul.mubr.bf16.gmra.mrb[0].mxu0 %v5705
    %v5768 = vpop.f32.mrb[0].mxu0
    %v5769 = vadd.f32 0.0, %v5768
    %v5770 = vpop.f32.mrb[0].mxu0
    %v5771 = vpop.f32.mrb[0].mxu0
    %v5772 = vpop.f32.mrb[0].mxu0
    %5773 = vdwg.mxu0
    %5774 = vrot.lane.b32.xlu0 %v1320, 32
    %v5775 = vpop.permute.xlu0 %5774
    %5776 = vrot.lane.b32.xlu0 %v1321, 32
    %v5777 = vpop.permute.xlu0 %5776
    %5778 = vrot.lane.b32.xlu0 %v1322, 32
    %v5779 = vpop.permute.xlu0 %5778
    %5780 = vrot.lane.b32.xlu0 %v1323, 32
    %v5781 = vpop.permute.xlu0 %5780
    %5782 = vrot.lane.b32.xlu0 %v1324, 32
    %v5783 = vpop.permute.xlu0 %5782
    %5784 = vrot.lane.b32.xlu0 %v1325, 32
    %v5785 = vpop.permute.xlu0 %5784
    %5786 = vrot.lane.b32.xlu0 %v1326, 32
    %v5787 = vpop.permute.xlu0 %5786
    %v5788 = vrot.slane %v5775, 4
    %v5789 = vrot.slane %v5777, 4
    %v5790 = vrot.slane %v5779, 4
    %v5791 = vrot.slane %v5781, 4
    %v5792 = vrot.slane %v5783, 4
    %v5793 = vrot.slane %v5785, 4
    %v5794 = vrot.slane %v5787, 4
    %v5795 = vunpack.c.l.b16 %v5788
    %v5796 = vunpack.c.l.b16 %v5789
    %v5797 = vunpack.c.l.b16 %v5790
    %v5798 = vunpack.c.l.b16 %v5791
    %v5799 = vunpack.c.l.b16 %v5792
    %v5800 = vunpack.c.l.b16 %v5793
    %v5801 = vunpack.c.l.b16 %v5794
    %v5802 = vpack.c.b16 %v5796, %v5795
    %v5803 = vpack.c.b16 %v5798, %v5797
    %v5804 = vpack.c.b16 %v5800, %v5799
    %v5805 = vpack.c.b16 %v5801, %v5801
    %v5810 = vsel %vm2156, %v5302, 0
    %v5813 = vsel %vm2156, %v5303, 0
    %v5816 = vsel %vm2156, %v5304, 0
    %v5819 = vsel %vm2156, %v5305, 0
    %v5822 = vsel %vm2852, %v5805, 0
    %5824 = vmatprep.subr.bf16.mxu0 0
    %5825 = vmatpush1.bf16.msra.mxu0 %v5802
    %5826 = vmatprep.subr.bf16.mxu0 0
    %5827 = vmatpush1.bf16.msra.mxu0 %v5803
    %5828 = vmatprep.subr.bf16.mxu0 0
    %5829 = vmatpush1.bf16.msra.mxu0 %v5804
    %5830 = vmatprep.subr.bf16.mxu0 0
    %5831 = vmatpush1.bf16.msra.mxu0 %v5822
    %5832 = vmatprep.subr.bf16.mxu0 0
    %5833 = vmatpush1.bf16.msra.mxu0 0
    %5834 = vmatprep.subr.bf16.mxu0 0
    %5835 = vmatpush1.bf16.msra.mxu0 0
    %5836 = vmatprep.subr.bf16.mxu0 0
    %5837 = vmatpush1.bf16.msra.mxu0 0
    %5838 = vmatprep.subr.bf16.mxu0 0
    %5839 = vmatpush1.bf16.msra.mxu0 0
    %5840 = vmatprep.subr.bf16.mxu0 0
    %5841 = vmatpush1.bf16.msra.mxu0 0
    %5842 = vmatprep.subr.bf16.mxu0 0
    %5843 = vmatpush1.bf16.msra.mxu0 0
    %5844 = vmatprep.subr.bf16.mxu0 0
    %5845 = vmatpush1.bf16.msra.mxu0 0
    %5846 = vmatprep.subr.bf16.mxu0 0
    %5847 = vmatpush1.bf16.msra.mxu0 0
    %5848 = vmatprep.subr.bf16.mxu0 0
    %5849 = vmatpush1.bf16.msra.mxu0 0
    %5850 = vmatprep.subr.bf16.mxu0 0
    %5851 = vmatpush1.bf16.msra.mxu0 0
    %5852 = vmatprep.subr.bf16.mxu0 0
    %5853 = vmatpush1.bf16.msra.mxu0 0
    %5854 = vmatprep.subr.bf16.mxu0 0
    %5855 = vmatpush1.bf16.msra.mxu0 0
    %5856 = vmatprep.mubr.bf16.mxu0 0
    %5857 = vmatmul.mubr.bf16.gmra.mrb[0].mxu0 %v5810
    %v5858 = vpop.f32.mrb[0].mxu0
    %v5859 = vadd.f32 0.0, %v5858
    %v5860 = vpop.f32.mrb[0].mxu0
    %v5861 = vpop.f32.mrb[0].mxu0
    %v5862 = vadd.f32 0.0, %v5861
    %v5863 = vpop.f32.mrb[0].mxu0
    %5864 = vmatprep.mubr.bf16.mxu0 0
    %5865 = vmatmul.mubr.bf16.gmra.mrb[0].mxu0 %v5813
    %v5866 = vpop.f32.mrb[0].mxu0
    %v5867 = vadd.f32 0.0, %v5866
    %v5868 = vpop.f32.mrb[0].mxu0
    %v5869 = vpop.f32.mrb[0].mxu0
    %v5870 = vadd.f32 0.0, %v5869
    %v5871 = vpop.f32.mrb[0].mxu0
    %5872 = vmatprep.mubr.bf16.mxu0 0
    %5873 = vmatmul.mubr.bf16.gmra.mrb[0].mxu0 %v5816
    %v5874 = vpop.f32.mrb[0].mxu0
    %v5875 = vadd.f32 0.0, %v5874
    %v5876 = vpop.f32.mrb[0].mxu0
    %v5877 = vpop.f32.mrb[0].mxu0
    %v5878 = vadd.f32 0.0, %v5877
    %v5879 = vpop.f32.mrb[0].mxu0
    %5880 = vmatprep.mubr.bf16.mxu0 0
    %5881 = vmatmul.mubr.bf16.gmra.mrb[0].mxu0 %v5819
    %v5882 = vpop.f32.mrb[0].mxu0
    %v5883 = vadd.f32 0.0, %v5882
    %v5884 = vpop.f32.mrb[0].mxu0
    %v5885 = vpop.f32.mrb[0].mxu0
    %v5886 = vpop.f32.mrb[0].mxu0
    %5887 = vdwg.mxu0
    %5888 = vrot.lane.b32.xlu0 %v1327, 32
    %v5889 = vpop.permute.xlu0 %5888
    %5890 = vrot.lane.b32.xlu0 %v1328, 32
    %v5891 = vpop.permute.xlu0 %5890
    %5892 = vrot.lane.b32.xlu0 %v1329, 32
    %v5893 = vpop.permute.xlu0 %5892
    %5894 = vrot.lane.b32.xlu0 %v1330, 32
    %v5895 = vpop.permute.xlu0 %5894
    %5896 = vrot.lane.b32.xlu0 %v1331, 32
    %v5897 = vpop.permute.xlu0 %5896
    %5898 = vrot.lane.b32.xlu0 %v1332, 32
    %v5899 = vpop.permute.xlu0 %5898
    %5900 = vrot.lane.b32.xlu0 %v1333, 32
    %v5901 = vpop.permute.xlu0 %5900
    %v5902 = vrot.slane %v5889, 4
    %v5903 = vrot.slane %v5891, 4
    %v5904 = vrot.slane %v5893, 4
    %v5905 = vrot.slane %v5895, 4
    %v5906 = vrot.slane %v5897, 4
    %v5907 = vrot.slane %v5899, 4
    %v5908 = vrot.slane %v5901, 4
    %v5909 = vunpack.c.l.b16 %v5902
    %v5910 = vunpack.c.l.b16 %v5903
    %v5911 = vunpack.c.l.b16 %v5904
    %v5912 = vunpack.c.l.b16 %v5905
    %v5913 = vunpack.c.l.b16 %v5906
    %v5914 = vunpack.c.l.b16 %v5907
    %v5915 = vunpack.c.l.b16 %v5908
    %v5916 = vpack.c.b16 %v5910, %v5909
    %v5917 = vpack.c.b16 %v5912, %v5911
    %v5918 = vpack.c.b16 %v5914, %v5913
    %v5919 = vpack.c.b16 %v5915, %v5915
    %v5924 = vsel %vm2156, %v5306, 0
    %v5927 = vsel %vm2156, %v5307, 0
    %v5930 = vsel %vm2156, %v5308, 0
    %v5933 = vsel %vm2156, %v5309, 0
    %v5936 = vsel %vm2852, %v5919, 0
    %5938 = vmatprep.subr.bf16.mxu0 0
    %5939 = vmatpush1.bf16.msra.mxu0 %v5916
    %5940 = vmatprep.subr.bf16.mxu0 0
    %5941 = vmatpush1.bf16.msra.mxu0 %v5917
    %5942 = vmatprep.subr.bf16.mxu0 0
    %5943 = vmatpush1.bf16.msra.mxu0 %v5918
    %5944 = vmatprep.subr.bf16.mxu0 0
    %5945 = vmatpush1.bf16.msra.mxu0 %v5936
    %5946 = vmatprep.subr.bf16.mxu0 0
    %5947 = vmatpush1.bf16.msra.mxu0 0
    %5948 = vmatprep.subr.bf16.mxu0 0
    %5949 = vmatpush1.bf16.msra.mxu0 0
    %5950 = vmatprep.subr.bf16.mxu0 0
    %5951 = vmatpush1.bf16.msra.mxu0 0
    %5952 = vmatprep.subr.bf16.mxu0 0
    %5953 = vmatpush1.bf16.msra.mxu0 0
    %5954 = vmatprep.subr.bf16.mxu0 0
    %5955 = vmatpush1.bf16.msra.mxu0 0
    %5956 = vmatprep.subr.bf16.mxu0 0
    %5957 = vmatpush1.bf16.msra.mxu0 0
    %5958 = vmatprep.subr.bf16.mxu0 0
    %5959 = vmatpush1.bf16.msra.mxu0 0
    %5960 = vmatprep.subr.bf16.mxu0 0
    %5961 = vmatpush1.bf16.msra.mxu0 0
    %5962 = vmatprep.subr.bf16.mxu0 0
    %5963 = vmatpush1.bf16.msra.mxu0 0
    %5964 = vmatprep.subr.bf16.mxu0 0
    %5965 = vmatpush1.bf16.msra.mxu0 0
    %5966 = vmatprep.subr.bf16.mxu0 0
    %5967 = vmatpush1.bf16.msra.mxu0 0
    %5968 = vmatprep.subr.bf16.mxu0 0
    %5969 = vmatpush1.bf16.msra.mxu0 0
    %5970 = vmatprep.mubr.bf16.mxu0 0
    %5971 = vmatmul.mubr.bf16.gmra.mrb[0].mxu0 %v5924
    %v5972 = vpop.f32.mrb[0].mxu0
    %v5973 = vadd.f32 0.0, %v5972
    %v5974 = vpop.f32.mrb[0].mxu0
    %v5975 = vpop.f32.mrb[0].mxu0
    %v5976 = vadd.f32 0.0, %v5975
    %v5977 = vpop.f32.mrb[0].mxu0
    %5978 = vmatprep.mubr.bf16.mxu0 0
    %5979 = vmatmul.mubr.bf16.gmra.mrb[0].mxu0 %v5927
    %v5980 = vpop.f32.mrb[0].mxu0
    %v5981 = vadd.f32 0.0, %v5980
    %v5982 = vpop.f32.mrb[0].mxu0
    %v5983 = vpop.f32.mrb[0].mxu0
    %v5984 = vadd.f32 0.0, %v5983
    %v5985 = vpop.f32.mrb[0].mxu0
    %5986 = vmatprep.mubr.bf16.mxu0 0
    %5987 = vmatmul.mubr.bf16.gmra.mrb[0].mxu0 %v5930
    %v5988 = vpop.f32.mrb[0].mxu0
    %v5989 = vadd.f32 0.0, %v5988
    %v5990 = vpop.f32.mrb[0].mxu0
    %v5991 = vpop.f32.mrb[0].mxu0
    %v5992 = vadd.f32 0.0, %v5991
    %v5993 = vpop.f32.mrb[0].mxu0
    %5994 = vmatprep.mubr.bf16.mxu0 0
    %5995 = vmatmul.mubr.bf16.gmra.mrb[0].mxu0 %v5933
    %v5996 = vpop.f32.mrb[0].mxu0
    %v5997 = vadd.f32 0.0, %v5996
    %v5998 = vpop.f32.mrb[0].mxu0
    %v5999 = vpop.f32.mrb[0].mxu0
    %v6000 = vpop.f32.mrb[0].mxu0
    %6001 = vdwg.mxu0
    %6002 = vrot.lane.b32.xlu0 %v1334, 32
    %v6003 = vpop.permute.xlu0 %6002
    %6004 = vrot.lane.b32.xlu0 %v1335, 32
    %v6005 = vpop.permute.xlu0 %6004
    %6006 = vrot.lane.b32.xlu0 %v1336, 32
    %v6007 = vpop.permute.xlu0 %6006
    %6008 = vrot.lane.b32.xlu0 %v1337, 32
    %v6009 = vpop.permute.xlu0 %6008
    %6010 = vrot.lane.b32.xlu0 %v1338, 32
    %v6011 = vpop.permute.xlu0 %6010
    %6012 = vrot.lane.b32.xlu0 %v1339, 32
    %v6013 = vpop.permute.xlu0 %6012
    %6014 = vrot.lane.b32.xlu0 %v1340, 32
    %v6015 = vpop.permute.xlu0 %6014
    %v6016 = vrot.slane %v6003, 4
    %v6017 = vrot.slane %v6005, 4
    %v6018 = vrot.slane %v6007, 4
    %v6019 = vrot.slane %v6009, 4
    %v6020 = vrot.slane %v6011, 4
    %v6021 = vrot.slane %v6013, 4
    %v6022 = vrot.slane %v6015, 4
    %v6023 = vunpack.c.l.b16 %v6016
    %v6024 = vunpack.c.l.b16 %v6017
    %v6025 = vunpack.c.l.b16 %v6018
    %v6026 = vunpack.c.l.b16 %v6019
    %v6027 = vunpack.c.l.b16 %v6020
    %v6028 = vunpack.c.l.b16 %v6021
    %v6029 = vunpack.c.l.b16 %v6022
    %v6030 = vpack.c.b16 %v6024, %v6023
    %v6031 = vpack.c.b16 %v6026, %v6025
    %v6032 = vpack.c.b16 %v6028, %v6027
    %v6033 = vpack.c.b16 %v6029, %v6029
    %v6038 = vsel %vm2156, %v5310, 0
    %v6041 = vsel %vm2156, %v5311, 0
    %v6044 = vsel %vm2156, %v5312, 0
    %v6047 = vsel %vm2156, %v5313, 0
    %v6050 = vsel %vm2852, %v6033, 0
    %6052 = vmatprep.subr.bf16.mxu0 0
    %6053 = vmatpush1.bf16.msra.mxu0 %v6030
    %6054 = vmatprep.subr.bf16.mxu0 0
    %6055 = vmatpush1.bf16.msra.mxu0 %v6031
    %6056 = vmatprep.subr.bf16.mxu0 0
    %6057 = vmatpush1.bf16.msra.mxu0 %v6032
    %6058 = vmatprep.subr.bf16.mxu0 0
    %6059 = vmatpush1.bf16.msra.mxu0 %v6050
    %6060 = vmatprep.subr.bf16.mxu0 0
    %6061 = vmatpush1.bf16.msra.mxu0 0
    %6062 = vmatprep.subr.bf16.mxu0 0
    %6063 = vmatpush1.bf16.msra.mxu0 0
    %6064 = vmatprep.subr.bf16.mxu0 0
    %6065 = vmatpush1.bf16.msra.mxu0 0
    %6066 = vmatprep.subr.bf16.mxu0 0
    %6067 = vmatpush1.bf16.msra.mxu0 0
    %6068 = vmatprep.subr.bf16.mxu0 0
    %6069 = vmatpush1.bf16.msra.mxu0 0
    %6070 = vmatprep.subr.bf16.mxu0 0
    %6071 = vmatpush1.bf16.msra.mxu0 0
    %6072 = vmatprep.subr.bf16.mxu0 0
    %6073 = vmatpush1.bf16.msra.mxu0 0
    %6074 = vmatprep.subr.bf16.mxu0 0
    %6075 = vmatpush1.bf16.msra.mxu0 0
    %6076 = vmatprep.subr.bf16.mxu0 0
    %6077 = vmatpush1.bf16.msra.mxu0 0
    %6078 = vmatprep.subr.bf16.mxu0 0
    %6079 = vmatpush1.bf16.msra.mxu0 0
    %6080 = vmatprep.subr.bf16.mxu0 0
    %6081 = vmatpush1.bf16.msra.mxu0 0
    %6082 = vmatprep.subr.bf16.mxu0 0
    %6083 = vmatpush1.bf16.msra.mxu0 0
    %6084 = vmatprep.mubr.bf16.mxu0 0
    %6085 = vmatmul.mubr.bf16.gmra.mrb[0].mxu0 %v6038
    %v6086 = vpop.f32.mrb[0].mxu0
    %v6087 = vadd.f32 0.0, %v6086
    %v6088 = vpop.f32.mrb[0].mxu0
    %v6089 = vpop.f32.mrb[0].mxu0
    %v6090 = vadd.f32 0.0, %v6089
    %v6091 = vpop.f32.mrb[0].mxu0
    %6092 = vmatprep.mubr.bf16.mxu0 0
    %6093 = vmatmul.mubr.bf16.gmra.mrb[0].mxu0 %v6041
    %v6094 = vpop.f32.mrb[0].mxu0
    %v6095 = vadd.f32 0.0, %v6094
    %v6096 = vpop.f32.mrb[0].mxu0
    %v6097 = vpop.f32.mrb[0].mxu0
    %v6098 = vadd.f32 0.0, %v6097
    %v6099 = vpop.f32.mrb[0].mxu0
    %6100 = vmatprep.mubr.bf16.mxu0 0
    %6101 = vmatmul.mubr.bf16.gmra.mrb[0].mxu0 %v6044
    %v6102 = vpop.f32.mrb[0].mxu0
    %v6103 = vadd.f32 0.0, %v6102
    %v6104 = vpop.f32.mrb[0].mxu0
    %v6105 = vpop.f32.mrb[0].mxu0
    %v6106 = vadd.f32 0.0, %v6105
    %v6107 = vpop.f32.mrb[0].mxu0
    %6108 = vmatprep.mubr.bf16.mxu0 0
    %6109 = vmatmul.mubr.bf16.gmra.mrb[0].mxu0 %v6047
    %v6110 = vpop.f32.mrb[0].mxu0
    %v6111 = vadd.f32 0.0, %v6110
    %v6112 = vpop.f32.mrb[0].mxu0
    %v6113 = vpop.f32.mrb[0].mxu0
    %v6114 = vpop.f32.mrb[0].mxu0
    %6115 = vdwg.mxu0
    %6116 = vrot.lane.b32.xlu0 %v1341, 32
    %v6117 = vpop.permute.xlu0 %6116
    %6118 = vrot.lane.b32.xlu0 %v1342, 32
    %v6119 = vpop.permute.xlu0 %6118
    %6120 = vrot.lane.b32.xlu0 %v1343, 32
    %v6121 = vpop.permute.xlu0 %6120
    %6122 = vrot.lane.b32.xlu0 %v1344, 32
    %v6123 = vpop.permute.xlu0 %6122
    %6124 = vrot.lane.b32.xlu0 %v1345, 32
    %v6125 = vpop.permute.xlu0 %6124
    %6126 = vrot.lane.b32.xlu0 %v1346, 32
    %v6127 = vpop.permute.xlu0 %6126
    %6128 = vrot.lane.b32.xlu0 %v1347, 32
    %v6129 = vpop.permute.xlu0 %6128
    %v6130 = vrot.slane %v6117, 4
    %v6131 = vrot.slane %v6119, 4
    %v6132 = vrot.slane %v6121, 4
    %v6133 = vrot.slane %v6123, 4
    %v6134 = vrot.slane %v6125, 4
    %v6135 = vrot.slane %v6127, 4
    %v6136 = vrot.slane %v6129, 4
    %v6137 = vunpack.c.l.b16 %v6130
    %v6138 = vunpack.c.l.b16 %v6131
    %v6139 = vunpack.c.l.b16 %v6132
    %v6140 = vunpack.c.l.b16 %v6133
    %v6141 = vunpack.c.l.b16 %v6134
    %v6142 = vunpack.c.l.b16 %v6135
    %v6143 = vunpack.c.l.b16 %v6136
    %v6144 = vpack.c.b16 %v6138, %v6137
    %v6145 = vpack.c.b16 %v6140, %v6139
    %v6146 = vpack.c.b16 %v6142, %v6141
    %v6147 = vpack.c.b16 %v6143, %v6143
    %v6152 = vsel %vm2156, %v5314, 0
    %v6155 = vsel %vm2156, %v5315, 0
    %v6158 = vsel %vm2156, %v5316, 0
    %v6161 = vsel %vm2156, %v5317, 0
    %v6164 = vsel %vm2852, %v6147, 0
    %6166 = vmatprep.subr.bf16.mxu0 0
    %6167 = vmatpush1.bf16.msra.mxu0 %v6144
    %6168 = vmatprep.subr.bf16.mxu0 0
    %6169 = vmatpush1.bf16.msra.mxu0 %v6145
    %6170 = vmatprep.subr.bf16.mxu0 0
    %6171 = vmatpush1.bf16.msra.mxu0 %v6146
    %6172 = vmatprep.subr.bf16.mxu0 0
    %6173 = vmatpush1.bf16.msra.mxu0 %v6164
    %6174 = vmatprep.subr.bf16.mxu0 0
    %6175 = vmatpush1.bf16.msra.mxu0 0
    %6176 = vmatprep.subr.bf16.mxu0 0
    %6177 = vmatpush1.bf16.msra.mxu0 0
    %6178 = vmatprep.subr.bf16.mxu0 0
    %6179 = vmatpush1.bf16.msra.mxu0 0
    %6180 = vmatprep.subr.bf16.mxu0 0
    %6181 = vmatpush1.bf16.msra.mxu0 0
    %6182 = vmatprep.subr.bf16.mxu0 0
    %6183 = vmatpush1.bf16.msra.mxu0 0
    %6184 = vmatprep.subr.bf16.mxu0 0
    %6185 = vmatpush1.bf16.msra.mxu0 0
    %6186 = vmatprep.subr.bf16.mxu0 0
    %6187 = vmatpush1.bf16.msra.mxu0 0
    %6188 = vmatprep.subr.bf16.mxu0 0
    %6189 = vmatpush1.bf16.msra.mxu0 0
    %6190 = vmatprep.subr.bf16.mxu0 0
    %6191 = vmatpush1.bf16.msra.mxu0 0
    %6192 = vmatprep.subr.bf16.mxu0 0
    %6193 = vmatpush1.bf16.msra.mxu0 0
    %6194 = vmatprep.subr.bf16.mxu0 0
    %6195 = vmatpush1.bf16.msra.mxu0 0
    %6196 = vmatprep.subr.bf16.mxu0 0
    %6197 = vmatpush1.bf16.msra.mxu0 0
    %6198 = vmatprep.mubr.bf16.mxu0 0
    %6199 = vmatmul.mubr.bf16.gmra.mrb[0].mxu0 %v6152
    %v6200 = vpop.f32.mrb[0].mxu0
    %v6201 = vadd.f32 0.0, %v6200
    %v6202 = vpop.f32.mrb[0].mxu0
    %v6203 = vpop.f32.mrb[0].mxu0
    %v6204 = vadd.f32 0.0, %v6203
    %v6205 = vpop.f32.mrb[0].mxu0
    %6206 = vmatprep.mubr.bf16.mxu0 0
    %6207 = vmatmul.mubr.bf16.gmra.mrb[0].mxu0 %v6155
    %v6208 = vpop.f32.mrb[0].mxu0
    %v6209 = vadd.f32 0.0, %v6208
    %v6210 = vpop.f32.mrb[0].mxu0
    %v6211 = vpop.f32.mrb[0].mxu0
    %v6212 = vadd.f32 0.0, %v6211
    %v6213 = vpop.f32.mrb[0].mxu0
    %6214 = vmatprep.mubr.bf16.mxu0 0
    %6215 = vmatmul.mubr.bf16.gmra.mrb[0].mxu0 %v6158
    %v6216 = vpop.f32.mrb[0].mxu0
    %v6217 = vadd.f32 0.0, %v6216
    %v6218 = vpop.f32.mrb[0].mxu0
    %v6219 = vpop.f32.mrb[0].mxu0
    %v6220 = vadd.f32 0.0, %v6219
    %v6221 = vpop.f32.mrb[0].mxu0
    %6222 = vmatprep.mubr.bf16.mxu0 0
    %6223 = vmatmul.mubr.bf16.gmra.mrb[0].mxu0 %v6161
    %v6224 = vpop.f32.mrb[0].mxu0
    %v6225 = vadd.f32 0.0, %v6224
    %v6226 = vpop.f32.mrb[0].mxu0
    %v6227 = vpop.f32.mrb[0].mxu0
    %v6228 = vpop.f32.mrb[0].mxu0
    %6229 = vdwg.mxu0
    %v6230 = vpack.c.bf16 %v5406, %v5403
    %v6231 = vpack.c.bf16 %v5414, %v5411
    %v6232 = vpack.c.bf16 %v5422, %v5419
    %v6233 = vpack.c.bf16 %v5427, %v5427
    %v6234 = vpack.c.bf16 %v5520, %v5517
    %v6235 = vpack.c.bf16 %v5528, %v5525
    %v6236 = vpack.c.bf16 %v5536, %v5533
    %v6237 = vpack.c.bf16 %v5541, %v5541
    %v6238 = vpack.c.bf16 %v5634, %v5631
    %v6239 = vpack.c.bf16 %v5642, %v5639
    %v6240 = vpack.c.bf16 %v5650, %v5647
    %v6241 = vpack.c.bf16 %v5655, %v5655
    %v6242 = vpack.c.bf16 %v5748, %v5745
    %v6243 = vpack.c.bf16 %v5756, %v5753
    %v6244 = vpack.c.bf16 %v5764, %v5761
    %v6245 = vpack.c.bf16 %v5769, %v5769
    %v6246 = vpack.c.bf16 %v5862, %v5859
    %v6247 = vpack.c.bf16 %v5870, %v5867
    %v6248 = vpack.c.bf16 %v5878, %v5875
    %v6249 = vpack.c.bf16 %v5883, %v5883
    %v6250 = vpack.c.bf16 %v5976, %v5973
    %v6251 = vpack.c.bf16 %v5984, %v5981
    %v6252 = vpack.c.bf16 %v5992, %v5989
    %v6253 = vpack.c.bf16 %v5997, %v5997
    %v6254 = vpack.c.bf16 %v6090, %v6087
    %v6255 = vpack.c.bf16 %v6098, %v6095
    %v6256 = vpack.c.bf16 %v6106, %v6103
    %v6257 = vpack.c.bf16 %v6111, %v6111
    %v6258 = vpack.c.bf16 %v6204, %v6201
    %v6259 = vpack.c.bf16 %v6212, %v6209
    %v6260 = vpack.c.bf16 %v6220, %v6217
    %v6261 = vpack.c.bf16 %v6225, %v6225
    %s6262 = scalar_lea.vmem [#allocation7], 112
    %v6263 = vld [vmem:[%s6262] sm:$0xff]
    %v6264 = vld [vmem:[%s6262 + $0x8] sm:$0xff]
    %v6265 = vld [vmem:[%s6262 + $0x10] sm:$0xff]
    %v6266 = vld [vmem:[%s6262 + $0x18] sm:$0xff]
    %v6267 = vld [vmem:[%s6262 + $0x20] sm:$0xff]
    %v6268 = vld [vmem:[%s6262 + $0x28] sm:$0xff]
    %v6269 = vld [vmem:[%s6262 + $0x30] sm:$0xff]
    %6270 = vrot.lane.b32.xlu0 %v1292, 96
    %v6271 = vpop.permute.xlu0 %6270
    %6272 = vrot.lane.b32.xlu0 %v1293, 96
    %v6273 = vpop.permute.xlu0 %6272
    %6274 = vrot.lane.b32.xlu0 %v1294, 96
    %v6275 = vpop.permute.xlu0 %6274
    %6276 = vrot.lane.b32.xlu0 %v1295, 96
    %v6277 = vpop.permute.xlu0 %6276
    %6278 = vrot.lane.b32.xlu0 %v1296, 96
    %v6279 = vpop.permute.xlu0 %6278
    %6280 = vrot.lane.b32.xlu0 %v1297, 96
    %v6281 = vpop.permute.xlu0 %6280
    %6282 = vrot.lane.b32.xlu0 %v1298, 96
    %v6283 = vpop.permute.xlu0 %6282
    %v6284 = vrot.slane %v6271, 4
    %v6285 = vrot.slane %v6273, 4
    %v6286 = vrot.slane %v6275, 4
    %v6287 = vrot.slane %v6277, 4
    %v6288 = vrot.slane %v6279, 4
    %v6289 = vrot.slane %v6281, 4
    %v6290 = vrot.slane %v6283, 4
    %6291 = vrot.lane.b32.xlu0 %v1355, 64
    %v6292 = vpop.permute.xlu0 %6291
    %6293 = vrot.lane.b32.xlu0 %v1356, 64
    %v6294 = vpop.permute.xlu0 %6293
    %6295 = vrot.lane.b32.xlu0 %v1357, 64
    %v6296 = vpop.permute.xlu0 %6295
    %6297 = vrot.lane.b32.xlu0 %v1358, 64
    %v6298 = vpop.permute.xlu0 %6297
    %v6299 = vunpack.c.l.b16 %v6284
    %v6300 = vunpack.c.l.b16 %v6285
    %v6301 = vunpack.c.l.b16 %v6286
    %v6302 = vunpack.c.l.b16 %v6287
    %v6303 = vunpack.c.l.b16 %v6288
    %v6304 = vunpack.c.l.b16 %v6289
    %v6305 = vunpack.c.l.b16 %v6290
    %v6306 = vpack.c.b16 %v6300, %v6299
    %v6307 = vpack.c.b16 %v6302, %v6301
    %v6308 = vpack.c.b16 %v6304, %v6303
    %v6309 = vpack.c.b16 %v6305, %v6305
    %v6311 = vsel %vm1367, %v6292, 0
    %v6314 = vsel %vm1367, %v6294, 0
    %v6317 = vsel %vm1367, %v6296, 0
    %v6320 = vsel %vm1367, %v6298, 0
    %v6323 = vsel %vm1367, %v6306, 0
    %v6326 = vsel %vm1367, %v6307, 0
    %v6329 = vsel %vm1367, %v6308, 0
    %v6332 = vsel %vm1367, %v6309, 0
    %6334 = vmatprep.subr.bf16.mxu0 0
    %6335 = vmatpush1.bf16.xpose.msra.mxu0 %v6323
    %6336 = vmatprep.subr.bf16.mxu0 0
    %6337 = vmatpush1.bf16.xpose.msra.mxu0 %v6326
    %6338 = vmatprep.subr.bf16.mxu0 0
    %6339 = vmatpush1.bf16.xpose.msra.mxu0 %v6329
    %6340 = vmatprep.subr.bf16.mxu0 0
    %6341 = vmatpush1.bf16.xpose.msra.mxu0 %v6332
    %6342 = vmatprep.subr.bf16.mxu0 0
    %6343 = vmatpush1.bf16.xpose.msra.mxu0 0
    %6344 = vmatprep.subr.bf16.mxu0 0
    %6345 = vmatpush1.bf16.xpose.msra.mxu0 0
    %6346 = vmatprep.subr.bf16.mxu0 0
    %6347 = vmatpush1.bf16.xpose.msra.mxu0 0
    %6348 = vmatprep.subr.bf16.mxu0 0
    %6349 = vmatpush1.bf16.xpose.msra.mxu0 0
    %6350 = vmatprep.subr.bf16.mxu0 0
    %6351 = vmatpush1.bf16.xpose.msra.mxu0 0
    %6352 = vmatprep.subr.bf16.mxu0 0
    %6353 = vmatpush1.bf16.xpose.msra.mxu0 0
    %6354 = vmatprep.subr.bf16.mxu0 0
    %6355 = vmatpush1.bf16.xpose.msra.mxu0 0
    %6356 = vmatprep.subr.bf16.mxu0 0
    %6357 = vmatpush1.bf16.xpose.msra.mxu0 0
    %6358 = vmatprep.subr.bf16.mxu0 0
    %6359 = vmatpush1.bf16.xpose.msra.mxu0 0
    %6360 = vmatprep.subr.bf16.mxu0 0
    %6361 = vmatpush1.bf16.xpose.msra.mxu0 0
    %6362 = vmatprep.subr.bf16.mxu0 0
    %6363 = vmatpush1.bf16.xpose.msra.mxu0 0
    %6364 = vmatprep.subr.bf16.mxu0 0
    %6365 = vmatpush1.bf16.xpose.msra.mxu0 0
    %6366 = vmatprep.mubr.bf16.mxu0 0
    %6367 = vmatmul.mubr.bf16.gmra.mrb[0].mxu0 %v6311
    %v6368 = vpop.f32.mrb[0].mxu0
    %v6369 = vadd.f32 %v6263, %v6368
    %v6370 = vpop.f32.mrb[0].mxu0
    %v6371 = vpop.f32.mrb[0].mxu0
    %v6372 = vadd.f32 %v6264, %v6371
    %v6373 = vpop.f32.mrb[0].mxu0
    %6374 = vmatprep.mubr.bf16.mxu0 0
    %6375 = vmatmul.mubr.bf16.gmra.mrb[0].mxu0 %v6314
    %v6376 = vpop.f32.mrb[0].mxu0
    %v6377 = vadd.f32 %v6265, %v6376
    %v6378 = vpop.f32.mrb[0].mxu0
    %v6379 = vpop.f32.mrb[0].mxu0
    %v6380 = vadd.f32 %v6266, %v6379
    %v6381 = vpop.f32.mrb[0].mxu0
    %6382 = vmatprep.mubr.bf16.mxu0 0
    %6383 = vmatmul.mubr.bf16.gmra.mrb[0].mxu0 %v6317
    %v6384 = vpop.f32.mrb[0].mxu0
    %v6385 = vadd.f32 %v6267, %v6384
    %v6386 = vpop.f32.mrb[0].mxu0
    %v6387 = vpop.f32.mrb[0].mxu0
    %v6388 = vadd.f32 %v6268, %v6387
    %v6389 = vpop.f32.mrb[0].mxu0
    %6390 = vmatprep.mubr.bf16.mxu0 0
    %6391 = vmatmul.mubr.bf16.gmra.mrb[0].mxu0 %v6320
    %v6392 = vpop.f32.mrb[0].mxu0
    %v6393 = vadd.f32 %v6269, %v6392
    %v6394 = vpop.f32.mrb[0].mxu0
    %v6395 = vpop.f32.mrb[0].mxu0
    %v6396 = vpop.f32.mrb[0].mxu0
    %6397 = vdwg.mxu0
    %6398 = vrot.lane.b32.xlu0 %v1299, 96
    %v6399 = vpop.permute.xlu0 %6398
    %6400 = vrot.lane.b32.xlu0 %v1300, 96
    %v6401 = vpop.permute.xlu0 %6400
    %6402 = vrot.lane.b32.xlu0 %v1301, 96
    %v6403 = vpop.permute.xlu0 %6402
    %6404 = vrot.lane.b32.xlu0 %v1302, 96
    %v6405 = vpop.permute.xlu0 %6404
    %6406 = vrot.lane.b32.xlu0 %v1303, 96
    %v6407 = vpop.permute.xlu0 %6406
    %6408 = vrot.lane.b32.xlu0 %v1304, 96
    %v6409 = vpop.permute.xlu0 %6408
    %6410 = vrot.lane.b32.xlu0 %v1305, 96
    %v6411 = vpop.permute.xlu0 %6410
    %v6412 = vrot.slane %v6399, 4
    %v6413 = vrot.slane %v6401, 4
    %v6414 = vrot.slane %v6403, 4
    %v6415 = vrot.slane %v6405, 4
    %v6416 = vrot.slane %v6407, 4
    %v6417 = vrot.slane %v6409, 4
    %v6418 = vrot.slane %v6411, 4
    %6419 = vrot.lane.b32.xlu0 %v1456, 64
    %v6420 = vpop.permute.xlu0 %6419
    %6421 = vrot.lane.b32.xlu0 %v1457, 64
    %v6422 = vpop.permute.xlu0 %6421
    %6423 = vrot.lane.b32.xlu0 %v1458, 64
    %v6424 = vpop.permute.xlu0 %6423
    %6425 = vrot.lane.b32.xlu0 %v1459, 64
    %v6426 = vpop.permute.xlu0 %6425
    %v6427 = vunpack.c.l.b16 %v6412
    %v6428 = vunpack.c.l.b16 %v6413
    %v6429 = vunpack.c.l.b16 %v6414
    %v6430 = vunpack.c.l.b16 %v6415
    %v6431 = vunpack.c.l.b16 %v6416
    %v6432 = vunpack.c.l.b16 %v6417
    %v6433 = vunpack.c.l.b16 %v6418
    %v6434 = vpack.c.b16 %v6428, %v6427
    %v6435 = vpack.c.b16 %v6430, %v6429
    %v6436 = vpack.c.b16 %v6432, %v6431
    %v6437 = vpack.c.b16 %v6433, %v6433
    %v6439 = vsel %vm1367, %v6420, 0
    %v6442 = vsel %vm1367, %v6422, 0
    %v6445 = vsel %vm1367, %v6424, 0
    %v6448 = vsel %vm1367, %v6426, 0
    %v6451 = vsel %vm1367, %v6434, 0
    %v6454 = vsel %vm1367, %v6435, 0
    %v6457 = vsel %vm1367, %v6436, 0
    %v6460 = vsel %vm1367, %v6437, 0
    %6462 = vmatprep.subr.bf16.mxu0 0
    %6463 = vmatpush1.bf16.xpose.msra.mxu0 %v6451
    %6464 = vmatprep.subr.bf16.mxu0 0
    %6465 = vmatpush1.bf16.xpose.msra.mxu0 %v6454
    %6466 = vmatprep.subr.bf16.mxu0 0
    %6467 = vmatpush1.bf16.xpose.msra.mxu0 %v6457
    %6468 = vmatprep.subr.bf16.mxu0 0
    %6469 = vmatpush1.bf16.xpose.msra.mxu0 %v6460
    %6470 = vmatprep.subr.bf16.mxu0 0
    %6471 = vmatpush1.bf16.xpose.msra.mxu0 0
    %6472 = vmatprep.subr.bf16.mxu0 0
    %6473 = vmatpush1.bf16.xpose.msra.mxu0 0
    %6474 = vmatprep.subr.bf16.mxu0 0
    %6475 = vmatpush1.bf16.xpose.msra.mxu0 0
    %6476 = vmatprep.subr.bf16.mxu0 0
    %6477 = vmatpush1.bf16.xpose.msra.mxu0 0
    %6478 = vmatprep.subr.bf16.mxu0 0
    %6479 = vmatpush1.bf16.xpose.msra.mxu0 0
    %6480 = vmatprep.subr.bf16.mxu0 0
    %6481 = vmatpush1.bf16.xpose.msra.mxu0 0
    %6482 = vmatprep.subr.bf16.mxu0 0
    %6483 = vmatpush1.bf16.xpose.msra.mxu0 0
    %6484 = vmatprep.subr.bf16.mxu0 0
    %6485 = vmatpush1.bf16.xpose.msra.mxu0 0
    %6486 = vmatprep.subr.bf16.mxu0 0
    %6487 = vmatpush1.bf16.xpose.msra.mxu0 0
    %6488 = vmatprep.subr.bf16.mxu0 0
    %6489 = vmatpush1.bf16.xpose.msra.mxu0 0
    %6490 = vmatprep.subr.bf16.mxu0 0
    %6491 = vmatpush1.bf16.xpose.msra.mxu0 0
    %6492 = vmatprep.subr.bf16.mxu0 0
    %6493 = vmatpush1.bf16.xpose.msra.mxu0 0
    %6494 = vmatprep.mubr.bf16.mxu0 0
    %6495 = vmatmul.mubr.bf16.gmra.mrb[0].mxu0 %v6439
    %v6496 = vpop.f32.mrb[0].mxu0
    %v6497 = vadd.f32 %v6263, %v6496
    %v6498 = vpop.f32.mrb[0].mxu0
    %v6499 = vpop.f32.mrb[0].mxu0
    %v6500 = vadd.f32 %v6264, %v6499
    %v6501 = vpop.f32.mrb[0].mxu0
    %6502 = vmatprep.mubr.bf16.mxu0 0
    %6503 = vmatmul.mubr.bf16.gmra.mrb[0].mxu0 %v6442
    %v6504 = vpop.f32.mrb[0].mxu0
    %v6505 = vadd.f32 %v6265, %v6504
    %v6506 = vpop.f32.mrb[0].mxu0
    %v6507 = vpop.f32.mrb[0].mxu0
    %v6508 = vadd.f32 %v6266, %v6507
    %v6509 = vpop.f32.mrb[0].mxu0
    %6510 = vmatprep.mubr.bf16.mxu0 0
    %6511 = vmatmul.mubr.bf16.gmra.mrb[0].mxu0 %v6445
    %v6512 = vpop.f32.mrb[0].mxu0
    %v6513 = vadd.f32 %v6267, %v6512
    %v6514 = vpop.f32.mrb[0].mxu0
    %v6515 = vpop.f32.mrb[0].mxu0
    %v6516 = vadd.f32 %v6268, %v6515
    %v6517 = vpop.f32.mrb[0].mxu0
    %6518 = vmatprep.mubr.bf16.mxu0 0
    %6519 = vmatmul.mubr.bf16.gmra.mrb[0].mxu0 %v6448
    %v6520 = vpop.f32.mrb[0].mxu0
    %v6521 = vadd.f32 %v6269, %v6520
    %v6522 = vpop.f32.mrb[0].mxu0
    %v6523 = vpop.f32.mrb[0].mxu0
    %v6524 = vpop.f32.mrb[0].mxu0
    %6525 = vdwg.mxu0
    %6526 = vrot.lane.b32.xlu0 %v1306, 96
    %v6527 = vpop.permute.xlu0 %6526
    %6528 = vrot.lane.b32.xlu0 %v1307, 96
    %v6529 = vpop.permute.xlu0 %6528
    %6530 = vrot.lane.b32.xlu0 %v1308, 96
    %v6531 = vpop.permute.xlu0 %6530
    %6532 = vrot.lane.b32.xlu0 %v1309, 96
    %v6533 = vpop.permute.xlu0 %6532
    %6534 = vrot.lane.b32.xlu0 %v1310, 96
    %v6535 = vpop.permute.xlu0 %6534
    %6536 = vrot.lane.b32.xlu0 %v1311, 96
    %v6537 = vpop.permute.xlu0 %6536
    %6538 = vrot.lane.b32.xlu0 %v1312, 96
    %v6539 = vpop.permute.xlu0 %6538
    %v6540 = vrot.slane %v6527, 4
    %v6541 = vrot.slane %v6529, 4
    %v6542 = vrot.slane %v6531, 4
    %v6543 = vrot.slane %v6533, 4
    %v6544 = vrot.slane %v6535, 4
    %v6545 = vrot.slane %v6537, 4
    %v6546 = vrot.slane %v6539, 4
    %6547 = vrot.lane.b32.xlu0 %v1556, 64
    %v6548 = vpop.permute.xlu0 %6547
    %6549 = vrot.lane.b32.xlu0 %v1557, 64
    %v6550 = vpop.permute.xlu0 %6549
    %6551 = vrot.lane.b32.xlu0 %v1558, 64
    %v6552 = vpop.permute.xlu0 %6551
    %6553 = vrot.lane.b32.xlu0 %v1559, 64
    %v6554 = vpop.permute.xlu0 %6553
    %v6555 = vunpack.c.l.b16 %v6540
    %v6556 = vunpack.c.l.b16 %v6541
    %v6557 = vunpack.c.l.b16 %v6542
    %v6558 = vunpack.c.l.b16 %v6543
    %v6559 = vunpack.c.l.b16 %v6544
    %v6560 = vunpack.c.l.b16 %v6545
    %v6561 = vunpack.c.l.b16 %v6546
    %v6562 = vpack.c.b16 %v6556, %v6555
    %v6563 = vpack.c.b16 %v6558, %v6557
    %v6564 = vpack.c.b16 %v6560, %v6559
    %v6565 = vpack.c.b16 %v6561, %v6561
    %v6567 = vsel %vm1367, %v6548, 0
    %v6570 = vsel %vm1367, %v6550, 0
    %v6573 = vsel %vm1367, %v6552, 0
    %v6576 = vsel %vm1367, %v6554, 0
    %v6579 = vsel %vm1367, %v6562, 0
    %v6582 = vsel %vm1367, %v6563, 0
    %v6585 = vsel %vm1367, %v6564, 0
    %v6588 = vsel %vm1367, %v6565, 0
    %6590 = vmatprep.subr.bf16.mxu0 0
    %6591 = vmatpush1.bf16.xpose.msra.mxu0 %v6579
    %6592 = vmatprep.subr.bf16.mxu0 0
    %6593 = vmatpush1.bf16.xpose.msra.mxu0 %v6582
    %6594 = vmatprep.subr.bf16.mxu0 0
    %6595 = vmatpush1.bf16.xpose.msra.mxu0 %v6585
    %6596 = vmatprep.subr.bf16.mxu0 0
    %6597 = vmatpush1.bf16.xpose.msra.mxu0 %v6588
    %6598 = vmatprep.subr.bf16.mxu0 0
    %6599 = vmatpush1.bf16.xpose.msra.mxu0 0
    %6600 = vmatprep.subr.bf16.mxu0 0
    %6601 = vmatpush1.bf16.xpose.msra.mxu0 0
    %6602 = vmatprep.subr.bf16.mxu0 0
    %6603 = vmatpush1.bf16.xpose.msra.mxu0 0
    %6604 = vmatprep.subr.bf16.mxu0 0
    %6605 = vmatpush1.bf16.xpose.msra.mxu0 0
    %6606 = vmatprep.subr.bf16.mxu0 0
    %6607 = vmatpush1.bf16.xpose.msra.mxu0 0
    %6608 = vmatprep.subr.bf16.mxu0 0
    %6609 = vmatpush1.bf16.xpose.msra.mxu0 0
    %6610 = vmatprep.subr.bf16.mxu0 0
    %6611 = vmatpush1.bf16.xpose.msra.mxu0 0
    %6612 = vmatprep.subr.bf16.mxu0 0
    %6613 = vmatpush1.bf16.xpose.msra.mxu0 0
    %6614 = vmatprep.subr.bf16.mxu0 0
    %6615 = vmatpush1.bf16.xpose.msra.mxu0 0
    %6616 = vmatprep.subr.bf16.mxu0 0
    %6617 = vmatpush1.bf16.xpose.msra.mxu0 0
    %6618 = vmatprep.subr.bf16.mxu0 0
    %6619 = vmatpush1.bf16.xpose.msra.mxu0 0
    %6620 = vmatprep.subr.bf16.mxu0 0
    %6621 = vmatpush1.bf16.xpose.msra.mxu0 0
    %6622 = vmatprep.mubr.bf16.mxu0 0
    %6623 = vmatmul.mubr.bf16.gmra.mrb[0].mxu0 %v6567
    %v6624 = vpop.f32.mrb[0].mxu0
    %v6625 = vadd.f32 %v6263, %v6624
    %v6626 = vpop.f32.mrb[0].mxu0
    %v6627 = vpop.f32.mrb[0].mxu0
    %v6628 = vadd.f32 %v6264, %v6627
    %v6629 = vpop.f32.mrb[0].mxu0
    %6630 = vmatprep.mubr.bf16.mxu0 0
    %6631 = vmatmul.mubr.bf16.gmra.mrb[0].mxu0 %v6570
    %v6632 = vpop.f32.mrb[0].mxu0
    %v6633 = vadd.f32 %v6265, %v6632
    %v6634 = vpop.f32.mrb[0].mxu0
    %v6635 = vpop.f32.mrb[0].mxu0
    %v6636 = vadd.f32 %v6266, %v6635
    %v6637 = vpop.f32.mrb[0].mxu0
    %6638 = vmatprep.mubr.bf16.mxu0 0
    %6639 = vmatmul.mubr.bf16.gmra.mrb[0].mxu0 %v6573
    %v6640 = vpop.f32.mrb[0].mxu0
    %v6641 = vadd.f32 %v6267, %v6640
    %v6642 = vpop.f32.mrb[0].mxu0
    %v6643 = vpop.f32.mrb[0].mxu0
    %v6644 = vadd.f32 %v6268, %v6643
    %v6645 = vpop.f32.mrb[0].mxu0
    %6646 = vmatprep.mubr.bf16.mxu0 0
    %6647 = vmatmul.mubr.bf16.gmra.mrb[0].mxu0 %v6576
    %v6648 = vpop.f32.mrb[0].mxu0
    %v6649 = vadd.f32 %v6269, %v6648
    %v6650 = vpop.f32.mrb[0].mxu0
    %v6651 = vpop.f32.mrb[0].mxu0
    %v6652 = vpop.f32.mrb[0].mxu0
    %6653 = vdwg.mxu0
    %6654 = vrot.lane.b32.xlu0 %v1313, 96
    %v6655 = vpop.permute.xlu0 %6654
    %6656 = vrot.lane.b32.xlu0 %v1314, 96
    %v6657 = vpop.permute.xlu0 %6656
    %6658 = vrot.lane.b32.xlu0 %v1315, 96
    %v6659 = vpop.permute.xlu0 %6658
    %6660 = vrot.lane.b32.xlu0 %v1316, 96
    %v6661 = vpop.permute.xlu0 %6660
    %6662 = vrot.lane.b32.xlu0 %v1317, 96
    %v6663 = vpop.permute.xlu0 %6662
    %6664 = vrot.lane.b32.xlu0 %v1318, 96
    %v6665 = vpop.permute.xlu0 %6664
    %6666 = vrot.lane.b32.xlu0 %v1319, 96
    %v6667 = vpop.permute.xlu0 %6666
    %v6668 = vrot.slane %v6655, 4
    %v6669 = vrot.slane %v6657, 4
    %v6670 = vrot.slane %v6659, 4
    %v6671 = vrot.slane %v6661, 4
    %v6672 = vrot.slane %v6663, 4
    %v6673 = vrot.slane %v6665, 4
    %v6674 = vrot.slane %v6667, 4
    %6675 = vrot.lane.b32.xlu0 %v1656, 64
    %v6676 = vpop.permute.xlu0 %6675
    %6677 = vrot.lane.b32.xlu0 %v1657, 64
    %v6678 = vpop.permute.xlu0 %6677
    %6679 = vrot.lane.b32.xlu0 %v1658, 64
    %v6680 = vpop.permute.xlu0 %6679
    %6681 = vrot.lane.b32.xlu0 %v1659, 64
    %v6682 = vpop.permute.xlu0 %6681
    %v6683 = vunpack.c.l.b16 %v6668
    %v6684 = vunpack.c.l.b16 %v6669
    %v6685 = vunpack.c.l.b16 %v6670
    %v6686 = vunpack.c.l.b16 %v6671
    %v6687 = vunpack.c.l.b16 %v6672
    %v6688 = vunpack.c.l.b16 %v6673
    %v6689 = vunpack.c.l.b16 %v6674
    %v6690 = vpack.c.b16 %v6684, %v6683
    %v6691 = vpack.c.b16 %v6686, %v6685
    %v6692 = vpack.c.b16 %v6688, %v6687
    %v6693 = vpack.c.b16 %v6689, %v6689
    %v6695 = vsel %vm1367, %v6676, 0
    %v6698 = vsel %vm1367, %v6678, 0
    %v6701 = vsel %vm1367, %v6680, 0
    %v6704 = vsel %vm1367, %v6682, 0
    %v6707 = vsel %vm1367, %v6690, 0
    %v6710 = vsel %vm1367, %v6691, 0
    %v6713 = vsel %vm1367, %v6692, 0
    %v6716 = vsel %vm1367, %v6693, 0
    %6718 = vmatprep.subr.bf16.mxu0 0
    %6719 = vmatpush1.bf16.xpose.msra.mxu0 %v6707
    %6720 = vmatprep.subr.bf16.mxu0 0
    %6721 = vmatpush1.bf16.xpose.msra.mxu0 %v6710
    %6722 = vmatprep.subr.bf16.mxu0 0
    %6723 = vmatpush1.bf16.xpose.msra.mxu0 %v6713
    %6724 = vmatprep.subr.bf16.mxu0 0
    %6725 = vmatpush1.bf16.xpose.msra.mxu0 %v6716
    %6726 = vmatprep.subr.bf16.mxu0 0
    %6727 = vmatpush1.bf16.xpose.msra.mxu0 0
    %6728 = vmatprep.subr.bf16.mxu0 0
    %6729 = vmatpush1.bf16.xpose.msra.mxu0 0
    %6730 = vmatprep.subr.bf16.mxu0 0
    %6731 = vmatpush1.bf16.xpose.msra.mxu0 0
    %6732 = vmatprep.subr.bf16.mxu0 0
    %6733 = vmatpush1.bf16.xpose.msra.mxu0 0
    %6734 = vmatprep.subr.bf16.mxu0 0
    %6735 = vmatpush1.bf16.xpose.msra.mxu0 0
    %6736 = vmatprep.subr.bf16.mxu0 0
    %6737 = vmatpush1.bf16.xpose.msra.mxu0 0
    %6738 = vmatprep.subr.bf16.mxu0 0
    %6739 = vmatpush1.bf16.xpose.msra.mxu0 0
    %6740 = vmatprep.subr.bf16.mxu0 0
    %6741 = vmatpush1.bf16.xpose.msra.mxu0 0
    %6742 = vmatprep.subr.bf16.mxu0 0
    %6743 = vmatpush1.bf16.xpose.msra.mxu0 0
    %6744 = vmatprep.subr.bf16.mxu0 0
    %6745 = vmatpush1.bf16.xpose.msra.mxu0 0
    %6746 = vmatprep.subr.bf16.mxu0 0
    %6747 = vmatpush1.bf16.xpose.msra.mxu0 0
    %6748 = vmatprep.subr.bf16.mxu0 0
    %6749 = vmatpush1.bf16.xpose.msra.mxu0 0
    %6750 = vmatprep.mubr.bf16.mxu0 0
    %6751 = vmatmul.mubr.bf16.gmra.mrb[0].mxu0 %v6695
    %v6752 = vpop.f32.mrb[0].mxu0
    %v6753 = vadd.f32 %v6263, %v6752
    %v6754 = vpop.f32.mrb[0].mxu0
    %v6755 = vpop.f32.mrb[0].mxu0
    %v6756 = vadd.f32 %v6264, %v6755
    %v6757 = vpop.f32.mrb[0].mxu0
    %6758 = vmatprep.mubr.bf16.mxu0 0
    %6759 = vmatmul.mubr.bf16.gmra.mrb[0].mxu0 %v6698
    %v6760 = vpop.f32.mrb[0].mxu0
    %v6761 = vadd.f32 %v6265, %v6760
    %v6762 = vpop.f32.mrb[0].mxu0
    %v6763 = vpop.f32.mrb[0].mxu0
    %v6764 = vadd.f32 %v6266, %v6763
    %v6765 = vpop.f32.mrb[0].mxu0
    %6766 = vmatprep.mubr.bf16.mxu0 0
    %6767 = vmatmul.mubr.bf16.gmra.mrb[0].mxu0 %v6701
    %v6768 = vpop.f32.mrb[0].mxu0
    %v6769 = vadd.f32 %v6267, %v6768
    %v6770 = vpop.f32.mrb[0].mxu0
    %v6771 = vpop.f32.mrb[0].mxu0
    %v6772 = vadd.f32 %v6268, %v6771
    %v6773 = vpop.f32.mrb[0].mxu0
    %6774 = vmatprep.mubr.bf16.mxu0 0
    %6775 = vmatmul.mubr.bf16.gmra.mrb[0].mxu0 %v6704
    %v6776 = vpop.f32.mrb[0].mxu0
    %v6777 = vadd.f32 %v6269, %v6776
    %v6778 = vpop.f32.mrb[0].mxu0
    %v6779 = vpop.f32.mrb[0].mxu0
    %v6780 = vpop.f32.mrb[0].mxu0
    %6781 = vdwg.mxu0
    %6782 = vrot.lane.b32.xlu0 %v1320, 96
    %v6783 = vpop.permute.xlu0 %6782
    %6784 = vrot.lane.b32.xlu0 %v1321, 96
    %v6785 = vpop.permute.xlu0 %6784
    %6786 = vrot.lane.b32.xlu0 %v1322, 96
    %v6787 = vpop.permute.xlu0 %6786
    %6788 = vrot.lane.b32.xlu0 %v1323, 96
    %v6789 = vpop.permute.xlu0 %6788
    %6790 = vrot.lane.b32.xlu0 %v1324, 96
    %v6791 = vpop.permute.xlu0 %6790
    %6792 = vrot.lane.b32.xlu0 %v1325, 96
    %v6793 = vpop.permute.xlu0 %6792
    %6794 = vrot.lane.b32.xlu0 %v1326, 96
    %v6795 = vpop.permute.xlu0 %6794
    %v6796 = vrot.slane %v6783, 4
    %v6797 = vrot.slane %v6785, 4
    %v6798 = vrot.slane %v6787, 4
    %v6799 = vrot.slane %v6789, 4
    %v6800 = vrot.slane %v6791, 4
    %v6801 = vrot.slane %v6793, 4
    %v6802 = vrot.slane %v6795, 4
    %6803 = vrot.lane.b32.xlu0 %v1756, 64
    %v6804 = vpop.permute.xlu0 %6803
    %6805 = vrot.lane.b32.xlu0 %v1757, 64
    %v6806 = vpop.permute.xlu0 %6805
    %6807 = vrot.lane.b32.xlu0 %v1758, 64
    %v6808 = vpop.permute.xlu0 %6807
    %6809 = vrot.lane.b32.xlu0 %v1759, 64
    %v6810 = vpop.permute.xlu0 %6809
    %v6811 = vunpack.c.l.b16 %v6796
    %v6812 = vunpack.c.l.b16 %v6797
    %v6813 = vunpack.c.l.b16 %v6798
    %v6814 = vunpack.c.l.b16 %v6799
    %v6815 = vunpack.c.l.b16 %v6800
    %v6816 = vunpack.c.l.b16 %v6801
    %v6817 = vunpack.c.l.b16 %v6802
    %v6818 = vpack.c.b16 %v6812, %v6811
    %v6819 = vpack.c.b16 %v6814, %v6813
    %v6820 = vpack.c.b16 %v6816, %v6815
    %v6821 = vpack.c.b16 %v6817, %v6817
    %v6823 = vsel %vm1367, %v6804, 0
    %v6826 = vsel %vm1367, %v6806, 0
    %v6829 = vsel %vm1367, %v6808, 0
    %v6832 = vsel %vm1367, %v6810, 0
    %v6835 = vsel %vm1367, %v6818, 0
    %v6838 = vsel %vm1367, %v6819, 0
    %v6841 = vsel %vm1367, %v6820, 0
    %v6844 = vsel %vm1367, %v6821, 0
    %6846 = vmatprep.subr.bf16.mxu0 0
    %6847 = vmatpush1.bf16.xpose.msra.mxu0 %v6835
    %6848 = vmatprep.subr.bf16.mxu0 0
    %6849 = vmatpush1.bf16.xpose.msra.mxu0 %v6838
    %6850 = vmatprep.subr.bf16.mxu0 0
    %6851 = vmatpush1.bf16.xpose.msra.mxu0 %v6841
    %6852 = vmatprep.subr.bf16.mxu0 0
    %6853 = vmatpush1.bf16.xpose.msra.mxu0 %v6844
    %6854 = vmatprep.subr.bf16.mxu0 0
    %6855 = vmatpush1.bf16.xpose.msra.mxu0 0
    %6856 = vmatprep.subr.bf16.mxu0 0
    %6857 = vmatpush1.bf16.xpose.msra.mxu0 0
    %6858 = vmatprep.subr.bf16.mxu0 0
    %6859 = vmatpush1.bf16.xpose.msra.mxu0 0
    %6860 = vmatprep.subr.bf16.mxu0 0
    %6861 = vmatpush1.bf16.xpose.msra.mxu0 0
    %6862 = vmatprep.subr.bf16.mxu0 0
    %6863 = vmatpush1.bf16.xpose.msra.mxu0 0
    %6864 = vmatprep.subr.bf16.mxu0 0
    %6865 = vmatpush1.bf16.xpose.msra.mxu0 0
    %6866 = vmatprep.subr.bf16.mxu0 0
    %6867 = vmatpush1.bf16.xpose.msra.mxu0 0
    %6868 = vmatprep.subr.bf16.mxu0 0
    %6869 = vmatpush1.bf16.xpose.msra.mxu0 0
    %6870 = vmatprep.subr.bf16.mxu0 0
    %6871 = vmatpush1.bf16.xpose.msra.mxu0 0
    %6872 = vmatprep.subr.bf16.mxu0 0
    %6873 = vmatpush1.bf16.xpose.msra.mxu0 0
    %6874 = vmatprep.subr.bf16.mxu0 0
    %6875 = vmatpush1.bf16.xpose.msra.mxu0 0
    %6876 = vmatprep.subr.bf16.mxu0 0
    %6877 = vmatpush1.bf16.xpose.msra.mxu0 0
    %6878 = vmatprep.mubr.bf16.mxu0 0
    %6879 = vmatmul.mubr.bf16.gmra.mrb[0].mxu0 %v6823
    %v6880 = vpop.f32.mrb[0].mxu0
    %v6881 = vadd.f32 %v6263, %v6880
    %v6882 = vpop.f32.mrb[0].mxu0
    %v6883 = vpop.f32.mrb[0].mxu0
    %v6884 = vadd.f32 %v6264, %v6883
    %v6885 = vpop.f32.mrb[0].mxu0
    %6886 = vmatprep.mubr.bf16.mxu0 0
    %6887 = vmatmul.mubr.bf16.gmra.mrb[0].mxu0 %v6826
    %v6888 = vpop.f32.mrb[0].mxu0
    %v6889 = vadd.f32 %v6265, %v6888
    %v6890 = vpop.f32.mrb[0].mxu0
    %v6891 = vpop.f32.mrb[0].mxu0
    %v6892 = vadd.f32 %v6266, %v6891
    %v6893 = vpop.f32.mrb[0].mxu0
    %6894 = vmatprep.mubr.bf16.mxu0 0
    %6895 = vmatmul.mubr.bf16.gmra.mrb[0].mxu0 %v6829
    %v6896 = vpop.f32.mrb[0].mxu0
    %v6897 = vadd.f32 %v6267, %v6896
    %v6898 = vpop.f32.mrb[0].mxu0
    %v6899 = vpop.f32.mrb[0].mxu0
    %v6900 = vadd.f32 %v6268, %v6899
    %v6901 = vpop.f32.mrb[0].mxu0
    %6902 = vmatprep.mubr.bf16.mxu0 0
    %6903 = vmatmul.mubr.bf16.gmra.mrb[0].mxu0 %v6832
    %v6904 = vpop.f32.mrb[0].mxu0
    %v6905 = vadd.f32 %v6269, %v6904
    %v6906 = vpop.f32.mrb[0].mxu0
    %v6907 = vpop.f32.mrb[0].mxu0
    %v6908 = vpop.f32.mrb[0].mxu0
    %6909 = vdwg.mxu0
    %6910 = vrot.lane.b32.xlu0 %v1327, 96
    %v6911 = vpop.permute.xlu0 %6910
    %6912 = vrot.lane.b32.xlu0 %v1328, 96
    %v6913 = vpop.permute.xlu0 %6912
    %6914 = vrot.lane.b32.xlu0 %v1329, 96
    %v6915 = vpop.permute.xlu0 %6914
    %6916 = vrot.lane.b32.xlu0 %v1330, 96
    %v6917 = vpop.permute.xlu0 %6916
    %6918 = vrot.lane.b32.xlu0 %v1331, 96
    %v6919 = vpop.permute.xlu0 %6918
    %6920 = vrot.lane.b32.xlu0 %v1332, 96
    %v6921 = vpop.permute.xlu0 %6920
    %6922 = vrot.lane.b32.xlu0 %v1333, 96
    %v6923 = vpop.permute.xlu0 %6922
    %v6924 = vrot.slane %v6911, 4
    %v6925 = vrot.slane %v6913, 4
    %v6926 = vrot.slane %v6915, 4
    %v6927 = vrot.slane %v6917, 4
    %v6928 = vrot.slane %v6919, 4
    %v6929 = vrot.slane %v6921, 4
    %v6930 = vrot.slane %v6923, 4
    %6931 = vrot.lane.b32.xlu0 %v1856, 64
    %v6932 = vpop.permute.xlu0 %6931
    %6933 = vrot.lane.b32.xlu0 %v1857, 64
    %v6934 = vpop.permute.xlu0 %6933
    %6935 = vrot.lane.b32.xlu0 %v1858, 64
    %v6936 = vpop.permute.xlu0 %6935
    %6937 = vrot.lane.b32.xlu0 %v1859, 64
    %v6938 = vpop.permute.xlu0 %6937
    %v6939 = vunpack.c.l.b16 %v6924
    %v6940 = vunpack.c.l.b16 %v6925
    %v6941 = vunpack.c.l.b16 %v6926
    %v6942 = vunpack.c.l.b16 %v6927
    %v6943 = vunpack.c.l.b16 %v6928
    %v6944 = vunpack.c.l.b16 %v6929
    %v6945 = vunpack.c.l.b16 %v6930
    %v6946 = vpack.c.b16 %v6940, %v6939
    %v6947 = vpack.c.b16 %v6942, %v6941
    %v6948 = vpack.c.b16 %v6944, %v6943
    %v6949 = vpack.c.b16 %v6945, %v6945
    %v6951 = vsel %vm1367, %v6932, 0
    %v6954 = vsel %vm1367, %v6934, 0
    %v6957 = vsel %vm1367, %v6936, 0
    %v6960 = vsel %vm1367, %v6938, 0
    %v6963 = vsel %vm1367, %v6946, 0
    %v6966 = vsel %vm1367, %v6947, 0
    %v6969 = vsel %vm1367, %v6948, 0
    %v6972 = vsel %vm1367, %v6949, 0
    %6974 = vmatprep.subr.bf16.mxu0 0
    %6975 = vmatpush1.bf16.xpose.msra.mxu0 %v6963
    %6976 = vmatprep.subr.bf16.mxu0 0
    %6977 = vmatpush1.bf16.xpose.msra.mxu0 %v6966
    %6978 = vmatprep.subr.bf16.mxu0 0
    %6979 = vmatpush1.bf16.xpose.msra.mxu0 %v6969
    %6980 = vmatprep.subr.bf16.mxu0 0
    %6981 = vmatpush1.bf16.xpose.msra.mxu0 %v6972
    %6982 = vmatprep.subr.bf16.mxu0 0
    %6983 = vmatpush1.bf16.xpose.msra.mxu0 0
    %6984 = vmatprep.subr.bf16.mxu0 0
    %6985 = vmatpush1.bf16.xpose.msra.mxu0 0
    %6986 = vmatprep.subr.bf16.mxu0 0
    %6987 = vmatpush1.bf16.xpose.msra.mxu0 0
    %6988 = vmatprep.subr.bf16.mxu0 0
    %6989 = vmatpush1.bf16.xpose.msra.mxu0 0
    %6990 = vmatprep.subr.bf16.mxu0 0
    %6991 = vmatpush1.bf16.xpose.msra.mxu0 0
    %6992 = vmatprep.subr.bf16.mxu0 0
    %6993 = vmatpush1.bf16.xpose.msra.mxu0 0
    %6994 = vmatprep.subr.bf16.mxu0 0
    %6995 = vmatpush1.bf16.xpose.msra.mxu0 0
    %6996 = vmatprep.subr.bf16.mxu0 0
    %6997 = vmatpush1.bf16.xpose.msra.mxu0 0
    %6998 = vmatprep.subr.bf16.mxu0 0
    %6999 = vmatpush1.bf16.xpose.msra.mxu0 0
    %7000 = vmatprep.subr.bf16.mxu0 0
    %7001 = vmatpush1.bf16.xpose.msra.mxu0 0
    %7002 = vmatprep.subr.bf16.mxu0 0
    %7003 = vmatpush1.bf16.xpose.msra.mxu0 0
    %7004 = vmatprep.subr.bf16.mxu0 0
    %7005 = vmatpush1.bf16.xpose.msra.mxu0 0
    %7006 = vmatprep.mubr.bf16.mxu0 0
    %7007 = vmatmul.mubr.bf16.gmra.mrb[0].mxu0 %v6951
    %v7008 = vpop.f32.mrb[0].mxu0
    %v7009 = vadd.f32 %v6263, %v7008
    %v7010 = vpop.f32.mrb[0].mxu0
    %v7011 = vpop.f32.mrb[0].mxu0
    %v7012 = vadd.f32 %v6264, %v7011
    %v7013 = vpop.f32.mrb[0].mxu0
    %7014 = vmatprep.mubr.bf16.mxu0 0
    %7015 = vmatmul.mubr.bf16.gmra.mrb[0].mxu0 %v6954
    %v7016 = vpop.f32.mrb[0].mxu0
    %v7017 = vadd.f32 %v6265, %v7016
    %v7018 = vpop.f32.mrb[0].mxu0
    %v7019 = vpop.f32.mrb[0].mxu0
    %v7020 = vadd.f32 %v6266, %v7019
    %v7021 = vpop.f32.mrb[0].mxu0
    %7022 = vmatprep.mubr.bf16.mxu0 0
    %7023 = vmatmul.mubr.bf16.gmra.mrb[0].mxu0 %v6957
    %v7024 = vpop.f32.mrb[0].mxu0
    %v7025 = vadd.f32 %v6267, %v7024
    %v7026 = vpop.f32.mrb[0].mxu0
    %v7027 = vpop.f32.mrb[0].mxu0
    %v7028 = vadd.f32 %v6268, %v7027
    %v7029 = vpop.f32.mrb[0].mxu0
    %7030 = vmatprep.mubr.bf16.mxu0 0
    %7031 = vmatmul.mubr.bf16.gmra.mrb[0].mxu0 %v6960
    %v7032 = vpop.f32.mrb[0].mxu0
    %v7033 = vadd.f32 %v6269, %v7032
    %v7034 = vpop.f32.mrb[0].mxu0
    %v7035 = vpop.f32.mrb[0].mxu0
    %v7036 = vpop.f32.mrb[0].mxu0
    %7037 = vdwg.mxu0
    %7038 = vrot.lane.b32.xlu0 %v1334, 96
    %v7039 = vpop.permute.xlu0 %7038
    %7040 = vrot.lane.b32.xlu0 %v1335, 96
    %v7041 = vpop.permute.xlu0 %7040
    %7042 = vrot.lane.b32.xlu0 %v1336, 96
    %v7043 = vpop.permute.xlu0 %7042
    %7044 = vrot.lane.b32.xlu0 %v1337, 96
    %v7045 = vpop.permute.xlu0 %7044
    %7046 = vrot.lane.b32.xlu0 %v1338, 96
    %v7047 = vpop.permute.xlu0 %7046
    %7048 = vrot.lane.b32.xlu0 %v1339, 96
    %v7049 = vpop.permute.xlu0 %7048
    %7050 = vrot.lane.b32.xlu0 %v1340, 96
    %v7051 = vpop.permute.xlu0 %7050
    %v7052 = vrot.slane %v7039, 4
    %v7053 = vrot.slane %v7041, 4
    %v7054 = vrot.slane %v7043, 4
    %v7055 = vrot.slane %v7045, 4
    %v7056 = vrot.slane %v7047, 4
    %v7057 = vrot.slane %v7049, 4
    %v7058 = vrot.slane %v7051, 4
    %7059 = vrot.lane.b32.xlu0 %v1956, 64
    %v7060 = vpop.permute.xlu0 %7059
    %7061 = vrot.lane.b32.xlu0 %v1957, 64
    %v7062 = vpop.permute.xlu0 %7061
    %7063 = vrot.lane.b32.xlu0 %v1958, 64
    %v7064 = vpop.permute.xlu0 %7063
    %7065 = vrot.lane.b32.xlu0 %v1959, 64
    %v7066 = vpop.permute.xlu0 %7065
    %v7067 = vunpack.c.l.b16 %v7052
    %v7068 = vunpack.c.l.b16 %v7053
    %v7069 = vunpack.c.l.b16 %v7054
    %v7070 = vunpack.c.l.b16 %v7055
    %v7071 = vunpack.c.l.b16 %v7056
    %v7072 = vunpack.c.l.b16 %v7057
    %v7073 = vunpack.c.l.b16 %v7058
    %v7074 = vpack.c.b16 %v7068, %v7067
    %v7075 = vpack.c.b16 %v7070, %v7069
    %v7076 = vpack.c.b16 %v7072, %v7071
    %v7077 = vpack.c.b16 %v7073, %v7073
    %v7079 = vsel %vm1367, %v7060, 0
    %v7082 = vsel %vm1367, %v7062, 0
    %v7085 = vsel %vm1367, %v7064, 0
    %v7088 = vsel %vm1367, %v7066, 0
    %v7091 = vsel %vm1367, %v7074, 0
    %v7094 = vsel %vm1367, %v7075, 0
    %v7097 = vsel %vm1367, %v7076, 0
    %v7100 = vsel %vm1367, %v7077, 0
    %7102 = vmatprep.subr.bf16.mxu0 0
    %7103 = vmatpush1.bf16.xpose.msra.mxu0 %v7091
    %7104 = vmatprep.subr.bf16.mxu0 0
    %7105 = vmatpush1.bf16.xpose.msra.mxu0 %v7094
    %7106 = vmatprep.subr.bf16.mxu0 0
    %7107 = vmatpush1.bf16.xpose.msra.mxu0 %v7097
    %7108 = vmatprep.subr.bf16.mxu0 0
    %7109 = vmatpush1.bf16.xpose.msra.mxu0 %v7100
    %7110 = vmatprep.subr.bf16.mxu0 0
    %7111 = vmatpush1.bf16.xpose.msra.mxu0 0
    %7112 = vmatprep.subr.bf16.mxu0 0
    %7113 = vmatpush1.bf16.xpose.msra.mxu0 0
    %7114 = vmatprep.subr.bf16.mxu0 0
    %7115 = vmatpush1.bf16.xpose.msra.mxu0 0
    %7116 = vmatprep.subr.bf16.mxu0 0
    %7117 = vmatpush1.bf16.xpose.msra.mxu0 0
    %7118 = vmatprep.subr.bf16.mxu0 0
    %7119 = vmatpush1.bf16.xpose.msra.mxu0 0
    %7120 = vmatprep.subr.bf16.mxu0 0
    %7121 = vmatpush1.bf16.xpose.msra.mxu0 0
    %7122 = vmatprep.subr.bf16.mxu0 0
    %7123 = vmatpush1.bf16.xpose.msra.mxu0 0
    %7124 = vmatprep.subr.bf16.mxu0 0
    %7125 = vmatpush1.bf16.xpose.msra.mxu0 0
    %7126 = vmatprep.subr.bf16.mxu0 0
    %7127 = vmatpush1.bf16.xpose.msra.mxu0 0
    %7128 = vmatprep.subr.bf16.mxu0 0
    %7129 = vmatpush1.bf16.xpose.msra.mxu0 0
    %7130 = vmatprep.subr.bf16.mxu0 0
    %7131 = vmatpush1.bf16.xpose.msra.mxu0 0
    %7132 = vmatprep.subr.bf16.mxu0 0
    %7133 = vmatpush1.bf16.xpose.msra.mxu0 0
    %7134 = vmatprep.mubr.bf16.mxu0 0
    %7135 = vmatmul.mubr.bf16.gmra.mrb[0].mxu0 %v7079
    %v7136 = vpop.f32.mrb[0].mxu0
    %v7137 = vadd.f32 %v6263, %v7136
    %v7138 = vpop.f32.mrb[0].mxu0
    %v7139 = vpop.f32.mrb[0].mxu0
    %v7140 = vadd.f32 %v6264, %v7139
    %v7141 = vpop.f32.mrb[0].mxu0
    %7142 = vmatprep.mubr.bf16.mxu0 0
    %7143 = vmatmul.mubr.bf16.gmra.mrb[0].mxu0 %v7082
    %v7144 = vpop.f32.mrb[0].mxu0
    %v7145 = vadd.f32 %v6265, %v7144
    %v7146 = vpop.f32.mrb[0].mxu0
    %v7147 = vpop.f32.mrb[0].mxu0
    %v7148 = vadd.f32 %v6266, %v7147
    %v7149 = vpop.f32.mrb[0].mxu0
    %7150 = vmatprep.mubr.bf16.mxu0 0
    %7151 = vmatmul.mubr.bf16.gmra.mrb[0].mxu0 %v7085
    %v7152 = vpop.f32.mrb[0].mxu0
    %v7153 = vadd.f32 %v6267, %v7152
    %v7154 = vpop.f32.mrb[0].mxu0
    %v7155 = vpop.f32.mrb[0].mxu0
    %v7156 = vadd.f32 %v6268, %v7155
    %v7157 = vpop.f32.mrb[0].mxu0
    %7158 = vmatprep.mubr.bf16.mxu0 0
    %7159 = vmatmul.mubr.bf16.gmra.mrb[0].mxu0 %v7088
    %v7160 = vpop.f32.mrb[0].mxu0
    %v7161 = vadd.f32 %v6269, %v7160
    %v7162 = vpop.f32.mrb[0].mxu0
    %v7163 = vpop.f32.mrb[0].mxu0
    %v7164 = vpop.f32.mrb[0].mxu0
    %7165 = vdwg.mxu0
    %7166 = vrot.lane.b32.xlu0 %v1341, 96
    %v7167 = vpop.permute.xlu0 %7166
    %7168 = vrot.lane.b32.xlu0 %v1342, 96
    %v7169 = vpop.permute.xlu0 %7168
    %7170 = vrot.lane.b32.xlu0 %v1343, 96
    %v7171 = vpop.permute.xlu0 %7170
    %7172 = vrot.lane.b32.xlu0 %v1344, 96
    %v7173 = vpop.permute.xlu0 %7172
    %7174 = vrot.lane.b32.xlu0 %v1345, 96
    %v7175 = vpop.permute.xlu0 %7174
    %7176 = vrot.lane.b32.xlu0 %v1346, 96
    %v7177 = vpop.permute.xlu0 %7176
    %7178 = vrot.lane.b32.xlu0 %v1347, 96
    %v7179 = vpop.permute.xlu0 %7178
    %v7180 = vrot.slane %v7167, 4
    %v7181 = vrot.slane %v7169, 4
    %v7182 = vrot.slane %v7171, 4
    %v7183 = vrot.slane %v7173, 4
    %v7184 = vrot.slane %v7175, 4
    %v7185 = vrot.slane %v7177, 4
    %v7186 = vrot.slane %v7179, 4
    %7187 = vrot.lane.b32.xlu0 %v2056, 64
    %v7188 = vpop.permute.xlu0 %7187
    %7189 = vrot.lane.b32.xlu0 %v2057, 64
    %v7190 = vpop.permute.xlu0 %7189
    %7191 = vrot.lane.b32.xlu0 %v2058, 64
    %v7192 = vpop.permute.xlu0 %7191
    %7193 = vrot.lane.b32.xlu0 %v2059, 64
    %v7194 = vpop.permute.xlu0 %7193
    %v7195 = vunpack.c.l.b16 %v7180
    %v7196 = vunpack.c.l.b16 %v7181
    %v7197 = vunpack.c.l.b16 %v7182
    %v7198 = vunpack.c.l.b16 %v7183
    %v7199 = vunpack.c.l.b16 %v7184
    %v7200 = vunpack.c.l.b16 %v7185
    %v7201 = vunpack.c.l.b16 %v7186
    %v7202 = vpack.c.b16 %v7196, %v7195
    %v7203 = vpack.c.b16 %v7198, %v7197
    %v7204 = vpack.c.b16 %v7200, %v7199
    %v7205 = vpack.c.b16 %v7201, %v7201
    %v7207 = vsel %vm1367, %v7188, 0
    %v7210 = vsel %vm1367, %v7190, 0
    %v7213 = vsel %vm1367, %v7192, 0
    %v7216 = vsel %vm1367, %v7194, 0
    %v7219 = vsel %vm1367, %v7202, 0
    %v7222 = vsel %vm1367, %v7203, 0
    %v7225 = vsel %vm1367, %v7204, 0
    %v7228 = vsel %vm1367, %v7205, 0
    %7230 = vmatprep.subr.bf16.mxu0 0
    %7231 = vmatpush1.bf16.xpose.msra.mxu0 %v7219
    %7232 = vmatprep.subr.bf16.mxu0 0
    %7233 = vmatpush1.bf16.xpose.msra.mxu0 %v7222
    %7234 = vmatprep.subr.bf16.mxu0 0
    %7235 = vmatpush1.bf16.xpose.msra.mxu0 %v7225
    %7236 = vmatprep.subr.bf16.mxu0 0
    %7237 = vmatpush1.bf16.xpose.msra.mxu0 %v7228
    %7238 = vmatprep.subr.bf16.mxu0 0
    %7239 = vmatpush1.bf16.xpose.msra.mxu0 0
    %7240 = vmatprep.subr.bf16.mxu0 0
    %7241 = vmatpush1.bf16.xpose.msra.mxu0 0
    %7242 = vmatprep.subr.bf16.mxu0 0
    %7243 = vmatpush1.bf16.xpose.msra.mxu0 0
    %7244 = vmatprep.subr.bf16.mxu0 0
    %7245 = vmatpush1.bf16.xpose.msra.mxu0 0
    %7246 = vmatprep.subr.bf16.mxu0 0
    %7247 = vmatpush1.bf16.xpose.msra.mxu0 0
    %7248 = vmatprep.subr.bf16.mxu0 0
    %7249 = vmatpush1.bf16.xpose.msra.mxu0 0
    %7250 = vmatprep.subr.bf16.mxu0 0
    %7251 = vmatpush1.bf16.xpose.msra.mxu0 0
    %7252 = vmatprep.subr.bf16.mxu0 0
    %7253 = vmatpush1.bf16.xpose.msra.mxu0 0
    %7254 = vmatprep.subr.bf16.mxu0 0
    %7255 = vmatpush1.bf16.xpose.msra.mxu0 0
    %7256 = vmatprep.subr.bf16.mxu0 0
    %7257 = vmatpush1.bf16.xpose.msra.mxu0 0
    %7258 = vmatprep.subr.bf16.mxu0 0
    %7259 = vmatpush1.bf16.xpose.msra.mxu0 0
    %7260 = vmatprep.subr.bf16.mxu0 0
    %7261 = vmatpush1.bf16.xpose.msra.mxu0 0
    %7262 = vmatprep.mubr.bf16.mxu0 0
    %7263 = vmatmul.mubr.bf16.gmra.mrb[0].mxu0 %v7207
    %v7264 = vpop.f32.mrb[0].mxu0
    %v7265 = vadd.f32 %v6263, %v7264
    %v7266 = vpop.f32.mrb[0].mxu0
    %v7267 = vpop.f32.mrb[0].mxu0
    %v7268 = vadd.f32 %v6264, %v7267
    %v7269 = vpop.f32.mrb[0].mxu0
    %7270 = vmatprep.mubr.bf16.mxu0 0
    %7271 = vmatmul.mubr.bf16.gmra.mrb[0].mxu0 %v7210
    %v7272 = vpop.f32.mrb[0].mxu0
    %v7273 = vadd.f32 %v6265, %v7272
    %v7274 = vpop.f32.mrb[0].mxu0
    %v7275 = vpop.f32.mrb[0].mxu0
    %v7276 = vadd.f32 %v6266, %v7275
    %v7277 = vpop.f32.mrb[0].mxu0
    %7278 = vmatprep.mubr.bf16.mxu0 0
    %7279 = vmatmul.mubr.bf16.gmra.mrb[0].mxu0 %v7213
    %v7280 = vpop.f32.mrb[0].mxu0
    %v7281 = vadd.f32 %v6267, %v7280
    %v7282 = vpop.f32.mrb[0].mxu0
    %v7283 = vpop.f32.mrb[0].mxu0
    %v7284 = vadd.f32 %v6268, %v7283
    %v7285 = vpop.f32.mrb[0].mxu0
    %7286 = vmatprep.mubr.bf16.mxu0 0
    %7287 = vmatmul.mubr.bf16.gmra.mrb[0].mxu0 %v7216
    %v7288 = vpop.f32.mrb[0].mxu0
    %v7289 = vadd.f32 %v6269, %v7288
    %v7290 = vpop.f32.mrb[0].mxu0
    %v7291 = vpop.f32.mrb[0].mxu0
    %v7292 = vpop.f32.mrb[0].mxu0
    %7293 = vdwg.mxu0
    %v7294 = vsel %vm2156, %v6369, -inf
    %7295 = vmax.xlane.f32.xlu0 %v7294
    %v7296 = vpop.xlane.xlu0 %7295
    %v7297 = vsel %vm2156, %v6372, -inf
    %7298 = vmax.xlane.f32.xlu0 %v7297
    %v7299 = vpop.xlane.xlu0 %7298
    %v7300 = vsel %vm2156, %v6377, -inf
    %7301 = vmax.xlane.f32.xlu0 %v7300
    %v7302 = vpop.xlane.xlu0 %7301
    %v7303 = vsel %vm2156, %v6380, -inf
    %7304 = vmax.xlane.f32.xlu0 %v7303
    %v7305 = vpop.xlane.xlu0 %7304
    %v7306 = vsel %vm2156, %v6385, -inf
    %7307 = vmax.xlane.f32.xlu0 %v7306
    %v7308 = vpop.xlane.xlu0 %7307
    %v7309 = vsel %vm2156, %v6388, -inf
    %7310 = vmax.xlane.f32.xlu0 %v7309
    %v7311 = vpop.xlane.xlu0 %7310
    %v7312 = vsel %vm2156, %v6393, -inf
    %7313 = vmax.xlane.f32.xlu0 %v7312
    %v7314 = vpop.xlane.xlu0 %7313
    %v7315 = vsel %vm2156, %v6497, -inf
    %7316 = vmax.xlane.f32.xlu0 %v7315
    %v7317 = vpop.xlane.xlu0 %7316
    %v7318 = vsel %vm2156, %v6500, -inf
    %7319 = vmax.xlane.f32.xlu0 %v7318
    %v7320 = vpop.xlane.xlu0 %7319
    %v7321 = vsel %vm2156, %v6505, -inf
    %7322 = vmax.xlane.f32.xlu0 %v7321
    %v7323 = vpop.xlane.xlu0 %7322
    %v7324 = vsel %vm2156, %v6508, -inf
    %7325 = vmax.xlane.f32.xlu0 %v7324
    %v7326 = vpop.xlane.xlu0 %7325
    %v7327 = vsel %vm2156, %v6513, -inf
    %7328 = vmax.xlane.f32.xlu0 %v7327
    %v7329 = vpop.xlane.xlu0 %7328
    %v7330 = vsel %vm2156, %v6516, -inf
    %7331 = vmax.xlane.f32.xlu0 %v7330
    %v7332 = vpop.xlane.xlu0 %7331
    %v7333 = vsel %vm2156, %v6521, -inf
    %7334 = vmax.xlane.f32.xlu0 %v7333
    %v7335 = vpop.xlane.xlu0 %7334
    %v7336 = vsel %vm2156, %v6625, -inf
    %7337 = vmax.xlane.f32.xlu0 %v7336
    %v7338 = vpop.xlane.xlu0 %7337
    %v7339 = vsel %vm2156, %v6628, -inf
    %7340 = vmax.xlane.f32.xlu0 %v7339
    %v7341 = vpop.xlane.xlu0 %7340
    %v7342 = vsel %vm2156, %v6633, -inf
    %7343 = vmax.xlane.f32.xlu0 %v7342
    %v7344 = vpop.xlane.xlu0 %7343
    %v7345 = vsel %vm2156, %v6636, -inf
    %7346 = vmax.xlane.f32.xlu0 %v7345
    %v7347 = vpop.xlane.xlu0 %7346
    %v7348 = vsel %vm2156, %v6641, -inf
    %7349 = vmax.xlane.f32.xlu0 %v7348
    %v7350 = vpop.xlane.xlu0 %7349
    %v7351 = vsel %vm2156, %v6644, -inf
    %7352 = vmax.xlane.f32.xlu0 %v7351
    %v7353 = vpop.xlane.xlu0 %7352
    %v7354 = vsel %vm2156, %v6649, -inf
    %7355 = vmax.xlane.f32.xlu0 %v7354
    %v7356 = vpop.xlane.xlu0 %7355
    %v7357 = vsel %vm2156, %v6753, -inf
    %7358 = vmax.xlane.f32.xlu0 %v7357
    %v7359 = vpop.xlane.xlu0 %7358
    %v7360 = vsel %vm2156, %v6756, -inf
    %7361 = vmax.xlane.f32.xlu0 %v7360
    %v7362 = vpop.xlane.xlu0 %7361
    %v7363 = vsel %vm2156, %v6761, -inf
    %7364 = vmax.xlane.f32.xlu0 %v7363
    %v7365 = vpop.xlane.xlu0 %7364
    %v7366 = vsel %vm2156, %v6764, -inf
    %7367 = vmax.xlane.f32.xlu0 %v7366
    %v7368 = vpop.xlane.xlu0 %7367
    %v7369 = vsel %vm2156, %v6769, -inf
    %7370 = vmax.xlane.f32.xlu0 %v7369
    %v7371 = vpop.xlane.xlu0 %7370
    %v7372 = vsel %vm2156, %v6772, -inf
    %7373 = vmax.xlane.f32.xlu0 %v7372
    %v7374 = vpop.xlane.xlu0 %7373
    %v7375 = vsel %vm2156, %v6777, -inf
    %7376 = vmax.xlane.f32.xlu0 %v7375
    %v7377 = vpop.xlane.xlu0 %7376
    %v7378 = vsel %vm2156, %v6881, -inf
    %7379 = vmax.xlane.f32.xlu0 %v7378
    %v7380 = vpop.xlane.xlu0 %7379
    %v7381 = vsel %vm2156, %v6884, -inf
    %7382 = vmax.xlane.f32.xlu0 %v7381
    %v7383 = vpop.xlane.xlu0 %7382
    %v7384 = vsel %vm2156, %v6889, -inf
    %7385 = vmax.xlane.f32.xlu0 %v7384
    %v7386 = vpop.xlane.xlu0 %7385
    %v7387 = vsel %vm2156, %v6892, -inf
    %7388 = vmax.xlane.f32.xlu0 %v7387
    %v7389 = vpop.xlane.xlu0 %7388
    %v7390 = vsel %vm2156, %v6897, -inf
    %7391 = vmax.xlane.f32.xlu0 %v7390
    %v7392 = vpop.xlane.xlu0 %7391
    %v7393 = vsel %vm2156, %v6900, -inf
    %7394 = vmax.xlane.f32.xlu0 %v7393
    %v7395 = vpop.xlane.xlu0 %7394
    %v7396 = vsel %vm2156, %v6905, -inf
    %7397 = vmax.xlane.f32.xlu0 %v7396
    %v7398 = vpop.xlane.xlu0 %7397
    %v7399 = vsel %vm2156, %v7009, -inf
    %7400 = vmax.xlane.f32.xlu0 %v7399
    %v7401 = vpop.xlane.xlu0 %7400
    %v7402 = vsel %vm2156, %v7012, -inf
    %7403 = vmax.xlane.f32.xlu0 %v7402
    %v7404 = vpop.xlane.xlu0 %7403
    %v7405 = vsel %vm2156, %v7017, -inf
    %7406 = vmax.xlane.f32.xlu0 %v7405
    %v7407 = vpop.xlane.xlu0 %7406
    %v7408 = vsel %vm2156, %v7020, -inf
    %7409 = vmax.xlane.f32.xlu0 %v7408
    %v7410 = vpop.xlane.xlu0 %7409
    %v7411 = vsel %vm2156, %v7025, -inf
    %7412 = vmax.xlane.f32.xlu0 %v7411
    %v7413 = vpop.xlane.xlu0 %7412
    %v7414 = vsel %vm2156, %v7028, -inf
    %7415 = vmax.xlane.f32.xlu0 %v7414
    %v7416 = vpop.xlane.xlu0 %7415
    %v7417 = vsel %vm2156, %v7033, -inf
    %7418 = vmax.xlane.f32.xlu0 %v7417
    %v7419 = vpop.xlane.xlu0 %7418
    %v7420 = vsel %vm2156, %v7137, -inf
    %7421 = vmax.xlane.f32.xlu0 %v7420
    %v7422 = vpop.xlane.xlu0 %7421
    %v7423 = vsel %vm2156, %v7140, -inf
    %7424 = vmax.xlane.f32.xlu0 %v7423
    %v7425 = vpop.xlane.xlu0 %7424
    %v7426 = vsel %vm2156, %v7145, -inf
    %7427 = vmax.xlane.f32.xlu0 %v7426
    %v7428 = vpop.xlane.xlu0 %7427
    %v7429 = vsel %vm2156, %v7148, -inf
    %7430 = vmax.xlane.f32.xlu0 %v7429
    %v7431 = vpop.xlane.xlu0 %7430
    %v7432 = vsel %vm2156, %v7153, -inf
    %7433 = vmax.xlane.f32.xlu0 %v7432
    %v7434 = vpop.xlane.xlu0 %7433
    %v7435 = vsel %vm2156, %v7156, -inf
    %7436 = vmax.xlane.f32.xlu0 %v7435
    %v7437 = vpop.xlane.xlu0 %7436
    %v7438 = vsel %vm2156, %v7161, -inf
    %7439 = vmax.xlane.f32.xlu0 %v7438
    %v7440 = vpop.xlane.xlu0 %7439
    %v7441 = vsel %vm2156, %v7265, -inf
    %7442 = vmax.xlane.f32.xlu0 %v7441
    %v7443 = vpop.xlane.xlu0 %7442
    %v7444 = vsel %vm2156, %v7268, -inf
    %7445 = vmax.xlane.f32.xlu0 %v7444
    %v7446 = vpop.xlane.xlu0 %7445
    %v7447 = vsel %vm2156, %v7273, -inf
    %7448 = vmax.xlane.f32.xlu0 %v7447
    %v7449 = vpop.xlane.xlu0 %7448
    %v7450 = vsel %vm2156, %v7276, -inf
    %7451 = vmax.xlane.f32.xlu0 %v7450
    %v7452 = vpop.xlane.xlu0 %7451
    %v7453 = vsel %vm2156, %v7281, -inf
    %7454 = vmax.xlane.f32.xlu0 %v7453
    %v7455 = vpop.xlane.xlu0 %7454
    %v7456 = vsel %vm2156, %v7284, -inf
    %7457 = vmax.xlane.f32.xlu0 %v7456
    %v7458 = vpop.xlane.xlu0 %7457
    %v7459 = vsel %vm2156, %v7289, -inf
    %7460 = vmax.xlane.f32.xlu0 %v7459
    %v7461 = vpop.xlane.xlu0 %7460
    %v7462 = vsub.f32 %v6369, %v7296
    %v7463 = vsub.f32 %v6372, %v7299
    %v7464 = vsub.f32 %v6377, %v7302
    %v7465 = vsub.f32 %v6380, %v7305
    %v7466 = vsub.f32 %v6385, %v7308
    %v7467 = vsub.f32 %v6388, %v7311
    %v7468 = vsub.f32 %v6393, %v7314
    %v7469 = vsub.f32 %v6497, %v7317
    %v7470 = vsub.f32 %v6500, %v7320
    %v7471 = vsub.f32 %v6505, %v7323
    %v7472 = vsub.f32 %v6508, %v7326
    %v7473 = vsub.f32 %v6513, %v7329
    %v7474 = vsub.f32 %v6516, %v7332
    %v7475 = vsub.f32 %v6521, %v7335
    %v7476 = vsub.f32 %v6625, %v7338
    %v7477 = vsub.f32 %v6628, %v7341
    %v7478 = vsub.f32 %v6633, %v7344
    %v7479 = vsub.f32 %v6636, %v7347
    %v7480 = vsub.f32 %v6641, %v7350
    %v7481 = vsub.f32 %v6644, %v7353
    %v7482 = vsub.f32 %v6649, %v7356
    %v7483 = vsub.f32 %v6753, %v7359
    %v7484 = vsub.f32 %v6756, %v7362
    %v7485 = vsub.f32 %v6761, %v7365
    %v7486 = vsub.f32 %v6764, %v7368
    %v7487 = vsub.f32 %v6769, %v7371
    %v7488 = vsub.f32 %v6772, %v7374
    %v7489 = vsub.f32 %v6777, %v7377
    %v7490 = vsub.f32 %v6881, %v7380
    %v7491 = vsub.f32 %v6884, %v7383
    %v7492 = vsub.f32 %v6889, %v7386
    %v7493 = vsub.f32 %v6892, %v7389
    %v7494 = vsub.f32 %v6897, %v7392
    %v7495 = vsub.f32 %v6900, %v7395
    %v7496 = vsub.f32 %v6905, %v7398
    %v7497 = vsub.f32 %v7009, %v7401
    %v7498 = vsub.f32 %v7012, %v7404
    %v7499 = vsub.f32 %v7017, %v7407
    %v7500 = vsub.f32 %v7020, %v7410
    %v7501 = vsub.f32 %v7025, %v7413
    %v7502 = vsub.f32 %v7028, %v7416
    %v7503 = vsub.f32 %v7033, %v7419
    %v7504 = vsub.f32 %v7137, %v7422
    %v7505 = vsub.f32 %v7140, %v7425
    %v7506 = vsub.f32 %v7145, %v7428
    %v7507 = vsub.f32 %v7148, %v7431
    %v7508 = vsub.f32 %v7153, %v7434
    %v7509 = vsub.f32 %v7156, %v7437
    %v7510 = vsub.f32 %v7161, %v7440
    %v7511 = vsub.f32 %v7265, %v7443
    %v7512 = vsub.f32 %v7268, %v7446
    %v7513 = vsub.f32 %v7273, %v7449
    %v7514 = vsub.f32 %v7276, %v7452
    %v7515 = vsub.f32 %v7281, %v7455
    %v7516 = vsub.f32 %v7284, %v7458
    %v7517 = vsub.f32 %v7289, %v7461
    %v7518 = vmul.f32 %v7462, 1.442695
    %v7519 = vpow.pop %v7518
    %v7520 = vmul.f32 %v7463, 1.442695
    %v7521 = vpow.pop %v7520
    %v7522 = vmul.f32 %v7464, 1.442695
    %v7523 = vpow.pop %v7522
    %v7524 = vmul.f32 %v7465, 1.442695
    %v7525 = vpow.pop %v7524
    %v7526 = vmul.f32 %v7466, 1.442695
    %v7527 = vpow.pop %v7526
    %v7528 = vmul.f32 %v7467, 1.442695
    %v7529 = vpow.pop %v7528
    %v7530 = vmul.f32 %v7468, 1.442695
    %v7531 = vpow.pop %v7530
    %v7532 = vmul.f32 %v7469, 1.442695
    %v7533 = vpow.pop %v7532
    %v7534 = vmul.f32 %v7470, 1.442695
    %v7535 = vpow.pop %v7534
    %v7536 = vmul.f32 %v7471, 1.442695
    %v7537 = vpow.pop %v7536
    %v7538 = vmul.f32 %v7472, 1.442695
    %v7539 = vpow.pop %v7538
    %v7540 = vmul.f32 %v7473, 1.442695
    %v7541 = vpow.pop %v7540
    %v7542 = vmul.f32 %v7474, 1.442695
    %v7543 = vpow.pop %v7542
    %v7544 = vmul.f32 %v7475, 1.442695
    %v7545 = vpow.pop %v7544
    %v7546 = vmul.f32 %v7476, 1.442695
    %v7547 = vpow.pop %v7546
    %v7548 = vmul.f32 %v7477, 1.442695
    %v7549 = vpow.pop %v7548
    %v7550 = vmul.f32 %v7478, 1.442695
    %v7551 = vpow.pop %v7550
    %v7552 = vmul.f32 %v7479, 1.442695
    %v7553 = vpow.pop %v7552
    %v7554 = vmul.f32 %v7480, 1.442695
    %v7555 = vpow.pop %v7554
    %v7556 = vmul.f32 %v7481, 1.442695
    %v7557 = vpow.pop %v7556
    %v7558 = vmul.f32 %v7482, 1.442695
    %v7559 = vpow.pop %v7558
    %v7560 = vmul.f32 %v7483, 1.442695
    %v7561 = vpow.pop %v7560
    %v7562 = vmul.f32 %v7484, 1.442695
    %v7563 = vpow.pop %v7562
    %v7564 = vmul.f32 %v7485, 1.442695
    %v7565 = vpow.pop %v7564
    %v7566 = vmul.f32 %v7486, 1.442695
    %v7567 = vpow.pop %v7566
    %v7568 = vmul.f32 %v7487, 1.442695
    %v7569 = vpow.pop %v7568
    %v7570 = vmul.f32 %v7488, 1.442695
    %v7571 = vpow.pop %v7570
    %v7572 = vmul.f32 %v7489, 1.442695
    %v7573 = vpow.pop %v7572
    %v7574 = vmul.f32 %v7490, 1.442695
    %v7575 = vpow.pop %v7574
    %v7576 = vmul.f32 %v7491, 1.442695
    %v7577 = vpow.pop %v7576
    %v7578 = vmul.f32 %v7492, 1.442695
    %v7579 = vpow.pop %v7578
    %v7580 = vmul.f32 %v7493, 1.442695
    %v7581 = vpow.pop %v7580
    %v7582 = vmul.f32 %v7494, 1.442695
    %v7583 = vpow.pop %v7582
    %v7584 = vmul.f32 %v7495, 1.442695
    %v7585 = vpow.pop %v7584
    %v7586 = vmul.f32 %v7496, 1.442695
    %v7587 = vpow.pop %v7586
    %v7588 = vmul.f32 %v7497, 1.442695
    %v7589 = vpow.pop %v7588
    %v7590 = vmul.f32 %v7498, 1.442695
    %v7591 = vpow.pop %v7590
    %v7592 = vmul.f32 %v7499, 1.442695
    %v7593 = vpow.pop %v7592
    %v7594 = vmul.f32 %v7500, 1.442695
    %v7595 = vpow.pop %v7594
    %v7596 = vmul.f32 %v7501, 1.442695
    %v7597 = vpow.pop %v7596
    %v7598 = vmul.f32 %v7502, 1.442695
    %v7599 = vpow.pop %v7598
    %v7600 = vmul.f32 %v7503, 1.442695
    %v7601 = vpow.pop %v7600
    %v7602 = vmul.f32 %v7504, 1.442695
    %v7603 = vpow.pop %v7602
    %v7604 = vmul.f32 %v7505, 1.442695
    %v7605 = vpow.pop %v7604
    %v7606 = vmul.f32 %v7506, 1.442695
    %v7607 = vpow.pop %v7606
    %v7608 = vmul.f32 %v7507, 1.442695
    %v7609 = vpow.pop %v7608
    %v7610 = vmul.f32 %v7508, 1.442695
    %v7611 = vpow.pop %v7610
    %v7612 = vmul.f32 %v7509, 1.442695
    %v7613 = vpow.pop %v7612
    %v7614 = vmul.f32 %v7510, 1.442695
    %v7615 = vpow.pop %v7614
    %v7616 = vmul.f32 %v7511, 1.442695
    %v7617 = vpow.pop %v7616
    %v7618 = vmul.f32 %v7512, 1.442695
    %v7619 = vpow.pop %v7618
    %v7620 = vmul.f32 %v7513, 1.442695
    %v7621 = vpow.pop %v7620
    %v7622 = vmul.f32 %v7514, 1.442695
    %v7623 = vpow.pop %v7622
    %v7624 = vmul.f32 %v7515, 1.442695
    %v7625 = vpow.pop %v7624
    %v7626 = vmul.f32 %v7516, 1.442695
    %v7627 = vpow.pop %v7626
    %v7628 = vmul.f32 %v7517, 1.442695
    %v7629 = vpow.pop %v7628
    %v7630 = vsel %vm2156, %v7519, 0.0
    %7631 = vadd.xlane.f32.xlu0 %v7630
    %v7632 = vpop.xlane.xlu0 %7631
    %v7633 = vsel %vm2156, %v7521, 0.0
    %7634 = vadd.xlane.f32.xlu0 %v7633
    %v7635 = vpop.xlane.xlu0 %7634
    %v7636 = vsel %vm2156, %v7523, 0.0
    %7637 = vadd.xlane.f32.xlu0 %v7636
    %v7638 = vpop.xlane.xlu0 %7637
    %v7639 = vsel %vm2156, %v7525, 0.0
    %7640 = vadd.xlane.f32.xlu0 %v7639
    %v7641 = vpop.xlane.xlu0 %7640
    %v7642 = vsel %vm2156, %v7527, 0.0
    %7643 = vadd.xlane.f32.xlu0 %v7642
    %v7644 = vpop.xlane.xlu0 %7643
    %v7645 = vsel %vm2156, %v7529, 0.0
    %7646 = vadd.xlane.f32.xlu0 %v7645
    %v7647 = vpop.xlane.xlu0 %7646
    %v7648 = vsel %vm2156, %v7531, 0.0
    %7649 = vadd.xlane.f32.xlu0 %v7648
    %v7650 = vpop.xlane.xlu0 %7649
    %v7651 = vsel %vm2156, %v7533, 0.0
    %7652 = vadd.xlane.f32.xlu0 %v7651
    %v7653 = vpop.xlane.xlu0 %7652
    %v7654 = vsel %vm2156, %v7535, 0.0
    %7655 = vadd.xlane.f32.xlu0 %v7654
    %v7656 = vpop.xlane.xlu0 %7655
    %v7657 = vsel %vm2156, %v7537, 0.0
    %7658 = vadd.xlane.f32.xlu0 %v7657
    %v7659 = vpop.xlane.xlu0 %7658
    %v7660 = vsel %vm2156, %v7539, 0.0
    %7661 = vadd.xlane.f32.xlu0 %v7660
    %v7662 = vpop.xlane.xlu0 %7661
    %v7663 = vsel %vm2156, %v7541, 0.0
    %7664 = vadd.xlane.f32.xlu0 %v7663
    %v7665 = vpop.xlane.xlu0 %7664
    %v7666 = vsel %vm2156, %v7543, 0.0
    %7667 = vadd.xlane.f32.xlu0 %v7666
    %v7668 = vpop.xlane.xlu0 %7667
    %v7669 = vsel %vm2156, %v7545, 0.0
    %7670 = vadd.xlane.f32.xlu0 %v7669
    %v7671 = vpop.xlane.xlu0 %7670
    %v7672 = vsel %vm2156, %v7547, 0.0
    %7673 = vadd.xlane.f32.xlu0 %v7672
    %v7674 = vpop.xlane.xlu0 %7673
    %v7675 = vsel %vm2156, %v7549, 0.0
    %7676 = vadd.xlane.f32.xlu0 %v7675
    %v7677 = vpop.xlane.xlu0 %7676
    %v7678 = vsel %vm2156, %v7551, 0.0
    %7679 = vadd.xlane.f32.xlu0 %v7678
    %v7680 = vpop.xlane.xlu0 %7679
    %v7681 = vsel %vm2156, %v7553, 0.0
    %7682 = vadd.xlane.f32.xlu0 %v7681
    %v7683 = vpop.xlane.xlu0 %7682
    %v7684 = vsel %vm2156, %v7555, 0.0
    %7685 = vadd.xlane.f32.xlu0 %v7684
    %v7686 = vpop.xlane.xlu0 %7685
    %v7687 = vsel %vm2156, %v7557, 0.0
    %7688 = vadd.xlane.f32.xlu0 %v7687
    %v7689 = vpop.xlane.xlu0 %7688
    %v7690 = vsel %vm2156, %v7559, 0.0
    %7691 = vadd.xlane.f32.xlu0 %v7690
    %v7692 = vpop.xlane.xlu0 %7691
    %v7693 = vsel %vm2156, %v7561, 0.0
    %7694 = vadd.xlane.f32.xlu0 %v7693
    %v7695 = vpop.xlane.xlu0 %7694
    %v7696 = vsel %vm2156, %v7563, 0.0
    %7697 = vadd.xlane.f32.xlu0 %v7696
    %v7698 = vpop.xlane.xlu0 %7697
    %v7699 = vsel %vm2156, %v7565, 0.0
    %7700 = vadd.xlane.f32.xlu0 %v7699
    %v7701 = vpop.xlane.xlu0 %7700
    %v7702 = vsel %vm2156, %v7567, 0.0
    %7703 = vadd.xlane.f32.xlu0 %v7702
    %v7704 = vpop.xlane.xlu0 %7703
    %v7705 = vsel %vm2156, %v7569, 0.0
    %7706 = vadd.xlane.f32.xlu0 %v7705
    %v7707 = vpop.xlane.xlu0 %7706
    %v7708 = vsel %vm2156, %v7571, 0.0
    %7709 = vadd.xlane.f32.xlu0 %v7708
    %v7710 = vpop.xlane.xlu0 %7709
    %v7711 = vsel %vm2156, %v7573, 0.0
    %7712 = vadd.xlane.f32.xlu0 %v7711
    %v7713 = vpop.xlane.xlu0 %7712
    %v7714 = vsel %vm2156, %v7575, 0.0
    %7715 = vadd.xlane.f32.xlu0 %v7714
    %v7716 = vpop.xlane.xlu0 %7715
    %v7717 = vsel %vm2156, %v7577, 0.0
    %7718 = vadd.xlane.f32.xlu0 %v7717
    %v7719 = vpop.xlane.xlu0 %7718
    %v7720 = vsel %vm2156, %v7579, 0.0
    %7721 = vadd.xlane.f32.xlu0 %v7720
    %v7722 = vpop.xlane.xlu0 %7721
    %v7723 = vsel %vm2156, %v7581, 0.0
    %7724 = vadd.xlane.f32.xlu0 %v7723
    %v7725 = vpop.xlane.xlu0 %7724
    %v7726 = vsel %vm2156, %v7583, 0.0
    %7727 = vadd.xlane.f32.xlu0 %v7726
    %v7728 = vpop.xlane.xlu0 %7727
    %v7729 = vsel %vm2156, %v7585, 0.0
    %7730 = vadd.xlane.f32.xlu0 %v7729
    %v7731 = vpop.xlane.xlu0 %7730
    %v7732 = vsel %vm2156, %v7587, 0.0
    %7733 = vadd.xlane.f32.xlu0 %v7732
    %v7734 = vpop.xlane.xlu0 %7733
    %v7735 = vsel %vm2156, %v7589, 0.0
    %7736 = vadd.xlane.f32.xlu0 %v7735
    %v7737 = vpop.xlane.xlu0 %7736
    %v7738 = vsel %vm2156, %v7591, 0.0
    %7739 = vadd.xlane.f32.xlu0 %v7738
    %v7740 = vpop.xlane.xlu0 %7739
    %v7741 = vsel %vm2156, %v7593, 0.0
    %7742 = vadd.xlane.f32.xlu0 %v7741
    %v7743 = vpop.xlane.xlu0 %7742
    %v7744 = vsel %vm2156, %v7595, 0.0
    %7745 = vadd.xlane.f32.xlu0 %v7744
    %v7746 = vpop.xlane.xlu0 %7745
    %v7747 = vsel %vm2156, %v7597, 0.0
    %7748 = vadd.xlane.f32.xlu0 %v7747
    %v7749 = vpop.xlane.xlu0 %7748
    %v7750 = vsel %vm2156, %v7599, 0.0
    %7751 = vadd.xlane.f32.xlu0 %v7750
    %v7752 = vpop.xlane.xlu0 %7751
    %v7753 = vsel %vm2156, %v7601, 0.0
    %7754 = vadd.xlane.f32.xlu0 %v7753
    %v7755 = vpop.xlane.xlu0 %7754
    %v7756 = vsel %vm2156, %v7603, 0.0
    %7757 = vadd.xlane.f32.xlu0 %v7756
    %v7758 = vpop.xlane.xlu0 %7757
    %v7759 = vsel %vm2156, %v7605, 0.0
    %7760 = vadd.xlane.f32.xlu0 %v7759
    %v7761 = vpop.xlane.xlu0 %7760
    %v7762 = vsel %vm2156, %v7607, 0.0
    %7763 = vadd.xlane.f32.xlu0 %v7762
    %v7764 = vpop.xlane.xlu0 %7763
    %v7765 = vsel %vm2156, %v7609, 0.0
    %7766 = vadd.xlane.f32.xlu0 %v7765
    %v7767 = vpop.xlane.xlu0 %7766
    %v7768 = vsel %vm2156, %v7611, 0.0
    %7769 = vadd.xlane.f32.xlu0 %v7768
    %v7770 = vpop.xlane.xlu0 %7769
    %v7771 = vsel %vm2156, %v7613, 0.0
    %7772 = vadd.xlane.f32.xlu0 %v7771
    %v7773 = vpop.xlane.xlu0 %7772
    %v7774 = vsel %vm2156, %v7615, 0.0
    %7775 = vadd.xlane.f32.xlu0 %v7774
    %v7776 = vpop.xlane.xlu0 %7775
    %v7777 = vsel %vm2156, %v7617, 0.0
    %7778 = vadd.xlane.f32.xlu0 %v7777
    %v7779 = vpop.xlane.xlu0 %7778
    %v7780 = vsel %vm2156, %v7619, 0.0
    %7781 = vadd.xlane.f32.xlu0 %v7780
    %v7782 = vpop.xlane.xlu0 %7781
    %v7783 = vsel %vm2156, %v7621, 0.0
    %7784 = vadd.xlane.f32.xlu0 %v7783
    %v7785 = vpop.xlane.xlu0 %7784
    %v7786 = vsel %vm2156, %v7623, 0.0
    %7787 = vadd.xlane.f32.xlu0 %v7786
    %v7788 = vpop.xlane.xlu0 %7787
    %v7789 = vsel %vm2156, %v7625, 0.0
    %7790 = vadd.xlane.f32.xlu0 %v7789
    %v7791 = vpop.xlane.xlu0 %7790
    %v7792 = vsel %vm2156, %v7627, 0.0
    %7793 = vadd.xlane.f32.xlu0 %v7792
    %v7794 = vpop.xlane.xlu0 %7793
    %v7795 = vsel %vm2156, %v7629, 0.0
    %7796 = vadd.xlane.f32.xlu0 %v7795
    %v7797 = vpop.xlane.xlu0 %7796
    %v7798 = vrcp.pop %v7632
    %v7799 = vmul.f32 %v7519, %v7798
    %v7800 = vrcp.pop %v7635
    %v7801 = vmul.f32 %v7521, %v7800
    %v7802 = vrcp.pop %v7638
    %v7803 = vmul.f32 %v7523, %v7802
    %v7804 = vrcp.pop %v7641
    %v7805 = vmul.f32 %v7525, %v7804
    %v7806 = vrcp.pop %v7644
    %v7807 = vmul.f32 %v7527, %v7806
    %v7808 = vrcp.pop %v7647
    %v7809 = vmul.f32 %v7529, %v7808
    %v7810 = vrcp.pop %v7650
    %v7811 = vmul.f32 %v7531, %v7810
    %v7812 = vrcp.pop %v7653
    %v7813 = vmul.f32 %v7533, %v7812
    %v7814 = vrcp.pop %v7656
    %v7815 = vmul.f32 %v7535, %v7814
    %v7816 = vrcp.pop %v7659
    %v7817 = vmul.f32 %v7537, %v7816
    %v7818 = vrcp.pop %v7662
    %v7819 = vmul.f32 %v7539, %v7818
    %v7820 = vrcp.pop %v7665
    %v7821 = vmul.f32 %v7541, %v7820
    %v7822 = vrcp.pop %v7668
    %v7823 = vmul.f32 %v7543, %v7822
    %v7824 = vrcp.pop %v7671
    %v7825 = vmul.f32 %v7545, %v7824
    %v7826 = vrcp.pop %v7674
    %v7827 = vmul.f32 %v7547, %v7826
    %v7828 = vrcp.pop %v7677
    %v7829 = vmul.f32 %v7549, %v7828
    %v7830 = vrcp.pop %v7680
    %v7831 = vmul.f32 %v7551, %v7830
    %v7832 = vrcp.pop %v7683
    %v7833 = vmul.f32 %v7553, %v7832
    %v7834 = vrcp.pop %v7686
    %v7835 = vmul.f32 %v7555, %v7834
    %v7836 = vrcp.pop %v7689
    %v7837 = vmul.f32 %v7557, %v7836
    %v7838 = vrcp.pop %v7692
    %v7839 = vmul.f32 %v7559, %v7838
    %v7840 = vrcp.pop %v7695
    %v7841 = vmul.f32 %v7561, %v7840
    %v7842 = vrcp.pop %v7698
    %v7843 = vmul.f32 %v7563, %v7842
    %v7844 = vrcp.pop %v7701
    %v7845 = vmul.f32 %v7565, %v7844
    %v7846 = vrcp.pop %v7704
    %v7847 = vmul.f32 %v7567, %v7846
    %v7848 = vrcp.pop %v7707
    %v7849 = vmul.f32 %v7569, %v7848
    %v7850 = vrcp.pop %v7710
    %v7851 = vmul.f32 %v7571, %v7850
    %v7852 = vrcp.pop %v7713
    %v7853 = vmul.f32 %v7573, %v7852
    %v7854 = vrcp.pop %v7716
    %v7855 = vmul.f32 %v7575, %v7854
    %v7856 = vrcp.pop %v7719
    %v7857 = vmul.f32 %v7577, %v7856
    %v7858 = vrcp.pop %v7722
    %v7859 = vmul.f32 %v7579, %v7858
    %v7860 = vrcp.pop %v7725
    %v7861 = vmul.f32 %v7581, %v7860
    %v7862 = vrcp.pop %v7728
    %v7863 = vmul.f32 %v7583, %v7862
    %v7864 = vrcp.pop %v7731
    %v7865 = vmul.f32 %v7585, %v7864
    %v7866 = vrcp.pop %v7734
    %v7867 = vmul.f32 %v7587, %v7866
    %v7868 = vrcp.pop %v7737
    %v7869 = vmul.f32 %v7589, %v7868
    %v7870 = vrcp.pop %v7740
    %v7871 = vmul.f32 %v7591, %v7870
    %v7872 = vrcp.pop %v7743
    %v7873 = vmul.f32 %v7593, %v7872
    %v7874 = vrcp.pop %v7746
    %v7875 = vmul.f32 %v7595, %v7874
    %v7876 = vrcp.pop %v7749
    %v7877 = vmul.f32 %v7597, %v7876
    %v7878 = vrcp.pop %v7752
    %v7879 = vmul.f32 %v7599, %v7878
    %v7880 = vrcp.pop %v7755
    %v7881 = vmul.f32 %v7601, %v7880
    %v7882 = vrcp.pop %v7758
    %v7883 = vmul.f32 %v7603, %v7882
    %v7884 = vrcp.pop %v7761
    %v7885 = vmul.f32 %v7605, %v7884
    %v7886 = vrcp.pop %v7764
    %v7887 = vmul.f32 %v7607, %v7886
    %v7888 = vrcp.pop %v7767
    %v7889 = vmul.f32 %v7609, %v7888
    %v7890 = vrcp.pop %v7770
    %v7891 = vmul.f32 %v7611, %v7890
    %v7892 = vrcp.pop %v7773
    %v7893 = vmul.f32 %v7613, %v7892
    %v7894 = vrcp.pop %v7776
    %v7895 = vmul.f32 %v7615, %v7894
    %v7896 = vrcp.pop %v7779
    %v7897 = vmul.f32 %v7617, %v7896
    %v7898 = vrcp.pop %v7782
    %v7899 = vmul.f32 %v7619, %v7898
    %v7900 = vrcp.pop %v7785
    %v7901 = vmul.f32 %v7621, %v7900
    %v7902 = vrcp.pop %v7788
    %v7903 = vmul.f32 %v7623, %v7902
    %v7904 = vrcp.pop %v7791
    %v7905 = vmul.f32 %v7625, %v7904
    %v7906 = vrcp.pop %v7794
    %v7907 = vmul.f32 %v7627, %v7906
    %v7908 = vrcp.pop %v7797
    %v7909 = vmul.f32 %v7629, %v7908
    %v7910 = vpack.c.bf16 %v7801, %v7799
    %v7911 = vpack.c.bf16 %v7805, %v7803
    %v7912 = vpack.c.bf16 %v7809, %v7807
    %v7913 = vpack.c.bf16 %v7811, %v7811
    %v7914 = vpack.c.bf16 %v7815, %v7813
    %v7915 = vpack.c.bf16 %v7819, %v7817
    %v7916 = vpack.c.bf16 %v7823, %v7821
    %v7917 = vpack.c.bf16 %v7825, %v7825
    %v7918 = vpack.c.bf16 %v7829, %v7827
    %v7919 = vpack.c.bf16 %v7833, %v7831
    %v7920 = vpack.c.bf16 %v7837, %v7835
    %v7921 = vpack.c.bf16 %v7839, %v7839
    %v7922 = vpack.c.bf16 %v7843, %v7841
    %v7923 = vpack.c.bf16 %v7847, %v7845
    %v7924 = vpack.c.bf16 %v7851, %v7849
    %v7925 = vpack.c.bf16 %v7853, %v7853
    %v7926 = vpack.c.bf16 %v7857, %v7855
    %v7927 = vpack.c.bf16 %v7861, %v7859
    %v7928 = vpack.c.bf16 %v7865, %v7863
    %v7929 = vpack.c.bf16 %v7867, %v7867
    %v7930 = vpack.c.bf16 %v7871, %v7869
    %v7931 = vpack.c.bf16 %v7875, %v7873
    %v7932 = vpack.c.bf16 %v7879, %v7877
    %v7933 = vpack.c.bf16 %v7881, %v7881
    %v7934 = vpack.c.bf16 %v7885, %v7883
    %v7935 = vpack.c.bf16 %v7889, %v7887
    %v7936 = vpack.c.bf16 %v7893, %v7891
    %v7937 = vpack.c.bf16 %v7895, %v7895
    %v7938 = vpack.c.bf16 %v7899, %v7897
    %v7939 = vpack.c.bf16 %v7903, %v7901
    %v7940 = vpack.c.bf16 %v7907, %v7905
    %v7941 = vpack.c.bf16 %v7909, %v7909
    %v7942 = vpack.c.b16 %v1129, %v1126
    %v7943 = vpack.c.b16 %v1135, %v1132
    %v7944 = vpack.c.b16 %v1141, %v1138
    %v7945 = vpack.c.b16 %v1144, %v1144
    %v7950 = vsel %vm2156, %v7910, 0
    %v7953 = vsel %vm2156, %v7911, 0
    %v7956 = vsel %vm2156, %v7912, 0
    %v7959 = vsel %vm2156, %v7913, 0
    %v7962 = vsel %vm2852, %v7945, 0
    %7964 = vmatprep.subr.bf16.mxu0 0
    %7965 = vmatpush1.bf16.msra.mxu0 %v7942
    %7966 = vmatprep.subr.bf16.mxu0 0
    %7967 = vmatpush1.bf16.msra.mxu0 %v7943
    %7968 = vmatprep.subr.bf16.mxu0 0
    %7969 = vmatpush1.bf16.msra.mxu0 %v7944
    %7970 = vmatprep.subr.bf16.mxu0 0
    %7971 = vmatpush1.bf16.msra.mxu0 %v7962
    %7972 = vmatprep.subr.bf16.mxu0 0
    %7973 = vmatpush1.bf16.msra.mxu0 0
    %7974 = vmatprep.subr.bf16.mxu0 0
    %7975 = vmatpush1.bf16.msra.mxu0 0
    %7976 = vmatprep.subr.bf16.mxu0 0
    %7977 = vmatpush1.bf16.msra.mxu0 0
    %7978 = vmatprep.subr.bf16.mxu0 0
    %7979 = vmatpush1.bf16.msra.mxu0 0
    %7980 = vmatprep.subr.bf16.mxu0 0
    %7981 = vmatpush1.bf16.msra.mxu0 0
    %7982 = vmatprep.subr.bf16.mxu0 0
    %7983 = vmatpush1.bf16.msra.mxu0 0
    %7984 = vmatprep.subr.bf16.mxu0 0
    %7985 = vmatpush1.bf16.msra.mxu0 0
    %7986 = vmatprep.subr.bf16.mxu0 0
    %7987 = vmatpush1.bf16.msra.mxu0 0
    %7988 = vmatprep.subr.bf16.mxu0 0
    %7989 = vmatpush1.bf16.msra.mxu0 0
    %7990 = vmatprep.subr.bf16.mxu0 0
    %7991 = vmatpush1.bf16.msra.mxu0 0
    %7992 = vmatprep.subr.bf16.mxu0 0
    %7993 = vmatpush1.bf16.msra.mxu0 0
    %7994 = vmatprep.subr.bf16.mxu0 0
    %7995 = vmatpush1.bf16.msra.mxu0 0
    %7996 = vmatprep.mubr.bf16.mxu0 0
    %7997 = vmatmul.mubr.bf16.gmra.mrb[0].mxu0 %v7950
    %v7998 = vpop.f32.mrb[0].mxu0
    %v7999 = vadd.f32 0.0, %v7998
    %v8000 = vpop.f32.mrb[0].mxu0
    %v8001 = vpop.f32.mrb[0].mxu0
    %v8002 = vadd.f32 0.0, %v8001
    %v8003 = vpop.f32.mrb[0].mxu0
    %8004 = vmatprep.mubr.bf16.mxu0 0
    %8005 = vmatmul.mubr.bf16.gmra.mrb[0].mxu0 %v7953
    %v8006 = vpop.f32.mrb[0].mxu0
    %v8007 = vadd.f32 0.0, %v8006
    %v8008 = vpop.f32.mrb[0].mxu0
    %v8009 = vpop.f32.mrb[0].mxu0
    %v8010 = vadd.f32 0.0, %v8009
    %v8011 = vpop.f32.mrb[0].mxu0
    %8012 = vmatprep.mubr.bf16.mxu0 0
    %8013 = vmatmul.mubr.bf16.gmra.mrb[0].mxu0 %v7956
    %v8014 = vpop.f32.mrb[0].mxu0
    %v8015 = vadd.f32 0.0, %v8014
    %v8016 = vpop.f32.mrb[0].mxu0
    %v8017 = vpop.f32.mrb[0].mxu0
    %v8018 = vadd.f32 0.0, %v8017
    %v8019 = vpop.f32.mrb[0].mxu0
    %8020 = vmatprep.mubr.bf16.mxu0 0
    %8021 = vmatmul.mubr.bf16.gmra.mrb[0].mxu0 %v7959
    %v8022 = vpop.f32.mrb[0].mxu0
    %v8023 = vadd.f32 0.0, %v8022
    %v8024 = vpop.f32.mrb[0].mxu0
    %v8025 = vpop.f32.mrb[0].mxu0
    %v8026 = vpop.f32.mrb[0].mxu0
    %8027 = vdwg.mxu0
    %v8028 = vpack.c.b16 %v1150, %v1147
    %v8029 = vpack.c.b16 %v1156, %v1153
    %v8030 = vpack.c.b16 %v1162, %v1159
    %v8031 = vpack.c.b16 %v1165, %v1165
    %v8036 = vsel %vm2156, %v7914, 0
    %v8039 = vsel %vm2156, %v7915, 0
    %v8042 = vsel %vm2156, %v7916, 0
    %v8045 = vsel %vm2156, %v7917, 0
    %v8048 = vsel %vm2852, %v8031, 0
    %8050 = vmatprep.subr.bf16.mxu0 0
    %8051 = vmatpush1.bf16.msra.mxu0 %v8028
    %8052 = vmatprep.subr.bf16.mxu0 0
    %8053 = vmatpush1.bf16.msra.mxu0 %v8029
    %8054 = vmatprep.subr.bf16.mxu0 0
    %8055 = vmatpush1.bf16.msra.mxu0 %v8030
    %8056 = vmatprep.subr.bf16.mxu0 0
    %8057 = vmatpush1.bf16.msra.mxu0 %v8048
    %8058 = vmatprep.subr.bf16.mxu0 0
    %8059 = vmatpush1.bf16.msra.mxu0 0
    %8060 = vmatprep.subr.bf16.mxu0 0
    %8061 = vmatpush1.bf16.msra.mxu0 0
    %8062 = vmatprep.subr.bf16.mxu0 0
    %8063 = vmatpush1.bf16.msra.mxu0 0
    %8064 = vmatprep.subr.bf16.mxu0 0
    %8065 = vmatpush1.bf16.msra.mxu0 0
    %8066 = vmatprep.subr.bf16.mxu0 0
    %8067 = vmatpush1.bf16.msra.mxu0 0
    %8068 = vmatprep.subr.bf16.mxu0 0
    %8069 = vmatpush1.bf16.msra.mxu0 0
    %8070 = vmatprep.subr.bf16.mxu0 0
    %8071 = vmatpush1.bf16.msra.mxu0 0
    %8072 = vmatprep.subr.bf16.mxu0 0
    %8073 = vmatpush1.bf16.msra.mxu0 0
    %8074 = vmatprep.subr.bf16.mxu0 0
    %8075 = vmatpush1.bf16.msra.mxu0 0
    %8076 = vmatprep.subr.bf16.mxu0 0
    %8077 = vmatpush1.bf16.msra.mxu0 0
    %8078 = vmatprep.subr.bf16.mxu0 0
    %8079 = vmatpush1.bf16.msra.mxu0 0
    %8080 = vmatprep.subr.bf16.mxu0 0
    %8081 = vmatpush1.bf16.msra.mxu0 0
    %8082 = vmatprep.mubr.bf16.mxu0 0
    %8083 = vmatmul.mubr.bf16.gmra.mrb[0].mxu0 %v8036
    %v8084 = vpop.f32.mrb[0].mxu0
    %v8085 = vadd.f32 0.0, %v8084
    %v8086 = vpop.f32.mrb[0].mxu0
    %v8087 = vpop.f32.mrb[0].mxu0
    %v8088 = vadd.f32 0.0, %v8087
    %v8089 = vpop.f32.mrb[0].mxu0
    %8090 = vmatprep.mubr.bf16.mxu0 0
    %8091 = vmatmul.mubr.bf16.gmra.mrb[0].mxu0 %v8039
    %v8092 = vpop.f32.mrb[0].mxu0
    %v8093 = vadd.f32 0.0, %v8092
    %v8094 = vpop.f32.mrb[0].mxu0
    %v8095 = vpop.f32.mrb[0].mxu0
    %v8096 = vadd.f32 0.0, %v8095
    %v8097 = vpop.f32.mrb[0].mxu0
    %8098 = vmatprep.mubr.bf16.mxu0 0
    %8099 = vmatmul.mubr.bf16.gmra.mrb[0].mxu0 %v8042
    %v8100 = vpop.f32.mrb[0].mxu0
    %v8101 = vadd.f32 0.0, %v8100
    %v8102 = vpop.f32.mrb[0].mxu0
    %v8103 = vpop.f32.mrb[0].mxu0
    %v8104 = vadd.f32 0.0, %v8103
    %v8105 = vpop.f32.mrb[0].mxu0
    %8106 = vmatprep.mubr.bf16.mxu0 0
    %8107 = vmatmul.mubr.bf16.gmra.mrb[0].mxu0 %v8045
    %v8108 = vpop.f32.mrb[0].mxu0
    %v8109 = vadd.f32 0.0, %v8108
    %v8110 = vpop.f32.mrb[0].mxu0
    %v8111 = vpop.f32.mrb[0].mxu0
    %v8112 = vpop.f32.mrb[0].mxu0
    %8113 = vdwg.mxu0
    %v8114 = vpack.c.b16 %v1171, %v1168
    %v8115 = vpack.c.b16 %v1177, %v1174
    %v8116 = vpack.c.b16 %v1183, %v1180
    %v8117 = vpack.c.b16 %v1186, %v1186
    %v8122 = vsel %vm2156, %v7918, 0
    %v8125 = vsel %vm2156, %v7919, 0
    %v8128 = vsel %vm2156, %v7920, 0
    %v8131 = vsel %vm2156, %v7921, 0
    %v8134 = vsel %vm2852, %v8117, 0
    %8136 = vmatprep.subr.bf16.mxu0 0
    %8137 = vmatpush1.bf16.msra.mxu0 %v8114
    %8138 = vmatprep.subr.bf16.mxu0 0
    %8139 = vmatpush1.bf16.msra.mxu0 %v8115
    %8140 = vmatprep.subr.bf16.mxu0 0
    %8141 = vmatpush1.bf16.msra.mxu0 %v8116
    %8142 = vmatprep.subr.bf16.mxu0 0
    %8143 = vmatpush1.bf16.msra.mxu0 %v8134
    %8144 = vmatprep.subr.bf16.mxu0 0
    %8145 = vmatpush1.bf16.msra.mxu0 0
    %8146 = vmatprep.subr.bf16.mxu0 0
    %8147 = vmatpush1.bf16.msra.mxu0 0
    %8148 = vmatprep.subr.bf16.mxu0 0
    %8149 = vmatpush1.bf16.msra.mxu0 0
    %8150 = vmatprep.subr.bf16.mxu0 0
    %8151 = vmatpush1.bf16.msra.mxu0 0
    %8152 = vmatprep.subr.bf16.mxu0 0
    %8153 = vmatpush1.bf16.msra.mxu0 0
    %8154 = vmatprep.subr.bf16.mxu0 0
    %8155 = vmatpush1.bf16.msra.mxu0 0
    %8156 = vmatprep.subr.bf16.mxu0 0
    %8157 = vmatpush1.bf16.msra.mxu0 0
    %8158 = vmatprep.subr.bf16.mxu0 0
    %8159 = vmatpush1.bf16.msra.mxu0 0
    %8160 = vmatprep.subr.bf16.mxu0 0
    %8161 = vmatpush1.bf16.msra.mxu0 0
    %8162 = vmatprep.subr.bf16.mxu0 0
    %8163 = vmatpush1.bf16.msra.mxu0 0
    %8164 = vmatprep.subr.bf16.mxu0 0
    %8165 = vmatpush1.bf16.msra.mxu0 0
    %8166 = vmatprep.subr.bf16.mxu0 0
    %8167 = vmatpush1.bf16.msra.mxu0 0
    %8168 = vmatprep.mubr.bf16.mxu0 0
    %8169 = vmatmul.mubr.bf16.gmra.mrb[0].mxu0 %v8122
    %v8170 = vpop.f32.mrb[0].mxu0
    %v8171 = vadd.f32 0.0, %v8170
    %v8172 = vpop.f32.mrb[0].mxu0
    %v8173 = vpop.f32.mrb[0].mxu0
    %v8174 = vadd.f32 0.0, %v8173
    %v8175 = vpop.f32.mrb[0].mxu0
    %8176 = vmatprep.mubr.bf16.mxu0 0
    %8177 = vmatmul.mubr.bf16.gmra.mrb[0].mxu0 %v8125
    %v8178 = vpop.f32.mrb[0].mxu0
    %v8179 = vadd.f32 0.0, %v8178
    %v8180 = vpop.f32.mrb[0].mxu0
    %v8181 = vpop.f32.mrb[0].mxu0
    %v8182 = vadd.f32 0.0, %v8181
    %v8183 = vpop.f32.mrb[0].mxu0
    %8184 = vmatprep.mubr.bf16.mxu0 0
    %8185 = vmatmul.mubr.bf16.gmra.mrb[0].mxu0 %v8128
    %v8186 = vpop.f32.mrb[0].mxu0
    %v8187 = vadd.f32 0.0, %v8186
    %v8188 = vpop.f32.mrb[0].mxu0
    %v8189 = vpop.f32.mrb[0].mxu0
    %v8190 = vadd.f32 0.0, %v8189
    %v8191 = vpop.f32.mrb[0].mxu0
    %8192 = vmatprep.mubr.bf16.mxu0 0
    %8193 = vmatmul.mubr.bf16.gmra.mrb[0].mxu0 %v8131
    %v8194 = vpop.f32.mrb[0].mxu0
    %v8195 = vadd.f32 0.0, %v8194
    %v8196 = vpop.f32.mrb[0].mxu0
    %v8197 = vpop.f32.mrb[0].mxu0
    %v8198 = vpop.f32.mrb[0].mxu0
    %8199 = vdwg.mxu0
    %v8200 = vpack.c.b16 %v1192, %v1189
    %v8201 = vpack.c.b16 %v1198, %v1195
    %v8202 = vpack.c.b16 %v1204, %v1201
    %v8203 = vpack.c.b16 %v1207, %v1207
    %v8208 = vsel %vm2156, %v7922, 0
    %v8211 = vsel %vm2156, %v7923, 0
    %v8214 = vsel %vm2156, %v7924, 0
    %v8217 = vsel %vm2156, %v7925, 0
    %v8220 = vsel %vm2852, %v8203, 0
    %8222 = vmatprep.subr.bf16.mxu0 0
    %8223 = vmatpush1.bf16.msra.mxu0 %v8200
    %8224 = vmatprep.subr.bf16.mxu0 0
    %8225 = vmatpush1.bf16.msra.mxu0 %v8201
    %8226 = vmatprep.subr.bf16.mxu0 0
    %8227 = vmatpush1.bf16.msra.mxu0 %v8202
    %8228 = vmatprep.subr.bf16.mxu0 0
    %8229 = vmatpush1.bf16.msra.mxu0 %v8220
    %8230 = vmatprep.subr.bf16.mxu0 0
    %8231 = vmatpush1.bf16.msra.mxu0 0
    %8232 = vmatprep.subr.bf16.mxu0 0
    %8233 = vmatpush1.bf16.msra.mxu0 0
    %8234 = vmatprep.subr.bf16.mxu0 0
    %8235 = vmatpush1.bf16.msra.mxu0 0
    %8236 = vmatprep.subr.bf16.mxu0 0
    %8237 = vmatpush1.bf16.msra.mxu0 0
    %8238 = vmatprep.subr.bf16.mxu0 0
    %8239 = vmatpush1.bf16.msra.mxu0 0
    %8240 = vmatprep.subr.bf16.mxu0 0
    %8241 = vmatpush1.bf16.msra.mxu0 0
    %8242 = vmatprep.subr.bf16.mxu0 0
    %8243 = vmatpush1.bf16.msra.mxu0 0
    %8244 = vmatprep.subr.bf16.mxu0 0
    %8245 = vmatpush1.bf16.msra.mxu0 0
    %8246 = vmatprep.subr.bf16.mxu0 0
    %8247 = vmatpush1.bf16.msra.mxu0 0
    %8248 = vmatprep.subr.bf16.mxu0 0
    %8249 = vmatpush1.bf16.msra.mxu0 0
    %8250 = vmatprep.subr.bf16.mxu0 0
    %8251 = vmatpush1.bf16.msra.mxu0 0
    %8252 = vmatprep.subr.bf16.mxu0 0
    %8253 = vmatpush1.bf16.msra.mxu0 0
    %8254 = vmatprep.mubr.bf16.mxu0 0
    %8255 = vmatmul.mubr.bf16.gmra.mrb[0].mxu0 %v8208
    %v8256 = vpop.f32.mrb[0].mxu0
    %v8257 = vadd.f32 0.0, %v8256
    %v8258 = vpop.f32.mrb[0].mxu0
    %v8259 = vpop.f32.mrb[0].mxu0
    %v8260 = vadd.f32 0.0, %v8259
    %v8261 = vpop.f32.mrb[0].mxu0
    %8262 = vmatprep.mubr.bf16.mxu0 0
    %8263 = vmatmul.mubr.bf16.gmra.mrb[0].mxu0 %v8211
    %v8264 = vpop.f32.mrb[0].mxu0
    %v8265 = vadd.f32 0.0, %v8264
    %v8266 = vpop.f32.mrb[0].mxu0
    %v8267 = vpop.f32.mrb[0].mxu0
    %v8268 = vadd.f32 0.0, %v8267
    %v8269 = vpop.f32.mrb[0].mxu0
    %8270 = vmatprep.mubr.bf16.mxu0 0
    %8271 = vmatmul.mubr.bf16.gmra.mrb[0].mxu0 %v8214
    %v8272 = vpop.f32.mrb[0].mxu0
    %v8273 = vadd.f32 0.0, %v8272
    %v8274 = vpop.f32.mrb[0].mxu0
    %v8275 = vpop.f32.mrb[0].mxu0
    %v8276 = vadd.f32 0.0, %v8275
    %v8277 = vpop.f32.mrb[0].mxu0
    %8278 = vmatprep.mubr.bf16.mxu0 0
    %8279 = vmatmul.mubr.bf16.gmra.mrb[0].mxu0 %v8217
    %v8280 = vpop.f32.mrb[0].mxu0
    %v8281 = vadd.f32 0.0, %v8280
    %v8282 = vpop.f32.mrb[0].mxu0
    %v8283 = vpop.f32.mrb[0].mxu0
    %v8284 = vpop.f32.mrb[0].mxu0
    %8285 = vdwg.mxu0
    %v8286 = vpack.c.b16 %v1213, %v1210
    %v8287 = vpack.c.b16 %v1219, %v1216
    %v8288 = vpack.c.b16 %v1225, %v1222
    %v8289 = vpack.c.b16 %v1228, %v1228
    %v8294 = vsel %vm2156, %v7926, 0
    %v8297 = vsel %vm2156, %v7927, 0
    %v8300 = vsel %vm2156, %v7928, 0
    %v8303 = vsel %vm2156, %v7929, 0
    %v8306 = vsel %vm2852, %v8289, 0
    %8308 = vmatprep.subr.bf16.mxu0 0
    %8309 = vmatpush1.bf16.msra.mxu0 %v8286
    %8310 = vmatprep.subr.bf16.mxu0 0
    %8311 = vmatpush1.bf16.msra.mxu0 %v8287
    %8312 = vmatprep.subr.bf16.mxu0 0
    %8313 = vmatpush1.bf16.msra.mxu0 %v8288
    %8314 = vmatprep.subr.bf16.mxu0 0
    %8315 = vmatpush1.bf16.msra.mxu0 %v8306
    %8316 = vmatprep.subr.bf16.mxu0 0
    %8317 = vmatpush1.bf16.msra.mxu0 0
    %8318 = vmatprep.subr.bf16.mxu0 0
    %8319 = vmatpush1.bf16.msra.mxu0 0
    %8320 = vmatprep.subr.bf16.mxu0 0
    %8321 = vmatpush1.bf16.msra.mxu0 0
    %8322 = vmatprep.subr.bf16.mxu0 0
    %8323 = vmatpush1.bf16.msra.mxu0 0
    %8324 = vmatprep.subr.bf16.mxu0 0
    %8325 = vmatpush1.bf16.msra.mxu0 0
    %8326 = vmatprep.subr.bf16.mxu0 0
    %8327 = vmatpush1.bf16.msra.mxu0 0
    %8328 = vmatprep.subr.bf16.mxu0 0
    %8329 = vmatpush1.bf16.msra.mxu0 0
    %8330 = vmatprep.subr.bf16.mxu0 0
    %8331 = vmatpush1.bf16.msra.mxu0 0
    %8332 = vmatprep.subr.bf16.mxu0 0
    %8333 = vmatpush1.bf16.msra.mxu0 0
    %8334 = vmatprep.subr.bf16.mxu0 0
    %8335 = vmatpush1.bf16.msra.mxu0 0
    %8336 = vmatprep.subr.bf16.mxu0 0
    %8337 = vmatpush1.bf16.msra.mxu0 0
    %8338 = vmatprep.subr.bf16.mxu0 0
    %8339 = vmatpush1.bf16.msra.mxu0 0
    %8340 = vmatprep.mubr.bf16.mxu0 0
    %8341 = vmatmul.mubr.bf16.gmra.mrb[0].mxu0 %v8294
    %v8342 = vpop.f32.mrb[0].mxu0
    %v8343 = vadd.f32 0.0, %v8342
    %v8344 = vpop.f32.mrb[0].mxu0
    %v8345 = vpop.f32.mrb[0].mxu0
    %v8346 = vadd.f32 0.0, %v8345
    %v8347 = vpop.f32.mrb[0].mxu0
    %8348 = vmatprep.mubr.bf16.mxu0 0
    %8349 = vmatmul.mubr.bf16.gmra.mrb[0].mxu0 %v8297
    %v8350 = vpop.f32.mrb[0].mxu0
    %v8351 = vadd.f32 0.0, %v8350
    %v8352 = vpop.f32.mrb[0].mxu0
    %v8353 = vpop.f32.mrb[0].mxu0
    %v8354 = vadd.f32 0.0, %v8353
    %v8355 = vpop.f32.mrb[0].mxu0
    %8356 = vmatprep.mubr.bf16.mxu0 0
    %8357 = vmatmul.mubr.bf16.gmra.mrb[0].mxu0 %v8300
    %v8358 = vpop.f32.mrb[0].mxu0
    %v8359 = vadd.f32 0.0, %v8358
    %v8360 = vpop.f32.mrb[0].mxu0
    %v8361 = vpop.f32.mrb[0].mxu0
    %v8362 = vadd.f32 0.0, %v8361
    %v8363 = vpop.f32.mrb[0].mxu0
    %8364 = vmatprep.mubr.bf16.mxu0 0
    %8365 = vmatmul.mubr.bf16.gmra.mrb[0].mxu0 %v8303
    %v8366 = vpop.f32.mrb[0].mxu0
    %v8367 = vadd.f32 0.0, %v8366
    %v8368 = vpop.f32.mrb[0].mxu0
    %v8369 = vpop.f32.mrb[0].mxu0
    %v8370 = vpop.f32.mrb[0].mxu0
    %8371 = vdwg.mxu0
    %v8372 = vpack.c.b16 %v1234, %v1231
    %v8373 = vpack.c.b16 %v1240, %v1237
    %v8374 = vpack.c.b16 %v1246, %v1243
    %v8375 = vpack.c.b16 %v1249, %v1249
    %v8380 = vsel %vm2156, %v7930, 0
    %v8383 = vsel %vm2156, %v7931, 0
    %v8386 = vsel %vm2156, %v7932, 0
    %v8389 = vsel %vm2156, %v7933, 0
    %v8392 = vsel %vm2852, %v8375, 0
    %8394 = vmatprep.subr.bf16.mxu0 0
    %8395 = vmatpush1.bf16.msra.mxu0 %v8372
    %8396 = vmatprep.subr.bf16.mxu0 0
    %8397 = vmatpush1.bf16.msra.mxu0 %v8373
    %8398 = vmatprep.subr.bf16.mxu0 0
    %8399 = vmatpush1.bf16.msra.mxu0 %v8374
    %8400 = vmatprep.subr.bf16.mxu0 0
    %8401 = vmatpush1.bf16.msra.mxu0 %v8392
    %8402 = vmatprep.subr.bf16.mxu0 0
    %8403 = vmatpush1.bf16.msra.mxu0 0
    %8404 = vmatprep.subr.bf16.mxu0 0
    %8405 = vmatpush1.bf16.msra.mxu0 0
    %8406 = vmatprep.subr.bf16.mxu0 0
    %8407 = vmatpush1.bf16.msra.mxu0 0
    %8408 = vmatprep.subr.bf16.mxu0 0
    %8409 = vmatpush1.bf16.msra.mxu0 0
    %8410 = vmatprep.subr.bf16.mxu0 0
    %8411 = vmatpush1.bf16.msra.mxu0 0
    %8412 = vmatprep.subr.bf16.mxu0 0
    %8413 = vmatpush1.bf16.msra.mxu0 0
    %8414 = vmatprep.subr.bf16.mxu0 0
    %8415 = vmatpush1.bf16.msra.mxu0 0
    %8416 = vmatprep.subr.bf16.mxu0 0
    %8417 = vmatpush1.bf16.msra.mxu0 0
    %8418 = vmatprep.subr.bf16.mxu0 0
    %8419 = vmatpush1.bf16.msra.mxu0 0
    %8420 = vmatprep.subr.bf16.mxu0 0
    %8421 = vmatpush1.bf16.msra.mxu0 0
    %8422 = vmatprep.subr.bf16.mxu0 0
    %8423 = vmatpush1.bf16.msra.mxu0 0
    %8424 = vmatprep.subr.bf16.mxu0 0
    %8425 = vmatpush1.bf16.msra.mxu0 0
    %8426 = vmatprep.mubr.bf16.mxu0 0
    %8427 = vmatmul.mubr.bf16.gmra.mrb[0].mxu0 %v8380
    %v8428 = vpop.f32.mrb[0].mxu0
    %v8429 = vadd.f32 0.0, %v8428
    %v8430 = vpop.f32.mrb[0].mxu0
    %v8431 = vpop.f32.mrb[0].mxu0
    %v8432 = vadd.f32 0.0, %v8431
    %v8433 = vpop.f32.mrb[0].mxu0
    %8434 = vmatprep.mubr.bf16.mxu0 0
    %8435 = vmatmul.mubr.bf16.gmra.mrb[0].mxu0 %v8383
    %v8436 = vpop.f32.mrb[0].mxu0
    %v8437 = vadd.f32 0.0, %v8436
    %v8438 = vpop.f32.mrb[0].mxu0
    %v8439 = vpop.f32.mrb[0].mxu0
    %v8440 = vadd.f32 0.0, %v8439
    %v8441 = vpop.f32.mrb[0].mxu0
    %8442 = vmatprep.mubr.bf16.mxu0 0
    %8443 = vmatmul.mubr.bf16.gmra.mrb[0].mxu0 %v8386
    %v8444 = vpop.f32.mrb[0].mxu0
    %v8445 = vadd.f32 0.0, %v8444
    %v8446 = vpop.f32.mrb[0].mxu0
    %v8447 = vpop.f32.mrb[0].mxu0
    %v8448 = vadd.f32 0.0, %v8447
    %v8449 = vpop.f32.mrb[0].mxu0
    %8450 = vmatprep.mubr.bf16.mxu0 0
    %8451 = vmatmul.mubr.bf16.gmra.mrb[0].mxu0 %v8389
    %v8452 = vpop.f32.mrb[0].mxu0
    %v8453 = vadd.f32 0.0, %v8452
    %v8454 = vpop.f32.mrb[0].mxu0
    %v8455 = vpop.f32.mrb[0].mxu0
    %v8456 = vpop.f32.mrb[0].mxu0
    %8457 = vdwg.mxu0
    %v8458 = vpack.c.b16 %v1255, %v1252
    %v8459 = vpack.c.b16 %v1261, %v1258
    %v8460 = vpack.c.b16 %v1267, %v1264
    %v8461 = vpack.c.b16 %v1270, %v1270
    %v8466 = vsel %vm2156, %v7934, 0
    %v8469 = vsel %vm2156, %v7935, 0
    %v8472 = vsel %vm2156, %v7936, 0
    %v8475 = vsel %vm2156, %v7937, 0
    %v8478 = vsel %vm2852, %v8461, 0
    %8480 = vmatprep.subr.bf16.mxu0 0
    %8481 = vmatpush1.bf16.msra.mxu0 %v8458
    %8482 = vmatprep.subr.bf16.mxu0 0
    %8483 = vmatpush1.bf16.msra.mxu0 %v8459
    %8484 = vmatprep.subr.bf16.mxu0 0
    %8485 = vmatpush1.bf16.msra.mxu0 %v8460
    %8486 = vmatprep.subr.bf16.mxu0 0
    %8487 = vmatpush1.bf16.msra.mxu0 %v8478
    %8488 = vmatprep.subr.bf16.mxu0 0
    %8489 = vmatpush1.bf16.msra.mxu0 0
    %8490 = vmatprep.subr.bf16.mxu0 0
    %8491 = vmatpush1.bf16.msra.mxu0 0
    %8492 = vmatprep.subr.bf16.mxu0 0
    %8493 = vmatpush1.bf16.msra.mxu0 0
    %8494 = vmatprep.subr.bf16.mxu0 0
    %8495 = vmatpush1.bf16.msra.mxu0 0
    %8496 = vmatprep.subr.bf16.mxu0 0
    %8497 = vmatpush1.bf16.msra.mxu0 0
    %8498 = vmatprep.subr.bf16.mxu0 0
    %8499 = vmatpush1.bf16.msra.mxu0 0
    %8500 = vmatprep.subr.bf16.mxu0 0
    %8501 = vmatpush1.bf16.msra.mxu0 0
    %8502 = vmatprep.subr.bf16.mxu0 0
    %8503 = vmatpush1.bf16.msra.mxu0 0
    %8504 = vmatprep.subr.bf16.mxu0 0
    %8505 = vmatpush1.bf16.msra.mxu0 0
    %8506 = vmatprep.subr.bf16.mxu0 0
    %8507 = vmatpush1.bf16.msra.mxu0 0
    %8508 = vmatprep.subr.bf16.mxu0 0
    %8509 = vmatpush1.bf16.msra.mxu0 0
    %8510 = vmatprep.subr.bf16.mxu0 0
    %8511 = vmatpush1.bf16.msra.mxu0 0
    %8512 = vmatprep.mubr.bf16.mxu0 0
    %8513 = vmatmul.mubr.bf16.gmra.mrb[0].mxu0 %v8466
    %v8514 = vpop.f32.mrb[0].mxu0
    %v8515 = vadd.f32 0.0, %v8514
    %v8516 = vpop.f32.mrb[0].mxu0
    %v8517 = vpop.f32.mrb[0].mxu0
    %v8518 = vadd.f32 0.0, %v8517
    %v8519 = vpop.f32.mrb[0].mxu0
    %8520 = vmatprep.mubr.bf16.mxu0 0
    %8521 = vmatmul.mubr.bf16.gmra.mrb[0].mxu0 %v8469
    %v8522 = vpop.f32.mrb[0].mxu0
    %v8523 = vadd.f32 0.0, %v8522
    %v8524 = vpop.f32.mrb[0].mxu0
    %v8525 = vpop.f32.mrb[0].mxu0
    %v8526 = vadd.f32 0.0, %v8525
    %v8527 = vpop.f32.mrb[0].mxu0
    %8528 = vmatprep.mubr.bf16.mxu0 0
    %8529 = vmatmul.mubr.bf16.gmra.mrb[0].mxu0 %v8472
    %v8530 = vpop.f32.mrb[0].mxu0
    %v8531 = vadd.f32 0.0, %v8530
    %v8532 = vpop.f32.mrb[0].mxu0
    %v8533 = vpop.f32.mrb[0].mxu0
    %v8534 = vadd.f32 0.0, %v8533
    %v8535 = vpop.f32.mrb[0].mxu0
    %8536 = vmatprep.mubr.bf16.mxu0 0
    %8537 = vmatmul.mubr.bf16.gmra.mrb[0].mxu0 %v8475
    %v8538 = vpop.f32.mrb[0].mxu0
    %v8539 = vadd.f32 0.0, %v8538
    %v8540 = vpop.f32.mrb[0].mxu0
    %v8541 = vpop.f32.mrb[0].mxu0
    %v8542 = vpop.f32.mrb[0].mxu0
    %8543 = vdwg.mxu0
    %v8544 = vpack.c.b16 %v1276, %v1273
    %v8545 = vpack.c.b16 %v1282, %v1279
    %v8546 = vpack.c.b16 %v1288, %v1285
    %v8547 = vpack.c.b16 %v1291, %v1291
    %v8552 = vsel %vm2156, %v7938, 0
    %v8555 = vsel %vm2156, %v7939, 0
    %v8558 = vsel %vm2156, %v7940, 0
    %v8561 = vsel %vm2156, %v7941, 0
    %v8564 = vsel %vm2852, %v8547, 0
    %8566 = vmatprep.subr.bf16.mxu0 0
    %8567 = vmatpush1.bf16.msra.mxu0 %v8544
    %8568 = vmatprep.subr.bf16.mxu0 0
    %8569 = vmatpush1.bf16.msra.mxu0 %v8545
    %8570 = vmatprep.subr.bf16.mxu0 0
    %8571 = vmatpush1.bf16.msra.mxu0 %v8546
    %8572 = vmatprep.subr.bf16.mxu0 0
    %8573 = vmatpush1.bf16.msra.mxu0 %v8564
    %8574 = vmatprep.subr.bf16.mxu0 0
    %8575 = vmatpush1.bf16.msra.mxu0 0
    %8576 = vmatprep.subr.bf16.mxu0 0
    %8577 = vmatpush1.bf16.msra.mxu0 0
    %8578 = vmatprep.subr.bf16.mxu0 0
    %8579 = vmatpush1.bf16.msra.mxu0 0
    %8580 = vmatprep.subr.bf16.mxu0 0
    %8581 = vmatpush1.bf16.msra.mxu0 0
    %8582 = vmatprep.subr.bf16.mxu0 0
    %8583 = vmatpush1.bf16.msra.mxu0 0
    %8584 = vmatprep.subr.bf16.mxu0 0
    %8585 = vmatpush1.bf16.msra.mxu0 0
    %8586 = vmatprep.subr.bf16.mxu0 0
    %8587 = vmatpush1.bf16.msra.mxu0 0
    %8588 = vmatprep.subr.bf16.mxu0 0
    %8589 = vmatpush1.bf16.msra.mxu0 0
    %8590 = vmatprep.subr.bf16.mxu0 0
    %8591 = vmatpush1.bf16.msra.mxu0 0
    %8592 = vmatprep.subr.bf16.mxu0 0
    %8593 = vmatpush1.bf16.msra.mxu0 0
    %8594 = vmatprep.subr.bf16.mxu0 0
    %8595 = vmatpush1.bf16.msra.mxu0 0
    %8596 = vmatprep.subr.bf16.mxu0 0
    %8597 = vmatpush1.bf16.msra.mxu0 0
    %8598 = vmatprep.mubr.bf16.mxu0 0
    %8599 = vmatmul.mubr.bf16.gmra.mrb[0].mxu0 %v8552
    %v8600 = vpop.f32.mrb[0].mxu0
    %v8601 = vadd.f32 0.0, %v8600
    %v8602 = vpop.f32.mrb[0].mxu0
    %v8603 = vpop.f32.mrb[0].mxu0
    %v8604 = vadd.f32 0.0, %v8603
    %v8605 = vpop.f32.mrb[0].mxu0
    %8606 = vmatprep.mubr.bf16.mxu0 0
    %8607 = vmatmul.mubr.bf16.gmra.mrb[0].mxu0 %v8555
    %v8608 = vpop.f32.mrb[0].mxu0
    %v8609 = vadd.f32 0.0, %v8608
    %v8610 = vpop.f32.mrb[0].mxu0
    %v8611 = vpop.f32.mrb[0].mxu0
    %v8612 = vadd.f32 0.0, %v8611
    %v8613 = vpop.f32.mrb[0].mxu0
    %8614 = vmatprep.mubr.bf16.mxu0 0
    %8615 = vmatmul.mubr.bf16.gmra.mrb[0].mxu0 %v8558
    %v8616 = vpop.f32.mrb[0].mxu0
    %v8617 = vadd.f32 0.0, %v8616
    %v8618 = vpop.f32.mrb[0].mxu0
    %v8619 = vpop.f32.mrb[0].mxu0
    %v8620 = vadd.f32 0.0, %v8619
    %v8621 = vpop.f32.mrb[0].mxu0
    %8622 = vmatprep.mubr.bf16.mxu0 0
    %8623 = vmatmul.mubr.bf16.gmra.mrb[0].mxu0 %v8561
    %v8624 = vpop.f32.mrb[0].mxu0
    %v8625 = vadd.f32 0.0, %v8624
    %v8626 = vpop.f32.mrb[0].mxu0
    %v8627 = vpop.f32.mrb[0].mxu0
    %v8628 = vpop.f32.mrb[0].mxu0
    %8629 = vdwg.mxu0
    %v8630 = vpack.c.bf16 %v8002, %v7999
    %v8631 = vpack.c.bf16 %v8010, %v8007
    %v8632 = vpack.c.bf16 %v8018, %v8015
    %v8633 = vpack.c.bf16 %v8023, %v8023
    %v8634 = vpack.c.bf16 %v8088, %v8085
    %v8635 = vpack.c.bf16 %v8096, %v8093
    %v8636 = vpack.c.bf16 %v8104, %v8101
    %v8637 = vpack.c.bf16 %v8109, %v8109
    %v8638 = vpack.c.bf16 %v8174, %v8171
    %v8639 = vpack.c.bf16 %v8182, %v8179
    %v8640 = vpack.c.bf16 %v8190, %v8187
    %v8641 = vpack.c.bf16 %v8195, %v8195
    %v8642 = vpack.c.bf16 %v8260, %v8257
    %v8643 = vpack.c.bf16 %v8268, %v8265
    %v8644 = vpack.c.bf16 %v8276, %v8273
    %v8645 = vpack.c.bf16 %v8281, %v8281
    %v8646 = vpack.c.bf16 %v8346, %v8343
    %v8647 = vpack.c.bf16 %v8354, %v8351
    %v8648 = vpack.c.bf16 %v8362, %v8359
    %v8649 = vpack.c.bf16 %v8367, %v8367
    %v8650 = vpack.c.bf16 %v8432, %v8429
    %v8651 = vpack.c.bf16 %v8440, %v8437
    %v8652 = vpack.c.bf16 %v8448, %v8445
    %v8653 = vpack.c.bf16 %v8453, %v8453
    %v8654 = vpack.c.bf16 %v8518, %v8515
    %v8655 = vpack.c.bf16 %v8526, %v8523
    %v8656 = vpack.c.bf16 %v8534, %v8531
    %v8657 = vpack.c.bf16 %v8539, %v8539
    %v8658 = vpack.c.bf16 %v8604, %v8601
    %v8659 = vpack.c.bf16 %v8612, %v8609
    %v8660 = vpack.c.bf16 %v8620, %v8617
    %v8661 = vpack.c.bf16 %v8625, %v8625
    %8694 = vrot.lane.b32.xlu0 %v6230, 32
    %v8695 = vpop.permute.xlu0 %8694
    %8696 = vrot.lane.b32.xlu0 %v6231, 32
    %v8697 = vpop.permute.xlu0 %8696
    %8698 = vrot.lane.b32.xlu0 %v6232, 32
    %v8699 = vpop.permute.xlu0 %8698
    %8700 = vrot.lane.b32.xlu0 %v6233, 32
    %v8701 = vpop.permute.xlu0 %8700
    %8702 = vrot.lane.b32.xlu0 %v6234, 32
    %v8703 = vpop.permute.xlu0 %8702
    %8704 = vrot.lane.b32.xlu0 %v6235, 32
    %v8705 = vpop.permute.xlu0 %8704
    %8706 = vrot.lane.b32.xlu0 %v6236, 32
    %v8707 = vpop.permute.xlu0 %8706
    %8708 = vrot.lane.b32.xlu0 %v6237, 32
    %v8709 = vpop.permute.xlu0 %8708
    %8710 = vrot.lane.b32.xlu0 %v6238, 32
    %v8711 = vpop.permute.xlu0 %8710
    %8712 = vrot.lane.b32.xlu0 %v6239, 32
    %v8713 = vpop.permute.xlu0 %8712
    %8714 = vrot.lane.b32.xlu0 %v6240, 32
    %v8715 = vpop.permute.xlu0 %8714
    %8716 = vrot.lane.b32.xlu0 %v6241, 32
    %v8717 = vpop.permute.xlu0 %8716
    %8718 = vrot.lane.b32.xlu0 %v6242, 32
    %v8719 = vpop.permute.xlu0 %8718
    %8720 = vrot.lane.b32.xlu0 %v6243, 32
    %v8721 = vpop.permute.xlu0 %8720
    %8722 = vrot.lane.b32.xlu0 %v6244, 32
    %v8723 = vpop.permute.xlu0 %8722
    %8724 = vrot.lane.b32.xlu0 %v6245, 32
    %v8725 = vpop.permute.xlu0 %8724
    %8726 = vrot.lane.b32.xlu0 %v6246, 32
    %v8727 = vpop.permute.xlu0 %8726
    %8728 = vrot.lane.b32.xlu0 %v6247, 32
    %v8729 = vpop.permute.xlu0 %8728
    %8730 = vrot.lane.b32.xlu0 %v6248, 32
    %v8731 = vpop.permute.xlu0 %8730
    %8732 = vrot.lane.b32.xlu0 %v6249, 32
    %v8733 = vpop.permute.xlu0 %8732
    %8734 = vrot.lane.b32.xlu0 %v6250, 32
    %v8735 = vpop.permute.xlu0 %8734
    %8736 = vrot.lane.b32.xlu0 %v6251, 32
    %v8737 = vpop.permute.xlu0 %8736
    %8738 = vrot.lane.b32.xlu0 %v6252, 32
    %v8739 = vpop.permute.xlu0 %8738
    %8740 = vrot.lane.b32.xlu0 %v6253, 32
    %v8741 = vpop.permute.xlu0 %8740
    %8742 = vrot.lane.b32.xlu0 %v6254, 32
    %v8743 = vpop.permute.xlu0 %8742
    %8744 = vrot.lane.b32.xlu0 %v6255, 32
    %v8745 = vpop.permute.xlu0 %8744
    %8746 = vrot.lane.b32.xlu0 %v6256, 32
    %v8747 = vpop.permute.xlu0 %8746
    %8748 = vrot.lane.b32.xlu0 %v6257, 32
    %v8749 = vpop.permute.xlu0 %8748
    %8750 = vrot.lane.b32.xlu0 %v6258, 32
    %v8751 = vpop.permute.xlu0 %8750
    %8752 = vrot.lane.b32.xlu0 %v6259, 32
    %v8753 = vpop.permute.xlu0 %8752
    %8754 = vrot.lane.b32.xlu0 %v6260, 32
    %v8755 = vpop.permute.xlu0 %8754
    %8756 = vrot.lane.b32.xlu0 %v6261, 32
    %v8757 = vpop.permute.xlu0 %8756
    %8790 = vrot.lane.b32.xlu0 %v8630, 64
    %v8791 = vpop.permute.xlu0 %8790
    %8792 = vrot.lane.b32.xlu0 %v8631, 64
    %v8793 = vpop.permute.xlu0 %8792
    %8794 = vrot.lane.b32.xlu0 %v8632, 64
    %v8795 = vpop.permute.xlu0 %8794
    %8796 = vrot.lane.b32.xlu0 %v8633, 64
    %v8797 = vpop.permute.xlu0 %8796
    %8798 = vrot.lane.b32.xlu0 %v8634, 64
    %v8799 = vpop.permute.xlu0 %8798
    %8800 = vrot.lane.b32.xlu0 %v8635, 64
    %v8801 = vpop.permute.xlu0 %8800
    %8802 = vrot.lane.b32.xlu0 %v8636, 64
    %v8803 = vpop.permute.xlu0 %8802
    %8804 = vrot.lane.b32.xlu0 %v8637, 64
    %v8805 = vpop.permute.xlu0 %8804
    %8806 = vrot.lane.b32.xlu0 %v8638, 64
    %v8807 = vpop.permute.xlu0 %8806
    %8808 = vrot.lane.b32.xlu0 %v8639, 64
    %v8809 = vpop.permute.xlu0 %8808
    %8810 = vrot.lane.b32.xlu0 %v8640, 64
    %v8811 = vpop.permute.xlu0 %8810
    %8812 = vrot.lane.b32.xlu0 %v8641, 64
    %v8813 = vpop.permute.xlu0 %8812
    %8814 = vrot.lane.b32.xlu0 %v8642, 64
    %v8815 = vpop.permute.xlu0 %8814
    %8816 = vrot.lane.b32.xlu0 %v8643, 64
    %v8817 = vpop.permute.xlu0 %8816
    %8818 = vrot.lane.b32.xlu0 %v8644, 64
    %v8819 = vpop.permute.xlu0 %8818
    %8820 = vrot.lane.b32.xlu0 %v8645, 64
    %v8821 = vpop.permute.xlu0 %8820
    %8822 = vrot.lane.b32.xlu0 %v8646, 64
    %v8823 = vpop.permute.xlu0 %8822
    %8824 = vrot.lane.b32.xlu0 %v8647, 64
    %v8825 = vpop.permute.xlu0 %8824
    %8826 = vrot.lane.b32.xlu0 %v8648, 64
    %v8827 = vpop.permute.xlu0 %8826
    %8828 = vrot.lane.b32.xlu0 %v8649, 64
    %v8829 = vpop.permute.xlu0 %8828
    %8830 = vrot.lane.b32.xlu0 %v8650, 64
    %v8831 = vpop.permute.xlu0 %8830
    %8832 = vrot.lane.b32.xlu0 %v8651, 64
    %v8833 = vpop.permute.xlu0 %8832
    %8834 = vrot.lane.b32.xlu0 %v8652, 64
    %v8835 = vpop.permute.xlu0 %8834
    %8836 = vrot.lane.b32.xlu0 %v8653, 64
    %v8837 = vpop.permute.xlu0 %8836
    %8838 = vrot.lane.b32.xlu0 %v8654, 64
    %v8839 = vpop.permute.xlu0 %8838
    %8840 = vrot.lane.b32.xlu0 %v8655, 64
    %v8841 = vpop.permute.xlu0 %8840
    %8842 = vrot.lane.b32.xlu0 %v8656, 64
    %v8843 = vpop.permute.xlu0 %8842
    %8844 = vrot.lane.b32.xlu0 %v8657, 64
    %v8845 = vpop.permute.xlu0 %8844
    %8846 = vrot.lane.b32.xlu0 %v8658, 64
    %v8847 = vpop.permute.xlu0 %8846
    %8848 = vrot.lane.b32.xlu0 %v8659, 64
    %v8849 = vpop.permute.xlu0 %8848
    %8850 = vrot.lane.b32.xlu0 %v8660, 64
    %v8851 = vpop.permute.xlu0 %8850
    %8852 = vrot.lane.b32.xlu0 %v8661, 64
    %v8853 = vpop.permute.xlu0 %8852
    %v8856 = vsel %vm1367, %v3718, %v8695
    %v8859 = vsel %vm1367, %v3719, %v8697
    %v8862 = vsel %vm1367, %v3720, %v8699
    %v8865 = vsel %vm1367, %v3721, %v8701
    %v8868 = vsel %vm1367, %v3722, %v8703
    %v8871 = vsel %vm1367, %v3723, %v8705
    %v8874 = vsel %vm1367, %v3724, %v8707
    %v8877 = vsel %vm1367, %v3725, %v8709
    %v8880 = vsel %vm1367, %v3726, %v8711
    %v8883 = vsel %vm1367, %v3727, %v8713
    %v8886 = vsel %vm1367, %v3728, %v8715
    %v8889 = vsel %vm1367, %v3729, %v8717
    %v8892 = vsel %vm1367, %v3730, %v8719
    %v8895 = vsel %vm1367, %v3731, %v8721
    %v8898 = vsel %vm1367, %v3732, %v8723
    %v8901 = vsel %vm1367, %v3733, %v8725
    %v8904 = vsel %vm1367, %v3734, %v8727
    %v8907 = vsel %vm1367, %v3735, %v8729
    %v8910 = vsel %vm1367, %v3736, %v8731
    %v8913 = vsel %vm1367, %v3737, %v8733
    %v8916 = vsel %vm1367, %v3738, %v8735
    %v8919 = vsel %vm1367, %v3739, %v8737
    %v8922 = vsel %vm1367, %v3740, %v8739
    %v8925 = vsel %vm1367, %v3741, %v8741
    %v8928 = vsel %vm1367, %v3742, %v8743
    %v8931 = vsel %vm1367, %v3743, %v8745
    %v8934 = vsel %vm1367, %v3744, %v8747
    %v8937 = vsel %vm1367, %v3745, %v8749
    %v8940 = vsel %vm1367, %v3746, %v8751
    %v8943 = vsel %vm1367, %v3747, %v8753
    %v8946 = vsel %vm1367, %v3748, %v8755
    %v8949 = vsel %vm1367, %v3749, %v8757
    %vm8950 = vcmask 523264
    %v8952 = vsel %vm8950, %v8856, %v8791
    %v8954 = vsel %vm8950, %v8859, %v8793
    %v8956 = vsel %vm8950, %v8862, %v8795
    %v8958 = vsel %vm8950, %v8865, %v8797
    %v8960 = vsel %vm8950, %v8868, %v8799
    %v8962 = vsel %vm8950, %v8871, %v8801
    %v8964 = vsel %vm8950, %v8874, %v8803
    %v8966 = vsel %vm8950, %v8877, %v8805
    %v8968 = vsel %vm8950, %v8880, %v8807
    %v8970 = vsel %vm8950, %v8883, %v8809
    %v8972 = vsel %vm8950, %v8886, %v8811
    %v8974 = vsel %vm8950, %v8889, %v8813
    %v8976 = vsel %vm8950, %v8892, %v8815
    %v8978 = vsel %vm8950, %v8895, %v8817
    %v8980 = vsel %vm8950, %v8898, %v8819
    %v8982 = vsel %vm8950, %v8901, %v8821
    %v8984 = vsel %vm8950, %v8904, %v8823
    %v8986 = vsel %vm8950, %v8907, %v8825
    %v8988 = vsel %vm8950, %v8910, %v8827
    %v8990 = vsel %vm8950, %v8913, %v8829
    %v8992 = vsel %vm8950, %v8916, %v8831
    %v8994 = vsel %vm8950, %v8919, %v8833
    %v8996 = vsel %vm8950, %v8922, %v8835
    %v8998 = vsel %vm8950, %v8925, %v8837
    %v9000 = vsel %vm8950, %v8928, %v8839
    %v9002 = vsel %vm8950, %v8931, %v8841
    %v9004 = vsel %vm8950, %v8934, %v8843
    %v9006 = vsel %vm8950, %v8937, %v8845
    %v9008 = vsel %vm8950, %v8940, %v8847
    %v9010 = vsel %vm8950, %v8943, %v8849
    %v9012 = vsel %vm8950, %v8946, %v8851
    %v9014 = vsel %vm8950, %v8949, %v8853
    %v9047 = vunpack.c.l.b16 %v8952
    %v9048 = vunpack.c.h.b16 %v8952
    %v9049 = vunpack.c.l.b16 %v8954
    %v9050 = vunpack.c.h.b16 %v8954
    %v9051 = vunpack.c.l.b16 %v8956
    %v9052 = vunpack.c.h.b16 %v8956
    %v9053 = vunpack.c.l.b16 %v8958
    %v9054 = vunpack.c.l.b16 %v8960
    %v9055 = vunpack.c.h.b16 %v8960
    %v9056 = vunpack.c.l.b16 %v8962
    %v9057 = vunpack.c.h.b16 %v8962
    %v9058 = vunpack.c.l.b16 %v8964
    %v9059 = vunpack.c.h.b16 %v8964
    %v9060 = vunpack.c.l.b16 %v8966
    %v9061 = vunpack.c.l.b16 %v8968
    %v9062 = vunpack.c.h.b16 %v8968
    %v9063 = vunpack.c.l.b16 %v8970
    %v9064 = vunpack.c.h.b16 %v8970
    %v9065 = vunpack.c.l.b16 %v8972
    %v9066 = vunpack.c.h.b16 %v8972
    %v9067 = vunpack.c.l.b16 %v8974
    %v9068 = vunpack.c.l.b16 %v8976
    %v9069 = vunpack.c.h.b16 %v8976
    %v9070 = vunpack.c.l.b16 %v8978
    %v9071 = vunpack.c.h.b16 %v8978
    %v9072 = vunpack.c.l.b16 %v8980
    %v9073 = vunpack.c.h.b16 %v8980
    %v9074 = vunpack.c.l.b16 %v8982
    %v9075 = vunpack.c.l.b16 %v8984
    %v9076 = vunpack.c.h.b16 %v8984
    %v9077 = vunpack.c.l.b16 %v8986
    %v9078 = vunpack.c.h.b16 %v8986
    %v9079 = vunpack.c.l.b16 %v8988
    %v9080 = vunpack.c.h.b16 %v8988
    %v9081 = vunpack.c.l.b16 %v8990
    %v9082 = vunpack.c.l.b16 %v8992
    %v9083 = vunpack.c.h.b16 %v8992
    %v9084 = vunpack.c.l.b16 %v8994
    %v9085 = vunpack.c.h.b16 %v8994
    %v9086 = vunpack.c.l.b16 %v8996
    %v9087 = vunpack.c.h.b16 %v8996
    %v9088 = vunpack.c.l.b16 %v8998
    %v9089 = vunpack.c.l.b16 %v9000
    %v9090 = vunpack.c.h.b16 %v9000
    %v9091 = vunpack.c.l.b16 %v9002
    %v9092 = vunpack.c.h.b16 %v9002
    %v9093 = vunpack.c.l.b16 %v9004
    %v9094 = vunpack.c.h.b16 %v9004
    %v9095 = vunpack.c.l.b16 %v9006
    %v9096 = vunpack.c.l.b16 %v9008
    %v9097 = vunpack.c.h.b16 %v9008
    %v9098 = vunpack.c.l.b16 %v9010
    %v9099 = vunpack.c.h.b16 %v9010
    %v9100 = vunpack.c.l.b16 %v9012
    %v9101 = vunpack.c.h.b16 %v9012
    %v9102 = vunpack.c.l.b16 %v9014
    %v9103 = vld [vmem:[#allocation8] sm:$0xf]
    %v9104 = vld [vmem:[#allocation8 + $0x4] sm:$0xf]
    %v9105 = vld [vmem:[#allocation8 + $0x8] sm:$0xf]
    %v9106 = vld [vmem:[#allocation8 + $0xc] sm:$0xf]
    %v9107 = vld [vmem:[#allocation8 + $0x10] sm:$0xf]
    %v9108 = vld [vmem:[#allocation8 + $0x14] sm:$0xf]
    %v9109 = vld [vmem:[#allocation8 + $0x18] sm:$0xf]
    %v9110 = vld [vmem:[#allocation8 + $0x1c] sm:$0xf]
    %v9111 = vld [vmem:[#allocation8 + $0x20] sm:$0xf]
    %v9112 = vld [vmem:[#allocation8 + $0x24] sm:$0xf]
    %v9113 = vld [vmem:[#allocation8 + $0x28] sm:$0xf]
    %v9114 = vld [vmem:[#allocation8 + $0x2c] sm:$0xf]
    %v9115 = vld [vmem:[%s5] sm:$0x1]
    %v9117 = vlaneseq
    %v9118 = vshrl.u32 %v9117, 7
    %v9119 = vsub.s32 0, %v9118
    %v9120 = vrot.slane %v9115, %v9119
    %v9122 = vpack.c.b16 %v9048, %v9047
    %v9123 = vpack.c.b16 %v9050, %v9049
    %v9124 = vpack.c.b16 %v9052, %v9051
    %v9125 = vpack.c.b16 %v9054, %v9053
    %v9126 = vpack.c.b16 %v9056, %v9055
    %v9127 = vpack.c.b16 %v9058, %v9057
    %v9128 = vpack.c.b16 %v9060, %v9059
    %v9129 = vpack.c.b16 %v9062, %v9061
    %v9130 = vpack.c.b16 %v9064, %v9063
    %v9131 = vpack.c.b16 %v9066, %v9065
    %v9132 = vpack.c.b16 %v9068, %v9067
    %v9133 = vpack.c.b16 %v9070, %v9069
    %v9134 = vpack.c.b16 %v9072, %v9071
    %v9135 = vpack.c.b16 %v9074, %v9073
    %v9136 = vpack.c.b16 %v9076, %v9075
    %v9137 = vpack.c.b16 %v9078, %v9077
    %v9138 = vpack.c.b16 %v9080, %v9079
    %v9139 = vpack.c.b16 %v9082, %v9081
    %v9140 = vpack.c.b16 %v9084, %v9083
    %v9141 = vpack.c.b16 %v9086, %v9085
    %v9142 = vpack.c.b16 %v9088, %v9087
    %v9143 = vpack.c.b16 %v9090, %v9089
    %v9144 = vpack.c.b16 %v9092, %v9091
    %v9145 = vpack.c.b16 %v9094, %v9093
    %v9146 = vpack.c.b16 %v9096, %v9095
    %v9147 = vpack.c.b16 %v9098, %v9097
    %v9148 = vpack.c.b16 %v9100, %v9099
    %v9149 = vpack.c.b16 %v9102, %v9101
    %v9162 = vunpack.c.l.b16 %v9103
    %v9163 = vunpack.c.l.b16 %v9104
    %v9164 = vunpack.c.l.b16 %v9105
    %v9165 = vunpack.c.l.b16 %v9106
    %v9166 = vunpack.c.l.b16 %v9107
    %v9167 = vunpack.c.l.b16 %v9108
    %v9168 = vunpack.c.l.b16 %v9109
    %v9169 = vunpack.c.l.b16 %v9110
    %v9170 = vunpack.c.l.b16 %v9111
    %v9171 = vunpack.c.l.b16 %v9112
    %v9172 = vunpack.c.l.b16 %v9113
    %v9173 = vunpack.c.l.b16 %v9114
    %v9174 = vpack.c.b16 %v9163, %v9162
    %v9175 = vpack.c.b16 %v9165, %v9164
    %v9176 = vpack.c.b16 %v9167, %v9166
    %v9177 = vpack.c.b16 %v9169, %v9168
    %v9178 = vpack.c.b16 %v9171, %v9170
    %v9179 = vpack.c.b16 %v9173, %v9172
    %v9187 = vsel %vm301, %v9122, 0
    %v9190 = vsel %vm301, %v9123, 0
    %v9193 = vsel %vm301, %v9124, 0
    %v9196 = vsel %vm301, %v9125, 0
    %v9199 = vsel %vm301, %v9126, 0
    %v9202 = vsel %vm301, %v9127, 0
    %v9205 = vsel %vm301, %v9128, 0
    %v9208 = vsel %vm301, %v9129, 0
    %v9211 = vsel %vm301, %v9130, 0
    %v9214 = vsel %vm301, %v9131, 0
    %v9217 = vsel %vm301, %v9132, 0
    %v9220 = vsel %vm301, %v9133, 0
    %v9223 = vsel %vm301, %v9134, 0
    %v9226 = vsel %vm301, %v9135, 0
    %v9229 = vsel %vm301, %v9136, 0
    %v9232 = vsel %vm301, %v9137, 0
    %v9235 = vsel %vm301, %v9138, 0
    %v9238 = vsel %vm301, %v9139, 0
    %v9241 = vsel %vm301, %v9140, 0
    %v9244 = vsel %vm301, %v9141, 0
    %v9247 = vsel %vm301, %v9142, 0
    %v9250 = vsel %vm301, %v9143, 0
    %v9253 = vsel %vm301, %v9144, 0
    %v9256 = vsel %vm301, %v9145, 0
    %v9259 = vsel %vm301, %v9146, 0
    %v9262 = vsel %vm301, %v9147, 0
    %v9265 = vsel %vm301, %v9148, 0
    %v9268 = vsel %vm301, %v9149, 0
    %9270 = vmatprep.subr.bf16.mxu0 0
    %9271 = vmatpush1.bf16.msra.mxu0 %v9174
    %9272 = vmatprep.subr.bf16.mxu0 0
    %9273 = vmatpush1.bf16.msra.mxu0 %v9175
    %9274 = vmatprep.subr.bf16.mxu0 0
    %9275 = vmatpush1.bf16.msra.mxu0 %v9176
    %9276 = vmatprep.subr.bf16.mxu0 0
    %9277 = vmatpush1.bf16.msra.mxu0 %v9177
    %9278 = vmatprep.subr.bf16.mxu0 0
    %9279 = vmatpush1.bf16.msra.mxu0 %v9178
    %9280 = vmatprep.subr.bf16.mxu0 0
    %9281 = vmatpush1.bf16.msra.mxu0 %v9179
    %9282 = vmatprep.subr.bf16.mxu0 0
    %9283 = vmatpush1.bf16.msra.mxu0 0
    %9284 = vmatprep.subr.bf16.mxu0 0
    %9285 = vmatpush1.bf16.msra.mxu0 0
    %9286 = vmatprep.subr.bf16.mxu0 0
    %9287 = vmatpush1.bf16.msra.mxu0 0
    %9288 = vmatprep.subr.bf16.mxu0 0
    %9289 = vmatpush1.bf16.msra.mxu0 0
    %9290 = vmatprep.subr.bf16.mxu0 0
    %9291 = vmatpush1.bf16.msra.mxu0 0
    %9292 = vmatprep.subr.bf16.mxu0 0
    %9293 = vmatpush1.bf16.msra.mxu0 0
    %9294 = vmatprep.subr.bf16.mxu0 0
    %9295 = vmatpush1.bf16.msra.mxu0 0
    %9296 = vmatprep.subr.bf16.mxu0 0
    %9297 = vmatpush1.bf16.msra.mxu0 0
    %9298 = vmatprep.subr.bf16.mxu0 0
    %9299 = vmatpush1.bf16.msra.mxu0 0
    %9300 = vmatprep.subr.bf16.mxu0 0
    %9301 = vmatpush1.bf16.msra.mxu0 0
    %9302 = vmatprep.mubr.bf16.mxu0 0
    %9303 = vmatmul.mubr.bf16.gmra.mrb[0].mxu0 %v9187
    %v9304 = vpop.f32.mrb[0].mxu0
    %v9305 = vadd.f32 %v9120, %v9304
    %v9306 = vpop.f32.mrb[0].mxu0
    %v9307 = vpop.f32.mrb[0].mxu0
    %v9308 = vadd.f32 %v9120, %v9307
    %v9309 = vpop.f32.mrb[0].mxu0
    %9310 = vmatprep.mubr.bf16.mxu0 0
    %9311 = vmatmul.mubr.bf16.gmra.mrb[0].mxu0 %v9190
    %v9312 = vpop.f32.mrb[0].mxu0
    %v9313 = vadd.f32 %v9120, %v9312
    %v9314 = vpop.f32.mrb[0].mxu0
    %v9315 = vpop.f32.mrb[0].mxu0
    %v9316 = vadd.f32 %v9120, %v9315
    %v9317 = vpop.f32.mrb[0].mxu0
    %9318 = vmatprep.mubr.bf16.mxu0 0
    %9319 = vmatmul.mubr.bf16.gmra.mrb[0].mxu0 %v9193
    %v9320 = vpop.f32.mrb[0].mxu0
    %v9321 = vadd.f32 %v9120, %v9320
    %v9322 = vpop.f32.mrb[0].mxu0
    %v9323 = vpop.f32.mrb[0].mxu0
    %v9324 = vadd.f32 %v9120, %v9323
    %v9325 = vpop.f32.mrb[0].mxu0
    %9326 = vmatprep.mubr.bf16.mxu0 0
    %9327 = vmatmul.mubr.bf16.gmra.mrb[0].mxu0 %v9196
    %v9328 = vpop.f32.mrb[0].mxu0
    %v9329 = vadd.f32 %v9120, %v9328
    %v9330 = vpop.f32.mrb[0].mxu0
    %v9331 = vpop.f32.mrb[0].mxu0
    %v9332 = vadd.f32 %v9120, %v9331
    %v9333 = vpop.f32.mrb[0].mxu0
    %9334 = vmatprep.mubr.bf16.mxu0 0
    %9335 = vmatmul.mubr.bf16.gmra.mrb[0].mxu0 %v9199
    %v9336 = vpop.f32.mrb[0].mxu0
    %v9337 = vadd.f32 %v9120, %v9336
    %v9338 = vpop.f32.mrb[0].mxu0
    %v9339 = vpop.f32.mrb[0].mxu0
    %v9340 = vadd.f32 %v9120, %v9339
    %v9341 = vpop.f32.mrb[0].mxu0
    %9342 = vmatprep.mubr.bf16.mxu0 0
    %9343 = vmatmul.mubr.bf16.gmra.mrb[0].mxu0 %v9202
    %v9344 = vpop.f32.mrb[0].mxu0
    %v9345 = vadd.f32 %v9120, %v9344
    %v9346 = vpop.f32.mrb[0].mxu0
    %v9347 = vpop.f32.mrb[0].mxu0
    %v9348 = vadd.f32 %v9120, %v9347
    %v9349 = vpop.f32.mrb[0].mxu0
    %9350 = vmatprep.mubr.bf16.mxu0 0
    %9351 = vmatmul.mubr.bf16.gmra.mrb[0].mxu0 %v9205
    %v9352 = vpop.f32.mrb[0].mxu0
    %v9353 = vadd.f32 %v9120, %v9352
    %v9354 = vpop.f32.mrb[0].mxu0
    %v9355 = vpop.f32.mrb[0].mxu0
    %v9356 = vadd.f32 %v9120, %v9355
    %v9357 = vpop.f32.mrb[0].mxu0
    %9358 = vmatprep.mubr.bf16.mxu0 0
    %9359 = vmatmul.mubr.bf16.gmra.mrb[0].mxu0 %v9208
    %v9360 = vpop.f32.mrb[0].mxu0
    %v9361 = vadd.f32 %v9120, %v9360
    %v9362 = vpop.f32.mrb[0].mxu0
    %v9363 = vpop.f32.mrb[0].mxu0
    %v9364 = vadd.f32 %v9120, %v9363
    %v9365 = vpop.f32.mrb[0].mxu0
    %9366 = vmatprep.mubr.bf16.mxu0 0
    %9367 = vmatmul.mubr.bf16.gmra.mrb[0].mxu0 %v9211
    %v9368 = vpop.f32.mrb[0].mxu0
    %v9369 = vadd.f32 %v9120, %v9368
    %v9370 = vpop.f32.mrb[0].mxu0
    %v9371 = vpop.f32.mrb[0].mxu0
    %v9372 = vadd.f32 %v9120, %v9371
    %v9373 = vpop.f32.mrb[0].mxu0
    %9374 = vmatprep.mubr.bf16.mxu0 0
    %9375 = vmatmul.mubr.bf16.gmra.mrb[0].mxu0 %v9214
    %v9376 = vpop.f32.mrb[0].mxu0
    %v9377 = vadd.f32 %v9120, %v9376
    %v9378 = vpop.f32.mrb[0].mxu0
    %v9379 = vpop.f32.mrb[0].mxu0
    %v9380 = vadd.f32 %v9120, %v9379
    %v9381 = vpop.f32.mrb[0].mxu0
    %9382 = vmatprep.mubr.bf16.mxu0 0
    %9383 = vmatmul.mubr.bf16.gmra.mrb[0].mxu0 %v9217
    %v9384 = vpop.f32.mrb[0].mxu0
    %v9385 = vadd.f32 %v9120, %v9384
    %v9386 = vpop.f32.mrb[0].mxu0
    %v9387 = vpop.f32.mrb[0].mxu0
    %v9388 = vadd.f32 %v9120, %v9387
    %v9389 = vpop.f32.mrb[0].mxu0
    %9390 = vmatprep.mubr.bf16.mxu0 0
    %9391 = vmatmul.mubr.bf16.gmra.mrb[0].mxu0 %v9220
    %v9392 = vpop.f32.mrb[0].mxu0
    %v9393 = vadd.f32 %v9120, %v9392
    %v9394 = vpop.f32.mrb[0].mxu0
    %v9395 = vpop.f32.mrb[0].mxu0
    %v9396 = vadd.f32 %v9120, %v9395
    %v9397 = vpop.f32.mrb[0].mxu0
    %9398 = vmatprep.mubr.bf16.mxu0 0
    %9399 = vmatmul.mubr.bf16.gmra.mrb[0].mxu0 %v9223
    %v9400 = vpop.f32.mrb[0].mxu0
    %v9401 = vadd.f32 %v9120, %v9400
    %v9402 = vpop.f32.mrb[0].mxu0
    %v9403 = vpop.f32.mrb[0].mxu0
    %v9404 = vadd.f32 %v9120, %v9403
    %v9405 = vpop.f32.mrb[0].mxu0
    %9406 = vmatprep.mubr.bf16.mxu0 0
    %9407 = vmatmul.mubr.bf16.gmra.mrb[0].mxu0 %v9226
    %v9408 = vpop.f32.mrb[0].mxu0
    %v9409 = vadd.f32 %v9120, %v9408
    %v9410 = vpop.f32.mrb[0].mxu0
    %v9411 = vpop.f32.mrb[0].mxu0
    %v9412 = vadd.f32 %v9120, %v9411
    %v9413 = vpop.f32.mrb[0].mxu0
    %9414 = vmatprep.mubr.bf16.mxu0 0
    %9415 = vmatmul.mubr.bf16.gmra.mrb[0].mxu0 %v9229
    %v9416 = vpop.f32.mrb[0].mxu0
    %v9417 = vadd.f32 %v9120, %v9416
    %v9418 = vpop.f32.mrb[0].mxu0
    %v9419 = vpop.f32.mrb[0].mxu0
    %v9420 = vadd.f32 %v9120, %v9419
    %v9421 = vpop.f32.mrb[0].mxu0
    %9422 = vmatprep.mubr.bf16.mxu0 0
    %9423 = vmatmul.mubr.bf16.gmra.mrb[0].mxu0 %v9232
    %v9424 = vpop.f32.mrb[0].mxu0
    %v9425 = vadd.f32 %v9120, %v9424
    %v9426 = vpop.f32.mrb[0].mxu0
    %v9427 = vpop.f32.mrb[0].mxu0
    %v9428 = vadd.f32 %v9120, %v9427
    %v9429 = vpop.f32.mrb[0].mxu0
    %9430 = vmatprep.mubr.bf16.mxu0 0
    %9431 = vmatmul.mubr.bf16.gmra.mrb[0].mxu0 %v9235
    %v9432 = vpop.f32.mrb[0].mxu0
    %v9433 = vadd.f32 %v9120, %v9432
    %v9434 = vpop.f32.mrb[0].mxu0
    %v9435 = vpop.f32.mrb[0].mxu0
    %v9436 = vadd.f32 %v9120, %v9435
    %v9437 = vpop.f32.mrb[0].mxu0
    %9438 = vmatprep.mubr.bf16.mxu0 0
    %9439 = vmatmul.mubr.bf16.gmra.mrb[0].mxu0 %v9238
    %v9440 = vpop.f32.mrb[0].mxu0
    %v9441 = vadd.f32 %v9120, %v9440
    %v9442 = vpop.f32.mrb[0].mxu0
    %v9443 = vpop.f32.mrb[0].mxu0
    %v9444 = vadd.f32 %v9120, %v9443
    %v9445 = vpop.f32.mrb[0].mxu0
    %9446 = vmatprep.mubr.bf16.mxu0 0
    %9447 = vmatmul.mubr.bf16.gmra.mrb[0].mxu0 %v9241
    %v9448 = vpop.f32.mrb[0].mxu0
    %v9449 = vadd.f32 %v9120, %v9448
    %v9450 = vpop.f32.mrb[0].mxu0
    %v9451 = vpop.f32.mrb[0].mxu0
    %v9452 = vadd.f32 %v9120, %v9451
    %v9453 = vpop.f32.mrb[0].mxu0
    %9454 = vmatprep.mubr.bf16.mxu0 0
    %9455 = vmatmul.mubr.bf16.gmra.mrb[0].mxu0 %v9244
    %v9456 = vpop.f32.mrb[0].mxu0
    %v9457 = vadd.f32 %v9120, %v9456
    %v9458 = vpop.f32.mrb[0].mxu0
    %v9459 = vpop.f32.mrb[0].mxu0
    %v9460 = vadd.f32 %v9120, %v9459
    %v9461 = vpop.f32.mrb[0].mxu0
    %9462 = vmatprep.mubr.bf16.mxu0 0
    %9463 = vmatmul.mubr.bf16.gmra.mrb[0].mxu0 %v9247
    %v9464 = vpop.f32.mrb[0].mxu0
    %v9465 = vadd.f32 %v9120, %v9464
    %v9466 = vpop.f32.mrb[0].mxu0
    %v9467 = vpop.f32.mrb[0].mxu0
    %v9468 = vadd.f32 %v9120, %v9467
    %v9469 = vpop.f32.mrb[0].mxu0
    %9470 = vmatprep.mubr.bf16.mxu0 0
    %9471 = vmatmul.mubr.bf16.gmra.mrb[0].mxu0 %v9250
    %v9472 = vpop.f32.mrb[0].mxu0
    %v9473 = vadd.f32 %v9120, %v9472
    %v9474 = vpop.f32.mrb[0].mxu0
    %v9475 = vpop.f32.mrb[0].mxu0
    %v9476 = vadd.f32 %v9120, %v9475
    %v9477 = vpop.f32.mrb[0].mxu0
    %9478 = vmatprep.mubr.bf16.mxu0 0
    %9479 = vmatmul.mubr.bf16.gmra.mrb[0].mxu0 %v9253
    %v9480 = vpop.f32.mrb[0].mxu0
    %v9481 = vadd.f32 %v9120, %v9480
    %v9482 = vpop.f32.mrb[0].mxu0
    %v9483 = vpop.f32.mrb[0].mxu0
    %v9484 = vadd.f32 %v9120, %v9483
    %v9485 = vpop.f32.mrb[0].mxu0
    %9486 = vmatprep.mubr.bf16.mxu0 0
    %9487 = vmatmul.mubr.bf16.gmra.mrb[0].mxu0 %v9256
    %v9488 = vpop.f32.mrb[0].mxu0
    %v9489 = vadd.f32 %v9120, %v9488
    %v9490 = vpop.f32.mrb[0].mxu0
    %v9491 = vpop.f32.mrb[0].mxu0
    %v9492 = vadd.f32 %v9120, %v9491
    %v9493 = vpop.f32.mrb[0].mxu0
    %9494 = vmatprep.mubr.bf16.mxu0 0
    %9495 = vmatmul.mubr.bf16.gmra.mrb[0].mxu0 %v9259
    %v9496 = vpop.f32.mrb[0].mxu0
    %v9497 = vadd.f32 %v9120, %v9496
    %v9498 = vpop.f32.mrb[0].mxu0
    %v9499 = vpop.f32.mrb[0].mxu0
    %v9500 = vadd.f32 %v9120, %v9499
    %v9501 = vpop.f32.mrb[0].mxu0
    %9502 = vmatprep.mubr.bf16.mxu0 0
    %9503 = vmatmul.mubr.bf16.gmra.mrb[0].mxu0 %v9262
    %v9504 = vpop.f32.mrb[0].mxu0
    %v9505 = vadd.f32 %v9120, %v9504
    %v9506 = vpop.f32.mrb[0].mxu0
    %v9507 = vpop.f32.mrb[0].mxu0
    %v9508 = vadd.f32 %v9120, %v9507
    %v9509 = vpop.f32.mrb[0].mxu0
    %9510 = vmatprep.mubr.bf16.mxu0 0
    %9511 = vmatmul.mubr.bf16.gmra.mrb[0].mxu0 %v9265
    %v9512 = vpop.f32.mrb[0].mxu0
    %v9513 = vadd.f32 %v9120, %v9512
    %v9514 = vpop.f32.mrb[0].mxu0
    %v9515 = vpop.f32.mrb[0].mxu0
    %v9516 = vadd.f32 %v9120, %v9515
    %v9517 = vpop.f32.mrb[0].mxu0
    %9518 = vmatprep.mubr.bf16.mxu0 0
    %9519 = vmatmul.mubr.bf16.gmra.mrb[0].mxu0 %v9268
    %v9520 = vpop.f32.mrb[0].mxu0
    %v9521 = vadd.f32 %v9120, %v9520
    %v9522 = vpop.f32.mrb[0].mxu0
    %v9523 = vpop.f32.mrb[0].mxu0
    %v9524 = vadd.f32 %v9120, %v9523
    %v9525 = vpop.f32.mrb[0].mxu0
    %9526 = vdwg.mxu0
    %9527 = vst [vmem:[#allocation10] sm:$0xff] %v9305
    %9528 = vst [vmem:[#allocation10 + $0x8] sm:$0xff] %v9308
    %9529 = vst [vmem:[#allocation10 + $0x10] sm:$0xff] %v9313
    %9530 = vst [vmem:[#allocation10 + $0x18] sm:$0xff] %v9316
    %9531 = vst [vmem:[#allocation10 + $0x20] sm:$0xff] %v9321
    %9532 = vst [vmem:[#allocation10 + $0x28] sm:$0xff] %v9324
    %9533 = vst [vmem:[#allocation10 + $0x30] sm:$0xff] %v9329
    %9534 = vst [vmem:[#allocation10 + $0x38] sm:$0xff] %v9332
    %9535 = vst [vmem:[#allocation10 + $0x40] sm:$0xff] %v9337
    %9536 = vst [vmem:[#allocation10 + $0x48] sm:$0xff] %v9340
    %9537 = vst [vmem:[#allocation10 + $0x50] sm:$0xff] %v9345
    %9538 = vst [vmem:[#allocation10 + $0x58] sm:$0xff] %v9348
    %9539 = vst [vmem:[#allocation10 + $0x60] sm:$0xff] %v9353
    %9540 = vst [vmem:[#allocation10 + $0x68] sm:$0xff] %v9356
    %9541 = vst [vmem:[#allocation10 + $0x70] sm:$0xff] %v9361
    %9542 = vst [vmem:[#allocation10 + $0x78] sm:$0xff] %v9364
    %9543 = vst [vmem:[#allocation10 + $0x80] sm:$0xff] %v9369
    %9544 = vst [vmem:[#allocation10 + $0x88] sm:$0xff] %v9372
    %9545 = vst [vmem:[#allocation10 + $0x90] sm:$0xff] %v9377
    %9546 = vst [vmem:[#allocation10 + $0x98] sm:$0xff] %v9380
    %9547 = vst [vmem:[#allocation10 + $0xa0] sm:$0xff] %v9385
    %9548 = vst [vmem:[#allocation10 + $0xa8] sm:$0xff] %v9388
    %9549 = vst [vmem:[#allocation10 + $0xb0] sm:$0xff] %v9393
    %9550 = vst [vmem:[#allocation10 + $0xb8] sm:$0xff] %v9396
    %9551 = vst [vmem:[#allocation10 + $0xc0] sm:$0xff] %v9401
    %9552 = vst [vmem:[#allocation10 + $0xc8] sm:$0xff] %v9404
    %9553 = vst [vmem:[#allocation10 + $0xd0] sm:$0xff] %v9409
    %9554 = vst [vmem:[#allocation10 + $0xd8] sm:$0xff] %v9412
    %9555 = vst [vmem:[#allocation10 + $0xe0] sm:$0xff] %v9417
    %9556 = vst [vmem:[#allocation10 + $0xe8] sm:$0xff] %v9420
    %9557 = vst [vmem:[#allocation10 + $0xf0] sm:$0xff] %v9425
    %9558 = vst [vmem:[#allocation10 + $0xf8] sm:$0xff] %v9428
    %9559 = vst [vmem:[#allocation10 + $0x100] sm:$0xff] %v9433
    %9560 = vst [vmem:[#allocation10 + $0x108] sm:$0xff] %v9436
    %9561 = vst [vmem:[#allocation10 + $0x110] sm:$0xff] %v9441
    %9562 = vst [vmem:[#allocation10 + $0x118] sm:$0xff] %v9444
    %9563 = vst [vmem:[#allocation10 + $0x120] sm:$0xff] %v9449
    %9564 = vst [vmem:[#allocation10 + $0x128] sm:$0xff] %v9452
    %9565 = vst [vmem:[#allocation10 + $0x130] sm:$0xff] %v9457
    %9566 = vst [vmem:[#allocation10 + $0x138] sm:$0xff] %v9460
    %9567 = vst [vmem:[#allocation10 + $0x140] sm:$0xff] %v9465
    %9568 = vst [vmem:[#allocation10 + $0x148] sm:$0xff] %v9468
    %9569 = vst [vmem:[#allocation10 + $0x150] sm:$0xff] %v9473
    %9570 = vst [vmem:[#allocation10 + $0x158] sm:$0xff] %v9476
    %9571 = vst [vmem:[#allocation10 + $0x160] sm:$0xff] %v9481
    %9572 = vst [vmem:[#allocation10 + $0x168] sm:$0xff] %v9484
    %9573 = vst [vmem:[#allocation10 + $0x170] sm:$0xff] %v9489
    %9574 = vst [vmem:[#allocation10 + $0x178] sm:$0xff] %v9492
    %9575 = vst [vmem:[#allocation10 + $0x180] sm:$0xff] %v9497
    %9576 = vst [vmem:[#allocation10 + $0x188] sm:$0xff] %v9500
    %9577 = vst [vmem:[#allocation10 + $0x190] sm:$0xff] %v9505
    %9578 = vst [vmem:[#allocation10 + $0x198] sm:$0xff] %v9508
    %9579 = vst [vmem:[#allocation10 + $0x1a0] sm:$0xff] %v9513
    %9580 = vst [vmem:[#allocation10 + $0x1a8] sm:$0xff] %v9516
    %9581 = vst [vmem:[#allocation10 + $0x1b0] sm:$0xff] %v9521
    %9582 = vst [vmem:[#allocation10 + $0x1b8] sm:$0xff] %v9524
    // Predicated region
    $region42: #{tpu_custom_call.1} parent=1 // pred_check
      _
    $region43: #{tpu_custom_call.1} parent=1 // pred_check_branch
      %9584 = sbr.rel (0) target = $region45
    $region44: #{tpu_custom_call.1} parent=1 // pred_region
      %s9586 = ssub.s32 7168, 7168
      %9587 = vsyncadd [#allocation4], %s9586
      %s9588 = sshll.u32 [#allocation10], 4
      %s9589 = int_to_ptr.vmem [resolvable:$true] %s9588
      %9594 = dma.vmem_to_hbm [thread:$0]  %s9589, 7168, %s6, [#allocation4], 128, 128, 8
    $region45: #{tpu_custom_call.1} parent=1 // pred_fallthru
      _
    // Predicated region
    $region46: #{tpu_custom_call.1} parent=1 // pred_check
      _
    $region47: #{tpu_custom_call.1} parent=1 // pred_check_branch
      %9596 = sbr.rel (0) target = $region49
    $region48: #{tpu_custom_call.1} parent=1 // pred_region
      %9597 = dma.done [#allocation4], 7168
    $region49: #{tpu_custom_call.1} parent=1 // pred_fallthru
      _
    %9598 = vsyncpa [#allocation3], 1
    %9599 = vsyncpa [#allocation6], 1
    %9600 = vsyncpa [#allocation9], 1
    %9601 = vsyncpa [#allocation4], 1

</llo_original>
